<compile_context>
chip_gen: v7x
topology: tpu7x:2x2x1
jax: 0.10.0
libtpu: 0.0.40
codegen_flags: <defaults>
</compile_context>

<pallas_src>
import numpy as np
import jax
import jax.numpy as jnp
from jax import lax
from jax.experimental import pallas as pl
from jax.experimental.pallas import tpu as pltpu

K = 3                   # kernel_size
D1, D2 = 3, 2           # dilations of the two convs
PAD1 = (K // 2) * D1    # 'same' padding for conv1 (= 3)
PAD2 = (K // 2) * D2    # 'same' padding for conv2 (= 2)
XOFF = 8                # sublane-aligned column where the scratch interior starts
CP = 128                # channel dim padded to one full lane tile


def _round_up(x, m):
    return ((x + m - 1) // m) * m


def _dblock_inv_kernel(x_ref, w1_ref, b1_ref, w2_ref, b2_ref, o_ref,
                       xpad_ref, mid_ref, col_ref):
    # x_ref   : (1, H, W, CP)        bf16  unpadded NHWC input block
    # w*_ref  : (K*K*CP, CP)         bf16  im2col weight slab (row = tap*CP + cin)
    # b*_ref  : (1, CP)              f32
    # o_ref   : (1, H, W, CP)        f32
    # xpad_ref: (H+2*PAD1, XW, CP)   bf16  zero-ringed conv1 input scratch
    # mid_ref : (H+2*PAD2, XW, CP)   bf16  zero-ringed relu(conv1) scratch
    # col_ref : (H*W, K*K*CP)        bf16  shared im2col buffer (fully rewritten)
    _, H, W, _ = x_ref.shape
    HW = H * W

    def zero_halo(ref, pad):
        # Zero only the halo strips the dilated taps actually read; the interior
        # is fully overwritten below.  Done every step (cheap, aligned stores)
        # so it stays correct when the batch axis is sharded across cores.
        rows, cols, ch = ref.shape
        ref[0:pad, :, :] = jnp.zeros((pad, cols, ch), ref.dtype)
        ref[rows - pad:rows, :, :] = jnp.zeros((pad, cols, ch), ref.dtype)
        ref[:, 0:XOFF, :] = jnp.zeros((rows, XOFF, ch), ref.dtype)
        ref[:, XOFF + W:XOFF + W + 8, :] = jnp.zeros((rows, 8, ch), ref.dtype)

    def im2col(src_ref, pad, dil):
        # Gather the 9 dilated taps into lane-aligned 128-wide slabs of col_ref.
        for kh in range(K):
            for kw in range(K):
                k = kh * K + kw
                r0 = kh * dil
                c0 = XOFF - pad + kw * dil
                patch = src_ref[r0:r0 + H, c0:c0 + W, :]
                col_ref[:, k * CP:(k + 1) * CP] = patch.reshape(HW, CP)

    # ---- stage input into the zero-ringed, sublane-aligned scratch ----
    zero_halo(xpad_ref, PAD1)
    xpad_ref[PAD1:PAD1 + H, XOFF:XOFF + W, :] = x_ref[0]

    # ---- conv1 (dilation=3): im2col + one MXU matmul + bias + ReLU (f32) ----
    im2col(xpad_ref, PAD1, D1)
    acc1 = jnp.dot(col_ref[...], w1_ref[...],
                   preferred_element_type=jnp.float32)
    h1 = jnp.maximum(acc1 + b1_ref[...], 0.0)

    # ---- stage relu(conv1) (bf16) for conv2 ----
    zero_halo(mid_ref, PAD2)
    mid_ref[PAD2:PAD2 + H, XOFF:XOFF + W, :] = (
        h1.astype(mid_ref.dtype).reshape(H, W, CP))

    # ---- conv2 (dilation=2): im2col + one MXU matmul + bias + ReLU (f32) ----
    im2col(mid_ref, PAD2, D2)
    acc2 = jnp.dot(col_ref[...], w2_ref[...],
                   preferred_element_type=jnp.float32)
    h2 = jnp.maximum(acc2 + b2_ref[...], 0.0)

    o_ref[...] = h2.reshape(1, H, W, CP).astype(o_ref.dtype)


def dblock_inv_forward(x_nchw, w1_hwio, b1, w2_hwio, b2):
    """DBlock_inv forward. x_nchw: (N, Cin, H, W); weights HWIO (K, K, Cin, Cout)."""
    N, Cin, H, W = x_nchw.shape
    Cout = w1_hwio.shape[-1]
    assert Cin <= CP and Cout <= CP

    # NHWC, channels zero-padded to a full 128-lane tile, bf16 for the MXU.
    x = jnp.transpose(x_nchw, (0, 2, 3, 1)).astype(jnp.bfloat16)
    x = jnp.pad(x, ((0, 0), (0, 0), (0, 0), (0, CP - Cin)))

    def pack_w(w, ci, co):
        wp = jnp.zeros((K, K, CP, CP), jnp.bfloat16)
        wp = wp.at[:, :, :ci, :co].set(w.astype(jnp.bfloat16))
        return wp.reshape(K * K * CP, CP)          # row index = tap*CP + cin

    def pack_b(b, co):
        return jnp.zeros((1, CP), jnp.float32).at[0, :co].set(
            b.astype(jnp.float32))

    w1p, w2p = pack_w(w1_hwio, Cin, Cout), pack_w(w2_hwio, Cout, Cout)
    b1p, b2p = pack_b(b1, Cout), pack_b(b2, Cout)

    # scratch column width: aligned interior at XOFF plus an 8-wide right halo
    XW = XOFF + _round_up(W, 8) + 8

    out = pl.pallas_call(
        _dblock_inv_kernel,
        out_shape=jax.ShapeDtypeStruct((N, H, W, CP), jnp.float32),
        grid_spec=pltpu.PrefetchScalarGridSpec(
            num_scalar_prefetch=0,
            grid=(N,),
            in_specs=[
                pl.BlockSpec((1, H, W, CP), lambda n: (n, 0, 0, 0)),
                pl.BlockSpec((K * K * CP, CP), lambda n: (0, 0)),
                pl.BlockSpec((1, CP), lambda n: (0, 0)),
                pl.BlockSpec((K * K * CP, CP), lambda n: (0, 0)),
                pl.BlockSpec((1, CP), lambda n: (0, 0)),
            ],
            out_specs=pl.BlockSpec((1, H, W, CP), lambda n: (n, 0, 0, 0)),
            scratch_shapes=[
                pltpu.VMEM((H + 2 * PAD1, XW, CP), jnp.bfloat16),   # xpad
                pltpu.VMEM((H + 2 * PAD2, XW, CP), jnp.bfloat16),   # mid
                pltpu.VMEM((H * W, K * K * CP), jnp.bfloat16),      # im2col
            ],
        ),
        compiler_params=pltpu.CompilerParams(
            dimension_semantics=("parallel",),        # batch shards across TCs on v7x
            vmem_limit_bytes=32 * 1024 * 1024,
        ),
    )(x, w1p, b1p, w2p, b2p)

    # drop channel padding, return NCHW like the PyTorch module
    return jnp.transpose(out[..., :Cout], (0, 3, 1, 2))


def _reference_forward(x_nchw, w1_hwio, b1, w2_hwio, b2):
    """Plain-JAX f32 reference (lax dilated conv) for the correctness check."""
    dn = ('NHWC', 'HWIO', 'NHWC')
    x = jnp.transpose(x_nchw, (0, 2, 3, 1)).astype(jnp.float32)
    y = lax.conv_general_dilated(x, w1_hwio.astype(jnp.float32), (1, 1),
                                 ((PAD1, PAD1), (PAD1, PAD1)),
                                 rhs_dilation=(D1, D1), dimension_numbers=dn)
    y = jnp.maximum(y + b1, 0.0)
    y = lax.conv_general_dilated(y, w2_hwio.astype(jnp.float32), (1, 1),
                                 ((PAD2, PAD2), (PAD2, PAD2)),
                                 rhs_dilation=(D2, D2), dimension_numbers=dn)
    y = jnp.maximum(y + b2, 0.0)
    return jnp.transpose(y, (0, 3, 1, 2))


if __name__ == "__main__":
    # Small shapes consistent with the module (in_channels == out_channels).
    N, Cin, Cout, H, W = 2, 4, 4, 16, 16

    key = jax.random.PRNGKey(0)
    kx, kw1, kb1, kw2, kb2 = jax.random.split(key, 5)

    x = jax.random.normal(kx, (N, Cin, H, W), jnp.float32)
    fan1, fan2 = Cin * K * K, Cout * K * K
    w1 = jax.random.normal(kw1, (K, K, Cin, Cout), jnp.float32) / np.sqrt(fan1)
    b1 = jax.random.normal(kb1, (Cout,), jnp.float32) * 0.1
    w2 = jax.random.normal(kw2, (K, K, Cout, Cout), jnp.float32) / np.sqrt(fan2)
    b2 = jax.random.normal(kb2, (Cout,), jnp.float32) * 0.1

    # The kernel runs the MXU in bf16 (f32 accumulation); quantize the test
    # inputs to bf16 once so the kernel and the f32 reference see the same data
    # (remaining difference: f32 accumulation order + bf16 intermediate).
    x = x.astype(jnp.bfloat16).astype(jnp.float32)
    w1 = w1.astype(jnp.bfloat16).astype(jnp.float32)
    w2 = w2.astype(jnp.bfloat16).astype(jnp.float32)

    out = jax.block_until_ready(dblock_inv_forward(x, w1, b1, w2, b2))
    ref = jax.block_until_ready(_reference_forward(x, w1, b1, w2, b2))
    np.testing.assert_allclose(np.asarray(out), np.asarray(ref),
                               rtol=2e-2, atol=2e-2)

    print("KERNEL_OK")
</pallas_src>

<mosaic_0001>
module attributes {stable_mosaic.version = 11 : i64} {
  func.func @_dblock_inv_kernel(%arg0: i32, %arg1: memref<1x16x16x128xbf16, #tpu.memory_space<vmem>>, %arg2: memref<1152x128xbf16, #tpu.memory_space<vmem>>, %arg3: memref<1x128xf32, #tpu.memory_space<vmem>>, %arg4: memref<1152x128xbf16, #tpu.memory_space<vmem>>, %arg5: memref<1x128xf32, #tpu.memory_space<vmem>>, %arg6: memref<1x16x16x128xf32, #tpu.memory_space<vmem>>, %arg7: memref<22x32x128xbf16, #tpu.memory_space<vmem>>, %arg8: memref<20x32x128xbf16, #tpu.memory_space<vmem>>, %arg9: memref<256x1152xbf16, #tpu.memory_space<vmem>>) attributes {dimension_semantics = [#tpu.dimension_semantics<parallel>], iteration_bounds = array<i64: 2>, scalar_prefetch = 0 : i64, scratch_operands = 3 : i64, tpu.core_type = #tpu.core_type<tc>, window_params = [{transform_indices = @transform_0, window_bounds = array<i64: 1, 16, 16, 128>}, {pipeline_mode = #tpu.pipeline_mode<synchronous>, transform_indices = @transform_1, window_bounds = array<i64: 1152, 128>}, {pipeline_mode = #tpu.pipeline_mode<synchronous>, transform_indices = @transform_2, window_bounds = array<i64: 1, 128>}, {pipeline_mode = #tpu.pipeline_mode<synchronous>, transform_indices = @transform_3, window_bounds = array<i64: 1152, 128>}, {pipeline_mode = #tpu.pipeline_mode<synchronous>, transform_indices = @transform_4, window_bounds = array<i64: 1, 128>}, {transform_indices = @transform_5, window_bounds = array<i64: 1, 16, 16, 128>}]} {
    %cst = arith.constant 0.000000e+00 : bf16
    %0 = vector.broadcast %cst : bf16 to vector<3x32x128xbf16>
    %c0 = arith.constant 0 : index
    %c0_0 = arith.constant 0 : index
    %c0_1 = arith.constant 0 : index
    %1 = vector.load %arg7[%c0, %c0_0, %c0_1] : memref<22x32x128xbf16, #tpu.memory_space<vmem>>, vector<3x32x128xbf16>
    tpu.vector_store %arg7[%c0, %c0_0, %c0_1], %0 {strides = array<i32>} : memref<22x32x128xbf16, #tpu.memory_space<vmem>>, vector<3x32x128xbf16>,
    %cst_2 = arith.constant 0.000000e+00 : bf16
    %2 = vector.broadcast %cst_2 : bf16 to vector<3x32x128xbf16>
    %c19 = arith.constant 19 : index
    %c0_3 = arith.constant 0 : index
    %c0_4 = arith.constant 0 : index
    %3 = vector.load %arg7[%c19, %c0_3, %c0_4] : memref<22x32x128xbf16, #tpu.memory_space<vmem>>, vector<3x32x128xbf16>
    tpu.vector_store %arg7[%c19, %c0_3, %c0_4], %2 {strides = array<i32>} : memref<22x32x128xbf16, #tpu.memory_space<vmem>>, vector<3x32x128xbf16>,
    %cst_5 = arith.constant 0.000000e+00 : bf16
    %4 = vector.broadcast %cst_5 : bf16 to vector<22x8x128xbf16>
    %c0_6 = arith.constant 0 : index
    %c0_7 = arith.constant 0 : index
    %c0_8 = arith.constant 0 : index
    %5 = vector.load %arg7[%c0_6, %c0_7, %c0_8] : memref<22x32x128xbf16, #tpu.memory_space<vmem>>, vector<22x8x128xbf16>
    tpu.vector_store %arg7[%c0_6, %c0_7, %c0_8], %4 {strides = array<i32>} : memref<22x32x128xbf16, #tpu.memory_space<vmem>>, vector<22x8x128xbf16>,
    %cst_9 = arith.constant 0.000000e+00 : bf16
    %6 = vector.broadcast %cst_9 : bf16 to vector<22x8x128xbf16>
    %c0_10 = arith.constant 0 : index
    %c24 = arith.constant 24 : index
    %c0_11 = arith.constant 0 : index
    %7 = vector.load %arg7[%c0_10, %c24, %c0_11] : memref<22x32x128xbf16, #tpu.memory_space<vmem>>, vector<22x8x128xbf16>
    tpu.vector_store %arg7[%c0_10, %c24, %c0_11], %6 {strides = array<i32>} : memref<22x32x128xbf16, #tpu.memory_space<vmem>>, vector<22x8x128xbf16>,
    %c0_12 = arith.constant 0 : index
    %c0_13 = arith.constant 0 : index
    %c0_14 = arith.constant 0 : index
    %c0_15 = arith.constant 0 : index
    %8 = vector.load %arg1[%c0_12, %c0_13, %c0_14, %c0_15] : memref<1x16x16x128xbf16, #tpu.memory_space<vmem>>, vector<1x16x16x128xbf16>
    %9 = vector.shape_cast %8 : vector<1x16x16x128xbf16> to vector<16x16x128xbf16>
    %c3 = arith.constant 3 : index
    %c8 = arith.constant 8 : index
    %c0_16 = arith.constant 0 : index
    %10 = vector.load %arg7[%c3, %c8, %c0_16] : memref<22x32x128xbf16, #tpu.memory_space<vmem>>, vector<16x16x128xbf16>
    tpu.vector_store %arg7[%c3, %c8, %c0_16], %9 {strides = array<i32>} : memref<22x32x128xbf16, #tpu.memory_space<vmem>>, vector<16x16x128xbf16>,
    %c0_17 = arith.constant 0 : index
    %c5 = arith.constant 5 : index
    %c0_18 = arith.constant 0 : index
    %11 = vector.load %arg7[%c0_17, %c5, %c0_18] : memref<22x32x128xbf16, #tpu.memory_space<vmem>>, vector<16x16x128xbf16>
    %12 = vector.shape_cast %11 : vector<16x16x128xbf16> to vector<256x128xbf16>
    %c0_19 = arith.constant 0 : index
    %c0_20 = arith.constant 0 : index
    %13 = vector.load %arg9[%c0_19, %c0_20] : memref<256x1152xbf16, #tpu.memory_space<vmem>>, vector<256x128xbf16>
    tpu.vector_store %arg9[%c0_19, %c0_20], %12 {strides = array<i32>} : memref<256x1152xbf16, #tpu.memory_space<vmem>>, vector<256x128xbf16>,
    %c0_21 = arith.constant 0 : index
    %c8_22 = arith.constant 8 : index
    %c0_23 = arith.constant 0 : index
    %14 = vector.load %arg7[%c0_21, %c8_22, %c0_23] : memref<22x32x128xbf16, #tpu.memory_space<vmem>>, vector<16x16x128xbf16>
    %15 = vector.shape_cast %14 : vector<16x16x128xbf16> to vector<256x128xbf16>
    %c0_24 = arith.constant 0 : index
    %c128 = arith.constant 128 : index
    %16 = vector.load %arg9[%c0_24, %c128] : memref<256x1152xbf16, #tpu.memory_space<vmem>>, vector<256x128xbf16>
    tpu.vector_store %arg9[%c0_24, %c128], %15 {strides = array<i32>} : memref<256x1152xbf16, #tpu.memory_space<vmem>>, vector<256x128xbf16>,
    %c0_25 = arith.constant 0 : index
    %c11 = arith.constant 11 : index
    %c0_26 = arith.constant 0 : index
    %17 = vector.load %arg7[%c0_25, %c11, %c0_26] : memref<22x32x128xbf16, #tpu.memory_space<vmem>>, vector<16x16x128xbf16>
    %18 = vector.shape_cast %17 : vector<16x16x128xbf16> to vector<256x128xbf16>
    %c0_27 = arith.constant 0 : index
    %c256 = arith.constant 256 : index
    %19 = vector.load %arg9[%c0_27, %c256] : memref<256x1152xbf16, #tpu.memory_space<vmem>>, vector<256x128xbf16>
    tpu.vector_store %arg9[%c0_27, %c256], %18 {strides = array<i32>} : memref<256x1152xbf16, #tpu.memory_space<vmem>>, vector<256x128xbf16>,
    %c3_28 = arith.constant 3 : index
    %c5_29 = arith.constant 5 : index
    %c0_30 = arith.constant 0 : index
    %20 = vector.load %arg7[%c3_28, %c5_29, %c0_30] : memref<22x32x128xbf16, #tpu.memory_space<vmem>>, vector<16x16x128xbf16>
    %21 = vector.shape_cast %20 : vector<16x16x128xbf16> to vector<256x128xbf16>
    %c0_31 = arith.constant 0 : index
    %c384 = arith.constant 384 : index
    %22 = vector.load %arg9[%c0_31, %c384] : memref<256x1152xbf16, #tpu.memory_space<vmem>>, vector<256x128xbf16>
    tpu.vector_store %arg9[%c0_31, %c384], %21 {strides = array<i32>} : memref<256x1152xbf16, #tpu.memory_space<vmem>>, vector<256x128xbf16>,
    %c3_32 = arith.constant 3 : index
    %c8_33 = arith.constant 8 : index
    %c0_34 = arith.constant 0 : index
    %23 = vector.load %arg7[%c3_32, %c8_33, %c0_34] : memref<22x32x128xbf16, #tpu.memory_space<vmem>>, vector<16x16x128xbf16>
    %24 = vector.shape_cast %23 : vector<16x16x128xbf16> to vector<256x128xbf16>
    %c0_35 = arith.constant 0 : index
    %c512 = arith.constant 512 : index
    %25 = vector.load %arg9[%c0_35, %c512] : memref<256x1152xbf16, #tpu.memory_space<vmem>>, vector<256x128xbf16>
    tpu.vector_store %arg9[%c0_35, %c512], %24 {strides = array<i32>} : memref<256x1152xbf16, #tpu.memory_space<vmem>>, vector<256x128xbf16>,
    %c3_36 = arith.constant 3 : index
    %c11_37 = arith.constant 11 : index
    %c0_38 = arith.constant 0 : index
    %26 = vector.load %arg7[%c3_36, %c11_37, %c0_38] : memref<22x32x128xbf16, #tpu.memory_space<vmem>>, vector<16x16x128xbf16>
    %27 = vector.shape_cast %26 : vector<16x16x128xbf16> to vector<256x128xbf16>
    %c0_39 = arith.constant 0 : index
    %c640 = arith.constant 640 : index
    %28 = vector.load %arg9[%c0_39, %c640] : memref<256x1152xbf16, #tpu.memory_space<vmem>>, vector<256x128xbf16>
    tpu.vector_store %arg9[%c0_39, %c640], %27 {strides = array<i32>} : memref<256x1152xbf16, #tpu.memory_space<vmem>>, vector<256x128xbf16>,
    %c6 = arith.constant 6 : index
    %c5_40 = arith.constant 5 : index
    %c0_41 = arith.constant 0 : index
    %29 = vector.load %arg7[%c6, %c5_40, %c0_41] : memref<22x32x128xbf16, #tpu.memory_space<vmem>>, vector<16x16x128xbf16>
    %30 = vector.shape_cast %29 : vector<16x16x128xbf16> to vector<256x128xbf16>
    %c0_42 = arith.constant 0 : index
    %c768 = arith.constant 768 : index
    %31 = vector.load %arg9[%c0_42, %c768] : memref<256x1152xbf16, #tpu.memory_space<vmem>>, vector<256x128xbf16>
    tpu.vector_store %arg9[%c0_42, %c768], %30 {strides = array<i32>} : memref<256x1152xbf16, #tpu.memory_space<vmem>>, vector<256x128xbf16>,
    %c6_43 = arith.constant 6 : index
    %c8_44 = arith.constant 8 : index
    %c0_45 = arith.constant 0 : index
    %32 = vector.load %arg7[%c6_43, %c8_44, %c0_45] : memref<22x32x128xbf16, #tpu.memory_space<vmem>>, vector<16x16x128xbf16>
    %33 = vector.shape_cast %32 : vector<16x16x128xbf16> to vector<256x128xbf16>
    %c0_46 = arith.constant 0 : index
    %c896 = arith.constant 896 : index
    %34 = vector.load %arg9[%c0_46, %c896] : memref<256x1152xbf16, #tpu.memory_space<vmem>>, vector<256x128xbf16>
    tpu.vector_store %arg9[%c0_46, %c896], %33 {strides = array<i32>} : memref<256x1152xbf16, #tpu.memory_space<vmem>>, vector<256x128xbf16>,
    %c6_47 = arith.constant 6 : index
    %c11_48 = arith.constant 11 : index
    %c0_49 = arith.constant 0 : index
    %35 = vector.load %arg7[%c6_47, %c11_48, %c0_49] : memref<22x32x128xbf16, #tpu.memory_space<vmem>>, vector<16x16x128xbf16>
    %36 = vector.shape_cast %35 : vector<16x16x128xbf16> to vector<256x128xbf16>
    %c0_50 = arith.constant 0 : index
    %c1024 = arith.constant 1024 : index
    %37 = vector.load %arg9[%c0_50, %c1024] : memref<256x1152xbf16, #tpu.memory_space<vmem>>, vector<256x128xbf16>
    tpu.vector_store %arg9[%c0_50, %c1024], %36 {strides = array<i32>} : memref<256x1152xbf16, #tpu.memory_space<vmem>>, vector<256x128xbf16>,
    %c0_51 = arith.constant 0 : index
    %c0_52 = arith.constant 0 : index
    %38 = vector.load %arg9[%c0_51, %c0_52] : memref<256x1152xbf16, #tpu.memory_space<vmem>>, vector<256x1152xbf16>
    %c0_53 = arith.constant 0 : index
    %c0_54 = arith.constant 0 : index
    %39 = vector.load %arg2[%c0_53, %c0_54] : memref<1152x128xbf16, #tpu.memory_space<vmem>>, vector<1152x128xbf16>
    %cst_55 = arith.constant dense<0.000000e+00> : vector<256x128xf32>
    %40 = tpu.matmul %38, %39, %cst_55 {dimension_numbers = #tpu.dot_dimension_numbers<[1], [0], [0], [1], [0, 0, 1, 1], [], []>} : vector<256x1152xbf16>, vector<1152x128xbf16>, vector<256x128xf32> -> vector<256x128xf32>
    %c0_56 = arith.constant 0 : index
    %c0_57 = arith.constant 0 : index
    %41 = vector.load %arg3[%c0_56, %c0_57] : memref<1x128xf32, #tpu.memory_space<vmem>>, vector<1x128xf32>
    %42 = vector.broadcast %41 : vector<1x128xf32> to vector<256x128xf32>
    %43 = arith.addf %40, %42 : vector<256x128xf32>
    %cst_58 = arith.constant 0.000000e+00 : f32
    %44 = vector.broadcast %cst_58 : f32 to vector<256x128xf32>
    %45 = arith.maximumf %43, %44 : vector<256x128xf32>
    %cst_59 = arith.constant 0.000000e+00 : bf16
    %46 = vector.broadcast %cst_59 : bf16 to vector<2x32x128xbf16>
    %c0_60 = arith.constant 0 : index
    %c0_61 = arith.constant 0 : index
    %c0_62 = arith.constant 0 : index
    %47 = vector.load %arg8[%c0_60, %c0_61, %c0_62] : memref<20x32x128xbf16, #tpu.memory_space<vmem>>, vector<2x32x128xbf16>
    tpu.vector_store %arg8[%c0_60, %c0_61, %c0_62], %46 {strides = array<i32>} : memref<20x32x128xbf16, #tpu.memory_space<vmem>>, vector<2x32x128xbf16>,
    %cst_63 = arith.constant 0.000000e+00 : bf16
    %48 = vector.broadcast %cst_63 : bf16 to vector<2x32x128xbf16>
    %c18 = arith.constant 18 : index
    %c0_64 = arith.constant 0 : index
    %c0_65 = arith.constant 0 : index
    %49 = vector.load %arg8[%c18, %c0_64, %c0_65] : memref<20x32x128xbf16, #tpu.memory_space<vmem>>, vector<2x32x128xbf16>
    tpu.vector_store %arg8[%c18, %c0_64, %c0_65], %48 {strides = array<i32>} : memref<20x32x128xbf16, #tpu.memory_space<vmem>>, vector<2x32x128xbf16>,
    %cst_66 = arith.constant 0.000000e+00 : bf16
    %50 = vector.broadcast %cst_66 : bf16 to vector<20x8x128xbf16>
    %c0_67 = arith.constant 0 : index
    %c0_68 = arith.constant 0 : index
    %c0_69 = arith.constant 0 : index
    %51 = vector.load %arg8[%c0_67, %c0_68, %c0_69] : memref<20x32x128xbf16, #tpu.memory_space<vmem>>, vector<20x8x128xbf16>
    tpu.vector_store %arg8[%c0_67, %c0_68, %c0_69], %50 {strides = array<i32>} : memref<20x32x128xbf16, #tpu.memory_space<vmem>>, vector<20x8x128xbf16>,
    %cst_70 = arith.constant 0.000000e+00 : bf16
    %52 = vector.broadcast %cst_70 : bf16 to vector<20x8x128xbf16>
    %c0_71 = arith.constant 0 : index
    %c24_72 = arith.constant 24 : index
    %c0_73 = arith.constant 0 : index
    %53 = vector.load %arg8[%c0_71, %c24_72, %c0_73] : memref<20x32x128xbf16, #tpu.memory_space<vmem>>, vector<20x8x128xbf16>
    tpu.vector_store %arg8[%c0_71, %c24_72, %c0_73], %52 {strides = array<i32>} : memref<20x32x128xbf16, #tpu.memory_space<vmem>>, vector<20x8x128xbf16>,
    %54 = arith.truncf %45 : vector<256x128xf32> to vector<256x128xbf16>
    %55 = vector.shape_cast %54 : vector<256x128xbf16> to vector<16x16x128xbf16>
    %c2 = arith.constant 2 : index
    %c8_74 = arith.constant 8 : index
    %c0_75 = arith.constant 0 : index
    %56 = vector.load %arg8[%c2, %c8_74, %c0_75] : memref<20x32x128xbf16, #tpu.memory_space<vmem>>, vector<16x16x128xbf16>
    tpu.vector_store %arg8[%c2, %c8_74, %c0_75], %55 {strides = array<i32>} : memref<20x32x128xbf16, #tpu.memory_space<vmem>>, vector<16x16x128xbf16>,
    %c0_76 = arith.constant 0 : index
    %c6_77 = arith.constant 6 : index
    %c0_78 = arith.constant 0 : index
    %57 = vector.load %arg8[%c0_76, %c6_77, %c0_78] : memref<20x32x128xbf16, #tpu.memory_space<vmem>>, vector<16x16x128xbf16>
    %58 = vector.shape_cast %57 : vector<16x16x128xbf16> to vector<256x128xbf16>
    %c0_79 = arith.constant 0 : index
    %c0_80 = arith.constant 0 : index
    %59 = vector.load %arg9[%c0_79, %c0_80] : memref<256x1152xbf16, #tpu.memory_space<vmem>>, vector<256x128xbf16>
    tpu.vector_store %arg9[%c0_79, %c0_80], %58 {strides = array<i32>} : memref<256x1152xbf16, #tpu.memory_space<vmem>>, vector<256x128xbf16>,
    %c0_81 = arith.constant 0 : index
    %c8_82 = arith.constant 8 : index
    %c0_83 = arith.constant 0 : index
    %60 = vector.load %arg8[%c0_81, %c8_82, %c0_83] : memref<20x32x128xbf16, #tpu.memory_space<vmem>>, vector<16x16x128xbf16>
    %61 = vector.shape_cast %60 : vector<16x16x128xbf16> to vector<256x128xbf16>
    %c0_84 = arith.constant 0 : index
    %c128_85 = arith.constant 128 : index
    %62 = vector.load %arg9[%c0_84, %c128_85] : memref<256x1152xbf16, #tpu.memory_space<vmem>>, vector<256x128xbf16>
    tpu.vector_store %arg9[%c0_84, %c128_85], %61 {strides = array<i32>} : memref<256x1152xbf16, #tpu.memory_space<vmem>>, vector<256x128xbf16>,
    %c0_86 = arith.constant 0 : index
    %c10 = arith.constant 10 : index
    %c0_87 = arith.constant 0 : index
    %63 = vector.load %arg8[%c0_86, %c10, %c0_87] : memref<20x32x128xbf16, #tpu.memory_space<vmem>>, vector<16x16x128xbf16>
    %64 = vector.shape_cast %63 : vector<16x16x128xbf16> to vector<256x128xbf16>
    %c0_88 = arith.constant 0 : index
    %c256_89 = arith.constant 256 : index
    %65 = vector.load %arg9[%c0_88, %c256_89] : memref<256x1152xbf16, #tpu.memory_space<vmem>>, vector<256x128xbf16>
    tpu.vector_store %arg9[%c0_88, %c256_89], %64 {strides = array<i32>} : memref<256x1152xbf16, #tpu.memory_space<vmem>>, vector<256x128xbf16>,
    %c2_90 = arith.constant 2 : index
    %c6_91 = arith.constant 6 : index
    %c0_92 = arith.constant 0 : index
    %66 = vector.load %arg8[%c2_90, %c6_91, %c0_92] : memref<20x32x128xbf16, #tpu.memory_space<vmem>>, vector<16x16x128xbf16>
    %67 = vector.shape_cast %66 : vector<16x16x128xbf16> to vector<256x128xbf16>
    %c0_93 = arith.constant 0 : index
    %c384_94 = arith.constant 384 : index
    %68 = vector.load %arg9[%c0_93, %c384_94] : memref<256x1152xbf16, #tpu.memory_space<vmem>>, vector<256x128xbf16>
    tpu.vector_store %arg9[%c0_93, %c384_94], %67 {strides = array<i32>} : memref<256x1152xbf16, #tpu.memory_space<vmem>>, vector<256x128xbf16>,
    %c2_95 = arith.constant 2 : index
    %c8_96 = arith.constant 8 : index
    %c0_97 = arith.constant 0 : index
    %69 = vector.load %arg8[%c2_95, %c8_96, %c0_97] : memref<20x32x128xbf16, #tpu.memory_space<vmem>>, vector<16x16x128xbf16>
    %70 = vector.shape_cast %69 : vector<16x16x128xbf16> to vector<256x128xbf16>
    %c0_98 = arith.constant 0 : index
    %c512_99 = arith.constant 512 : index
    %71 = vector.load %arg9[%c0_98, %c512_99] : memref<256x1152xbf16, #tpu.memory_space<vmem>>, vector<256x128xbf16>
    tpu.vector_store %arg9[%c0_98, %c512_99], %70 {strides = array<i32>} : memref<256x1152xbf16, #tpu.memory_space<vmem>>, vector<256x128xbf16>,
    %c2_100 = arith.constant 2 : index
    %c10_101 = arith.constant 10 : index
    %c0_102 = arith.constant 0 : index
    %72 = vector.load %arg8[%c2_100, %c10_101, %c0_102] : memref<20x32x128xbf16, #tpu.memory_space<vmem>>, vector<16x16x128xbf16>
    %73 = vector.shape_cast %72 : vector<16x16x128xbf16> to vector<256x128xbf16>
    %c0_103 = arith.constant 0 : index
    %c640_104 = arith.constant 640 : index
    %74 = vector.load %arg9[%c0_103, %c640_104] : memref<256x1152xbf16, #tpu.memory_space<vmem>>, vector<256x128xbf16>
    tpu.vector_store %arg9[%c0_103, %c640_104], %73 {strides = array<i32>} : memref<256x1152xbf16, #tpu.memory_space<vmem>>, vector<256x128xbf16>,
    %c4 = arith.constant 4 : index
    %c6_105 = arith.constant 6 : index
    %c0_106 = arith.constant 0 : index
    %75 = vector.load %arg8[%c4, %c6_105, %c0_106] : memref<20x32x128xbf16, #tpu.memory_space<vmem>>, vector<16x16x128xbf16>
    %76 = vector.shape_cast %75 : vector<16x16x128xbf16> to vector<256x128xbf16>
    %c0_107 = arith.constant 0 : index
    %c768_108 = arith.constant 768 : index
    %77 = vector.load %arg9[%c0_107, %c768_108] : memref<256x1152xbf16, #tpu.memory_space<vmem>>, vector<256x128xbf16>
    tpu.vector_store %arg9[%c0_107, %c768_108], %76 {strides = array<i32>} : memref<256x1152xbf16, #tpu.memory_space<vmem>>, vector<256x128xbf16>,
    %c4_109 = arith.constant 4 : index
    %c8_110 = arith.constant 8 : index
    %c0_111 = arith.constant 0 : index
    %78 = vector.load %arg8[%c4_109, %c8_110, %c0_111] : memref<20x32x128xbf16, #tpu.memory_space<vmem>>, vector<16x16x128xbf16>
    %79 = vector.shape_cast %78 : vector<16x16x128xbf16> to vector<256x128xbf16>
    %c0_112 = arith.constant 0 : index
    %c896_113 = arith.constant 896 : index
    %80 = vector.load %arg9[%c0_112, %c896_113] : memref<256x1152xbf16, #tpu.memory_space<vmem>>, vector<256x128xbf16>
    tpu.vector_store %arg9[%c0_112, %c896_113], %79 {strides = array<i32>} : memref<256x1152xbf16, #tpu.memory_space<vmem>>, vector<256x128xbf16>,
    %c4_114 = arith.constant 4 : index
    %c10_115 = arith.constant 10 : index
    %c0_116 = arith.constant 0 : index
    %81 = vector.load %arg8[%c4_114, %c10_115, %c0_116] : memref<20x32x128xbf16, #tpu.memory_space<vmem>>, vector<16x16x128xbf16>
    %82 = vector.shape_cast %81 : vector<16x16x128xbf16> to vector<256x128xbf16>
    %c0_117 = arith.constant 0 : index
    %c1024_118 = arith.constant 1024 : index
    %83 = vector.load %arg9[%c0_117, %c1024_118] : memref<256x1152xbf16, #tpu.memory_space<vmem>>, vector<256x128xbf16>
    tpu.vector_store %arg9[%c0_117, %c1024_118], %82 {strides = array<i32>} : memref<256x1152xbf16, #tpu.memory_space<vmem>>, vector<256x128xbf16>,
    %c0_119 = arith.constant 0 : index
    %c0_120 = arith.constant 0 : index
    %84 = vector.load %arg9[%c0_119, %c0_120] : memref<256x1152xbf16, #tpu.memory_space<vmem>>, vector<256x1152xbf16>
    %c0_121 = arith.constant 0 : index
    %c0_122 = arith.constant 0 : index
    %85 = vector.load %arg4[%c0_121, %c0_122] : memref<1152x128xbf16, #tpu.memory_space<vmem>>, vector<1152x128xbf16>
    %cst_123 = arith.constant dense<0.000000e+00> : vector<256x128xf32>
    %86 = tpu.matmul %84, %85, %cst_123 {dimension_numbers = #tpu.dot_dimension_numbers<[1], [0], [0], [1], [0, 0, 1, 1], [], []>} : vector<256x1152xbf16>, vector<1152x128xbf16>, vector<256x128xf32> -> vector<256x128xf32>
    %c0_124 = arith.constant 0 : index
    %c0_125 = arith.constant 0 : index
    %87 = vector.load %arg5[%c0_124, %c0_125] : memref<1x128xf32, #tpu.memory_space<vmem>>, vector<1x128xf32>
    %88 = vector.broadcast %87 : vector<1x128xf32> to vector<256x128xf32>
    %89 = arith.addf %86, %88 : vector<256x128xf32>
    %cst_126 = arith.constant 0.000000e+00 : f32
    %90 = vector.broadcast %cst_126 : f32 to vector<256x128xf32>
    %91 = arith.maximumf %89, %90 : vector<256x128xf32>
    %92 = vector.shape_cast %91 : vector<256x128xf32> to vector<1x16x16x128xf32>
    %c0_127 = arith.constant 0 : index
    %c0_128 = arith.constant 0 : index
    %c0_129 = arith.constant 0 : index
    %c0_130 = arith.constant 0 : index
    %93 = vector.load %arg6[%c0_127, %c0_128, %c0_129, %c0_130] : memref<1x16x16x128xf32, #tpu.memory_space<vmem>>, vector<1x16x16x128xf32>
    tpu.vector_store %arg6[%c0_127, %c0_128, %c0_129, %c0_130], %92 {strides = array<i32>} : memref<1x16x16x128xf32, #tpu.memory_space<vmem>>, vector<1x16x16x128xf32>,
    return
  }
  func.func @transform_0(%arg0: i32) -> (i32, i32, i32, i32) {
    %c0_i32 = arith.constant 0 : i32
    %c0_i32_0 = arith.constant 0 : i32
    %c0_i32_1 = arith.constant 0 : i32
    %c0_i32_2 = arith.constant 0 : i32
    return %arg0, %c0_i32, %c0_i32_0, %c0_i32_1 : i32, i32, i32, i32
  }
  func.func @transform_1(%arg0: i32) -> (i32, i32) {
    %c0_i32 = arith.constant 0 : i32
    %c0_i32_0 = arith.constant 0 : i32
    %c0_i32_1 = arith.constant 0 : i32
    return %c0_i32, %c0_i32_0 : i32, i32
  }
  func.func @transform_2(%arg0: i32) -> (i32, i32) {
    %c0_i32 = arith.constant 0 : i32
    %c0_i32_0 = arith.constant 0 : i32
    %c0_i32_1 = arith.constant 0 : i32
    return %c0_i32, %c0_i32_0 : i32, i32
  }
  func.func @transform_3(%arg0: i32) -> (i32, i32) {
    %c0_i32 = arith.constant 0 : i32
    %c0_i32_0 = arith.constant 0 : i32
    %c0_i32_1 = arith.constant 0 : i32
    return %c0_i32, %c0_i32_0 : i32, i32
  }
  func.func @transform_4(%arg0: i32) -> (i32, i32) {
    %c0_i32 = arith.constant 0 : i32
    %c0_i32_0 = arith.constant 0 : i32
    %c0_i32_1 = arith.constant 0 : i32
    return %c0_i32, %c0_i32_0 : i32, i32
  }
  func.func @transform_5(%arg0: i32) -> (i32, i32, i32, i32) {
    %c0_i32 = arith.constant 0 : i32
    %c0_i32_0 = arith.constant 0 : i32
    %c0_i32_1 = arith.constant 0 : i32
    %c0_i32_2 = arith.constant 0 : i32
    return %arg0, %c0_i32, %c0_i32_0, %c0_i32_1 : i32, i32, i32, i32
  }
}

</mosaic_0001>

<llo_original>
// kernel: tpu_custom_call.1
$region0: #{tpu_custom_call.1}
  #allocation0 [shape = 'u32[]', space=smem, size = 0x4, offset = 0x4, fixed_abs, tag = 'smem constant byte address 0x4 - core index']
  #allocation1 [shape = 'u32[144,128]{1,0:T(1,128)}', space=vmem, size = 0x12000, scoped, tag = 'internal scratch']
  #allocation2 [shape = 'bf16[22,32,128]{2,1,0:T(16,128)(2,1)}', space=vmem, size = 0x2c000, scoped, tag = 'scratch operand']
  #allocation3 [shape = 'bf16[20,32,128]{2,1,0:T(16,128)(2,1)}', space=vmem, size = 0x28000, scoped, tag = 'scratch operand']
  #allocation4 [shape = 'bf16[256,1152]{1,0:T(16,128)(2,1)}', space=vmem, size = 0x90000, scoped, tag = 'scratch operand']
  %s0 = inlined_call_operand.hbm [shape: bf16[2,16,16,128], index: 0, kind: input, shape index: {}]
  %s1 = inlined_call_operand.hbm [shape: bf16[1152,128], index: 1, kind: input, shape index: {}]
  %s2 = inlined_call_operand.vmem [shape: f32[1,128], index: 2, kind: input, shape index: {}]
  %s3 = inlined_call_operand.hbm [shape: bf16[1152,128], index: 3, kind: input, shape index: {}]
  %s4 = inlined_call_operand.vmem [shape: f32[1,128], index: 4, kind: input, shape index: {}]
  %s5 = inlined_call_operand.hbm [shape: f32[2,16,16,128], index: 5, kind: output, shape index: {}]
  %s6 = sld [smem:[#allocation0]]
  $region65: #{tpu_custom_call.1} parent=0
    _
  %s8 = ssub.s32 1, %s6
  %s9 = scalar_select 0, %s8, %s6
  $region1: #{tpu_custom_call.1} parent=0
    #allocation5 [shape = 'u8[131072]{0}', space=vmem, size = 0x20000, scoped, tag = 'input window, operand 0']
    #allocation6 [shape = 's32[2]{0}', space=sflag, size = 0x8, scoped, tag = 'scoped memory for tpu_custom_call.1']
    #allocation7 [shape = 's32[2]{0}', space=sflag, size = 0x8, scoped, tag = 'scoped memory for tpu_custom_call.1']
    #allocation8 [shape = 'u8[294912]{0}', space=vmem, size = 0x48000, scoped, tag = 'input window, operand 1, single buffered']
    #allocation9 [shape = 's32[1]{0}', space=sflag, size = 0x4, scoped, tag = 'scoped memory for tpu_custom_call.1']
    #allocation10 [shape = 'u8[294912]{0}', space=vmem, size = 0x48000, scoped, tag = 'input window, operand 3, single buffered']
    #allocation11 [shape = 'u8[262144]{0}', space=vmem, size = 0x40000, scoped, tag = 'output window, operand 0']
    %10 = vsyncpa [#allocation6], 0
    %s11 = scalar_lea.sflag [#allocation6], 1
    %12 = vsyncpa %s11, 0
    %13 = vsyncpa [#allocation9], 0
    %14 = vsyncpa [#allocation7], 0
    %s15 = scalar_lea.sflag [#allocation7], 1
    %16 = vsyncpa %s15, 0
    loop: start=0, step=1, limit=4
    $region2: #{tpu_custom_call.1} parent=1 // loop_pre_header
      _
    $region3: #{tpu_custom_call.1} parent=1 // loop_header
      %s18 = sphi 0, %s22
      %p19 = scmp.ge.s32.totalorder %s18, 4
      %s28 = sphi 0, %s30
      %s31 = sphi 0, %s28
      %s32 = sphi 0, %s31
      %s48 = sphi 0, %s32
      %s52 = sphi 0, %s52
      %s54 = sphi 0, %s52
      %s55 = sphi 0, %s54
      %s69 = sphi 0, %s55
      %s73 = sphi 0, %s73
      %s75 = sphi 0, %s73
      %s76 = sphi 0, %s75
      %s90 = sphi 0, %s76
      %s94 = sphi 0, %s94
      %s96 = sphi 0, %s94
      %s97 = sphi 0, %s96
      %s111 = sphi 0, %s97
      %s115 = sphi 0, %s115
      %s117 = sphi 0, %s115
      %s118 = sphi 0, %s117
      %s132 = sphi 0, %s118
      %s138 = sphi 0, %s140
      %s141 = sphi 0, %s138
      %s142 = sphi 0, %s141
      %s158 = sphi 0, %s142
    $region4: #{tpu_custom_call.1} parent=1 // loop_header_branch
      %21 = sbr.rel (%p19) target = $region8
    $region5: #{tpu_custom_call.1} parent=1 // loop_body
      %s23 = ssub.s32 %s18, 1
      %s24 = ssub.s32 %s18, 2
      %s25 = sadd.s32 %s18, 1
      %s26 = ssub.s32 %s18, %s25
      %p27 = scmp.eq.s32.totalorder %s26, 0
      %s29 = sadd.s32 %s28, 1
      %s30 = scalar_select %p27, %s28, %s29
      %p33 = pneg %p27
      %p34 = scmp.eq.s32.totalorder %s18, 1
      %p35 = por %p33, %p34
      %p36 = scmp.ne.s32.totalorder %s28, %s31
      %p37 = scmp.eq.s32.totalorder %s18, 0
      %p38 = por %p36, %p37
      %p39 = scmp.ne.s32.totalorder %s28, %s31
      %p40 = scmp.eq.s32.totalorder %s23, 1
      %p41 = por %p39, %p40
      %p42 = scmp.ne.s32.totalorder %s31, %s32
      %p43 = scmp.eq.s32.totalorder %s23, 0
      %p44 = por %p42, %p43
      %p45 = scmp.ne.s32.totalorder %s31, %s32
      %p46 = scmp.eq.s32.totalorder %s24, 1
      %p47 = por %p45, %p46
      %p49 = scmp.ne.s32.totalorder %s32, %s48
      %p50 = scmp.eq.s32.totalorder %s24, 0
      %p51 = por %p49, %p50
      %s53 = sadd.s32 %s52, 1
      %p56 = scmp.eq.s32.totalorder %s18, 1
      %p57 = scmp.ne.s32.totalorder %s52, %s54
      %p58 = scmp.eq.s32.totalorder %s18, 0
      %p59 = por %p57, %p58
      %p60 = scmp.ne.s32.totalorder %s52, %s54
      %p61 = scmp.eq.s32.totalorder %s23, 1
      %p62 = por %p60, %p61
      %p63 = scmp.ne.s32.totalorder %s54, %s55
      %p64 = scmp.eq.s32.totalorder %s23, 0
      %p65 = por %p63, %p64
      %p66 = scmp.ne.s32.totalorder %s54, %s55
      %p67 = scmp.eq.s32.totalorder %s24, 1
      %p68 = por %p66, %p67
      %p70 = scmp.ne.s32.totalorder %s55, %s69
      %p71 = scmp.eq.s32.totalorder %s24, 0
      %p72 = por %p70, %p71
      %s74 = sadd.s32 %s73, 1
      %p77 = scmp.eq.s32.totalorder %s18, 1
      %p78 = scmp.ne.s32.totalorder %s73, %s75
      %p79 = scmp.eq.s32.totalorder %s18, 0
      %p80 = por %p78, %p79
      %p81 = scmp.ne.s32.totalorder %s73, %s75
      %p82 = scmp.eq.s32.totalorder %s23, 1
      %p83 = por %p81, %p82
      %p84 = scmp.ne.s32.totalorder %s75, %s76
      %p85 = scmp.eq.s32.totalorder %s23, 0
      %p86 = por %p84, %p85
      %p87 = scmp.ne.s32.totalorder %s75, %s76
      %p88 = scmp.eq.s32.totalorder %s24, 1
      %p89 = por %p87, %p88
      %p91 = scmp.ne.s32.totalorder %s76, %s90
      %p92 = scmp.eq.s32.totalorder %s24, 0
      %p93 = por %p91, %p92
      %s95 = sadd.s32 %s94, 1
      %p98 = scmp.eq.s32.totalorder %s18, 1
      %p99 = scmp.ne.s32.totalorder %s94, %s96
      %p100 = scmp.eq.s32.totalorder %s18, 0
      %p101 = por %p99, %p100
      %p102 = scmp.ne.s32.totalorder %s94, %s96
      %p103 = scmp.eq.s32.totalorder %s23, 1
      %p104 = por %p102, %p103
      %p105 = scmp.ne.s32.totalorder %s96, %s97
      %p106 = scmp.eq.s32.totalorder %s23, 0
      %p107 = por %p105, %p106
      %p108 = scmp.ne.s32.totalorder %s96, %s97
      %p109 = scmp.eq.s32.totalorder %s24, 1
      %p110 = por %p108, %p109
      %p112 = scmp.ne.s32.totalorder %s97, %s111
      %p113 = scmp.eq.s32.totalorder %s24, 0
      %p114 = por %p112, %p113
      %s116 = sadd.s32 %s115, 1
      %p119 = scmp.eq.s32.totalorder %s18, 1
      %p120 = scmp.ne.s32.totalorder %s115, %s117
      %p121 = scmp.eq.s32.totalorder %s18, 0
      %p122 = por %p120, %p121
      %p123 = scmp.ne.s32.totalorder %s115, %s117
      %p124 = scmp.eq.s32.totalorder %s23, 1
      %p125 = por %p123, %p124
      %p126 = scmp.ne.s32.totalorder %s117, %s118
      %p127 = scmp.eq.s32.totalorder %s23, 0
      %p128 = por %p126, %p127
      %p129 = scmp.ne.s32.totalorder %s117, %s118
      %p130 = scmp.eq.s32.totalorder %s24, 1
      %p131 = por %p129, %p130
      %p133 = scmp.ne.s32.totalorder %s118, %s132
      %p134 = scmp.eq.s32.totalorder %s24, 0
      %p135 = por %p133, %p134
      %s136 = ssub.s32 %s18, %s25
      %p137 = scmp.eq.s32.totalorder %s136, 0
      %s139 = sadd.s32 %s138, 1
      %s140 = scalar_select %p137, %s138, %s139
      %p143 = pneg %p137
      %p144 = scmp.eq.s32.totalorder %s18, 1
      %p145 = por %p143, %p144
      %p146 = scmp.ne.s32.totalorder %s138, %s141
      %p147 = scmp.eq.s32.totalorder %s18, 0
      %p148 = por %p146, %p147
      %p149 = scmp.ne.s32.totalorder %s138, %s141
      %p150 = scmp.eq.s32.totalorder %s23, 1
      %p151 = por %p149, %p150
      %p152 = scmp.ne.s32.totalorder %s141, %s142
      %p153 = scmp.eq.s32.totalorder %s23, 0
      %p154 = por %p152, %p153
      %p155 = scmp.ne.s32.totalorder %s141, %s142
      %p156 = scmp.eq.s32.totalorder %s24, 1
      %p157 = por %p155, %p156
      %p159 = scmp.ne.s32.totalorder %s142, %s158
      %p160 = scmp.eq.s32.totalorder %s24, 0
      %p161 = por %p159, %p160
      %p162 = scmp.le.s32.totalorder 1, %s18
      %p163 = scmp.lt.s32.totalorder %s18, 3
      %p164 = pnand %p162, %p163
      %p165 = pneg %p164
      // Predicated region
      $region9: #{tpu_custom_call.1} parent=5 // pred_check
        _
      $region10: #{tpu_custom_call.1} parent=5 // pred_check_branch
        %167 = sbr.rel (%p164) target = $region12
      $region11: #{tpu_custom_call.1} parent=5 // pred_region
        %s168 = ssub.s32 %s18, 1
        // Predicated region
        $region13: #{tpu_custom_call.1} parent=11 // pred_check
          %p169 = pneg %p65
        $region14: #{tpu_custom_call.1} parent=11 // pred_check_branch
          %171 = sbr.rel (%p169) target = $region16
        $region15: #{tpu_custom_call.1} parent=11 // pred_region
          %s173 = ssub.s32 9216, 9216
          %174 = vsyncadd [#allocation9], %s173
          %s175 = sshll.u32 [#allocation8], 4
          %s176 = int_to_ptr.vmem [resolvable:$true] %s175
          %181 = dma.hbm_to_vmem [thread:$0]  %s1, 9216, %s176, [#allocation9], 64, 64, 4
        $region16: #{tpu_custom_call.1} parent=11 // pred_fallthru
          _
        // Predicated region
        $region17: #{tpu_custom_call.1} parent=11 // pred_check
          %p182 = pneg %p86
        $region18: #{tpu_custom_call.1} parent=11 // pred_check_branch
          %184 = sbr.rel (%p182) target = $region20
        $region19: #{tpu_custom_call.1} parent=11 // pred_region
          _
        $region20: #{tpu_custom_call.1} parent=11 // pred_fallthru
          _
        // Predicated region
        $region21: #{tpu_custom_call.1} parent=11 // pred_check
          %p185 = pneg %p107
        $region22: #{tpu_custom_call.1} parent=11 // pred_check_branch
          %187 = sbr.rel (%p185) target = $region24
        $region23: #{tpu_custom_call.1} parent=11 // pred_region
          %s189 = ssub.s32 9216, 9216
          %190 = vsyncadd [#allocation9], %s189
          %s191 = sshll.u32 [#allocation10], 4
          %s192 = int_to_ptr.vmem [resolvable:$true] %s191
          %197 = dma.hbm_to_vmem [thread:$0]  %s3, 9216, %s192, [#allocation9], 64, 64, 4
        $region24: #{tpu_custom_call.1} parent=11 // pred_fallthru
          _
        // Predicated region
        $region25: #{tpu_custom_call.1} parent=11 // pred_check
          %p198 = pneg %p128
        $region26: #{tpu_custom_call.1} parent=11 // pred_check_branch
          %200 = sbr.rel (%p198) target = $region28
        $region27: #{tpu_custom_call.1} parent=11 // pred_region
          _
        $region28: #{tpu_custom_call.1} parent=11 // pred_fallthru
          _
      $region12: #{tpu_custom_call.1} parent=5 // pred_fallthru
        _
      %p201 = scmp.lt.s32.totalorder %s18, 2
      // Predicated region
      $region29: #{tpu_custom_call.1} parent=5 // pred_check
        %p202 = pneg %p201
      $region30: #{tpu_custom_call.1} parent=5 // pred_check_branch
        %204 = sbr.rel (%p202) target = $region32
      $region31: #{tpu_custom_call.1} parent=5 // pred_region
        // Predicated region
        $region33: #{tpu_custom_call.1} parent=31 // pred_check
          %p205 = pneg %p38
        $region34: #{tpu_custom_call.1} parent=31 // pred_check_branch
          %207 = sbr.rel (%p205) target = $region36
        $region35: #{tpu_custom_call.1} parent=31 // pred_region
          %s208 = sand.u32 %s28, 1
          %s209 = scalar_lea.sflag [#allocation6], %s208
          %s210 = sand.u32 %s28, 1
          %s211 = smul.addr %s210, 128
          %s212 = scalar_lea.vmem [#allocation5], %s211
          %s214 = ssub.s32 2048, 2048
          %215 = vsyncadd %s209, %s214
          %s216 = smul.addr %s18, 32
          %s217 = smul.addr %s216, 64
          %s218 = scalar_lea.hbm %s0, %s217
          %s219 = sshll.u32 %s212, 4
          %s220 = int_to_ptr.vmem [resolvable:$true] %s219
          %225 = dma.hbm_to_vmem [thread:$0]  %s218, 2048, %s220, %s209, 64, 64, 4
        $region36: #{tpu_custom_call.1} parent=31 // pred_fallthru
          _
      $region32: #{tpu_custom_call.1} parent=5 // pred_fallthru
        _
      %p226 = scmp.le.s32.totalorder 1, %s18
      %p227 = scmp.lt.s32.totalorder %s18, 3
      %p228 = pnand %p226, %p227
      %p229 = pneg %p228
      // Predicated region
      $region37: #{tpu_custom_call.1} parent=5 // pred_check
        _
      $region38: #{tpu_custom_call.1} parent=5 // pred_check_branch
        %231 = sbr.rel (%p228) target = $region40
      $region39: #{tpu_custom_call.1} parent=5 // pred_region
        %s232 = ssub.s32 %s18, 1
        %s233 = sand.u32 %s31, 1
        %s234 = scalar_lea.sflag [#allocation6], %s233
        %s235 = sand.u32 %s31, 1
        %s236 = smul.addr %s235, 128
        %s237 = scalar_lea.vmem [#allocation5], %s236
        // Predicated region
        $region41: #{tpu_custom_call.1} parent=39 // pred_check
          %p238 = pneg %p44
        $region42: #{tpu_custom_call.1} parent=39 // pred_check_branch
          %240 = sbr.rel (%p238) target = $region44
        $region43: #{tpu_custom_call.1} parent=39 // pred_region
          %241 = dma.done %s234, 2048
        $region44: #{tpu_custom_call.1} parent=39 // pred_fallthru
          _
        // Predicated region
        $region45: #{tpu_custom_call.1} parent=39 // pred_check
          %p242 = pneg %p65
        $region46: #{tpu_custom_call.1} parent=39 // pred_check_branch
          %244 = sbr.rel (%p242) target = $region48
        $region47: #{tpu_custom_call.1} parent=39 // pred_region
          %245 = dma.done [#allocation9], 9216
        $region48: #{tpu_custom_call.1} parent=39 // pred_fallthru
          _
        // Predicated region
        $region49: #{tpu_custom_call.1} parent=39 // pred_check
          %p246 = pneg %p107
        $region50: #{tpu_custom_call.1} parent=39 // pred_check_branch
          %248 = sbr.rel (%p246) target = $region52
        $region51: #{tpu_custom_call.1} parent=39 // pred_region
          %249 = dma.done [#allocation9], 9216
        $region52: #{tpu_custom_call.1} parent=39 // pred_fallthru
          _
        %s250 = sand.u32 %s31, 1
        %s251 = scalar_lea.sflag [#allocation6], %s250
        %s252 = sand.u32 %s31, 1
        %s253 = smul.addr %s252, 128
        %s254 = scalar_lea.vmem [#allocation5], %s253
        %p255 = pneg %p44
        %p256 = pneg %p41
        %p257 = pneg %p65
        %p258 = pneg %p62
        %p259 = pneg %p86
        %p260 = pneg %p83
        %p261 = pneg %p107
        %p262 = pneg %p104
        %p263 = pneg %p128
        %p264 = pneg %p125
        %p265 = pneg %p154
        %p266 = pneg %p151
        %s267 = sand.u32 %s141, 1
        %s268 = scalar_lea.sflag [#allocation7], %s267
        %s269 = sand.u32 %s141, 1
        %s270 = smul.addr %s269, 256
        %s271 = scalar_lea.vmem [#allocation11], %s270
        %273 = vst [vmem:[#allocation2] sm:$0xff] 0
        %274 = vst [vmem:[#allocation2 + $0x8] sm:$0xff] 0
        %275 = vst [vmem:[#allocation2 + $0x10] sm:$0xff] 0
        %276 = vst [vmem:[#allocation2 + $0x18] sm:$0xff] 0
        %277 = vst [vmem:[#allocation2 + $0x20] sm:$0xff] 0
        %278 = vst [vmem:[#allocation2 + $0x28] sm:$0xff] 0
        %s279 = scalar_lea.vmem [#allocation2], 304
        %280 = vst [vmem:[%s279] sm:$0xff] 0
        %281 = vst [vmem:[%s279 + $0x8] sm:$0xff] 0
        %282 = vst [vmem:[%s279 + $0x10] sm:$0xff] 0
        %283 = vst [vmem:[%s279 + $0x18] sm:$0xff] 0
        %284 = vst [vmem:[%s279 + $0x20] sm:$0xff] 0
        %285 = vst [vmem:[%s279 + $0x28] sm:$0xff] 0
        %286 = vst [vmem:[#allocation2] sm:$0xf] 0
        %287 = vst [vmem:[#allocation2 + $0x10] sm:$0xf] 0
        %288 = vst [vmem:[#allocation2 + $0x20] sm:$0xf] 0
        %289 = vst [vmem:[#allocation2 + $0x30] sm:$0xf] 0
        %290 = vst [vmem:[#allocation2 + $0x40] sm:$0xf] 0
        %291 = vst [vmem:[#allocation2 + $0x50] sm:$0xf] 0
        %292 = vst [vmem:[#allocation2 + $0x60] sm:$0xf] 0
        %293 = vst [vmem:[#allocation2 + $0x70] sm:$0xf] 0
        %294 = vst [vmem:[#allocation2 + $0x80] sm:$0xf] 0
        %295 = vst [vmem:[#allocation2 + $0x90] sm:$0xf] 0
        %296 = vst [vmem:[#allocation2 + $0xa0] sm:$0xf] 0
        %297 = vst [vmem:[#allocation2 + $0xb0] sm:$0xf] 0
        %298 = vst [vmem:[#allocation2 + $0xc0] sm:$0xf] 0
        %299 = vst [vmem:[#allocation2 + $0xd0] sm:$0xf] 0
        %300 = vst [vmem:[#allocation2 + $0xe0] sm:$0xf] 0
        %301 = vst [vmem:[#allocation2 + $0xf0] sm:$0xf] 0
        %302 = vst [vmem:[#allocation2 + $0x100] sm:$0xf] 0
        %303 = vst [vmem:[#allocation2 + $0x110] sm:$0xf] 0
        %304 = vst [vmem:[#allocation2 + $0x120] sm:$0xf] 0
        %305 = vst [vmem:[#allocation2 + $0x130] sm:$0xf] 0
        %306 = vst [vmem:[#allocation2 + $0x140] sm:$0xf] 0
        %307 = vst [vmem:[#allocation2 + $0x150] sm:$0xf] 0
        %308 = vst [vmem:[#allocation2 + $0x8] sm:$0xf0] 0
        %309 = vst [vmem:[#allocation2 + $0x18] sm:$0xf0] 0
        %310 = vst [vmem:[#allocation2 + $0x28] sm:$0xf0] 0
        %311 = vst [vmem:[#allocation2 + $0x38] sm:$0xf0] 0
        %312 = vst [vmem:[#allocation2 + $0x48] sm:$0xf0] 0
        %313 = vst [vmem:[#allocation2 + $0x58] sm:$0xf0] 0
        %314 = vst [vmem:[#allocation2 + $0x68] sm:$0xf0] 0
        %315 = vst [vmem:[#allocation2 + $0x78] sm:$0xf0] 0
        %316 = vst [vmem:[#allocation2 + $0x88] sm:$0xf0] 0
        %317 = vst [vmem:[#allocation2 + $0x98] sm:$0xf0] 0
        %318 = vst [vmem:[#allocation2 + $0xa8] sm:$0xf0] 0
        %319 = vst [vmem:[#allocation2 + $0xb8] sm:$0xf0] 0
        %320 = vst [vmem:[#allocation2 + $0xc8] sm:$0xf0] 0
        %321 = vst [vmem:[#allocation2 + $0xd8] sm:$0xf0] 0
        %322 = vst [vmem:[#allocation2 + $0xe8] sm:$0xf0] 0
        %323 = vst [vmem:[#allocation2 + $0xf8] sm:$0xf0] 0
        %324 = vst [vmem:[#allocation2 + $0x108] sm:$0xf0] 0
        %325 = vst [vmem:[#allocation2 + $0x118] sm:$0xf0] 0
        %326 = vst [vmem:[#allocation2 + $0x128] sm:$0xf0] 0
        %327 = vst [vmem:[#allocation2 + $0x138] sm:$0xf0] 0
        %328 = vst [vmem:[#allocation2 + $0x148] sm:$0xf0] 0
        %329 = vst [vmem:[#allocation2 + $0x158] sm:$0xf0] 0
        %v330 = vld [vmem:[%s237] sm:$0xf]
        %v331 = vld [vmem:[%s237 + $0x4] sm:$0xf]
        %v332 = vld [vmem:[%s237 + $0x8] sm:$0xf]
        %v333 = vld [vmem:[%s237 + $0xc] sm:$0xf]
        %v334 = vld [vmem:[%s237 + $0x10] sm:$0xf]
        %v335 = vld [vmem:[%s237 + $0x14] sm:$0xf]
        %v336 = vld [vmem:[%s237 + $0x18] sm:$0xf]
        %v337 = vld [vmem:[%s237 + $0x1c] sm:$0xf]
        %v338 = vld [vmem:[%s237 + $0x20] sm:$0xf]
        %v339 = vld [vmem:[%s237 + $0x24] sm:$0xf]
        %v340 = vld [vmem:[%s237 + $0x28] sm:$0xf]
        %v341 = vld [vmem:[%s237 + $0x2c] sm:$0xf]
        %v342 = vld [vmem:[%s237 + $0x30] sm:$0xf]
        %v343 = vld [vmem:[%s237 + $0x34] sm:$0xf]
        %v344 = vld [vmem:[%s237 + $0x38] sm:$0xf]
        %v345 = vld [vmem:[%s237 + $0x3c] sm:$0xf]
        %v346 = vld [vmem:[%s237 + $0x40] sm:$0xf]
        %v347 = vld [vmem:[%s237 + $0x44] sm:$0xf]
        %v348 = vld [vmem:[%s237 + $0x48] sm:$0xf]
        %v349 = vld [vmem:[%s237 + $0x4c] sm:$0xf]
        %v350 = vld [vmem:[%s237 + $0x50] sm:$0xf]
        %v351 = vld [vmem:[%s237 + $0x54] sm:$0xf]
        %v352 = vld [vmem:[%s237 + $0x58] sm:$0xf]
        %v353 = vld [vmem:[%s237 + $0x5c] sm:$0xf]
        %v354 = vld [vmem:[%s237 + $0x60] sm:$0xf]
        %v355 = vld [vmem:[%s237 + $0x64] sm:$0xf]
        %v356 = vld [vmem:[%s237 + $0x68] sm:$0xf]
        %v357 = vld [vmem:[%s237 + $0x6c] sm:$0xf]
        %v358 = vld [vmem:[%s237 + $0x70] sm:$0xf]
        %v359 = vld [vmem:[%s237 + $0x74] sm:$0xf]
        %v360 = vld [vmem:[%s237 + $0x78] sm:$0xf]
        %v361 = vld [vmem:[%s237 + $0x7c] sm:$0xf]
        %v394 = vunpack.c.l.b16 %v330
        %v395 = vunpack.c.l.b16 %v331
        %v396 = vunpack.c.l.b16 %v332
        %v397 = vunpack.c.l.b16 %v333
        %v398 = vunpack.c.l.b16 %v334
        %v399 = vunpack.c.l.b16 %v335
        %v400 = vunpack.c.l.b16 %v336
        %v401 = vunpack.c.l.b16 %v337
        %v402 = vunpack.c.l.b16 %v338
        %v403 = vunpack.c.l.b16 %v339
        %v404 = vunpack.c.l.b16 %v340
        %v405 = vunpack.c.l.b16 %v341
        %v406 = vunpack.c.l.b16 %v342
        %v407 = vunpack.c.l.b16 %v343
        %v408 = vunpack.c.l.b16 %v344
        %v409 = vunpack.c.l.b16 %v345
        %v410 = vunpack.c.l.b16 %v346
        %v411 = vunpack.c.l.b16 %v347
        %v412 = vunpack.c.l.b16 %v348
        %v413 = vunpack.c.l.b16 %v349
        %v414 = vunpack.c.l.b16 %v350
        %v415 = vunpack.c.l.b16 %v351
        %v416 = vunpack.c.l.b16 %v352
        %v417 = vunpack.c.l.b16 %v353
        %v418 = vunpack.c.l.b16 %v354
        %v419 = vunpack.c.l.b16 %v355
        %v420 = vunpack.c.l.b16 %v356
        %v421 = vunpack.c.l.b16 %v357
        %v422 = vunpack.c.l.b16 %v358
        %v423 = vunpack.c.l.b16 %v359
        %v424 = vunpack.c.l.b16 %v360
        %v425 = vunpack.c.l.b16 %v361
        %v426 = vpack.c.b16 %v394, %v394
        %v427 = vpack.c.b16 %v395, %v395
        %v428 = vpack.c.b16 %v396, %v396
        %v429 = vpack.c.b16 %v397, %v397
        %v430 = vpack.c.b16 %v398, %v398
        %v431 = vpack.c.b16 %v399, %v399
        %v432 = vpack.c.b16 %v400, %v400
        %v433 = vpack.c.b16 %v401, %v401
        %v434 = vpack.c.b16 %v402, %v402
        %v435 = vpack.c.b16 %v403, %v403
        %v436 = vpack.c.b16 %v404, %v404
        %v437 = vpack.c.b16 %v405, %v405
        %v438 = vpack.c.b16 %v406, %v406
        %v439 = vpack.c.b16 %v407, %v407
        %v440 = vpack.c.b16 %v408, %v408
        %v441 = vpack.c.b16 %v409, %v409
        %v442 = vpack.c.b16 %v410, %v410
        %v443 = vpack.c.b16 %v411, %v411
        %v444 = vpack.c.b16 %v412, %v412
        %v445 = vpack.c.b16 %v413, %v413
        %v446 = vpack.c.b16 %v414, %v414
        %v447 = vpack.c.b16 %v415, %v415
        %v448 = vpack.c.b16 %v416, %v416
        %v449 = vpack.c.b16 %v417, %v417
        %v450 = vpack.c.b16 %v418, %v418
        %v451 = vpack.c.b16 %v419, %v419
        %v452 = vpack.c.b16 %v420, %v420
        %v453 = vpack.c.b16 %v421, %v421
        %v454 = vpack.c.b16 %v422, %v422
        %v455 = vpack.c.b16 %v423, %v423
        %v456 = vpack.c.b16 %v424, %v424
        %v457 = vpack.c.b16 %v425, %v425
        %s490 = scalar_lea.vmem [#allocation2], 48
        %491 = vst [vmem:[%s490] sm:$0xf0] %v426
        %492 = vst [vmem:[%s490 + $0x8] sm:$0xf] %v427
        %493 = vst [vmem:[%s490 + $0x10] sm:$0xf0] %v428
        %494 = vst [vmem:[%s490 + $0x18] sm:$0xf] %v429
        %495 = vst [vmem:[%s490 + $0x20] sm:$0xf0] %v430
        %496 = vst [vmem:[%s490 + $0x28] sm:$0xf] %v431
        %497 = vst [vmem:[%s490 + $0x30] sm:$0xf0] %v432
        %498 = vst [vmem:[%s490 + $0x38] sm:$0xf] %v433
        %499 = vst [vmem:[%s490 + $0x40] sm:$0xf0] %v434
        %500 = vst [vmem:[%s490 + $0x48] sm:$0xf] %v435
        %501 = vst [vmem:[%s490 + $0x50] sm:$0xf0] %v436
        %502 = vst [vmem:[%s490 + $0x58] sm:$0xf] %v437
        %503 = vst [vmem:[%s490 + $0x60] sm:$0xf0] %v438
        %504 = vst [vmem:[%s490 + $0x68] sm:$0xf] %v439
        %505 = vst [vmem:[%s490 + $0x70] sm:$0xf0] %v440
        %506 = vst [vmem:[%s490 + $0x78] sm:$0xf] %v441
        %507 = vst [vmem:[%s490 + $0x80] sm:$0xf0] %v442
        %508 = vst [vmem:[%s490 + $0x88] sm:$0xf] %v443
        %509 = vst [vmem:[%s490 + $0x90] sm:$0xf0] %v444
        %510 = vst [vmem:[%s490 + $0x98] sm:$0xf] %v445
        %511 = vst [vmem:[%s490 + $0xa0] sm:$0xf0] %v446
        %512 = vst [vmem:[%s490 + $0xa8] sm:$0xf] %v447
        %513 = vst [vmem:[%s490 + $0xb0] sm:$0xf0] %v448
        %514 = vst [vmem:[%s490 + $0xb8] sm:$0xf] %v449
        %515 = vst [vmem:[%s490 + $0xc0] sm:$0xf0] %v450
        %516 = vst [vmem:[%s490 + $0xc8] sm:$0xf] %v451
        %517 = vst [vmem:[%s490 + $0xd0] sm:$0xf0] %v452
        %518 = vst [vmem:[%s490 + $0xd8] sm:$0xf] %v453
        %519 = vst [vmem:[%s490 + $0xe0] sm:$0xf0] %v454
        %520 = vst [vmem:[%s490 + $0xe8] sm:$0xf] %v455
        %521 = vst [vmem:[%s490 + $0xf0] sm:$0xf0] %v456
        %522 = vst [vmem:[%s490 + $0xf8] sm:$0xf] %v457
        %v523 = vld [vmem:[#allocation2] sm:$0xfc]
        %v524 = vld [vmem:[#allocation2 + $0x8] sm:$0x7]
        %v525 = vld [vmem:[#allocation2 + $0x10] sm:$0xfc]
        %v526 = vld [vmem:[#allocation2 + $0x18] sm:$0x7]
        %v527 = vld [vmem:[#allocation2 + $0x20] sm:$0xfc]
        %v528 = vld [vmem:[#allocation2 + $0x28] sm:$0x7]
        %v529 = vld [vmem:[#allocation2 + $0x30] sm:$0xfc]
        %v530 = vld [vmem:[#allocation2 + $0x38] sm:$0x7]
        %v531 = vld [vmem:[#allocation2 + $0x40] sm:$0xfc]
        %v532 = vld [vmem:[#allocation2 + $0x48] sm:$0x7]
        %v533 = vld [vmem:[#allocation2 + $0x50] sm:$0xfc]
        %v534 = vld [vmem:[#allocation2 + $0x58] sm:$0x7]
        %v535 = vld [vmem:[#allocation2 + $0x60] sm:$0xfc]
        %v536 = vld [vmem:[#allocation2 + $0x68] sm:$0x7]
        %v537 = vld [vmem:[#allocation2 + $0x70] sm:$0xfc]
        %v538 = vld [vmem:[#allocation2 + $0x78] sm:$0x7]
        %v539 = vld [vmem:[#allocation2 + $0x80] sm:$0xfc]
        %v540 = vld [vmem:[#allocation2 + $0x88] sm:$0x7]
        %v541 = vld [vmem:[#allocation2 + $0x90] sm:$0xfc]
        %v542 = vld [vmem:[#allocation2 + $0x98] sm:$0x7]
        %v543 = vld [vmem:[#allocation2 + $0xa0] sm:$0xfc]
        %v544 = vld [vmem:[#allocation2 + $0xa8] sm:$0x7]
        %v545 = vld [vmem:[#allocation2 + $0xb0] sm:$0xfc]
        %v546 = vld [vmem:[#allocation2 + $0xb8] sm:$0x7]
        %v547 = vld [vmem:[#allocation2 + $0xc0] sm:$0xfc]
        %v548 = vld [vmem:[#allocation2 + $0xc8] sm:$0x7]
        %v549 = vld [vmem:[#allocation2 + $0xd0] sm:$0xfc]
        %v550 = vld [vmem:[#allocation2 + $0xd8] sm:$0x7]
        %v551 = vld [vmem:[#allocation2 + $0xe0] sm:$0xfc]
        %v552 = vld [vmem:[#allocation2 + $0xe8] sm:$0x7]
        %v553 = vld [vmem:[#allocation2 + $0xf0] sm:$0xfc]
        %v554 = vld [vmem:[#allocation2 + $0xf8] sm:$0x7]
        %vm555 = vsmask.f32 5376
        %v557 = vshrl.u32 %v523, 16
        %v559 = vrot.slane %v557, 2
        %v560 = vshll.u32 %v523, 16
        %v562 = vrot.slane %v560, 3
        %v563 = vor.u32 %v559, %v562
        %v565 = vshrl.u32 %v524, 16
        %v567 = vrot.slane %v565, 2
        %v568 = vshll.u32 %v524, 16
        %v570 = vrot.slane %v568, 3
        %v571 = vor.u32 %v567, %v570
        %v572 = vsel %vm555, %v563, %v571
        %v574 = vshrl.u32 %v525, 16
        %v576 = vrot.slane %v574, 2
        %v577 = vshll.u32 %v525, 16
        %v579 = vrot.slane %v577, 3
        %v580 = vor.u32 %v576, %v579
        %v582 = vshrl.u32 %v526, 16
        %v584 = vrot.slane %v582, 2
        %v585 = vshll.u32 %v526, 16
        %v587 = vrot.slane %v585, 3
        %v588 = vor.u32 %v584, %v587
        %v589 = vsel %vm555, %v580, %v588
        %v591 = vshrl.u32 %v527, 16
        %v593 = vrot.slane %v591, 2
        %v594 = vshll.u32 %v527, 16
        %v596 = vrot.slane %v594, 3
        %v597 = vor.u32 %v593, %v596
        %v599 = vshrl.u32 %v528, 16
        %v601 = vrot.slane %v599, 2
        %v602 = vshll.u32 %v528, 16
        %v604 = vrot.slane %v602, 3
        %v605 = vor.u32 %v601, %v604
        %v606 = vsel %vm555, %v597, %v605
        %v608 = vshrl.u32 %v529, 16
        %v610 = vrot.slane %v608, 2
        %v611 = vshll.u32 %v529, 16
        %v613 = vrot.slane %v611, 3
        %v614 = vor.u32 %v610, %v613
        %v616 = vshrl.u32 %v530, 16
        %v618 = vrot.slane %v616, 2
        %v619 = vshll.u32 %v530, 16
        %v621 = vrot.slane %v619, 3
        %v622 = vor.u32 %v618, %v621
        %v623 = vsel %vm555, %v614, %v622
        %v625 = vshrl.u32 %v531, 16
        %v627 = vrot.slane %v625, 2
        %v628 = vshll.u32 %v531, 16
        %v630 = vrot.slane %v628, 3
        %v631 = vor.u32 %v627, %v630
        %v633 = vshrl.u32 %v532, 16
        %v635 = vrot.slane %v633, 2
        %v636 = vshll.u32 %v532, 16
        %v638 = vrot.slane %v636, 3
        %v639 = vor.u32 %v635, %v638
        %v640 = vsel %vm555, %v631, %v639
        %v642 = vshrl.u32 %v533, 16
        %v644 = vrot.slane %v642, 2
        %v645 = vshll.u32 %v533, 16
        %v647 = vrot.slane %v645, 3
        %v648 = vor.u32 %v644, %v647
        %v650 = vshrl.u32 %v534, 16
        %v652 = vrot.slane %v650, 2
        %v653 = vshll.u32 %v534, 16
        %v655 = vrot.slane %v653, 3
        %v656 = vor.u32 %v652, %v655
        %v657 = vsel %vm555, %v648, %v656
        %v659 = vshrl.u32 %v535, 16
        %v661 = vrot.slane %v659, 2
        %v662 = vshll.u32 %v535, 16
        %v664 = vrot.slane %v662, 3
        %v665 = vor.u32 %v661, %v664
        %v667 = vshrl.u32 %v536, 16
        %v669 = vrot.slane %v667, 2
        %v670 = vshll.u32 %v536, 16
        %v672 = vrot.slane %v670, 3
        %v673 = vor.u32 %v669, %v672
        %v674 = vsel %vm555, %v665, %v673
        %v676 = vshrl.u32 %v537, 16
        %v678 = vrot.slane %v676, 2
        %v679 = vshll.u32 %v537, 16
        %v681 = vrot.slane %v679, 3
        %v682 = vor.u32 %v678, %v681
        %v684 = vshrl.u32 %v538, 16
        %v686 = vrot.slane %v684, 2
        %v687 = vshll.u32 %v538, 16
        %v689 = vrot.slane %v687, 3
        %v690 = vor.u32 %v686, %v689
        %v691 = vsel %vm555, %v682, %v690
        %v693 = vshrl.u32 %v539, 16
        %v695 = vrot.slane %v693, 2
        %v696 = vshll.u32 %v539, 16
        %v698 = vrot.slane %v696, 3
        %v699 = vor.u32 %v695, %v698
        %v701 = vshrl.u32 %v540, 16
        %v703 = vrot.slane %v701, 2
        %v704 = vshll.u32 %v540, 16
        %v706 = vrot.slane %v704, 3
        %v707 = vor.u32 %v703, %v706
        %v708 = vsel %vm555, %v699, %v707
        %v710 = vshrl.u32 %v541, 16
        %v712 = vrot.slane %v710, 2
        %v713 = vshll.u32 %v541, 16
        %v715 = vrot.slane %v713, 3
        %v716 = vor.u32 %v712, %v715
        %v718 = vshrl.u32 %v542, 16
        %v720 = vrot.slane %v718, 2
        %v721 = vshll.u32 %v542, 16
        %v723 = vrot.slane %v721, 3
        %v724 = vor.u32 %v720, %v723
        %v725 = vsel %vm555, %v716, %v724
        %v727 = vshrl.u32 %v543, 16
        %v729 = vrot.slane %v727, 2
        %v730 = vshll.u32 %v543, 16
        %v732 = vrot.slane %v730, 3
        %v733 = vor.u32 %v729, %v732
        %v735 = vshrl.u32 %v544, 16
        %v737 = vrot.slane %v735, 2
        %v738 = vshll.u32 %v544, 16
        %v740 = vrot.slane %v738, 3
        %v741 = vor.u32 %v737, %v740
        %v742 = vsel %vm555, %v733, %v741
        %v744 = vshrl.u32 %v545, 16
        %v746 = vrot.slane %v744, 2
        %v747 = vshll.u32 %v545, 16
        %v749 = vrot.slane %v747, 3
        %v750 = vor.u32 %v746, %v749
        %v752 = vshrl.u32 %v546, 16
        %v754 = vrot.slane %v752, 2
        %v755 = vshll.u32 %v546, 16
        %v757 = vrot.slane %v755, 3
        %v758 = vor.u32 %v754, %v757
        %v759 = vsel %vm555, %v750, %v758
        %v761 = vshrl.u32 %v547, 16
        %v763 = vrot.slane %v761, 2
        %v764 = vshll.u32 %v547, 16
        %v766 = vrot.slane %v764, 3
        %v767 = vor.u32 %v763, %v766
        %v769 = vshrl.u32 %v548, 16
        %v771 = vrot.slane %v769, 2
        %v772 = vshll.u32 %v548, 16
        %v774 = vrot.slane %v772, 3
        %v775 = vor.u32 %v771, %v774
        %v776 = vsel %vm555, %v767, %v775
        %v778 = vshrl.u32 %v549, 16
        %v780 = vrot.slane %v778, 2
        %v781 = vshll.u32 %v549, 16
        %v783 = vrot.slane %v781, 3
        %v784 = vor.u32 %v780, %v783
        %v786 = vshrl.u32 %v550, 16
        %v788 = vrot.slane %v786, 2
        %v789 = vshll.u32 %v550, 16
        %v791 = vrot.slane %v789, 3
        %v792 = vor.u32 %v788, %v791
        %v793 = vsel %vm555, %v784, %v792
        %v795 = vshrl.u32 %v551, 16
        %v797 = vrot.slane %v795, 2
        %v798 = vshll.u32 %v551, 16
        %v800 = vrot.slane %v798, 3
        %v801 = vor.u32 %v797, %v800
        %v803 = vshrl.u32 %v552, 16
        %v805 = vrot.slane %v803, 2
        %v806 = vshll.u32 %v552, 16
        %v808 = vrot.slane %v806, 3
        %v809 = vor.u32 %v805, %v808
        %v810 = vsel %vm555, %v801, %v809
        %v812 = vshrl.u32 %v553, 16
        %v814 = vrot.slane %v812, 2
        %v815 = vshll.u32 %v553, 16
        %v817 = vrot.slane %v815, 3
        %v818 = vor.u32 %v814, %v817
        %v820 = vshrl.u32 %v554, 16
        %v822 = vrot.slane %v820, 2
        %v823 = vshll.u32 %v554, 16
        %v825 = vrot.slane %v823, 3
        %v826 = vor.u32 %v822, %v825
        %v827 = vsel %vm555, %v818, %v826
        %844 = vst [vmem:[#allocation4] sm:$0xff] %v572
        %845 = vst [vmem:[#allocation4 + $0x48] sm:$0xff] %v589
        %846 = vst [vmem:[#allocation4 + $0x90] sm:$0xff] %v606
        %847 = vst [vmem:[#allocation4 + $0xd8] sm:$0xff] %v623
        %848 = vst [vmem:[#allocation4 + $0x120] sm:$0xff] %v640
        %849 = vst [vmem:[#allocation4 + $0x168] sm:$0xff] %v657
        %850 = vst [vmem:[#allocation4 + $0x1b0] sm:$0xff] %v674
        %851 = vst [vmem:[#allocation4 + $0x1f8] sm:$0xff] %v691
        %852 = vst [vmem:[#allocation4 + $0x240] sm:$0xff] %v708
        %853 = vst [vmem:[#allocation4 + $0x288] sm:$0xff] %v725
        %854 = vst [vmem:[#allocation4 + $0x2d0] sm:$0xff] %v742
        %855 = vst [vmem:[#allocation4 + $0x318] sm:$0xff] %v759
        %856 = vst [vmem:[#allocation4 + $0x360] sm:$0xff] %v776
        %857 = vst [vmem:[#allocation4 + $0x3a8] sm:$0xff] %v793
        %858 = vst [vmem:[#allocation4 + $0x3f0] sm:$0xff] %v810
        %859 = vst [vmem:[#allocation4 + $0x438] sm:$0xff] %v827
        %v860 = vld [vmem:[#allocation2] sm:$0xf0]
        %v861 = vld [vmem:[#allocation2 + $0x8] sm:$0xf]
        %v862 = vld [vmem:[#allocation2 + $0x10] sm:$0xf0]
        %v863 = vld [vmem:[#allocation2 + $0x18] sm:$0xf]
        %v864 = vld [vmem:[#allocation2 + $0x20] sm:$0xf0]
        %v865 = vld [vmem:[#allocation2 + $0x28] sm:$0xf]
        %v866 = vld [vmem:[#allocation2 + $0x30] sm:$0xf0]
        %v867 = vld [vmem:[#allocation2 + $0x38] sm:$0xf]
        %v868 = vld [vmem:[#allocation2 + $0x40] sm:$0xf0]
        %v869 = vld [vmem:[#allocation2 + $0x48] sm:$0xf]
        %v870 = vld [vmem:[#allocation2 + $0x50] sm:$0xf0]
        %v871 = vld [vmem:[#allocation2 + $0x58] sm:$0xf]
        %v872 = vld [vmem:[#allocation2 + $0x60] sm:$0xf0]
        %v873 = vld [vmem:[#allocation2 + $0x68] sm:$0xf]
        %v874 = vld [vmem:[#allocation2 + $0x70] sm:$0xf0]
        %v875 = vld [vmem:[#allocation2 + $0x78] sm:$0xf]
        %v876 = vld [vmem:[#allocation2 + $0x80] sm:$0xf0]
        %v877 = vld [vmem:[#allocation2 + $0x88] sm:$0xf]
        %v878 = vld [vmem:[#allocation2 + $0x90] sm:$0xf0]
        %v879 = vld [vmem:[#allocation2 + $0x98] sm:$0xf]
        %v880 = vld [vmem:[#allocation2 + $0xa0] sm:$0xf0]
        %v881 = vld [vmem:[#allocation2 + $0xa8] sm:$0xf]
        %v882 = vld [vmem:[#allocation2 + $0xb0] sm:$0xf0]
        %v883 = vld [vmem:[#allocation2 + $0xb8] sm:$0xf]
        %v884 = vld [vmem:[#allocation2 + $0xc0] sm:$0xf0]
        %v885 = vld [vmem:[#allocation2 + $0xc8] sm:$0xf]
        %v886 = vld [vmem:[#allocation2 + $0xd0] sm:$0xf0]
        %v887 = vld [vmem:[#allocation2 + $0xd8] sm:$0xf]
        %v888 = vld [vmem:[#allocation2 + $0xe0] sm:$0xf0]
        %v889 = vld [vmem:[#allocation2 + $0xe8] sm:$0xf]
        %v890 = vld [vmem:[#allocation2 + $0xf0] sm:$0xf0]
        %v891 = vld [vmem:[#allocation2 + $0xf8] sm:$0xf]
        %vm924 = vcmask 1043456
        %v925 = vrot.slane %v860, 4
        %v926 = vrot.slane %v861, 4
        %v927 = vsel %vm924, %v925, %v926
        %v928 = vrot.slane %v862, 4
        %v929 = vrot.slane %v863, 4
        %v930 = vsel %vm924, %v928, %v929
        %v931 = vrot.slane %v864, 4
        %v932 = vrot.slane %v865, 4
        %v933 = vsel %vm924, %v931, %v932
        %v934 = vrot.slane %v866, 4
        %v935 = vrot.slane %v867, 4
        %v936 = vsel %vm924, %v934, %v935
        %v937 = vrot.slane %v868, 4
        %v938 = vrot.slane %v869, 4
        %v939 = vsel %vm924, %v937, %v938
        %v940 = vrot.slane %v870, 4
        %v941 = vrot.slane %v871, 4
        %v942 = vsel %vm924, %v940, %v941
        %v943 = vrot.slane %v872, 4
        %v944 = vrot.slane %v873, 4
        %v945 = vsel %vm924, %v943, %v944
        %v946 = vrot.slane %v874, 4
        %v947 = vrot.slane %v875, 4
        %v948 = vsel %vm924, %v946, %v947
        %v949 = vrot.slane %v876, 4
        %v950 = vrot.slane %v877, 4
        %v951 = vsel %vm924, %v949, %v950
        %v952 = vrot.slane %v878, 4
        %v953 = vrot.slane %v879, 4
        %v954 = vsel %vm924, %v952, %v953
        %v955 = vrot.slane %v880, 4
        %v956 = vrot.slane %v881, 4
        %v957 = vsel %vm924, %v955, %v956
        %v958 = vrot.slane %v882, 4
        %v959 = vrot.slane %v883, 4
        %v960 = vsel %vm924, %v958, %v959
        %v961 = vrot.slane %v884, 4
        %v962 = vrot.slane %v885, 4
        %v963 = vsel %vm924, %v961, %v962
        %v964 = vrot.slane %v886, 4
        %v965 = vrot.slane %v887, 4
        %v966 = vsel %vm924, %v964, %v965
        %v967 = vrot.slane %v888, 4
        %v968 = vrot.slane %v889, 4
        %v969 = vsel %vm924, %v967, %v968
        %v970 = vrot.slane %v890, 4
        %v971 = vrot.slane %v891, 4
        %v972 = vsel %vm924, %v970, %v971
        %989 = vst [vmem:[#allocation4 + $0x8] sm:$0xff] %v927
        %990 = vst [vmem:[#allocation4 + $0x50] sm:$0xff] %v930
        %991 = vst [vmem:[#allocation4 + $0x98] sm:$0xff] %v933
        %992 = vst [vmem:[#allocation4 + $0xe0] sm:$0xff] %v936
        %993 = vst [vmem:[#allocation4 + $0x128] sm:$0xff] %v939
        %994 = vst [vmem:[#allocation4 + $0x170] sm:$0xff] %v942
        %995 = vst [vmem:[#allocation4 + $0x1b8] sm:$0xff] %v945
        %996 = vst [vmem:[#allocation4 + $0x200] sm:$0xff] %v948
        %997 = vst [vmem:[#allocation4 + $0x248] sm:$0xff] %v951
        %998 = vst [vmem:[#allocation4 + $0x290] sm:$0xff] %v954
        %999 = vst [vmem:[#allocation4 + $0x2d8] sm:$0xff] %v957
        %1000 = vst [vmem:[#allocation4 + $0x320] sm:$0xff] %v960
        %1001 = vst [vmem:[#allocation4 + $0x368] sm:$0xff] %v963
        %1002 = vst [vmem:[#allocation4 + $0x3b0] sm:$0xff] %v966
        %1003 = vst [vmem:[#allocation4 + $0x3f8] sm:$0xff] %v969
        %1004 = vst [vmem:[#allocation4 + $0x440] sm:$0xff] %v972
        %v1005 = vld [vmem:[#allocation2] sm:$0xe0]
        %v1006 = vld [vmem:[#allocation2 + $0x8] sm:$0x3f]
        %v1007 = vld [vmem:[#allocation2 + $0x10] sm:$0xe0]
        %v1008 = vld [vmem:[#allocation2 + $0x18] sm:$0x3f]
        %v1009 = vld [vmem:[#allocation2 + $0x20] sm:$0xe0]
        %v1010 = vld [vmem:[#allocation2 + $0x28] sm:$0x3f]
        %v1011 = vld [vmem:[#allocation2 + $0x30] sm:$0xe0]
        %v1012 = vld [vmem:[#allocation2 + $0x38] sm:$0x3f]
        %v1013 = vld [vmem:[#allocation2 + $0x40] sm:$0xe0]
        %v1014 = vld [vmem:[#allocation2 + $0x48] sm:$0x3f]
        %v1015 = vld [vmem:[#allocation2 + $0x50] sm:$0xe0]
        %v1016 = vld [vmem:[#allocation2 + $0x58] sm:$0x3f]
        %v1017 = vld [vmem:[#allocation2 + $0x60] sm:$0xe0]
        %v1018 = vld [vmem:[#allocation2 + $0x68] sm:$0x3f]
        %v1019 = vld [vmem:[#allocation2 + $0x70] sm:$0xe0]
        %v1020 = vld [vmem:[#allocation2 + $0x78] sm:$0x3f]
        %v1021 = vld [vmem:[#allocation2 + $0x80] sm:$0xe0]
        %v1022 = vld [vmem:[#allocation2 + $0x88] sm:$0x3f]
        %v1023 = vld [vmem:[#allocation2 + $0x90] sm:$0xe0]
        %v1024 = vld [vmem:[#allocation2 + $0x98] sm:$0x3f]
        %v1025 = vld [vmem:[#allocation2 + $0xa0] sm:$0xe0]
        %v1026 = vld [vmem:[#allocation2 + $0xa8] sm:$0x3f]
        %v1027 = vld [vmem:[#allocation2 + $0xb0] sm:$0xe0]
        %v1028 = vld [vmem:[#allocation2 + $0xb8] sm:$0x3f]
        %v1029 = vld [vmem:[#allocation2 + $0xc0] sm:$0xe0]
        %v1030 = vld [vmem:[#allocation2 + $0xc8] sm:$0x3f]
        %v1031 = vld [vmem:[#allocation2 + $0xd0] sm:$0xe0]
        %v1032 = vld [vmem:[#allocation2 + $0xd8] sm:$0x3f]
        %v1033 = vld [vmem:[#allocation2 + $0xe0] sm:$0xe0]
        %v1034 = vld [vmem:[#allocation2 + $0xe8] sm:$0x3f]
        %v1035 = vld [vmem:[#allocation2 + $0xf0] sm:$0xe0]
        %v1036 = vld [vmem:[#allocation2 + $0xf8] sm:$0x3f]
        %vm1037 = vsmask.f32 2304
        %v1039 = vshrl.u32 %v1005, 16
        %v1041 = vrot.slane %v1039, 5
        %v1042 = vshll.u32 %v1005, 16
        %v1044 = vrot.slane %v1042, 6
        %v1045 = vor.u32 %v1041, %v1044
        %v1047 = vshrl.u32 %v1006, 16
        %v1049 = vrot.slane %v1047, 5
        %v1050 = vshll.u32 %v1006, 16
        %v1052 = vrot.slane %v1050, 6
        %v1053 = vor.u32 %v1049, %v1052
        %v1054 = vsel %vm1037, %v1045, %v1053
        %v1056 = vshrl.u32 %v1007, 16
        %v1058 = vrot.slane %v1056, 5
        %v1059 = vshll.u32 %v1007, 16
        %v1061 = vrot.slane %v1059, 6
        %v1062 = vor.u32 %v1058, %v1061
        %v1064 = vshrl.u32 %v1008, 16
        %v1066 = vrot.slane %v1064, 5
        %v1067 = vshll.u32 %v1008, 16
        %v1069 = vrot.slane %v1067, 6
        %v1070 = vor.u32 %v1066, %v1069
        %v1071 = vsel %vm1037, %v1062, %v1070
        %v1073 = vshrl.u32 %v1009, 16
        %v1075 = vrot.slane %v1073, 5
        %v1076 = vshll.u32 %v1009, 16
        %v1078 = vrot.slane %v1076, 6
        %v1079 = vor.u32 %v1075, %v1078
        %v1081 = vshrl.u32 %v1010, 16
        %v1083 = vrot.slane %v1081, 5
        %v1084 = vshll.u32 %v1010, 16
        %v1086 = vrot.slane %v1084, 6
        %v1087 = vor.u32 %v1083, %v1086
        %v1088 = vsel %vm1037, %v1079, %v1087
        %v1090 = vshrl.u32 %v1011, 16
        %v1092 = vrot.slane %v1090, 5
        %v1093 = vshll.u32 %v1011, 16
        %v1095 = vrot.slane %v1093, 6
        %v1096 = vor.u32 %v1092, %v1095
        %v1098 = vshrl.u32 %v1012, 16
        %v1100 = vrot.slane %v1098, 5
        %v1101 = vshll.u32 %v1012, 16
        %v1103 = vrot.slane %v1101, 6
        %v1104 = vor.u32 %v1100, %v1103
        %v1105 = vsel %vm1037, %v1096, %v1104
        %v1107 = vshrl.u32 %v1013, 16
        %v1109 = vrot.slane %v1107, 5
        %v1110 = vshll.u32 %v1013, 16
        %v1112 = vrot.slane %v1110, 6
        %v1113 = vor.u32 %v1109, %v1112
        %v1115 = vshrl.u32 %v1014, 16
        %v1117 = vrot.slane %v1115, 5
        %v1118 = vshll.u32 %v1014, 16
        %v1120 = vrot.slane %v1118, 6
        %v1121 = vor.u32 %v1117, %v1120
        %v1122 = vsel %vm1037, %v1113, %v1121
        %v1124 = vshrl.u32 %v1015, 16
        %v1126 = vrot.slane %v1124, 5
        %v1127 = vshll.u32 %v1015, 16
        %v1129 = vrot.slane %v1127, 6
        %v1130 = vor.u32 %v1126, %v1129
        %v1132 = vshrl.u32 %v1016, 16
        %v1134 = vrot.slane %v1132, 5
        %v1135 = vshll.u32 %v1016, 16
        %v1137 = vrot.slane %v1135, 6
        %v1138 = vor.u32 %v1134, %v1137
        %v1139 = vsel %vm1037, %v1130, %v1138
        %v1141 = vshrl.u32 %v1017, 16
        %v1143 = vrot.slane %v1141, 5
        %v1144 = vshll.u32 %v1017, 16
        %v1146 = vrot.slane %v1144, 6
        %v1147 = vor.u32 %v1143, %v1146
        %v1149 = vshrl.u32 %v1018, 16
        %v1151 = vrot.slane %v1149, 5
        %v1152 = vshll.u32 %v1018, 16
        %v1154 = vrot.slane %v1152, 6
        %v1155 = vor.u32 %v1151, %v1154
        %v1156 = vsel %vm1037, %v1147, %v1155
        %v1158 = vshrl.u32 %v1019, 16
        %v1160 = vrot.slane %v1158, 5
        %v1161 = vshll.u32 %v1019, 16
        %v1163 = vrot.slane %v1161, 6
        %v1164 = vor.u32 %v1160, %v1163
        %v1166 = vshrl.u32 %v1020, 16
        %v1168 = vrot.slane %v1166, 5
        %v1169 = vshll.u32 %v1020, 16
        %v1171 = vrot.slane %v1169, 6
        %v1172 = vor.u32 %v1168, %v1171
        %v1173 = vsel %vm1037, %v1164, %v1172
        %v1175 = vshrl.u32 %v1021, 16
        %v1177 = vrot.slane %v1175, 5
        %v1178 = vshll.u32 %v1021, 16
        %v1180 = vrot.slane %v1178, 6
        %v1181 = vor.u32 %v1177, %v1180
        %v1183 = vshrl.u32 %v1022, 16
        %v1185 = vrot.slane %v1183, 5
        %v1186 = vshll.u32 %v1022, 16
        %v1188 = vrot.slane %v1186, 6
        %v1189 = vor.u32 %v1185, %v1188
        %v1190 = vsel %vm1037, %v1181, %v1189
        %v1192 = vshrl.u32 %v1023, 16
        %v1194 = vrot.slane %v1192, 5
        %v1195 = vshll.u32 %v1023, 16
        %v1197 = vrot.slane %v1195, 6
        %v1198 = vor.u32 %v1194, %v1197
        %v1200 = vshrl.u32 %v1024, 16
        %v1202 = vrot.slane %v1200, 5
        %v1203 = vshll.u32 %v1024, 16
        %v1205 = vrot.slane %v1203, 6
        %v1206 = vor.u32 %v1202, %v1205
        %v1207 = vsel %vm1037, %v1198, %v1206
        %v1209 = vshrl.u32 %v1025, 16
        %v1211 = vrot.slane %v1209, 5
        %v1212 = vshll.u32 %v1025, 16
        %v1214 = vrot.slane %v1212, 6
        %v1215 = vor.u32 %v1211, %v1214
        %v1217 = vshrl.u32 %v1026, 16
        %v1219 = vrot.slane %v1217, 5
        %v1220 = vshll.u32 %v1026, 16
        %v1222 = vrot.slane %v1220, 6
        %v1223 = vor.u32 %v1219, %v1222
        %v1224 = vsel %vm1037, %v1215, %v1223
        %v1226 = vshrl.u32 %v1027, 16
        %v1228 = vrot.slane %v1226, 5
        %v1229 = vshll.u32 %v1027, 16
        %v1231 = vrot.slane %v1229, 6
        %v1232 = vor.u32 %v1228, %v1231
        %v1234 = vshrl.u32 %v1028, 16
        %v1236 = vrot.slane %v1234, 5
        %v1237 = vshll.u32 %v1028, 16
        %v1239 = vrot.slane %v1237, 6
        %v1240 = vor.u32 %v1236, %v1239
        %v1241 = vsel %vm1037, %v1232, %v1240
        %v1243 = vshrl.u32 %v1029, 16
        %v1245 = vrot.slane %v1243, 5
        %v1246 = vshll.u32 %v1029, 16
        %v1248 = vrot.slane %v1246, 6
        %v1249 = vor.u32 %v1245, %v1248
        %v1251 = vshrl.u32 %v1030, 16
        %v1253 = vrot.slane %v1251, 5
        %v1254 = vshll.u32 %v1030, 16
        %v1256 = vrot.slane %v1254, 6
        %v1257 = vor.u32 %v1253, %v1256
        %v1258 = vsel %vm1037, %v1249, %v1257
        %v1260 = vshrl.u32 %v1031, 16
        %v1262 = vrot.slane %v1260, 5
        %v1263 = vshll.u32 %v1031, 16
        %v1265 = vrot.slane %v1263, 6
        %v1266 = vor.u32 %v1262, %v1265
        %v1268 = vshrl.u32 %v1032, 16
        %v1270 = vrot.slane %v1268, 5
        %v1271 = vshll.u32 %v1032, 16
        %v1273 = vrot.slane %v1271, 6
        %v1274 = vor.u32 %v1270, %v1273
        %v1275 = vsel %vm1037, %v1266, %v1274
        %v1277 = vshrl.u32 %v1033, 16
        %v1279 = vrot.slane %v1277, 5
        %v1280 = vshll.u32 %v1033, 16
        %v1282 = vrot.slane %v1280, 6
        %v1283 = vor.u32 %v1279, %v1282
        %v1285 = vshrl.u32 %v1034, 16
        %v1287 = vrot.slane %v1285, 5
        %v1288 = vshll.u32 %v1034, 16
        %v1290 = vrot.slane %v1288, 6
        %v1291 = vor.u32 %v1287, %v1290
        %v1292 = vsel %vm1037, %v1283, %v1291
        %v1294 = vshrl.u32 %v1035, 16
        %v1296 = vrot.slane %v1294, 5
        %v1297 = vshll.u32 %v1035, 16
        %v1299 = vrot.slane %v1297, 6
        %v1300 = vor.u32 %v1296, %v1299
        %v1302 = vshrl.u32 %v1036, 16
        %v1304 = vrot.slane %v1302, 5
        %v1305 = vshll.u32 %v1036, 16
        %v1307 = vrot.slane %v1305, 6
        %v1308 = vor.u32 %v1304, %v1307
        %v1309 = vsel %vm1037, %v1300, %v1308
        %1326 = vst [vmem:[#allocation4 + $0x10] sm:$0xff] %v1054
        %1327 = vst [vmem:[#allocation4 + $0x58] sm:$0xff] %v1071
        %1328 = vst [vmem:[#allocation4 + $0xa0] sm:$0xff] %v1088
        %1329 = vst [vmem:[#allocation4 + $0xe8] sm:$0xff] %v1105
        %1330 = vst [vmem:[#allocation4 + $0x130] sm:$0xff] %v1122
        %1331 = vst [vmem:[#allocation4 + $0x178] sm:$0xff] %v1139
        %1332 = vst [vmem:[#allocation4 + $0x1c0] sm:$0xff] %v1156
        %1333 = vst [vmem:[#allocation4 + $0x208] sm:$0xff] %v1173
        %1334 = vst [vmem:[#allocation4 + $0x250] sm:$0xff] %v1190
        %1335 = vst [vmem:[#allocation4 + $0x298] sm:$0xff] %v1207
        %1336 = vst [vmem:[#allocation4 + $0x2e0] sm:$0xff] %v1224
        %1337 = vst [vmem:[#allocation4 + $0x328] sm:$0xff] %v1241
        %1338 = vst [vmem:[#allocation4 + $0x370] sm:$0xff] %v1258
        %1339 = vst [vmem:[#allocation4 + $0x3b8] sm:$0xff] %v1275
        %1340 = vst [vmem:[#allocation4 + $0x400] sm:$0xff] %v1292
        %1341 = vst [vmem:[#allocation4 + $0x448] sm:$0xff] %v1309
        %v1342 = vld [vmem:[%s490] sm:$0xfc]
        %v1343 = vld [vmem:[%s490 + $0x8] sm:$0x7]
        %v1344 = vld [vmem:[%s490 + $0x10] sm:$0xfc]
        %v1345 = vld [vmem:[%s490 + $0x18] sm:$0x7]
        %v1346 = vld [vmem:[%s490 + $0x20] sm:$0xfc]
        %v1347 = vld [vmem:[%s490 + $0x28] sm:$0x7]
        %v1348 = vld [vmem:[%s490 + $0x30] sm:$0xfc]
        %v1349 = vld [vmem:[%s490 + $0x38] sm:$0x7]
        %v1350 = vld [vmem:[%s490 + $0x40] sm:$0xfc]
        %v1351 = vld [vmem:[%s490 + $0x48] sm:$0x7]
        %v1352 = vld [vmem:[%s490 + $0x50] sm:$0xfc]
        %v1353 = vld [vmem:[%s490 + $0x58] sm:$0x7]
        %v1354 = vld [vmem:[%s490 + $0x60] sm:$0xfc]
        %v1355 = vld [vmem:[%s490 + $0x68] sm:$0x7]
        %v1356 = vld [vmem:[%s490 + $0x70] sm:$0xfc]
        %v1357 = vld [vmem:[%s490 + $0x78] sm:$0x7]
        %v1358 = vld [vmem:[%s490 + $0x80] sm:$0xfc]
        %v1359 = vld [vmem:[%s490 + $0x88] sm:$0x7]
        %v1360 = vld [vmem:[%s490 + $0x90] sm:$0xfc]
        %v1361 = vld [vmem:[%s490 + $0x98] sm:$0x7]
        %v1362 = vld [vmem:[%s490 + $0xa0] sm:$0xfc]
        %v1363 = vld [vmem:[%s490 + $0xa8] sm:$0x7]
        %v1364 = vld [vmem:[%s490 + $0xb0] sm:$0xfc]
        %v1365 = vld [vmem:[%s490 + $0xb8] sm:$0x7]
        %v1366 = vld [vmem:[%s490 + $0xc0] sm:$0xfc]
        %v1367 = vld [vmem:[%s490 + $0xc8] sm:$0x7]
        %v1368 = vld [vmem:[%s490 + $0xd0] sm:$0xfc]
        %v1369 = vld [vmem:[%s490 + $0xd8] sm:$0x7]
        %v1370 = vld [vmem:[%s490 + $0xe0] sm:$0xfc]
        %v1371 = vld [vmem:[%s490 + $0xe8] sm:$0x7]
        %v1372 = vld [vmem:[%s490 + $0xf0] sm:$0xfc]
        %v1373 = vld [vmem:[%s490 + $0xf8] sm:$0x7]
        %v1375 = vshrl.u32 %v1342, 16
        %v1377 = vrot.slane %v1375, 2
        %v1378 = vshll.u32 %v1342, 16
        %v1380 = vrot.slane %v1378, 3
        %v1381 = vor.u32 %v1377, %v1380
        %v1383 = vshrl.u32 %v1343, 16
        %v1385 = vrot.slane %v1383, 2
        %v1386 = vshll.u32 %v1343, 16
        %v1388 = vrot.slane %v1386, 3
        %v1389 = vor.u32 %v1385, %v1388
        %v1390 = vsel %vm555, %v1381, %v1389
        %v1392 = vshrl.u32 %v1344, 16
        %v1394 = vrot.slane %v1392, 2
        %v1395 = vshll.u32 %v1344, 16
        %v1397 = vrot.slane %v1395, 3
        %v1398 = vor.u32 %v1394, %v1397
        %v1400 = vshrl.u32 %v1345, 16
        %v1402 = vrot.slane %v1400, 2
        %v1403 = vshll.u32 %v1345, 16
        %v1405 = vrot.slane %v1403, 3
        %v1406 = vor.u32 %v1402, %v1405
        %v1407 = vsel %vm555, %v1398, %v1406
        %v1409 = vshrl.u32 %v1346, 16
        %v1411 = vrot.slane %v1409, 2
        %v1412 = vshll.u32 %v1346, 16
        %v1414 = vrot.slane %v1412, 3
        %v1415 = vor.u32 %v1411, %v1414
        %v1417 = vshrl.u32 %v1347, 16
        %v1419 = vrot.slane %v1417, 2
        %v1420 = vshll.u32 %v1347, 16
        %v1422 = vrot.slane %v1420, 3
        %v1423 = vor.u32 %v1419, %v1422
        %v1424 = vsel %vm555, %v1415, %v1423
        %v1426 = vshrl.u32 %v1348, 16
        %v1428 = vrot.slane %v1426, 2
        %v1429 = vshll.u32 %v1348, 16
        %v1431 = vrot.slane %v1429, 3
        %v1432 = vor.u32 %v1428, %v1431
        %v1434 = vshrl.u32 %v1349, 16
        %v1436 = vrot.slane %v1434, 2
        %v1437 = vshll.u32 %v1349, 16
        %v1439 = vrot.slane %v1437, 3
        %v1440 = vor.u32 %v1436, %v1439
        %v1441 = vsel %vm555, %v1432, %v1440
        %v1443 = vshrl.u32 %v1350, 16
        %v1445 = vrot.slane %v1443, 2
        %v1446 = vshll.u32 %v1350, 16
        %v1448 = vrot.slane %v1446, 3
        %v1449 = vor.u32 %v1445, %v1448
        %v1451 = vshrl.u32 %v1351, 16
        %v1453 = vrot.slane %v1451, 2
        %v1454 = vshll.u32 %v1351, 16
        %v1456 = vrot.slane %v1454, 3
        %v1457 = vor.u32 %v1453, %v1456
        %v1458 = vsel %vm555, %v1449, %v1457
        %v1460 = vshrl.u32 %v1352, 16
        %v1462 = vrot.slane %v1460, 2
        %v1463 = vshll.u32 %v1352, 16
        %v1465 = vrot.slane %v1463, 3
        %v1466 = vor.u32 %v1462, %v1465
        %v1468 = vshrl.u32 %v1353, 16
        %v1470 = vrot.slane %v1468, 2
        %v1471 = vshll.u32 %v1353, 16
        %v1473 = vrot.slane %v1471, 3
        %v1474 = vor.u32 %v1470, %v1473
        %v1475 = vsel %vm555, %v1466, %v1474
        %v1477 = vshrl.u32 %v1354, 16
        %v1479 = vrot.slane %v1477, 2
        %v1480 = vshll.u32 %v1354, 16
        %v1482 = vrot.slane %v1480, 3
        %v1483 = vor.u32 %v1479, %v1482
        %v1485 = vshrl.u32 %v1355, 16
        %v1487 = vrot.slane %v1485, 2
        %v1488 = vshll.u32 %v1355, 16
        %v1490 = vrot.slane %v1488, 3
        %v1491 = vor.u32 %v1487, %v1490
        %v1492 = vsel %vm555, %v1483, %v1491
        %v1494 = vshrl.u32 %v1356, 16
        %v1496 = vrot.slane %v1494, 2
        %v1497 = vshll.u32 %v1356, 16
        %v1499 = vrot.slane %v1497, 3
        %v1500 = vor.u32 %v1496, %v1499
        %v1502 = vshrl.u32 %v1357, 16
        %v1504 = vrot.slane %v1502, 2
        %v1505 = vshll.u32 %v1357, 16
        %v1507 = vrot.slane %v1505, 3
        %v1508 = vor.u32 %v1504, %v1507
        %v1509 = vsel %vm555, %v1500, %v1508
        %v1511 = vshrl.u32 %v1358, 16
        %v1513 = vrot.slane %v1511, 2
        %v1514 = vshll.u32 %v1358, 16
        %v1516 = vrot.slane %v1514, 3
        %v1517 = vor.u32 %v1513, %v1516
        %v1519 = vshrl.u32 %v1359, 16
        %v1521 = vrot.slane %v1519, 2
        %v1522 = vshll.u32 %v1359, 16
        %v1524 = vrot.slane %v1522, 3
        %v1525 = vor.u32 %v1521, %v1524
        %v1526 = vsel %vm555, %v1517, %v1525
        %v1528 = vshrl.u32 %v1360, 16
        %v1530 = vrot.slane %v1528, 2
        %v1531 = vshll.u32 %v1360, 16
        %v1533 = vrot.slane %v1531, 3
        %v1534 = vor.u32 %v1530, %v1533
        %v1536 = vshrl.u32 %v1361, 16
        %v1538 = vrot.slane %v1536, 2
        %v1539 = vshll.u32 %v1361, 16
        %v1541 = vrot.slane %v1539, 3
        %v1542 = vor.u32 %v1538, %v1541
        %v1543 = vsel %vm555, %v1534, %v1542
        %v1545 = vshrl.u32 %v1362, 16
        %v1547 = vrot.slane %v1545, 2
        %v1548 = vshll.u32 %v1362, 16
        %v1550 = vrot.slane %v1548, 3
        %v1551 = vor.u32 %v1547, %v1550
        %v1553 = vshrl.u32 %v1363, 16
        %v1555 = vrot.slane %v1553, 2
        %v1556 = vshll.u32 %v1363, 16
        %v1558 = vrot.slane %v1556, 3
        %v1559 = vor.u32 %v1555, %v1558
        %v1560 = vsel %vm555, %v1551, %v1559
        %v1562 = vshrl.u32 %v1364, 16
        %v1564 = vrot.slane %v1562, 2
        %v1565 = vshll.u32 %v1364, 16
        %v1567 = vrot.slane %v1565, 3
        %v1568 = vor.u32 %v1564, %v1567
        %v1570 = vshrl.u32 %v1365, 16
        %v1572 = vrot.slane %v1570, 2
        %v1573 = vshll.u32 %v1365, 16
        %v1575 = vrot.slane %v1573, 3
        %v1576 = vor.u32 %v1572, %v1575
        %v1577 = vsel %vm555, %v1568, %v1576
        %v1579 = vshrl.u32 %v1366, 16
        %v1581 = vrot.slane %v1579, 2
        %v1582 = vshll.u32 %v1366, 16
        %v1584 = vrot.slane %v1582, 3
        %v1585 = vor.u32 %v1581, %v1584
        %v1587 = vshrl.u32 %v1367, 16
        %v1589 = vrot.slane %v1587, 2
        %v1590 = vshll.u32 %v1367, 16
        %v1592 = vrot.slane %v1590, 3
        %v1593 = vor.u32 %v1589, %v1592
        %v1594 = vsel %vm555, %v1585, %v1593
        %v1596 = vshrl.u32 %v1368, 16
        %v1598 = vrot.slane %v1596, 2
        %v1599 = vshll.u32 %v1368, 16
        %v1601 = vrot.slane %v1599, 3
        %v1602 = vor.u32 %v1598, %v1601
        %v1604 = vshrl.u32 %v1369, 16
        %v1606 = vrot.slane %v1604, 2
        %v1607 = vshll.u32 %v1369, 16
        %v1609 = vrot.slane %v1607, 3
        %v1610 = vor.u32 %v1606, %v1609
        %v1611 = vsel %vm555, %v1602, %v1610
        %v1613 = vshrl.u32 %v1370, 16
        %v1615 = vrot.slane %v1613, 2
        %v1616 = vshll.u32 %v1370, 16
        %v1618 = vrot.slane %v1616, 3
        %v1619 = vor.u32 %v1615, %v1618
        %v1621 = vshrl.u32 %v1371, 16
        %v1623 = vrot.slane %v1621, 2
        %v1624 = vshll.u32 %v1371, 16
        %v1626 = vrot.slane %v1624, 3
        %v1627 = vor.u32 %v1623, %v1626
        %v1628 = vsel %vm555, %v1619, %v1627
        %v1630 = vshrl.u32 %v1372, 16
        %v1632 = vrot.slane %v1630, 2
        %v1633 = vshll.u32 %v1372, 16
        %v1635 = vrot.slane %v1633, 3
        %v1636 = vor.u32 %v1632, %v1635
        %v1638 = vshrl.u32 %v1373, 16
        %v1640 = vrot.slane %v1638, 2
        %v1641 = vshll.u32 %v1373, 16
        %v1643 = vrot.slane %v1641, 3
        %v1644 = vor.u32 %v1640, %v1643
        %v1645 = vsel %vm555, %v1636, %v1644
        %1662 = vst [vmem:[#allocation4 + $0x18] sm:$0xff] %v1390
        %1663 = vst [vmem:[#allocation4 + $0x60] sm:$0xff] %v1407
        %1664 = vst [vmem:[#allocation4 + $0xa8] sm:$0xff] %v1424
        %1665 = vst [vmem:[#allocation4 + $0xf0] sm:$0xff] %v1441
        %1666 = vst [vmem:[#allocation4 + $0x138] sm:$0xff] %v1458
        %1667 = vst [vmem:[#allocation4 + $0x180] sm:$0xff] %v1475
        %1668 = vst [vmem:[#allocation4 + $0x1c8] sm:$0xff] %v1492
        %1669 = vst [vmem:[#allocation4 + $0x210] sm:$0xff] %v1509
        %1670 = vst [vmem:[#allocation4 + $0x258] sm:$0xff] %v1526
        %1671 = vst [vmem:[#allocation4 + $0x2a0] sm:$0xff] %v1543
        %1672 = vst [vmem:[#allocation4 + $0x2e8] sm:$0xff] %v1560
        %1673 = vst [vmem:[#allocation4 + $0x330] sm:$0xff] %v1577
        %1674 = vst [vmem:[#allocation4 + $0x378] sm:$0xff] %v1594
        %1675 = vst [vmem:[#allocation4 + $0x3c0] sm:$0xff] %v1611
        %1676 = vst [vmem:[#allocation4 + $0x408] sm:$0xff] %v1628
        %1677 = vst [vmem:[#allocation4 + $0x450] sm:$0xff] %v1645
        %v1678 = vld [vmem:[%s490] sm:$0xf0]
        %v1679 = vld [vmem:[%s490 + $0x8] sm:$0xf]
        %v1680 = vld [vmem:[%s490 + $0x10] sm:$0xf0]
        %v1681 = vld [vmem:[%s490 + $0x18] sm:$0xf]
        %v1682 = vld [vmem:[%s490 + $0x20] sm:$0xf0]
        %v1683 = vld [vmem:[%s490 + $0x28] sm:$0xf]
        %v1684 = vld [vmem:[%s490 + $0x30] sm:$0xf0]
        %v1685 = vld [vmem:[%s490 + $0x38] sm:$0xf]
        %v1686 = vld [vmem:[%s490 + $0x40] sm:$0xf0]
        %v1687 = vld [vmem:[%s490 + $0x48] sm:$0xf]
        %v1688 = vld [vmem:[%s490 + $0x50] sm:$0xf0]
        %v1689 = vld [vmem:[%s490 + $0x58] sm:$0xf]
        %v1690 = vld [vmem:[%s490 + $0x60] sm:$0xf0]
        %v1691 = vld [vmem:[%s490 + $0x68] sm:$0xf]
        %v1692 = vld [vmem:[%s490 + $0x70] sm:$0xf0]
        %v1693 = vld [vmem:[%s490 + $0x78] sm:$0xf]
        %v1694 = vld [vmem:[%s490 + $0x80] sm:$0xf0]
        %v1695 = vld [vmem:[%s490 + $0x88] sm:$0xf]
        %v1696 = vld [vmem:[%s490 + $0x90] sm:$0xf0]
        %v1697 = vld [vmem:[%s490 + $0x98] sm:$0xf]
        %v1698 = vld [vmem:[%s490 + $0xa0] sm:$0xf0]
        %v1699 = vld [vmem:[%s490 + $0xa8] sm:$0xf]
        %v1700 = vld [vmem:[%s490 + $0xb0] sm:$0xf0]
        %v1701 = vld [vmem:[%s490 + $0xb8] sm:$0xf]
        %v1702 = vld [vmem:[%s490 + $0xc0] sm:$0xf0]
        %v1703 = vld [vmem:[%s490 + $0xc8] sm:$0xf]
        %v1704 = vld [vmem:[%s490 + $0xd0] sm:$0xf0]
        %v1705 = vld [vmem:[%s490 + $0xd8] sm:$0xf]
        %v1706 = vld [vmem:[%s490 + $0xe0] sm:$0xf0]
        %v1707 = vld [vmem:[%s490 + $0xe8] sm:$0xf]
        %v1708 = vld [vmem:[%s490 + $0xf0] sm:$0xf0]
        %v1709 = vld [vmem:[%s490 + $0xf8] sm:$0xf]
        %v1742 = vrot.slane %v1678, 4
        %v1743 = vrot.slane %v1679, 4
        %v1744 = vsel %vm924, %v1742, %v1743
        %v1745 = vrot.slane %v1680, 4
        %v1746 = vrot.slane %v1681, 4
        %v1747 = vsel %vm924, %v1745, %v1746
        %v1748 = vrot.slane %v1682, 4
        %v1749 = vrot.slane %v1683, 4
        %v1750 = vsel %vm924, %v1748, %v1749
        %v1751 = vrot.slane %v1684, 4
        %v1752 = vrot.slane %v1685, 4
        %v1753 = vsel %vm924, %v1751, %v1752
        %v1754 = vrot.slane %v1686, 4
        %v1755 = vrot.slane %v1687, 4
        %v1756 = vsel %vm924, %v1754, %v1755
        %v1757 = vrot.slane %v1688, 4
        %v1758 = vrot.slane %v1689, 4
        %v1759 = vsel %vm924, %v1757, %v1758
        %v1760 = vrot.slane %v1690, 4
        %v1761 = vrot.slane %v1691, 4
        %v1762 = vsel %vm924, %v1760, %v1761
        %v1763 = vrot.slane %v1692, 4
        %v1764 = vrot.slane %v1693, 4
        %v1765 = vsel %vm924, %v1763, %v1764
        %v1766 = vrot.slane %v1694, 4
        %v1767 = vrot.slane %v1695, 4
        %v1768 = vsel %vm924, %v1766, %v1767
        %v1769 = vrot.slane %v1696, 4
        %v1770 = vrot.slane %v1697, 4
        %v1771 = vsel %vm924, %v1769, %v1770
        %v1772 = vrot.slane %v1698, 4
        %v1773 = vrot.slane %v1699, 4
        %v1774 = vsel %vm924, %v1772, %v1773
        %v1775 = vrot.slane %v1700, 4
        %v1776 = vrot.slane %v1701, 4
        %v1777 = vsel %vm924, %v1775, %v1776
        %v1778 = vrot.slane %v1702, 4
        %v1779 = vrot.slane %v1703, 4
        %v1780 = vsel %vm924, %v1778, %v1779
        %v1781 = vrot.slane %v1704, 4
        %v1782 = vrot.slane %v1705, 4
        %v1783 = vsel %vm924, %v1781, %v1782
        %v1784 = vrot.slane %v1706, 4
        %v1785 = vrot.slane %v1707, 4
        %v1786 = vsel %vm924, %v1784, %v1785
        %v1787 = vrot.slane %v1708, 4
        %v1788 = vrot.slane %v1709, 4
        %v1789 = vsel %vm924, %v1787, %v1788
        %1806 = vst [vmem:[#allocation4 + $0x20] sm:$0xff] %v1744
        %1807 = vst [vmem:[#allocation4 + $0x68] sm:$0xff] %v1747
        %1808 = vst [vmem:[#allocation4 + $0xb0] sm:$0xff] %v1750
        %1809 = vst [vmem:[#allocation4 + $0xf8] sm:$0xff] %v1753
        %1810 = vst [vmem:[#allocation4 + $0x140] sm:$0xff] %v1756
        %1811 = vst [vmem:[#allocation4 + $0x188] sm:$0xff] %v1759
        %1812 = vst [vmem:[#allocation4 + $0x1d0] sm:$0xff] %v1762
        %1813 = vst [vmem:[#allocation4 + $0x218] sm:$0xff] %v1765
        %1814 = vst [vmem:[#allocation4 + $0x260] sm:$0xff] %v1768
        %1815 = vst [vmem:[#allocation4 + $0x2a8] sm:$0xff] %v1771
        %1816 = vst [vmem:[#allocation4 + $0x2f0] sm:$0xff] %v1774
        %1817 = vst [vmem:[#allocation4 + $0x338] sm:$0xff] %v1777
        %1818 = vst [vmem:[#allocation4 + $0x380] sm:$0xff] %v1780
        %1819 = vst [vmem:[#allocation4 + $0x3c8] sm:$0xff] %v1783
        %1820 = vst [vmem:[#allocation4 + $0x410] sm:$0xff] %v1786
        %1821 = vst [vmem:[#allocation4 + $0x458] sm:$0xff] %v1789
        %v1822 = vld [vmem:[%s490] sm:$0xe0]
        %v1823 = vld [vmem:[%s490 + $0x8] sm:$0x3f]
        %v1824 = vld [vmem:[%s490 + $0x10] sm:$0xe0]
        %v1825 = vld [vmem:[%s490 + $0x18] sm:$0x3f]
        %v1826 = vld [vmem:[%s490 + $0x20] sm:$0xe0]
        %v1827 = vld [vmem:[%s490 + $0x28] sm:$0x3f]
        %v1828 = vld [vmem:[%s490 + $0x30] sm:$0xe0]
        %v1829 = vld [vmem:[%s490 + $0x38] sm:$0x3f]
        %v1830 = vld [vmem:[%s490 + $0x40] sm:$0xe0]
        %v1831 = vld [vmem:[%s490 + $0x48] sm:$0x3f]
        %v1832 = vld [vmem:[%s490 + $0x50] sm:$0xe0]
        %v1833 = vld [vmem:[%s490 + $0x58] sm:$0x3f]
        %v1834 = vld [vmem:[%s490 + $0x60] sm:$0xe0]
        %v1835 = vld [vmem:[%s490 + $0x68] sm:$0x3f]
        %v1836 = vld [vmem:[%s490 + $0x70] sm:$0xe0]
        %v1837 = vld [vmem:[%s490 + $0x78] sm:$0x3f]
        %v1838 = vld [vmem:[%s490 + $0x80] sm:$0xe0]
        %v1839 = vld [vmem:[%s490 + $0x88] sm:$0x3f]
        %v1840 = vld [vmem:[%s490 + $0x90] sm:$0xe0]
        %v1841 = vld [vmem:[%s490 + $0x98] sm:$0x3f]
        %v1842 = vld [vmem:[%s490 + $0xa0] sm:$0xe0]
        %v1843 = vld [vmem:[%s490 + $0xa8] sm:$0x3f]
        %v1844 = vld [vmem:[%s490 + $0xb0] sm:$0xe0]
        %v1845 = vld [vmem:[%s490 + $0xb8] sm:$0x3f]
        %v1846 = vld [vmem:[%s490 + $0xc0] sm:$0xe0]
        %v1847 = vld [vmem:[%s490 + $0xc8] sm:$0x3f]
        %v1848 = vld [vmem:[%s490 + $0xd0] sm:$0xe0]
        %v1849 = vld [vmem:[%s490 + $0xd8] sm:$0x3f]
        %v1850 = vld [vmem:[%s490 + $0xe0] sm:$0xe0]
        %v1851 = vld [vmem:[%s490 + $0xe8] sm:$0x3f]
        %v1852 = vld [vmem:[%s490 + $0xf0] sm:$0xe0]
        %v1853 = vld [vmem:[%s490 + $0xf8] sm:$0x3f]
        %v1855 = vshrl.u32 %v1822, 16
        %v1857 = vrot.slane %v1855, 5
        %v1858 = vshll.u32 %v1822, 16
        %v1860 = vrot.slane %v1858, 6
        %v1861 = vor.u32 %v1857, %v1860
        %v1863 = vshrl.u32 %v1823, 16
        %v1865 = vrot.slane %v1863, 5
        %v1866 = vshll.u32 %v1823, 16
        %v1868 = vrot.slane %v1866, 6
        %v1869 = vor.u32 %v1865, %v1868
        %v1870 = vsel %vm1037, %v1861, %v1869
        %v1872 = vshrl.u32 %v1824, 16
        %v1874 = vrot.slane %v1872, 5
        %v1875 = vshll.u32 %v1824, 16
        %v1877 = vrot.slane %v1875, 6
        %v1878 = vor.u32 %v1874, %v1877
        %v1880 = vshrl.u32 %v1825, 16
        %v1882 = vrot.slane %v1880, 5
        %v1883 = vshll.u32 %v1825, 16
        %v1885 = vrot.slane %v1883, 6
        %v1886 = vor.u32 %v1882, %v1885
        %v1887 = vsel %vm1037, %v1878, %v1886
        %v1889 = vshrl.u32 %v1826, 16
        %v1891 = vrot.slane %v1889, 5
        %v1892 = vshll.u32 %v1826, 16
        %v1894 = vrot.slane %v1892, 6
        %v1895 = vor.u32 %v1891, %v1894
        %v1897 = vshrl.u32 %v1827, 16
        %v1899 = vrot.slane %v1897, 5
        %v1900 = vshll.u32 %v1827, 16
        %v1902 = vrot.slane %v1900, 6
        %v1903 = vor.u32 %v1899, %v1902
        %v1904 = vsel %vm1037, %v1895, %v1903
        %v1906 = vshrl.u32 %v1828, 16
        %v1908 = vrot.slane %v1906, 5
        %v1909 = vshll.u32 %v1828, 16
        %v1911 = vrot.slane %v1909, 6
        %v1912 = vor.u32 %v1908, %v1911
        %v1914 = vshrl.u32 %v1829, 16
        %v1916 = vrot.slane %v1914, 5
        %v1917 = vshll.u32 %v1829, 16
        %v1919 = vrot.slane %v1917, 6
        %v1920 = vor.u32 %v1916, %v1919
        %v1921 = vsel %vm1037, %v1912, %v1920
        %v1923 = vshrl.u32 %v1830, 16
        %v1925 = vrot.slane %v1923, 5
        %v1926 = vshll.u32 %v1830, 16
        %v1928 = vrot.slane %v1926, 6
        %v1929 = vor.u32 %v1925, %v1928
        %v1931 = vshrl.u32 %v1831, 16
        %v1933 = vrot.slane %v1931, 5
        %v1934 = vshll.u32 %v1831, 16
        %v1936 = vrot.slane %v1934, 6
        %v1937 = vor.u32 %v1933, %v1936
        %v1938 = vsel %vm1037, %v1929, %v1937
        %v1940 = vshrl.u32 %v1832, 16
        %v1942 = vrot.slane %v1940, 5
        %v1943 = vshll.u32 %v1832, 16
        %v1945 = vrot.slane %v1943, 6
        %v1946 = vor.u32 %v1942, %v1945
        %v1948 = vshrl.u32 %v1833, 16
        %v1950 = vrot.slane %v1948, 5
        %v1951 = vshll.u32 %v1833, 16
        %v1953 = vrot.slane %v1951, 6
        %v1954 = vor.u32 %v1950, %v1953
        %v1955 = vsel %vm1037, %v1946, %v1954
        %v1957 = vshrl.u32 %v1834, 16
        %v1959 = vrot.slane %v1957, 5
        %v1960 = vshll.u32 %v1834, 16
        %v1962 = vrot.slane %v1960, 6
        %v1963 = vor.u32 %v1959, %v1962
        %v1965 = vshrl.u32 %v1835, 16
        %v1967 = vrot.slane %v1965, 5
        %v1968 = vshll.u32 %v1835, 16
        %v1970 = vrot.slane %v1968, 6
        %v1971 = vor.u32 %v1967, %v1970
        %v1972 = vsel %vm1037, %v1963, %v1971
        %v1974 = vshrl.u32 %v1836, 16
        %v1976 = vrot.slane %v1974, 5
        %v1977 = vshll.u32 %v1836, 16
        %v1979 = vrot.slane %v1977, 6
        %v1980 = vor.u32 %v1976, %v1979
        %v1982 = vshrl.u32 %v1837, 16
        %v1984 = vrot.slane %v1982, 5
        %v1985 = vshll.u32 %v1837, 16
        %v1987 = vrot.slane %v1985, 6
        %v1988 = vor.u32 %v1984, %v1987
        %v1989 = vsel %vm1037, %v1980, %v1988
        %v1991 = vshrl.u32 %v1838, 16
        %v1993 = vrot.slane %v1991, 5
        %v1994 = vshll.u32 %v1838, 16
        %v1996 = vrot.slane %v1994, 6
        %v1997 = vor.u32 %v1993, %v1996
        %v1999 = vshrl.u32 %v1839, 16
        %v2001 = vrot.slane %v1999, 5
        %v2002 = vshll.u32 %v1839, 16
        %v2004 = vrot.slane %v2002, 6
        %v2005 = vor.u32 %v2001, %v2004
        %v2006 = vsel %vm1037, %v1997, %v2005
        %v2008 = vshrl.u32 %v1840, 16
        %v2010 = vrot.slane %v2008, 5
        %v2011 = vshll.u32 %v1840, 16
        %v2013 = vrot.slane %v2011, 6
        %v2014 = vor.u32 %v2010, %v2013
        %v2016 = vshrl.u32 %v1841, 16
        %v2018 = vrot.slane %v2016, 5
        %v2019 = vshll.u32 %v1841, 16
        %v2021 = vrot.slane %v2019, 6
        %v2022 = vor.u32 %v2018, %v2021
        %v2023 = vsel %vm1037, %v2014, %v2022
        %v2025 = vshrl.u32 %v1842, 16
        %v2027 = vrot.slane %v2025, 5
        %v2028 = vshll.u32 %v1842, 16
        %v2030 = vrot.slane %v2028, 6
        %v2031 = vor.u32 %v2027, %v2030
        %v2033 = vshrl.u32 %v1843, 16
        %v2035 = vrot.slane %v2033, 5
        %v2036 = vshll.u32 %v1843, 16
        %v2038 = vrot.slane %v2036, 6
        %v2039 = vor.u32 %v2035, %v2038
        %v2040 = vsel %vm1037, %v2031, %v2039
        %v2042 = vshrl.u32 %v1844, 16
        %v2044 = vrot.slane %v2042, 5
        %v2045 = vshll.u32 %v1844, 16
        %v2047 = vrot.slane %v2045, 6
        %v2048 = vor.u32 %v2044, %v2047
        %v2050 = vshrl.u32 %v1845, 16
        %v2052 = vrot.slane %v2050, 5
        %v2053 = vshll.u32 %v1845, 16
        %v2055 = vrot.slane %v2053, 6
        %v2056 = vor.u32 %v2052, %v2055
        %v2057 = vsel %vm1037, %v2048, %v2056
        %v2059 = vshrl.u32 %v1846, 16
        %v2061 = vrot.slane %v2059, 5
        %v2062 = vshll.u32 %v1846, 16
        %v2064 = vrot.slane %v2062, 6
        %v2065 = vor.u32 %v2061, %v2064
        %v2067 = vshrl.u32 %v1847, 16
        %v2069 = vrot.slane %v2067, 5
        %v2070 = vshll.u32 %v1847, 16
        %v2072 = vrot.slane %v2070, 6
        %v2073 = vor.u32 %v2069, %v2072
        %v2074 = vsel %vm1037, %v2065, %v2073
        %v2076 = vshrl.u32 %v1848, 16
        %v2078 = vrot.slane %v2076, 5
        %v2079 = vshll.u32 %v1848, 16
        %v2081 = vrot.slane %v2079, 6
        %v2082 = vor.u32 %v2078, %v2081
        %v2084 = vshrl.u32 %v1849, 16
        %v2086 = vrot.slane %v2084, 5
        %v2087 = vshll.u32 %v1849, 16
        %v2089 = vrot.slane %v2087, 6
        %v2090 = vor.u32 %v2086, %v2089
        %v2091 = vsel %vm1037, %v2082, %v2090
        %v2093 = vshrl.u32 %v1850, 16
        %v2095 = vrot.slane %v2093, 5
        %v2096 = vshll.u32 %v1850, 16
        %v2098 = vrot.slane %v2096, 6
        %v2099 = vor.u32 %v2095, %v2098
        %v2101 = vshrl.u32 %v1851, 16
        %v2103 = vrot.slane %v2101, 5
        %v2104 = vshll.u32 %v1851, 16
        %v2106 = vrot.slane %v2104, 6
        %v2107 = vor.u32 %v2103, %v2106
        %v2108 = vsel %vm1037, %v2099, %v2107
        %v2110 = vshrl.u32 %v1852, 16
        %v2112 = vrot.slane %v2110, 5
        %v2113 = vshll.u32 %v1852, 16
        %v2115 = vrot.slane %v2113, 6
        %v2116 = vor.u32 %v2112, %v2115
        %v2118 = vshrl.u32 %v1853, 16
        %v2120 = vrot.slane %v2118, 5
        %v2121 = vshll.u32 %v1853, 16
        %v2123 = vrot.slane %v2121, 6
        %v2124 = vor.u32 %v2120, %v2123
        %v2125 = vsel %vm1037, %v2116, %v2124
        %2142 = vst [vmem:[#allocation4 + $0x28] sm:$0xff] %v1870
        %2143 = vst [vmem:[#allocation4 + $0x70] sm:$0xff] %v1887
        %2144 = vst [vmem:[#allocation4 + $0xb8] sm:$0xff] %v1904
        %2145 = vst [vmem:[#allocation4 + $0x100] sm:$0xff] %v1921
        %2146 = vst [vmem:[#allocation4 + $0x148] sm:$0xff] %v1938
        %2147 = vst [vmem:[#allocation4 + $0x190] sm:$0xff] %v1955
        %2148 = vst [vmem:[#allocation4 + $0x1d8] sm:$0xff] %v1972
        %2149 = vst [vmem:[#allocation4 + $0x220] sm:$0xff] %v1989
        %2150 = vst [vmem:[#allocation4 + $0x268] sm:$0xff] %v2006
        %2151 = vst [vmem:[#allocation4 + $0x2b0] sm:$0xff] %v2023
        %2152 = vst [vmem:[#allocation4 + $0x2f8] sm:$0xff] %v2040
        %2153 = vst [vmem:[#allocation4 + $0x340] sm:$0xff] %v2057
        %2154 = vst [vmem:[#allocation4 + $0x388] sm:$0xff] %v2074
        %2155 = vst [vmem:[#allocation4 + $0x3d0] sm:$0xff] %v2091
        %2156 = vst [vmem:[#allocation4 + $0x418] sm:$0xff] %v2108
        %2157 = vst [vmem:[#allocation4 + $0x460] sm:$0xff] %v2125
        %s2158 = scalar_lea.vmem [#allocation2], 96
        %v2159 = vld [vmem:[%s2158] sm:$0xfc]
        %v2160 = vld [vmem:[%s2158 + $0x8] sm:$0x7]
        %v2161 = vld [vmem:[%s2158 + $0x10] sm:$0xfc]
        %v2162 = vld [vmem:[%s2158 + $0x18] sm:$0x7]
        %v2163 = vld [vmem:[%s2158 + $0x20] sm:$0xfc]
        %v2164 = vld [vmem:[%s2158 + $0x28] sm:$0x7]
        %v2165 = vld [vmem:[%s2158 + $0x30] sm:$0xfc]
        %v2166 = vld [vmem:[%s2158 + $0x38] sm:$0x7]
        %v2167 = vld [vmem:[%s2158 + $0x40] sm:$0xfc]
        %v2168 = vld [vmem:[%s2158 + $0x48] sm:$0x7]
        %v2169 = vld [vmem:[%s2158 + $0x50] sm:$0xfc]
        %v2170 = vld [vmem:[%s2158 + $0x58] sm:$0x7]
        %v2171 = vld [vmem:[%s2158 + $0x60] sm:$0xfc]
        %v2172 = vld [vmem:[%s2158 + $0x68] sm:$0x7]
        %v2173 = vld [vmem:[%s2158 + $0x70] sm:$0xfc]
        %v2174 = vld [vmem:[%s2158 + $0x78] sm:$0x7]
        %v2175 = vld [vmem:[%s2158 + $0x80] sm:$0xfc]
        %v2176 = vld [vmem:[%s2158 + $0x88] sm:$0x7]
        %v2177 = vld [vmem:[%s2158 + $0x90] sm:$0xfc]
        %v2178 = vld [vmem:[%s2158 + $0x98] sm:$0x7]
        %v2179 = vld [vmem:[%s2158 + $0xa0] sm:$0xfc]
        %v2180 = vld [vmem:[%s2158 + $0xa8] sm:$0x7]
        %v2181 = vld [vmem:[%s2158 + $0xb0] sm:$0xfc]
        %v2182 = vld [vmem:[%s2158 + $0xb8] sm:$0x7]
        %v2183 = vld [vmem:[%s2158 + $0xc0] sm:$0xfc]
        %v2184 = vld [vmem:[%s2158 + $0xc8] sm:$0x7]
        %v2185 = vld [vmem:[%s2158 + $0xd0] sm:$0xfc]
        %v2186 = vld [vmem:[%s2158 + $0xd8] sm:$0x7]
        %v2187 = vld [vmem:[%s2158 + $0xe0] sm:$0xfc]
        %v2188 = vld [vmem:[%s2158 + $0xe8] sm:$0x7]
        %v2189 = vld [vmem:[%s2158 + $0xf0] sm:$0xfc]
        %v2190 = vld [vmem:[%s2158 + $0xf8] sm:$0x7]
        %v2192 = vshrl.u32 %v2159, 16
        %v2194 = vrot.slane %v2192, 2
        %v2195 = vshll.u32 %v2159, 16
        %v2197 = vrot.slane %v2195, 3
        %v2198 = vor.u32 %v2194, %v2197
        %v2200 = vshrl.u32 %v2160, 16
        %v2202 = vrot.slane %v2200, 2
        %v2203 = vshll.u32 %v2160, 16
        %v2205 = vrot.slane %v2203, 3
        %v2206 = vor.u32 %v2202, %v2205
        %v2207 = vsel %vm555, %v2198, %v2206
        %v2209 = vshrl.u32 %v2161, 16
        %v2211 = vrot.slane %v2209, 2
        %v2212 = vshll.u32 %v2161, 16
        %v2214 = vrot.slane %v2212, 3
        %v2215 = vor.u32 %v2211, %v2214
        %v2217 = vshrl.u32 %v2162, 16
        %v2219 = vrot.slane %v2217, 2
        %v2220 = vshll.u32 %v2162, 16
        %v2222 = vrot.slane %v2220, 3
        %v2223 = vor.u32 %v2219, %v2222
        %v2224 = vsel %vm555, %v2215, %v2223
        %v2226 = vshrl.u32 %v2163, 16
        %v2228 = vrot.slane %v2226, 2
        %v2229 = vshll.u32 %v2163, 16
        %v2231 = vrot.slane %v2229, 3
        %v2232 = vor.u32 %v2228, %v2231
        %v2234 = vshrl.u32 %v2164, 16
        %v2236 = vrot.slane %v2234, 2
        %v2237 = vshll.u32 %v2164, 16
        %v2239 = vrot.slane %v2237, 3
        %v2240 = vor.u32 %v2236, %v2239
        %v2241 = vsel %vm555, %v2232, %v2240
        %v2243 = vshrl.u32 %v2165, 16
        %v2245 = vrot.slane %v2243, 2
        %v2246 = vshll.u32 %v2165, 16
        %v2248 = vrot.slane %v2246, 3
        %v2249 = vor.u32 %v2245, %v2248
        %v2251 = vshrl.u32 %v2166, 16
        %v2253 = vrot.slane %v2251, 2
        %v2254 = vshll.u32 %v2166, 16
        %v2256 = vrot.slane %v2254, 3
        %v2257 = vor.u32 %v2253, %v2256
        %v2258 = vsel %vm555, %v2249, %v2257
        %v2260 = vshrl.u32 %v2167, 16
        %v2262 = vrot.slane %v2260, 2
        %v2263 = vshll.u32 %v2167, 16
        %v2265 = vrot.slane %v2263, 3
        %v2266 = vor.u32 %v2262, %v2265
        %v2268 = vshrl.u32 %v2168, 16
        %v2270 = vrot.slane %v2268, 2
        %v2271 = vshll.u32 %v2168, 16
        %v2273 = vrot.slane %v2271, 3
        %v2274 = vor.u32 %v2270, %v2273
        %v2275 = vsel %vm555, %v2266, %v2274
        %v2277 = vshrl.u32 %v2169, 16
        %v2279 = vrot.slane %v2277, 2
        %v2280 = vshll.u32 %v2169, 16
        %v2282 = vrot.slane %v2280, 3
        %v2283 = vor.u32 %v2279, %v2282
        %v2285 = vshrl.u32 %v2170, 16
        %v2287 = vrot.slane %v2285, 2
        %v2288 = vshll.u32 %v2170, 16
        %v2290 = vrot.slane %v2288, 3
        %v2291 = vor.u32 %v2287, %v2290
        %v2292 = vsel %vm555, %v2283, %v2291
        %v2294 = vshrl.u32 %v2171, 16
        %v2296 = vrot.slane %v2294, 2
        %v2297 = vshll.u32 %v2171, 16
        %v2299 = vrot.slane %v2297, 3
        %v2300 = vor.u32 %v2296, %v2299
        %v2302 = vshrl.u32 %v2172, 16
        %v2304 = vrot.slane %v2302, 2
        %v2305 = vshll.u32 %v2172, 16
        %v2307 = vrot.slane %v2305, 3
        %v2308 = vor.u32 %v2304, %v2307
        %v2309 = vsel %vm555, %v2300, %v2308
        %v2311 = vshrl.u32 %v2173, 16
        %v2313 = vrot.slane %v2311, 2
        %v2314 = vshll.u32 %v2173, 16
        %v2316 = vrot.slane %v2314, 3
        %v2317 = vor.u32 %v2313, %v2316
        %v2319 = vshrl.u32 %v2174, 16
        %v2321 = vrot.slane %v2319, 2
        %v2322 = vshll.u32 %v2174, 16
        %v2324 = vrot.slane %v2322, 3
        %v2325 = vor.u32 %v2321, %v2324
        %v2326 = vsel %vm555, %v2317, %v2325
        %v2328 = vshrl.u32 %v2175, 16
        %v2330 = vrot.slane %v2328, 2
        %v2331 = vshll.u32 %v2175, 16
        %v2333 = vrot.slane %v2331, 3
        %v2334 = vor.u32 %v2330, %v2333
        %v2336 = vshrl.u32 %v2176, 16
        %v2338 = vrot.slane %v2336, 2
        %v2339 = vshll.u32 %v2176, 16
        %v2341 = vrot.slane %v2339, 3
        %v2342 = vor.u32 %v2338, %v2341
        %v2343 = vsel %vm555, %v2334, %v2342
        %v2345 = vshrl.u32 %v2177, 16
        %v2347 = vrot.slane %v2345, 2
        %v2348 = vshll.u32 %v2177, 16
        %v2350 = vrot.slane %v2348, 3
        %v2351 = vor.u32 %v2347, %v2350
        %v2353 = vshrl.u32 %v2178, 16
        %v2355 = vrot.slane %v2353, 2
        %v2356 = vshll.u32 %v2178, 16
        %v2358 = vrot.slane %v2356, 3
        %v2359 = vor.u32 %v2355, %v2358
        %v2360 = vsel %vm555, %v2351, %v2359
        %v2362 = vshrl.u32 %v2179, 16
        %v2364 = vrot.slane %v2362, 2
        %v2365 = vshll.u32 %v2179, 16
        %v2367 = vrot.slane %v2365, 3
        %v2368 = vor.u32 %v2364, %v2367
        %v2370 = vshrl.u32 %v2180, 16
        %v2372 = vrot.slane %v2370, 2
        %v2373 = vshll.u32 %v2180, 16
        %v2375 = vrot.slane %v2373, 3
        %v2376 = vor.u32 %v2372, %v2375
        %v2377 = vsel %vm555, %v2368, %v2376
        %v2379 = vshrl.u32 %v2181, 16
        %v2381 = vrot.slane %v2379, 2
        %v2382 = vshll.u32 %v2181, 16
        %v2384 = vrot.slane %v2382, 3
        %v2385 = vor.u32 %v2381, %v2384
        %v2387 = vshrl.u32 %v2182, 16
        %v2389 = vrot.slane %v2387, 2
        %v2390 = vshll.u32 %v2182, 16
        %v2392 = vrot.slane %v2390, 3
        %v2393 = vor.u32 %v2389, %v2392
        %v2394 = vsel %vm555, %v2385, %v2393
        %v2396 = vshrl.u32 %v2183, 16
        %v2398 = vrot.slane %v2396, 2
        %v2399 = vshll.u32 %v2183, 16
        %v2401 = vrot.slane %v2399, 3
        %v2402 = vor.u32 %v2398, %v2401
        %v2404 = vshrl.u32 %v2184, 16
        %v2406 = vrot.slane %v2404, 2
        %v2407 = vshll.u32 %v2184, 16
        %v2409 = vrot.slane %v2407, 3
        %v2410 = vor.u32 %v2406, %v2409
        %v2411 = vsel %vm555, %v2402, %v2410
        %v2413 = vshrl.u32 %v2185, 16
        %v2415 = vrot.slane %v2413, 2
        %v2416 = vshll.u32 %v2185, 16
        %v2418 = vrot.slane %v2416, 3
        %v2419 = vor.u32 %v2415, %v2418
        %v2421 = vshrl.u32 %v2186, 16
        %v2423 = vrot.slane %v2421, 2
        %v2424 = vshll.u32 %v2186, 16
        %v2426 = vrot.slane %v2424, 3
        %v2427 = vor.u32 %v2423, %v2426
        %v2428 = vsel %vm555, %v2419, %v2427
        %v2430 = vshrl.u32 %v2187, 16
        %v2432 = vrot.slane %v2430, 2
        %v2433 = vshll.u32 %v2187, 16
        %v2435 = vrot.slane %v2433, 3
        %v2436 = vor.u32 %v2432, %v2435
        %v2438 = vshrl.u32 %v2188, 16
        %v2440 = vrot.slane %v2438, 2
        %v2441 = vshll.u32 %v2188, 16
        %v2443 = vrot.slane %v2441, 3
        %v2444 = vor.u32 %v2440, %v2443
        %v2445 = vsel %vm555, %v2436, %v2444
        %v2447 = vshrl.u32 %v2189, 16
        %v2449 = vrot.slane %v2447, 2
        %v2450 = vshll.u32 %v2189, 16
        %v2452 = vrot.slane %v2450, 3
        %v2453 = vor.u32 %v2449, %v2452
        %v2455 = vshrl.u32 %v2190, 16
        %v2457 = vrot.slane %v2455, 2
        %v2458 = vshll.u32 %v2190, 16
        %v2460 = vrot.slane %v2458, 3
        %v2461 = vor.u32 %v2457, %v2460
        %v2462 = vsel %vm555, %v2453, %v2461
        %2479 = vst [vmem:[#allocation4 + $0x30] sm:$0xff] %v2207
        %2480 = vst [vmem:[#allocation4 + $0x78] sm:$0xff] %v2224
        %2481 = vst [vmem:[#allocation4 + $0xc0] sm:$0xff] %v2241
        %2482 = vst [vmem:[#allocation4 + $0x108] sm:$0xff] %v2258
        %2483 = vst [vmem:[#allocation4 + $0x150] sm:$0xff] %v2275
        %2484 = vst [vmem:[#allocation4 + $0x198] sm:$0xff] %v2292
        %2485 = vst [vmem:[#allocation4 + $0x1e0] sm:$0xff] %v2309
        %2486 = vst [vmem:[#allocation4 + $0x228] sm:$0xff] %v2326
        %2487 = vst [vmem:[#allocation4 + $0x270] sm:$0xff] %v2343
        %2488 = vst [vmem:[#allocation4 + $0x2b8] sm:$0xff] %v2360
        %2489 = vst [vmem:[#allocation4 + $0x300] sm:$0xff] %v2377
        %2490 = vst [vmem:[#allocation4 + $0x348] sm:$0xff] %v2394
        %2491 = vst [vmem:[#allocation4 + $0x390] sm:$0xff] %v2411
        %2492 = vst [vmem:[#allocation4 + $0x3d8] sm:$0xff] %v2428
        %2493 = vst [vmem:[#allocation4 + $0x420] sm:$0xff] %v2445
        %2494 = vst [vmem:[#allocation4 + $0x468] sm:$0xff] %v2462
        %v2495 = vld [vmem:[%s2158] sm:$0xf0]
        %v2496 = vld [vmem:[%s2158 + $0x8] sm:$0xf]
        %v2497 = vld [vmem:[%s2158 + $0x10] sm:$0xf0]
        %v2498 = vld [vmem:[%s2158 + $0x18] sm:$0xf]
        %v2499 = vld [vmem:[%s2158 + $0x20] sm:$0xf0]
        %v2500 = vld [vmem:[%s2158 + $0x28] sm:$0xf]
        %v2501 = vld [vmem:[%s2158 + $0x30] sm:$0xf0]
        %v2502 = vld [vmem:[%s2158 + $0x38] sm:$0xf]
        %v2503 = vld [vmem:[%s2158 + $0x40] sm:$0xf0]
        %v2504 = vld [vmem:[%s2158 + $0x48] sm:$0xf]
        %v2505 = vld [vmem:[%s2158 + $0x50] sm:$0xf0]
        %v2506 = vld [vmem:[%s2158 + $0x58] sm:$0xf]
        %v2507 = vld [vmem:[%s2158 + $0x60] sm:$0xf0]
        %v2508 = vld [vmem:[%s2158 + $0x68] sm:$0xf]
        %v2509 = vld [vmem:[%s2158 + $0x70] sm:$0xf0]
        %v2510 = vld [vmem:[%s2158 + $0x78] sm:$0xf]
        %v2511 = vld [vmem:[%s2158 + $0x80] sm:$0xf0]
        %v2512 = vld [vmem:[%s2158 + $0x88] sm:$0xf]
        %v2513 = vld [vmem:[%s2158 + $0x90] sm:$0xf0]
        %v2514 = vld [vmem:[%s2158 + $0x98] sm:$0xf]
        %v2515 = vld [vmem:[%s2158 + $0xa0] sm:$0xf0]
        %v2516 = vld [vmem:[%s2158 + $0xa8] sm:$0xf]
        %v2517 = vld [vmem:[%s2158 + $0xb0] sm:$0xf0]
        %v2518 = vld [vmem:[%s2158 + $0xb8] sm:$0xf]
        %v2519 = vld [vmem:[%s2158 + $0xc0] sm:$0xf0]
        %v2520 = vld [vmem:[%s2158 + $0xc8] sm:$0xf]
        %v2521 = vld [vmem:[%s2158 + $0xd0] sm:$0xf0]
        %v2522 = vld [vmem:[%s2158 + $0xd8] sm:$0xf]
        %v2523 = vld [vmem:[%s2158 + $0xe0] sm:$0xf0]
        %v2524 = vld [vmem:[%s2158 + $0xe8] sm:$0xf]
        %v2525 = vld [vmem:[%s2158 + $0xf0] sm:$0xf0]
        %v2526 = vld [vmem:[%s2158 + $0xf8] sm:$0xf]
        %v2559 = vrot.slane %v2495, 4
        %v2560 = vrot.slane %v2496, 4
        %v2561 = vsel %vm924, %v2559, %v2560
        %v2562 = vrot.slane %v2497, 4
        %v2563 = vrot.slane %v2498, 4
        %v2564 = vsel %vm924, %v2562, %v2563
        %v2565 = vrot.slane %v2499, 4
        %v2566 = vrot.slane %v2500, 4
        %v2567 = vsel %vm924, %v2565, %v2566
        %v2568 = vrot.slane %v2501, 4
        %v2569 = vrot.slane %v2502, 4
        %v2570 = vsel %vm924, %v2568, %v2569
        %v2571 = vrot.slane %v2503, 4
        %v2572 = vrot.slane %v2504, 4
        %v2573 = vsel %vm924, %v2571, %v2572
        %v2574 = vrot.slane %v2505, 4
        %v2575 = vrot.slane %v2506, 4
        %v2576 = vsel %vm924, %v2574, %v2575
        %v2577 = vrot.slane %v2507, 4
        %v2578 = vrot.slane %v2508, 4
        %v2579 = vsel %vm924, %v2577, %v2578
        %v2580 = vrot.slane %v2509, 4
        %v2581 = vrot.slane %v2510, 4
        %v2582 = vsel %vm924, %v2580, %v2581
        %v2583 = vrot.slane %v2511, 4
        %v2584 = vrot.slane %v2512, 4
        %v2585 = vsel %vm924, %v2583, %v2584
        %v2586 = vrot.slane %v2513, 4
        %v2587 = vrot.slane %v2514, 4
        %v2588 = vsel %vm924, %v2586, %v2587
        %v2589 = vrot.slane %v2515, 4
        %v2590 = vrot.slane %v2516, 4
        %v2591 = vsel %vm924, %v2589, %v2590
        %v2592 = vrot.slane %v2517, 4
        %v2593 = vrot.slane %v2518, 4
        %v2594 = vsel %vm924, %v2592, %v2593
        %v2595 = vrot.slane %v2519, 4
        %v2596 = vrot.slane %v2520, 4
        %v2597 = vsel %vm924, %v2595, %v2596
        %v2598 = vrot.slane %v2521, 4
        %v2599 = vrot.slane %v2522, 4
        %v2600 = vsel %vm924, %v2598, %v2599
        %v2601 = vrot.slane %v2523, 4
        %v2602 = vrot.slane %v2524, 4
        %v2603 = vsel %vm924, %v2601, %v2602
        %v2604 = vrot.slane %v2525, 4
        %v2605 = vrot.slane %v2526, 4
        %v2606 = vsel %vm924, %v2604, %v2605
        %2623 = vst [vmem:[#allocation4 + $0x38] sm:$0xff] %v2561
        %2624 = vst [vmem:[#allocation4 + $0x80] sm:$0xff] %v2564
        %2625 = vst [vmem:[#allocation4 + $0xc8] sm:$0xff] %v2567
        %2626 = vst [vmem:[#allocation4 + $0x110] sm:$0xff] %v2570
        %2627 = vst [vmem:[#allocation4 + $0x158] sm:$0xff] %v2573
        %2628 = vst [vmem:[#allocation4 + $0x1a0] sm:$0xff] %v2576
        %2629 = vst [vmem:[#allocation4 + $0x1e8] sm:$0xff] %v2579
        %2630 = vst [vmem:[#allocation4 + $0x230] sm:$0xff] %v2582
        %2631 = vst [vmem:[#allocation4 + $0x278] sm:$0xff] %v2585
        %2632 = vst [vmem:[#allocation4 + $0x2c0] sm:$0xff] %v2588
        %2633 = vst [vmem:[#allocation4 + $0x308] sm:$0xff] %v2591
        %2634 = vst [vmem:[#allocation4 + $0x350] sm:$0xff] %v2594
        %2635 = vst [vmem:[#allocation4 + $0x398] sm:$0xff] %v2597
        %2636 = vst [vmem:[#allocation4 + $0x3e0] sm:$0xff] %v2600
        %2637 = vst [vmem:[#allocation4 + $0x428] sm:$0xff] %v2603
        %2638 = vst [vmem:[#allocation4 + $0x470] sm:$0xff] %v2606
        %v2639 = vld [vmem:[%s2158] sm:$0xe0]
        %v2640 = vld [vmem:[%s2158 + $0x8] sm:$0x3f]
        %v2641 = vld [vmem:[%s2158 + $0x10] sm:$0xe0]
        %v2642 = vld [vmem:[%s2158 + $0x18] sm:$0x3f]
        %v2643 = vld [vmem:[%s2158 + $0x20] sm:$0xe0]
        %v2644 = vld [vmem:[%s2158 + $0x28] sm:$0x3f]
        %v2645 = vld [vmem:[%s2158 + $0x30] sm:$0xe0]
        %v2646 = vld [vmem:[%s2158 + $0x38] sm:$0x3f]
        %v2647 = vld [vmem:[%s2158 + $0x40] sm:$0xe0]
        %v2648 = vld [vmem:[%s2158 + $0x48] sm:$0x3f]
        %v2649 = vld [vmem:[%s2158 + $0x50] sm:$0xe0]
        %v2650 = vld [vmem:[%s2158 + $0x58] sm:$0x3f]
        %v2651 = vld [vmem:[%s2158 + $0x60] sm:$0xe0]
        %v2652 = vld [vmem:[%s2158 + $0x68] sm:$0x3f]
        %v2653 = vld [vmem:[%s2158 + $0x70] sm:$0xe0]
        %v2654 = vld [vmem:[%s2158 + $0x78] sm:$0x3f]
        %v2655 = vld [vmem:[%s2158 + $0x80] sm:$0xe0]
        %v2656 = vld [vmem:[%s2158 + $0x88] sm:$0x3f]
        %v2657 = vld [vmem:[%s2158 + $0x90] sm:$0xe0]
        %v2658 = vld [vmem:[%s2158 + $0x98] sm:$0x3f]
        %v2659 = vld [vmem:[%s2158 + $0xa0] sm:$0xe0]
        %v2660 = vld [vmem:[%s2158 + $0xa8] sm:$0x3f]
        %v2661 = vld [vmem:[%s2158 + $0xb0] sm:$0xe0]
        %v2662 = vld [vmem:[%s2158 + $0xb8] sm:$0x3f]
        %v2663 = vld [vmem:[%s2158 + $0xc0] sm:$0xe0]
        %v2664 = vld [vmem:[%s2158 + $0xc8] sm:$0x3f]
        %v2665 = vld [vmem:[%s2158 + $0xd0] sm:$0xe0]
        %v2666 = vld [vmem:[%s2158 + $0xd8] sm:$0x3f]
        %v2667 = vld [vmem:[%s2158 + $0xe0] sm:$0xe0]
        %v2668 = vld [vmem:[%s2158 + $0xe8] sm:$0x3f]
        %v2669 = vld [vmem:[%s2158 + $0xf0] sm:$0xe0]
        %v2670 = vld [vmem:[%s2158 + $0xf8] sm:$0x3f]
        %v2672 = vshrl.u32 %v2639, 16
        %v2674 = vrot.slane %v2672, 5
        %v2675 = vshll.u32 %v2639, 16
        %v2677 = vrot.slane %v2675, 6
        %v2678 = vor.u32 %v2674, %v2677
        %v2680 = vshrl.u32 %v2640, 16
        %v2682 = vrot.slane %v2680, 5
        %v2683 = vshll.u32 %v2640, 16
        %v2685 = vrot.slane %v2683, 6
        %v2686 = vor.u32 %v2682, %v2685
        %v2687 = vsel %vm1037, %v2678, %v2686
        %v2689 = vshrl.u32 %v2641, 16
        %v2691 = vrot.slane %v2689, 5
        %v2692 = vshll.u32 %v2641, 16
        %v2694 = vrot.slane %v2692, 6
        %v2695 = vor.u32 %v2691, %v2694
        %v2697 = vshrl.u32 %v2642, 16
        %v2699 = vrot.slane %v2697, 5
        %v2700 = vshll.u32 %v2642, 16
        %v2702 = vrot.slane %v2700, 6
        %v2703 = vor.u32 %v2699, %v2702
        %v2704 = vsel %vm1037, %v2695, %v2703
        %v2706 = vshrl.u32 %v2643, 16
        %v2708 = vrot.slane %v2706, 5
        %v2709 = vshll.u32 %v2643, 16
        %v2711 = vrot.slane %v2709, 6
        %v2712 = vor.u32 %v2708, %v2711
        %v2714 = vshrl.u32 %v2644, 16
        %v2716 = vrot.slane %v2714, 5
        %v2717 = vshll.u32 %v2644, 16
        %v2719 = vrot.slane %v2717, 6
        %v2720 = vor.u32 %v2716, %v2719
        %v2721 = vsel %vm1037, %v2712, %v2720
        %v2723 = vshrl.u32 %v2645, 16
        %v2725 = vrot.slane %v2723, 5
        %v2726 = vshll.u32 %v2645, 16
        %v2728 = vrot.slane %v2726, 6
        %v2729 = vor.u32 %v2725, %v2728
        %v2731 = vshrl.u32 %v2646, 16
        %v2733 = vrot.slane %v2731, 5
        %v2734 = vshll.u32 %v2646, 16
        %v2736 = vrot.slane %v2734, 6
        %v2737 = vor.u32 %v2733, %v2736
        %v2738 = vsel %vm1037, %v2729, %v2737
        %v2740 = vshrl.u32 %v2647, 16
        %v2742 = vrot.slane %v2740, 5
        %v2743 = vshll.u32 %v2647, 16
        %v2745 = vrot.slane %v2743, 6
        %v2746 = vor.u32 %v2742, %v2745
        %v2748 = vshrl.u32 %v2648, 16
        %v2750 = vrot.slane %v2748, 5
        %v2751 = vshll.u32 %v2648, 16
        %v2753 = vrot.slane %v2751, 6
        %v2754 = vor.u32 %v2750, %v2753
        %v2755 = vsel %vm1037, %v2746, %v2754
        %v2757 = vshrl.u32 %v2649, 16
        %v2759 = vrot.slane %v2757, 5
        %v2760 = vshll.u32 %v2649, 16
        %v2762 = vrot.slane %v2760, 6
        %v2763 = vor.u32 %v2759, %v2762
        %v2765 = vshrl.u32 %v2650, 16
        %v2767 = vrot.slane %v2765, 5
        %v2768 = vshll.u32 %v2650, 16
        %v2770 = vrot.slane %v2768, 6
        %v2771 = vor.u32 %v2767, %v2770
        %v2772 = vsel %vm1037, %v2763, %v2771
        %v2774 = vshrl.u32 %v2651, 16
        %v2776 = vrot.slane %v2774, 5
        %v2777 = vshll.u32 %v2651, 16
        %v2779 = vrot.slane %v2777, 6
        %v2780 = vor.u32 %v2776, %v2779
        %v2782 = vshrl.u32 %v2652, 16
        %v2784 = vrot.slane %v2782, 5
        %v2785 = vshll.u32 %v2652, 16
        %v2787 = vrot.slane %v2785, 6
        %v2788 = vor.u32 %v2784, %v2787
        %v2789 = vsel %vm1037, %v2780, %v2788
        %v2791 = vshrl.u32 %v2653, 16
        %v2793 = vrot.slane %v2791, 5
        %v2794 = vshll.u32 %v2653, 16
        %v2796 = vrot.slane %v2794, 6
        %v2797 = vor.u32 %v2793, %v2796
        %v2799 = vshrl.u32 %v2654, 16
        %v2801 = vrot.slane %v2799, 5
        %v2802 = vshll.u32 %v2654, 16
        %v2804 = vrot.slane %v2802, 6
        %v2805 = vor.u32 %v2801, %v2804
        %v2806 = vsel %vm1037, %v2797, %v2805
        %v2808 = vshrl.u32 %v2655, 16
        %v2810 = vrot.slane %v2808, 5
        %v2811 = vshll.u32 %v2655, 16
        %v2813 = vrot.slane %v2811, 6
        %v2814 = vor.u32 %v2810, %v2813
        %v2816 = vshrl.u32 %v2656, 16
        %v2818 = vrot.slane %v2816, 5
        %v2819 = vshll.u32 %v2656, 16
        %v2821 = vrot.slane %v2819, 6
        %v2822 = vor.u32 %v2818, %v2821
        %v2823 = vsel %vm1037, %v2814, %v2822
        %v2825 = vshrl.u32 %v2657, 16
        %v2827 = vrot.slane %v2825, 5
        %v2828 = vshll.u32 %v2657, 16
        %v2830 = vrot.slane %v2828, 6
        %v2831 = vor.u32 %v2827, %v2830
        %v2833 = vshrl.u32 %v2658, 16
        %v2835 = vrot.slane %v2833, 5
        %v2836 = vshll.u32 %v2658, 16
        %v2838 = vrot.slane %v2836, 6
        %v2839 = vor.u32 %v2835, %v2838
        %v2840 = vsel %vm1037, %v2831, %v2839
        %v2842 = vshrl.u32 %v2659, 16
        %v2844 = vrot.slane %v2842, 5
        %v2845 = vshll.u32 %v2659, 16
        %v2847 = vrot.slane %v2845, 6
        %v2848 = vor.u32 %v2844, %v2847
        %v2850 = vshrl.u32 %v2660, 16
        %v2852 = vrot.slane %v2850, 5
        %v2853 = vshll.u32 %v2660, 16
        %v2855 = vrot.slane %v2853, 6
        %v2856 = vor.u32 %v2852, %v2855
        %v2857 = vsel %vm1037, %v2848, %v2856
        %v2859 = vshrl.u32 %v2661, 16
        %v2861 = vrot.slane %v2859, 5
        %v2862 = vshll.u32 %v2661, 16
        %v2864 = vrot.slane %v2862, 6
        %v2865 = vor.u32 %v2861, %v2864
        %v2867 = vshrl.u32 %v2662, 16
        %v2869 = vrot.slane %v2867, 5
        %v2870 = vshll.u32 %v2662, 16
        %v2872 = vrot.slane %v2870, 6
        %v2873 = vor.u32 %v2869, %v2872
        %v2874 = vsel %vm1037, %v2865, %v2873
        %v2876 = vshrl.u32 %v2663, 16
        %v2878 = vrot.slane %v2876, 5
        %v2879 = vshll.u32 %v2663, 16
        %v2881 = vrot.slane %v2879, 6
        %v2882 = vor.u32 %v2878, %v2881
        %v2884 = vshrl.u32 %v2664, 16
        %v2886 = vrot.slane %v2884, 5
        %v2887 = vshll.u32 %v2664, 16
        %v2889 = vrot.slane %v2887, 6
        %v2890 = vor.u32 %v2886, %v2889
        %v2891 = vsel %vm1037, %v2882, %v2890
        %v2893 = vshrl.u32 %v2665, 16
        %v2895 = vrot.slane %v2893, 5
        %v2896 = vshll.u32 %v2665, 16
        %v2898 = vrot.slane %v2896, 6
        %v2899 = vor.u32 %v2895, %v2898
        %v2901 = vshrl.u32 %v2666, 16
        %v2903 = vrot.slane %v2901, 5
        %v2904 = vshll.u32 %v2666, 16
        %v2906 = vrot.slane %v2904, 6
        %v2907 = vor.u32 %v2903, %v2906
        %v2908 = vsel %vm1037, %v2899, %v2907
        %v2910 = vshrl.u32 %v2667, 16
        %v2912 = vrot.slane %v2910, 5
        %v2913 = vshll.u32 %v2667, 16
        %v2915 = vrot.slane %v2913, 6
        %v2916 = vor.u32 %v2912, %v2915
        %v2918 = vshrl.u32 %v2668, 16
        %v2920 = vrot.slane %v2918, 5
        %v2921 = vshll.u32 %v2668, 16
        %v2923 = vrot.slane %v2921, 6
        %v2924 = vor.u32 %v2920, %v2923
        %v2925 = vsel %vm1037, %v2916, %v2924
        %v2927 = vshrl.u32 %v2669, 16
        %v2929 = vrot.slane %v2927, 5
        %v2930 = vshll.u32 %v2669, 16
        %v2932 = vrot.slane %v2930, 6
        %v2933 = vor.u32 %v2929, %v2932
        %v2935 = vshrl.u32 %v2670, 16
        %v2937 = vrot.slane %v2935, 5
        %v2938 = vshll.u32 %v2670, 16
        %v2940 = vrot.slane %v2938, 6
        %v2941 = vor.u32 %v2937, %v2940
        %v2942 = vsel %vm1037, %v2933, %v2941
        %2959 = vst [vmem:[#allocation4 + $0x40] sm:$0xff] %v2687
        %2960 = vst [vmem:[#allocation4 + $0x88] sm:$0xff] %v2704
        %2961 = vst [vmem:[#allocation4 + $0xd0] sm:$0xff] %v2721
        %2962 = vst [vmem:[#allocation4 + $0x118] sm:$0xff] %v2738
        %2963 = vst [vmem:[#allocation4 + $0x160] sm:$0xff] %v2755
        %2964 = vst [vmem:[#allocation4 + $0x1a8] sm:$0xff] %v2772
        %2965 = vst [vmem:[#allocation4 + $0x1f0] sm:$0xff] %v2789
        %2966 = vst [vmem:[#allocation4 + $0x238] sm:$0xff] %v2806
        %2967 = vst [vmem:[#allocation4 + $0x280] sm:$0xff] %v2823
        %2968 = vst [vmem:[#allocation4 + $0x2c8] sm:$0xff] %v2840
        %2969 = vst [vmem:[#allocation4 + $0x310] sm:$0xff] %v2857
        %2970 = vst [vmem:[#allocation4 + $0x358] sm:$0xff] %v2874
        %2971 = vst [vmem:[#allocation4 + $0x3a0] sm:$0xff] %v2891
        %2972 = vst [vmem:[#allocation4 + $0x3e8] sm:$0xff] %v2908
        %2973 = vst [vmem:[#allocation4 + $0x430] sm:$0xff] %v2925
        %2974 = vst [vmem:[#allocation4 + $0x478] sm:$0xff] %v2942
        %v2975 = vld [vmem:[#allocation4] sm:$0xff]
        %v2976 = vld [vmem:[#allocation4 + $0x8] sm:$0xff]
        %v2977 = vld [vmem:[#allocation4 + $0x10] sm:$0xff]
        %v2978 = vld [vmem:[#allocation4 + $0x18] sm:$0xff]
        %v2979 = vld [vmem:[#allocation4 + $0x20] sm:$0xff]
        %v2980 = vld [vmem:[#allocation4 + $0x28] sm:$0xff]
        %v2981 = vld [vmem:[#allocation4 + $0x30] sm:$0xff]
        %v2982 = vld [vmem:[#allocation4 + $0x38] sm:$0xff]
        %v2983 = vld [vmem:[#allocation4 + $0x40] sm:$0xff]
        %v2984 = vld [vmem:[#allocation4 + $0x48] sm:$0xff]
        %v2985 = vld [vmem:[#allocation4 + $0x50] sm:$0xff]
        %v2986 = vld [vmem:[#allocation4 + $0x58] sm:$0xff]
        %v2987 = vld [vmem:[#allocation4 + $0x60] sm:$0xff]
        %v2988 = vld [vmem:[#allocation4 + $0x68] sm:$0xff]
        %v2989 = vld [vmem:[#allocation4 + $0x70] sm:$0xff]
        %v2990 = vld [vmem:[#allocation4 + $0x78] sm:$0xff]
        %v2991 = vld [vmem:[#allocation4 + $0x80] sm:$0xff]
        %v2992 = vld [vmem:[#allocation4 + $0x88] sm:$0xff]
        %v2993 = vld [vmem:[#allocation4 + $0x90] sm:$0xff]
        %v2994 = vld [vmem:[#allocation4 + $0x98] sm:$0xff]
        %v2995 = vld [vmem:[#allocation4 + $0xa0] sm:$0xff]
        %v2996 = vld [vmem:[#allocation4 + $0xa8] sm:$0xff]
        %v2997 = vld [vmem:[#allocation4 + $0xb0] sm:$0xff]
        %v2998 = vld [vmem:[#allocation4 + $0xb8] sm:$0xff]
        %v2999 = vld [vmem:[#allocation4 + $0xc0] sm:$0xff]
        %v3000 = vld [vmem:[#allocation4 + $0xc8] sm:$0xff]
        %v3001 = vld [vmem:[#allocation4 + $0xd0] sm:$0xff]
        %v3002 = vld [vmem:[#allocation4 + $0xd8] sm:$0xff]
        %v3003 = vld [vmem:[#allocation4 + $0xe0] sm:$0xff]
        %v3004 = vld [vmem:[#allocation4 + $0xe8] sm:$0xff]
        %v3005 = vld [vmem:[#allocation4 + $0xf0] sm:$0xff]
        %v3006 = vld [vmem:[#allocation4 + $0xf8] sm:$0xff]
        %v3007 = vld [vmem:[#allocation4 + $0x100] sm:$0xff]
        %v3008 = vld [vmem:[#allocation4 + $0x108] sm:$0xff]
        %v3009 = vld [vmem:[#allocation4 + $0x110] sm:$0xff]
        %v3010 = vld [vmem:[#allocation4 + $0x118] sm:$0xff]
        %v3011 = vld [vmem:[#allocation4 + $0x120] sm:$0xff]
        %v3012 = vld [vmem:[#allocation4 + $0x128] sm:$0xff]
        %v3013 = vld [vmem:[#allocation4 + $0x130] sm:$0xff]
        %v3014 = vld [vmem:[#allocation4 + $0x138] sm:$0xff]
        %v3015 = vld [vmem:[#allocation4 + $0x140] sm:$0xff]
        %v3016 = vld [vmem:[#allocation4 + $0x148] sm:$0xff]
        %v3017 = vld [vmem:[#allocation4 + $0x150] sm:$0xff]
        %v3018 = vld [vmem:[#allocation4 + $0x158] sm:$0xff]
        %v3019 = vld [vmem:[#allocation4 + $0x160] sm:$0xff]
        %v3020 = vld [vmem:[#allocation4 + $0x168] sm:$0xff]
        %v3021 = vld [vmem:[#allocation4 + $0x170] sm:$0xff]
        %v3022 = vld [vmem:[#allocation4 + $0x178] sm:$0xff]
        %v3023 = vld [vmem:[#allocation4 + $0x180] sm:$0xff]
        %v3024 = vld [vmem:[#allocation4 + $0x188] sm:$0xff]
        %v3025 = vld [vmem:[#allocation4 + $0x190] sm:$0xff]
        %v3026 = vld [vmem:[#allocation4 + $0x198] sm:$0xff]
        %v3027 = vld [vmem:[#allocation4 + $0x1a0] sm:$0xff]
        %v3028 = vld [vmem:[#allocation4 + $0x1a8] sm:$0xff]
        %v3029 = vld [vmem:[#allocation4 + $0x1b0] sm:$0xff]
        %v3030 = vld [vmem:[#allocation4 + $0x1b8] sm:$0xff]
        %v3031 = vld [vmem:[#allocation4 + $0x1c0] sm:$0xff]
        %v3032 = vld [vmem:[#allocation4 + $0x1c8] sm:$0xff]
        %v3033 = vld [vmem:[#allocation4 + $0x1d0] sm:$0xff]
        %v3034 = vld [vmem:[#allocation4 + $0x1d8] sm:$0xff]
        %v3035 = vld [vmem:[#allocation4 + $0x1e0] sm:$0xff]
        %v3036 = vld [vmem:[#allocation4 + $0x1e8] sm:$0xff]
        %v3037 = vld [vmem:[#allocation4 + $0x1f0] sm:$0xff]
        %v3038 = vld [vmem:[#allocation4 + $0x1f8] sm:$0xff]
        %v3039 = vld [vmem:[#allocation4 + $0x200] sm:$0xff]
        %v3040 = vld [vmem:[#allocation4 + $0x208] sm:$0xff]
        %v3041 = vld [vmem:[#allocation4 + $0x210] sm:$0xff]
        %v3042 = vld [vmem:[#allocation4 + $0x218] sm:$0xff]
        %v3043 = vld [vmem:[#allocation4 + $0x220] sm:$0xff]
        %v3044 = vld [vmem:[#allocation4 + $0x228] sm:$0xff]
        %v3045 = vld [vmem:[#allocation4 + $0x230] sm:$0xff]
        %v3046 = vld [vmem:[#allocation4 + $0x238] sm:$0xff]
        %v3047 = vld [vmem:[#allocation4 + $0x240] sm:$0xff]
        %v3048 = vld [vmem:[#allocation4 + $0x248] sm:$0xff]
        %v3049 = vld [vmem:[#allocation4 + $0x250] sm:$0xff]
        %v3050 = vld [vmem:[#allocation4 + $0x258] sm:$0xff]
        %v3051 = vld [vmem:[#allocation4 + $0x260] sm:$0xff]
        %v3052 = vld [vmem:[#allocation4 + $0x268] sm:$0xff]
        %v3053 = vld [vmem:[#allocation4 + $0x270] sm:$0xff]
        %v3054 = vld [vmem:[#allocation4 + $0x278] sm:$0xff]
        %v3055 = vld [vmem:[#allocation4 + $0x280] sm:$0xff]
        %v3056 = vld [vmem:[#allocation4 + $0x288] sm:$0xff]
        %v3057 = vld [vmem:[#allocation4 + $0x290] sm:$0xff]
        %v3058 = vld [vmem:[#allocation4 + $0x298] sm:$0xff]
        %v3059 = vld [vmem:[#allocation4 + $0x2a0] sm:$0xff]
        %v3060 = vld [vmem:[#allocation4 + $0x2a8] sm:$0xff]
        %v3061 = vld [vmem:[#allocation4 + $0x2b0] sm:$0xff]
        %v3062 = vld [vmem:[#allocation4 + $0x2b8] sm:$0xff]
        %v3063 = vld [vmem:[#allocation4 + $0x2c0] sm:$0xff]
        %v3064 = vld [vmem:[#allocation4 + $0x2c8] sm:$0xff]
        %v3065 = vld [vmem:[#allocation4 + $0x2d0] sm:$0xff]
        %v3066 = vld [vmem:[#allocation4 + $0x2d8] sm:$0xff]
        %v3067 = vld [vmem:[#allocation4 + $0x2e0] sm:$0xff]
        %v3068 = vld [vmem:[#allocation4 + $0x2e8] sm:$0xff]
        %v3069 = vld [vmem:[#allocation4 + $0x2f0] sm:$0xff]
        %v3070 = vld [vmem:[#allocation4 + $0x2f8] sm:$0xff]
        %v3071 = vld [vmem:[#allocation4 + $0x300] sm:$0xff]
        %v3072 = vld [vmem:[#allocation4 + $0x308] sm:$0xff]
        %v3073 = vld [vmem:[#allocation4 + $0x310] sm:$0xff]
        %v3074 = vld [vmem:[#allocation4 + $0x318] sm:$0xff]
        %v3075 = vld [vmem:[#allocation4 + $0x320] sm:$0xff]
        %v3076 = vld [vmem:[#allocation4 + $0x328] sm:$0xff]
        %v3077 = vld [vmem:[#allocation4 + $0x330] sm:$0xff]
        %v3078 = vld [vmem:[#allocation4 + $0x338] sm:$0xff]
        %v3079 = vld [vmem:[#allocation4 + $0x340] sm:$0xff]
        %v3080 = vld [vmem:[#allocation4 + $0x348] sm:$0xff]
        %v3081 = vld [vmem:[#allocation4 + $0x350] sm:$0xff]
        %v3082 = vld [vmem:[#allocation4 + $0x358] sm:$0xff]
        %v3083 = vld [vmem:[#allocation4 + $0x360] sm:$0xff]
        %v3084 = vld [vmem:[#allocation4 + $0x368] sm:$0xff]
        %v3085 = vld [vmem:[#allocation4 + $0x370] sm:$0xff]
        %v3086 = vld [vmem:[#allocation4 + $0x378] sm:$0xff]
        %v3087 = vld [vmem:[#allocation4 + $0x380] sm:$0xff]
        %v3088 = vld [vmem:[#allocation4 + $0x388] sm:$0xff]
        %v3089 = vld [vmem:[#allocation4 + $0x390] sm:$0xff]
        %v3090 = vld [vmem:[#allocation4 + $0x398] sm:$0xff]
        %v3091 = vld [vmem:[#allocation4 + $0x3a0] sm:$0xff]
        %v3092 = vld [vmem:[#allocation4 + $0x3a8] sm:$0xff]
        %v3093 = vld [vmem:[#allocation4 + $0x3b0] sm:$0xff]
        %v3094 = vld [vmem:[#allocation4 + $0x3b8] sm:$0xff]
        %v3095 = vld [vmem:[#allocation4 + $0x3c0] sm:$0xff]
        %v3096 = vld [vmem:[#allocation4 + $0x3c8] sm:$0xff]
        %v3097 = vld [vmem:[#allocation4 + $0x3d0] sm:$0xff]
        %v3098 = vld [vmem:[#allocation4 + $0x3d8] sm:$0xff]
        %v3099 = vld [vmem:[#allocation4 + $0x3e0] sm:$0xff]
        %v3100 = vld [vmem:[#allocation4 + $0x3e8] sm:$0xff]
        %v3101 = vld [vmem:[#allocation4 + $0x3f0] sm:$0xff]
        %v3102 = vld [vmem:[#allocation4 + $0x3f8] sm:$0xff]
        %v3103 = vld [vmem:[#allocation4 + $0x400] sm:$0xff]
        %v3104 = vld [vmem:[#allocation4 + $0x408] sm:$0xff]
        %v3105 = vld [vmem:[#allocation4 + $0x410] sm:$0xff]
        %v3106 = vld [vmem:[#allocation4 + $0x418] sm:$0xff]
        %v3107 = vld [vmem:[#allocation4 + $0x420] sm:$0xff]
        %v3108 = vld [vmem:[#allocation4 + $0x428] sm:$0xff]
        %v3109 = vld [vmem:[#allocation4 + $0x430] sm:$0xff]
        %v3110 = vld [vmem:[#allocation4 + $0x438] sm:$0xff]
        %v3111 = vld [vmem:[#allocation4 + $0x440] sm:$0xff]
        %v3112 = vld [vmem:[#allocation4 + $0x448] sm:$0xff]
        %v3113 = vld [vmem:[#allocation4 + $0x450] sm:$0xff]
        %v3114 = vld [vmem:[#allocation4 + $0x458] sm:$0xff]
        %v3115 = vld [vmem:[#allocation4 + $0x460] sm:$0xff]
        %v3116 = vld [vmem:[#allocation4 + $0x468] sm:$0xff]
        %v3117 = vld [vmem:[#allocation4 + $0x470] sm:$0xff]
        %v3118 = vld [vmem:[#allocation4 + $0x478] sm:$0xff]
        %v3119 = vld [vmem:[#allocation8] sm:$0xf]
        %v3120 = vld [vmem:[#allocation8 + $0x4] sm:$0xf]
        %v3121 = vld [vmem:[#allocation8 + $0x8] sm:$0xf]
        %v3122 = vld [vmem:[#allocation8 + $0xc] sm:$0xf]
        %v3123 = vld [vmem:[#allocation8 + $0x10] sm:$0xf]
        %v3124 = vld [vmem:[#allocation8 + $0x14] sm:$0xf]
        %v3125 = vld [vmem:[#allocation8 + $0x18] sm:$0xf]
        %v3126 = vld [vmem:[#allocation8 + $0x1c] sm:$0xf]
        %v3127 = vld [vmem:[#allocation8 + $0x20] sm:$0xf]
        %v3128 = vld [vmem:[#allocation8 + $0x24] sm:$0xf]
        %v3129 = vld [vmem:[#allocation8 + $0x28] sm:$0xf]
        %v3130 = vld [vmem:[#allocation8 + $0x2c] sm:$0xf]
        %v3131 = vld [vmem:[#allocation8 + $0x30] sm:$0xf]
        %v3132 = vld [vmem:[#allocation8 + $0x34] sm:$0xf]
        %v3133 = vld [vmem:[#allocation8 + $0x38] sm:$0xf]
        %v3134 = vld [vmem:[#allocation8 + $0x3c] sm:$0xf]
        %v3135 = vld [vmem:[#allocation8 + $0x40] sm:$0xf]
        %v3136 = vld [vmem:[#allocation8 + $0x44] sm:$0xf]
        %v3137 = vld [vmem:[#allocation8 + $0x48] sm:$0xf]
        %v3138 = vld [vmem:[#allocation8 + $0x4c] sm:$0xf]
        %v3139 = vld [vmem:[#allocation8 + $0x50] sm:$0xf]
        %v3140 = vld [vmem:[#allocation8 + $0x54] sm:$0xf]
        %v3141 = vld [vmem:[#allocation8 + $0x58] sm:$0xf]
        %v3142 = vld [vmem:[#allocation8 + $0x5c] sm:$0xf]
        %v3143 = vld [vmem:[#allocation8 + $0x60] sm:$0xf]
        %v3144 = vld [vmem:[#allocation8 + $0x64] sm:$0xf]
        %v3145 = vld [vmem:[#allocation8 + $0x68] sm:$0xf]
        %v3146 = vld [vmem:[#allocation8 + $0x6c] sm:$0xf]
        %v3147 = vld [vmem:[#allocation8 + $0x70] sm:$0xf]
        %v3148 = vld [vmem:[#allocation8 + $0x74] sm:$0xf]
        %v3149 = vld [vmem:[#allocation8 + $0x78] sm:$0xf]
        %v3150 = vld [vmem:[#allocation8 + $0x7c] sm:$0xf]
        %v3151 = vld [vmem:[#allocation8 + $0x80] sm:$0xf]
        %v3152 = vld [vmem:[#allocation8 + $0x84] sm:$0xf]
        %v3153 = vld [vmem:[#allocation8 + $0x88] sm:$0xf]
        %v3154 = vld [vmem:[#allocation8 + $0x8c] sm:$0xf]
        %v3155 = vld [vmem:[#allocation8 + $0x90] sm:$0xf]
        %v3156 = vld [vmem:[#allocation8 + $0x94] sm:$0xf]
        %v3157 = vld [vmem:[#allocation8 + $0x98] sm:$0xf]
        %v3158 = vld [vmem:[#allocation8 + $0x9c] sm:$0xf]
        %v3159 = vld [vmem:[#allocation8 + $0xa0] sm:$0xf]
        %v3160 = vld [vmem:[#allocation8 + $0xa4] sm:$0xf]
        %v3161 = vld [vmem:[#allocation8 + $0xa8] sm:$0xf]
        %v3162 = vld [vmem:[#allocation8 + $0xac] sm:$0xf]
        %v3163 = vld [vmem:[#allocation8 + $0xb0] sm:$0xf]
        %v3164 = vld [vmem:[#allocation8 + $0xb4] sm:$0xf]
        %v3165 = vld [vmem:[#allocation8 + $0xb8] sm:$0xf]
        %v3166 = vld [vmem:[#allocation8 + $0xbc] sm:$0xf]
        %v3167 = vld [vmem:[#allocation8 + $0xc0] sm:$0xf]
        %v3168 = vld [vmem:[#allocation8 + $0xc4] sm:$0xf]
        %v3169 = vld [vmem:[#allocation8 + $0xc8] sm:$0xf]
        %v3170 = vld [vmem:[#allocation8 + $0xcc] sm:$0xf]
        %v3171 = vld [vmem:[#allocation8 + $0xd0] sm:$0xf]
        %v3172 = vld [vmem:[#allocation8 + $0xd4] sm:$0xf]
        %v3173 = vld [vmem:[#allocation8 + $0xd8] sm:$0xf]
        %v3174 = vld [vmem:[#allocation8 + $0xdc] sm:$0xf]
        %v3175 = vld [vmem:[#allocation8 + $0xe0] sm:$0xf]
        %v3176 = vld [vmem:[#allocation8 + $0xe4] sm:$0xf]
        %v3177 = vld [vmem:[#allocation8 + $0xe8] sm:$0xf]
        %v3178 = vld [vmem:[#allocation8 + $0xec] sm:$0xf]
        %v3179 = vld [vmem:[#allocation8 + $0xf0] sm:$0xf]
        %v3180 = vld [vmem:[#allocation8 + $0xf4] sm:$0xf]
        %v3181 = vld [vmem:[#allocation8 + $0xf8] sm:$0xf]
        %v3182 = vld [vmem:[#allocation8 + $0xfc] sm:$0xf]
        %v3183 = vld [vmem:[#allocation8 + $0x100] sm:$0xf]
        %v3184 = vld [vmem:[#allocation8 + $0x104] sm:$0xf]
        %v3185 = vld [vmem:[#allocation8 + $0x108] sm:$0xf]
        %v3186 = vld [vmem:[#allocation8 + $0x10c] sm:$0xf]
        %v3187 = vld [vmem:[#allocation8 + $0x110] sm:$0xf]
        %v3188 = vld [vmem:[#allocation8 + $0x114] sm:$0xf]
        %v3189 = vld [vmem:[#allocation8 + $0x118] sm:$0xf]
        %v3190 = vld [vmem:[#allocation8 + $0x11c] sm:$0xf]
        %v3191 = vld [vmem:[#allocation8 + $0x120] sm:$0xf]
        %v3192 = vld [vmem:[#allocation8 + $0x124] sm:$0xf]
        %v3193 = vld [vmem:[#allocation8 + $0x128] sm:$0xf]
        %v3194 = vld [vmem:[#allocation8 + $0x12c] sm:$0xf]
        %v3195 = vld [vmem:[#allocation8 + $0x130] sm:$0xf]
        %v3196 = vld [vmem:[#allocation8 + $0x134] sm:$0xf]
        %v3197 = vld [vmem:[#allocation8 + $0x138] sm:$0xf]
        %v3198 = vld [vmem:[#allocation8 + $0x13c] sm:$0xf]
        %v3199 = vld [vmem:[#allocation8 + $0x140] sm:$0xf]
        %v3200 = vld [vmem:[#allocation8 + $0x144] sm:$0xf]
        %v3201 = vld [vmem:[#allocation8 + $0x148] sm:$0xf]
        %v3202 = vld [vmem:[#allocation8 + $0x14c] sm:$0xf]
        %v3203 = vld [vmem:[#allocation8 + $0x150] sm:$0xf]
        %v3204 = vld [vmem:[#allocation8 + $0x154] sm:$0xf]
        %v3205 = vld [vmem:[#allocation8 + $0x158] sm:$0xf]
        %v3206 = vld [vmem:[#allocation8 + $0x15c] sm:$0xf]
        %v3207 = vld [vmem:[#allocation8 + $0x160] sm:$0xf]
        %v3208 = vld [vmem:[#allocation8 + $0x164] sm:$0xf]
        %v3209 = vld [vmem:[#allocation8 + $0x168] sm:$0xf]
        %v3210 = vld [vmem:[#allocation8 + $0x16c] sm:$0xf]
        %v3211 = vld [vmem:[#allocation8 + $0x170] sm:$0xf]
        %v3212 = vld [vmem:[#allocation8 + $0x174] sm:$0xf]
        %v3213 = vld [vmem:[#allocation8 + $0x178] sm:$0xf]
        %v3214 = vld [vmem:[#allocation8 + $0x17c] sm:$0xf]
        %v3215 = vld [vmem:[#allocation8 + $0x180] sm:$0xf]
        %v3216 = vld [vmem:[#allocation8 + $0x184] sm:$0xf]
        %v3217 = vld [vmem:[#allocation8 + $0x188] sm:$0xf]
        %v3218 = vld [vmem:[#allocation8 + $0x18c] sm:$0xf]
        %v3219 = vld [vmem:[#allocation8 + $0x190] sm:$0xf]
        %v3220 = vld [vmem:[#allocation8 + $0x194] sm:$0xf]
        %v3221 = vld [vmem:[#allocation8 + $0x198] sm:$0xf]
        %v3222 = vld [vmem:[#allocation8 + $0x19c] sm:$0xf]
        %v3223 = vld [vmem:[#allocation8 + $0x1a0] sm:$0xf]
        %v3224 = vld [vmem:[#allocation8 + $0x1a4] sm:$0xf]
        %v3225 = vld [vmem:[#allocation8 + $0x1a8] sm:$0xf]
        %v3226 = vld [vmem:[#allocation8 + $0x1ac] sm:$0xf]
        %v3227 = vld [vmem:[#allocation8 + $0x1b0] sm:$0xf]
        %v3228 = vld [vmem:[#allocation8 + $0x1b4] sm:$0xf]
        %v3229 = vld [vmem:[#allocation8 + $0x1b8] sm:$0xf]
        %v3230 = vld [vmem:[#allocation8 + $0x1bc] sm:$0xf]
        %v3231 = vld [vmem:[#allocation8 + $0x1c0] sm:$0xf]
        %v3232 = vld [vmem:[#allocation8 + $0x1c4] sm:$0xf]
        %v3233 = vld [vmem:[#allocation8 + $0x1c8] sm:$0xf]
        %v3234 = vld [vmem:[#allocation8 + $0x1cc] sm:$0xf]
        %v3235 = vld [vmem:[#allocation8 + $0x1d0] sm:$0xf]
        %v3236 = vld [vmem:[#allocation8 + $0x1d4] sm:$0xf]
        %v3237 = vld [vmem:[#allocation8 + $0x1d8] sm:$0xf]
        %v3238 = vld [vmem:[#allocation8 + $0x1dc] sm:$0xf]
        %v3239 = vld [vmem:[#allocation8 + $0x1e0] sm:$0xf]
        %v3240 = vld [vmem:[#allocation8 + $0x1e4] sm:$0xf]
        %v3241 = vld [vmem:[#allocation8 + $0x1e8] sm:$0xf]
        %v3242 = vld [vmem:[#allocation8 + $0x1ec] sm:$0xf]
        %v3243 = vld [vmem:[#allocation8 + $0x1f0] sm:$0xf]
        %v3244 = vld [vmem:[#allocation8 + $0x1f4] sm:$0xf]
        %v3245 = vld [vmem:[#allocation8 + $0x1f8] sm:$0xf]
        %v3246 = vld [vmem:[#allocation8 + $0x1fc] sm:$0xf]
        %v3247 = vld [vmem:[#allocation8 + $0x200] sm:$0xf]
        %v3248 = vld [vmem:[#allocation8 + $0x204] sm:$0xf]
        %v3249 = vld [vmem:[#allocation8 + $0x208] sm:$0xf]
        %v3250 = vld [vmem:[#allocation8 + $0x20c] sm:$0xf]
        %v3251 = vld [vmem:[#allocation8 + $0x210] sm:$0xf]
        %v3252 = vld [vmem:[#allocation8 + $0x214] sm:$0xf]
        %v3253 = vld [vmem:[#allocation8 + $0x218] sm:$0xf]
        %v3254 = vld [vmem:[#allocation8 + $0x21c] sm:$0xf]
        %v3255 = vld [vmem:[#allocation8 + $0x220] sm:$0xf]
        %v3256 = vld [vmem:[#allocation8 + $0x224] sm:$0xf]
        %v3257 = vld [vmem:[#allocation8 + $0x228] sm:$0xf]
        %v3258 = vld [vmem:[#allocation8 + $0x22c] sm:$0xf]
        %v3259 = vld [vmem:[#allocation8 + $0x230] sm:$0xf]
        %v3260 = vld [vmem:[#allocation8 + $0x234] sm:$0xf]
        %v3261 = vld [vmem:[#allocation8 + $0x238] sm:$0xf]
        %v3262 = vld [vmem:[#allocation8 + $0x23c] sm:$0xf]
        %v3263 = vld [vmem:[%s2] sm:$0x1]
        %v3265 = vlaneseq
        %v3266 = vshrl.u32 %v3265, 7
        %v3267 = vsub.s32 0, %v3266
        %v3268 = vrot.slane %v3263, %v3267
        %v3414 = vunpack.c.l.b16 %v3119
        %v3415 = vunpack.c.l.b16 %v3120
        %v3416 = vunpack.c.l.b16 %v3121
        %v3417 = vunpack.c.l.b16 %v3122
        %v3418 = vunpack.c.l.b16 %v3123
        %v3419 = vunpack.c.l.b16 %v3124
        %v3420 = vunpack.c.l.b16 %v3125
        %v3421 = vunpack.c.l.b16 %v3126
        %v3422 = vunpack.c.l.b16 %v3127
        %v3423 = vunpack.c.l.b16 %v3128
        %v3424 = vunpack.c.l.b16 %v3129
        %v3425 = vunpack.c.l.b16 %v3130
        %v3426 = vunpack.c.l.b16 %v3131
        %v3427 = vunpack.c.l.b16 %v3132
        %v3428 = vunpack.c.l.b16 %v3133
        %v3429 = vunpack.c.l.b16 %v3134
        %v3430 = vunpack.c.l.b16 %v3135
        %v3431 = vunpack.c.l.b16 %v3136
        %v3432 = vunpack.c.l.b16 %v3137
        %v3433 = vunpack.c.l.b16 %v3138
        %v3434 = vunpack.c.l.b16 %v3139
        %v3435 = vunpack.c.l.b16 %v3140
        %v3436 = vunpack.c.l.b16 %v3141
        %v3437 = vunpack.c.l.b16 %v3142
        %v3438 = vunpack.c.l.b16 %v3143
        %v3439 = vunpack.c.l.b16 %v3144
        %v3440 = vunpack.c.l.b16 %v3145
        %v3441 = vunpack.c.l.b16 %v3146
        %v3442 = vunpack.c.l.b16 %v3147
        %v3443 = vunpack.c.l.b16 %v3148
        %v3444 = vunpack.c.l.b16 %v3149
        %v3445 = vunpack.c.l.b16 %v3150
        %v3446 = vunpack.c.l.b16 %v3151
        %v3447 = vunpack.c.l.b16 %v3152
        %v3448 = vunpack.c.l.b16 %v3153
        %v3449 = vunpack.c.l.b16 %v3154
        %v3450 = vunpack.c.l.b16 %v3155
        %v3451 = vunpack.c.l.b16 %v3156
        %v3452 = vunpack.c.l.b16 %v3157
        %v3453 = vunpack.c.l.b16 %v3158
        %v3454 = vunpack.c.l.b16 %v3159
        %v3455 = vunpack.c.l.b16 %v3160
        %v3456 = vunpack.c.l.b16 %v3161
        %v3457 = vunpack.c.l.b16 %v3162
        %v3458 = vunpack.c.l.b16 %v3163
        %v3459 = vunpack.c.l.b16 %v3164
        %v3460 = vunpack.c.l.b16 %v3165
        %v3461 = vunpack.c.l.b16 %v3166
        %v3462 = vunpack.c.l.b16 %v3167
        %v3463 = vunpack.c.l.b16 %v3168
        %v3464 = vunpack.c.l.b16 %v3169
        %v3465 = vunpack.c.l.b16 %v3170
        %v3466 = vunpack.c.l.b16 %v3171
        %v3467 = vunpack.c.l.b16 %v3172
        %v3468 = vunpack.c.l.b16 %v3173
        %v3469 = vunpack.c.l.b16 %v3174
        %v3470 = vunpack.c.l.b16 %v3175
        %v3471 = vunpack.c.l.b16 %v3176
        %v3472 = vunpack.c.l.b16 %v3177
        %v3473 = vunpack.c.l.b16 %v3178
        %v3474 = vunpack.c.l.b16 %v3179
        %v3475 = vunpack.c.l.b16 %v3180
        %v3476 = vunpack.c.l.b16 %v3181
        %v3477 = vunpack.c.l.b16 %v3182
        %v3478 = vunpack.c.l.b16 %v3183
        %v3479 = vunpack.c.l.b16 %v3184
        %v3480 = vunpack.c.l.b16 %v3185
        %v3481 = vunpack.c.l.b16 %v3186
        %v3482 = vunpack.c.l.b16 %v3187
        %v3483 = vunpack.c.l.b16 %v3188
        %v3484 = vunpack.c.l.b16 %v3189
        %v3485 = vunpack.c.l.b16 %v3190
        %v3486 = vunpack.c.l.b16 %v3191
        %v3487 = vunpack.c.l.b16 %v3192
        %v3488 = vunpack.c.l.b16 %v3193
        %v3489 = vunpack.c.l.b16 %v3194
        %v3490 = vunpack.c.l.b16 %v3195
        %v3491 = vunpack.c.l.b16 %v3196
        %v3492 = vunpack.c.l.b16 %v3197
        %v3493 = vunpack.c.l.b16 %v3198
        %v3494 = vunpack.c.l.b16 %v3199
        %v3495 = vunpack.c.l.b16 %v3200
        %v3496 = vunpack.c.l.b16 %v3201
        %v3497 = vunpack.c.l.b16 %v3202
        %v3498 = vunpack.c.l.b16 %v3203
        %v3499 = vunpack.c.l.b16 %v3204
        %v3500 = vunpack.c.l.b16 %v3205
        %v3501 = vunpack.c.l.b16 %v3206
        %v3502 = vunpack.c.l.b16 %v3207
        %v3503 = vunpack.c.l.b16 %v3208
        %v3504 = vunpack.c.l.b16 %v3209
        %v3505 = vunpack.c.l.b16 %v3210
        %v3506 = vunpack.c.l.b16 %v3211
        %v3507 = vunpack.c.l.b16 %v3212
        %v3508 = vunpack.c.l.b16 %v3213
        %v3509 = vunpack.c.l.b16 %v3214
        %v3510 = vunpack.c.l.b16 %v3215
        %v3511 = vunpack.c.l.b16 %v3216
        %v3512 = vunpack.c.l.b16 %v3217
        %v3513 = vunpack.c.l.b16 %v3218
        %v3514 = vunpack.c.l.b16 %v3219
        %v3515 = vunpack.c.l.b16 %v3220
        %v3516 = vunpack.c.l.b16 %v3221
        %v3517 = vunpack.c.l.b16 %v3222
        %v3518 = vunpack.c.l.b16 %v3223
        %v3519 = vunpack.c.l.b16 %v3224
        %v3520 = vunpack.c.l.b16 %v3225
        %v3521 = vunpack.c.l.b16 %v3226
        %v3522 = vunpack.c.l.b16 %v3227
        %v3523 = vunpack.c.l.b16 %v3228
        %v3524 = vunpack.c.l.b16 %v3229
        %v3525 = vunpack.c.l.b16 %v3230
        %v3526 = vunpack.c.l.b16 %v3231
        %v3527 = vunpack.c.l.b16 %v3232
        %v3528 = vunpack.c.l.b16 %v3233
        %v3529 = vunpack.c.l.b16 %v3234
        %v3530 = vunpack.c.l.b16 %v3235
        %v3531 = vunpack.c.l.b16 %v3236
        %v3532 = vunpack.c.l.b16 %v3237
        %v3533 = vunpack.c.l.b16 %v3238
        %v3534 = vunpack.c.l.b16 %v3239
        %v3535 = vunpack.c.l.b16 %v3240
        %v3536 = vunpack.c.l.b16 %v3241
        %v3537 = vunpack.c.l.b16 %v3242
        %v3538 = vunpack.c.l.b16 %v3243
        %v3539 = vunpack.c.l.b16 %v3244
        %v3540 = vunpack.c.l.b16 %v3245
        %v3541 = vunpack.c.l.b16 %v3246
        %v3542 = vunpack.c.l.b16 %v3247
        %v3543 = vunpack.c.l.b16 %v3248
        %v3544 = vunpack.c.l.b16 %v3249
        %v3545 = vunpack.c.l.b16 %v3250
        %v3546 = vunpack.c.l.b16 %v3251
        %v3547 = vunpack.c.l.b16 %v3252
        %v3548 = vunpack.c.l.b16 %v3253
        %v3549 = vunpack.c.l.b16 %v3254
        %v3550 = vunpack.c.l.b16 %v3255
        %v3551 = vunpack.c.l.b16 %v3256
        %v3552 = vunpack.c.l.b16 %v3257
        %v3553 = vunpack.c.l.b16 %v3258
        %v3554 = vunpack.c.l.b16 %v3259
        %v3555 = vunpack.c.l.b16 %v3260
        %v3556 = vunpack.c.l.b16 %v3261
        %v3557 = vunpack.c.l.b16 %v3262
        %v3558 = vpack.c.b16 %v3415, %v3414
        %v3559 = vpack.c.b16 %v3417, %v3416
        %v3560 = vpack.c.b16 %v3419, %v3418
        %v3561 = vpack.c.b16 %v3421, %v3420
        %v3562 = vpack.c.b16 %v3423, %v3422
        %v3563 = vpack.c.b16 %v3425, %v3424
        %v3564 = vpack.c.b16 %v3427, %v3426
        %v3565 = vpack.c.b16 %v3429, %v3428
        %v3566 = vpack.c.b16 %v3431, %v3430
        %v3567 = vpack.c.b16 %v3433, %v3432
        %v3568 = vpack.c.b16 %v3435, %v3434
        %v3569 = vpack.c.b16 %v3437, %v3436
        %v3570 = vpack.c.b16 %v3439, %v3438
        %v3571 = vpack.c.b16 %v3441, %v3440
        %v3572 = vpack.c.b16 %v3443, %v3442
        %v3573 = vpack.c.b16 %v3445, %v3444
        %v3574 = vpack.c.b16 %v3447, %v3446
        %v3575 = vpack.c.b16 %v3449, %v3448
        %v3576 = vpack.c.b16 %v3451, %v3450
        %v3577 = vpack.c.b16 %v3453, %v3452
        %v3578 = vpack.c.b16 %v3455, %v3454
        %v3579 = vpack.c.b16 %v3457, %v3456
        %v3580 = vpack.c.b16 %v3459, %v3458
        %v3581 = vpack.c.b16 %v3461, %v3460
        %v3582 = vpack.c.b16 %v3463, %v3462
        %v3583 = vpack.c.b16 %v3465, %v3464
        %v3584 = vpack.c.b16 %v3467, %v3466
        %v3585 = vpack.c.b16 %v3469, %v3468
        %v3586 = vpack.c.b16 %v3471, %v3470
        %v3587 = vpack.c.b16 %v3473, %v3472
        %v3588 = vpack.c.b16 %v3475, %v3474
        %v3589 = vpack.c.b16 %v3477, %v3476
        %v3590 = vpack.c.b16 %v3479, %v3478
        %v3591 = vpack.c.b16 %v3481, %v3480
        %v3592 = vpack.c.b16 %v3483, %v3482
        %v3593 = vpack.c.b16 %v3485, %v3484
        %v3594 = vpack.c.b16 %v3487, %v3486
        %v3595 = vpack.c.b16 %v3489, %v3488
        %v3596 = vpack.c.b16 %v3491, %v3490
        %v3597 = vpack.c.b16 %v3493, %v3492
        %v3598 = vpack.c.b16 %v3495, %v3494
        %v3599 = vpack.c.b16 %v3497, %v3496
        %v3600 = vpack.c.b16 %v3499, %v3498
        %v3601 = vpack.c.b16 %v3501, %v3500
        %v3602 = vpack.c.b16 %v3503, %v3502
        %v3603 = vpack.c.b16 %v3505, %v3504
        %v3604 = vpack.c.b16 %v3507, %v3506
        %v3605 = vpack.c.b16 %v3509, %v3508
        %v3606 = vpack.c.b16 %v3511, %v3510
        %v3607 = vpack.c.b16 %v3513, %v3512
        %v3608 = vpack.c.b16 %v3515, %v3514
        %v3609 = vpack.c.b16 %v3517, %v3516
        %v3610 = vpack.c.b16 %v3519, %v3518
        %v3611 = vpack.c.b16 %v3521, %v3520
        %v3612 = vpack.c.b16 %v3523, %v3522
        %v3613 = vpack.c.b16 %v3525, %v3524
        %v3614 = vpack.c.b16 %v3527, %v3526
        %v3615 = vpack.c.b16 %v3529, %v3528
        %v3616 = vpack.c.b16 %v3531, %v3530
        %v3617 = vpack.c.b16 %v3533, %v3532
        %v3618 = vpack.c.b16 %v3535, %v3534
        %v3619 = vpack.c.b16 %v3537, %v3536
        %v3620 = vpack.c.b16 %v3539, %v3538
        %v3621 = vpack.c.b16 %v3541, %v3540
        %v3622 = vpack.c.b16 %v3543, %v3542
        %v3623 = vpack.c.b16 %v3545, %v3544
        %v3624 = vpack.c.b16 %v3547, %v3546
        %v3625 = vpack.c.b16 %v3549, %v3548
        %v3626 = vpack.c.b16 %v3551, %v3550
        %v3627 = vpack.c.b16 %v3553, %v3552
        %v3628 = vpack.c.b16 %v3555, %v3554
        %v3629 = vpack.c.b16 %v3557, %v3556
        %3702 = vmatprep.subr.bf16.mxu0 0
        %3703 = vmatpush1.bf16.msra.mxu0 %v3558
        %3704 = vmatprep.subr.bf16.mxu0 0
        %3705 = vmatpush1.bf16.msra.mxu0 %v3559
        %3706 = vmatprep.subr.bf16.mxu0 0
        %3707 = vmatpush1.bf16.msra.mxu0 %v3560
        %3708 = vmatprep.subr.bf16.mxu0 0
        %3709 = vmatpush1.bf16.msra.mxu0 %v3561
        %3710 = vmatprep.subr.bf16.mxu0 0
        %3711 = vmatpush1.bf16.msra.mxu0 %v3562
        %3712 = vmatprep.subr.bf16.mxu0 0
        %3713 = vmatpush1.bf16.msra.mxu0 %v3563
        %3714 = vmatprep.subr.bf16.mxu0 0
        %3715 = vmatpush1.bf16.msra.mxu0 %v3564
        %3716 = vmatprep.subr.bf16.mxu0 0
        %3717 = vmatpush1.bf16.msra.mxu0 %v3565
        %3718 = vmatprep.subr.bf16.mxu0 0
        %3719 = vmatpush1.bf16.msra.mxu0 %v3566
        %3720 = vmatprep.subr.bf16.mxu0 0
        %3721 = vmatpush1.bf16.msra.mxu0 %v3567
        %3722 = vmatprep.subr.bf16.mxu0 0
        %3723 = vmatpush1.bf16.msra.mxu0 %v3568
        %3724 = vmatprep.subr.bf16.mxu0 0
        %3725 = vmatpush1.bf16.msra.mxu0 %v3569
        %3726 = vmatprep.subr.bf16.mxu0 0
        %3727 = vmatpush1.bf16.msra.mxu0 %v3570
        %3728 = vmatprep.subr.bf16.mxu0 0
        %3729 = vmatpush1.bf16.msra.mxu0 %v3571
        %3730 = vmatprep.subr.bf16.mxu0 0
        %3731 = vmatpush1.bf16.msra.mxu0 %v3572
        %3732 = vmatprep.subr.bf16.mxu0 0
        %3733 = vmatpush1.bf16.msra.mxu0 %v3573
        %3734 = vmatprep.mubr.bf16.mxu0 %v2976
        %3735 = vmatmul.mubr.bf16.gmra.mrb[0].mxu0 %v2975
        %v3736 = vpop.f32.mrb[0].mxu0
        %v3737 = vadd.f32 %v3268, %v3736
        %v3738 = vpop.f32.mrb[0].mxu0
        %v3739 = vpop.f32.mrb[0].mxu0
        %v3740 = vadd.f32 %v3268, %v3739
        %v3741 = vpop.f32.mrb[0].mxu0
        %3742 = vmatprep.mubr.bf16.mxu0 %v2985
        %3743 = vmatmul.mubr.bf16.gmra.mrb[0].mxu0 %v2984
        %v3744 = vpop.f32.mrb[0].mxu0
        %v3745 = vadd.f32 %v3268, %v3744
        %v3746 = vpop.f32.mrb[0].mxu0
        %v3747 = vpop.f32.mrb[0].mxu0
        %v3748 = vadd.f32 %v3268, %v3747
        %v3749 = vpop.f32.mrb[0].mxu0
        %3750 = vmatprep.mubr.bf16.mxu0 %v2994
        %3751 = vmatmul.mubr.bf16.gmra.mrb[0].mxu0 %v2993
        %v3752 = vpop.f32.mrb[0].mxu0
        %v3753 = vadd.f32 %v3268, %v3752
        %v3754 = vpop.f32.mrb[0].mxu0
        %v3755 = vpop.f32.mrb[0].mxu0
        %v3756 = vadd.f32 %v3268, %v3755
        %v3757 = vpop.f32.mrb[0].mxu0
        %3758 = vmatprep.mubr.bf16.mxu0 %v3003
        %3759 = vmatmul.mubr.bf16.gmra.mrb[0].mxu0 %v3002
        %v3760 = vpop.f32.mrb[0].mxu0
        %v3761 = vadd.f32 %v3268, %v3760
        %v3762 = vpop.f32.mrb[0].mxu0
        %v3763 = vpop.f32.mrb[0].mxu0
        %v3764 = vadd.f32 %v3268, %v3763
        %v3765 = vpop.f32.mrb[0].mxu0
        %3766 = vmatprep.mubr.bf16.mxu0 %v3012
        %3767 = vmatmul.mubr.bf16.gmra.mrb[0].mxu0 %v3011
        %v3768 = vpop.f32.mrb[0].mxu0
        %v3769 = vadd.f32 %v3268, %v3768
        %v3770 = vpop.f32.mrb[0].mxu0
        %v3771 = vpop.f32.mrb[0].mxu0
        %v3772 = vadd.f32 %v3268, %v3771
        %v3773 = vpop.f32.mrb[0].mxu0
        %3774 = vmatprep.mubr.bf16.mxu0 %v3021
        %3775 = vmatmul.mubr.bf16.gmra.mrb[0].mxu0 %v3020
        %v3776 = vpop.f32.mrb[0].mxu0
        %v3777 = vadd.f32 %v3268, %v3776
        %v3778 = vpop.f32.mrb[0].mxu0
        %v3779 = vpop.f32.mrb[0].mxu0
        %v3780 = vadd.f32 %v3268, %v3779
        %v3781 = vpop.f32.mrb[0].mxu0
        %3782 = vmatprep.mubr.bf16.mxu0 %v3030
        %3783 = vmatmul.mubr.bf16.gmra.mrb[0].mxu0 %v3029
        %v3784 = vpop.f32.mrb[0].mxu0
        %v3785 = vadd.f32 %v3268, %v3784
        %v3786 = vpop.f32.mrb[0].mxu0
        %v3787 = vpop.f32.mrb[0].mxu0
        %v3788 = vadd.f32 %v3268, %v3787
        %v3789 = vpop.f32.mrb[0].mxu0
        %3790 = vmatprep.mubr.bf16.mxu0 %v3039
        %3791 = vmatmul.mubr.bf16.gmra.mrb[0].mxu0 %v3038
        %v3792 = vpop.f32.mrb[0].mxu0
        %v3793 = vadd.f32 %v3268, %v3792
        %v3794 = vpop.f32.mrb[0].mxu0
        %v3795 = vpop.f32.mrb[0].mxu0
        %v3796 = vadd.f32 %v3268, %v3795
        %v3797 = vpop.f32.mrb[0].mxu0
        %3798 = vmatprep.mubr.bf16.mxu0 %v3048
        %3799 = vmatmul.mubr.bf16.gmra.mrb[0].mxu0 %v3047
        %v3800 = vpop.f32.mrb[0].mxu0
        %v3801 = vadd.f32 %v3268, %v3800
        %v3802 = vpop.f32.mrb[0].mxu0
        %v3803 = vpop.f32.mrb[0].mxu0
        %v3804 = vadd.f32 %v3268, %v3803
        %v3805 = vpop.f32.mrb[0].mxu0
        %3806 = vmatprep.mubr.bf16.mxu0 %v3057
        %3807 = vmatmul.mubr.bf16.gmra.mrb[0].mxu0 %v3056
        %v3808 = vpop.f32.mrb[0].mxu0
        %v3809 = vadd.f32 %v3268, %v3808
        %v3810 = vpop.f32.mrb[0].mxu0
        %v3811 = vpop.f32.mrb[0].mxu0
        %v3812 = vadd.f32 %v3268, %v3811
        %v3813 = vpop.f32.mrb[0].mxu0
        %3814 = vmatprep.mubr.bf16.mxu0 %v3066
        %3815 = vmatmul.mubr.bf16.gmra.mrb[0].mxu0 %v3065
        %v3816 = vpop.f32.mrb[0].mxu0
        %v3817 = vadd.f32 %v3268, %v3816
        %v3818 = vpop.f32.mrb[0].mxu0
        %v3819 = vpop.f32.mrb[0].mxu0
        %v3820 = vadd.f32 %v3268, %v3819
        %v3821 = vpop.f32.mrb[0].mxu0
        %3822 = vmatprep.mubr.bf16.mxu0 %v3075
        %3823 = vmatmul.mubr.bf16.gmra.mrb[0].mxu0 %v3074
        %v3824 = vpop.f32.mrb[0].mxu0
        %v3825 = vadd.f32 %v3268, %v3824
        %v3826 = vpop.f32.mrb[0].mxu0
        %v3827 = vpop.f32.mrb[0].mxu0
        %v3828 = vadd.f32 %v3268, %v3827
        %v3829 = vpop.f32.mrb[0].mxu0
        %3830 = vmatprep.mubr.bf16.mxu0 %v3084
        %3831 = vmatmul.mubr.bf16.gmra.mrb[0].mxu0 %v3083
        %v3832 = vpop.f32.mrb[0].mxu0
        %v3833 = vadd.f32 %v3268, %v3832
        %v3834 = vpop.f32.mrb[0].mxu0
        %v3835 = vpop.f32.mrb[0].mxu0
        %v3836 = vadd.f32 %v3268, %v3835
        %v3837 = vpop.f32.mrb[0].mxu0
        %3838 = vmatprep.mubr.bf16.mxu0 %v3093
        %3839 = vmatmul.mubr.bf16.gmra.mrb[0].mxu0 %v3092
        %v3840 = vpop.f32.mrb[0].mxu0
        %v3841 = vadd.f32 %v3268, %v3840
        %v3842 = vpop.f32.mrb[0].mxu0
        %v3843 = vpop.f32.mrb[0].mxu0
        %v3844 = vadd.f32 %v3268, %v3843
        %v3845 = vpop.f32.mrb[0].mxu0
        %3846 = vmatprep.mubr.bf16.mxu0 %v3102
        %3847 = vmatmul.mubr.bf16.gmra.mrb[0].mxu0 %v3101
        %v3848 = vpop.f32.mrb[0].mxu0
        %v3849 = vadd.f32 %v3268, %v3848
        %v3850 = vpop.f32.mrb[0].mxu0
        %v3851 = vpop.f32.mrb[0].mxu0
        %v3852 = vadd.f32 %v3268, %v3851
        %v3853 = vpop.f32.mrb[0].mxu0
        %3854 = vmatprep.mubr.bf16.mxu0 %v3111
        %3855 = vmatmul.mubr.bf16.gmra.mrb[0].mxu0 %v3110
        %v3856 = vpop.f32.mrb[0].mxu0
        %v3857 = vadd.f32 %v3268, %v3856
        %v3858 = vpop.f32.mrb[0].mxu0
        %v3859 = vpop.f32.mrb[0].mxu0
        %v3860 = vadd.f32 %v3268, %v3859
        %v3861 = vpop.f32.mrb[0].mxu0
        %3862 = vdwg.mxu0
        %3863 = vmatprep.subr.bf16.mxu0 0
        %3864 = vmatpush1.bf16.msra.mxu0 %v3574
        %3865 = vmatprep.subr.bf16.mxu0 0
        %3866 = vmatpush1.bf16.msra.mxu0 %v3575
        %3867 = vmatprep.subr.bf16.mxu0 0
        %3868 = vmatpush1.bf16.msra.mxu0 %v3576
        %3869 = vmatprep.subr.bf16.mxu0 0
        %3870 = vmatpush1.bf16.msra.mxu0 %v3577
        %3871 = vmatprep.subr.bf16.mxu0 0
        %3872 = vmatpush1.bf16.msra.mxu0 %v3578
        %3873 = vmatprep.subr.bf16.mxu0 0
        %3874 = vmatpush1.bf16.msra.mxu0 %v3579
        %3875 = vmatprep.subr.bf16.mxu0 0
        %3876 = vmatpush1.bf16.msra.mxu0 %v3580
        %3877 = vmatprep.subr.bf16.mxu0 0
        %3878 = vmatpush1.bf16.msra.mxu0 %v3581
        %3879 = vmatprep.subr.bf16.mxu0 0
        %3880 = vmatpush1.bf16.msra.mxu0 %v3582
        %3881 = vmatprep.subr.bf16.mxu0 0
        %3882 = vmatpush1.bf16.msra.mxu0 %v3583
        %3883 = vmatprep.subr.bf16.mxu0 0
        %3884 = vmatpush1.bf16.msra.mxu0 %v3584
        %3885 = vmatprep.subr.bf16.mxu0 0
        %3886 = vmatpush1.bf16.msra.mxu0 %v3585
        %3887 = vmatprep.subr.bf16.mxu0 0
        %3888 = vmatpush1.bf16.msra.mxu0 %v3586
        %3889 = vmatprep.subr.bf16.mxu0 0
        %3890 = vmatpush1.bf16.msra.mxu0 %v3587
        %3891 = vmatprep.subr.bf16.mxu0 0
        %3892 = vmatpush1.bf16.msra.mxu0 %v3588
        %3893 = vmatprep.subr.bf16.mxu0 0
        %3894 = vmatpush1.bf16.msra.mxu0 %v3589
        %3895 = vmatprep.mubr.bf16.mxu0 %v2978
        %3896 = vmatmul.mubr.bf16.gmra.mrb[0].mxu0 %v2977
        %v3897 = vpop.f32.mrb[0].mxu0
        %v3898 = vadd.f32 %v3737, %v3897
        %v3899 = vpop.f32.mrb[0].mxu0
        %v3900 = vpop.f32.mrb[0].mxu0
        %v3901 = vadd.f32 %v3740, %v3900
        %v3902 = vpop.f32.mrb[0].mxu0
        %3903 = vmatprep.mubr.bf16.mxu0 %v2987
        %3904 = vmatmul.mubr.bf16.gmra.mrb[0].mxu0 %v2986
        %v3905 = vpop.f32.mrb[0].mxu0
        %v3906 = vadd.f32 %v3745, %v3905
        %v3907 = vpop.f32.mrb[0].mxu0
        %v3908 = vpop.f32.mrb[0].mxu0
        %v3909 = vadd.f32 %v3748, %v3908
        %v3910 = vpop.f32.mrb[0].mxu0
        %3911 = vmatprep.mubr.bf16.mxu0 %v2996
        %3912 = vmatmul.mubr.bf16.gmra.mrb[0].mxu0 %v2995
        %v3913 = vpop.f32.mrb[0].mxu0
        %v3914 = vadd.f32 %v3753, %v3913
        %v3915 = vpop.f32.mrb[0].mxu0
        %v3916 = vpop.f32.mrb[0].mxu0
        %v3917 = vadd.f32 %v3756, %v3916
        %v3918 = vpop.f32.mrb[0].mxu0
        %3919 = vmatprep.mubr.bf16.mxu0 %v3005
        %3920 = vmatmul.mubr.bf16.gmra.mrb[0].mxu0 %v3004
        %v3921 = vpop.f32.mrb[0].mxu0
        %v3922 = vadd.f32 %v3761, %v3921
        %v3923 = vpop.f32.mrb[0].mxu0
        %v3924 = vpop.f32.mrb[0].mxu0
        %v3925 = vadd.f32 %v3764, %v3924
        %v3926 = vpop.f32.mrb[0].mxu0
        %3927 = vmatprep.mubr.bf16.mxu0 %v3014
        %3928 = vmatmul.mubr.bf16.gmra.mrb[0].mxu0 %v3013
        %v3929 = vpop.f32.mrb[0].mxu0
        %v3930 = vadd.f32 %v3769, %v3929
        %v3931 = vpop.f32.mrb[0].mxu0
        %v3932 = vpop.f32.mrb[0].mxu0
        %v3933 = vadd.f32 %v3772, %v3932
        %v3934 = vpop.f32.mrb[0].mxu0
        %3935 = vmatprep.mubr.bf16.mxu0 %v3023
        %3936 = vmatmul.mubr.bf16.gmra.mrb[0].mxu0 %v3022
        %v3937 = vpop.f32.mrb[0].mxu0
        %v3938 = vadd.f32 %v3777, %v3937
        %v3939 = vpop.f32.mrb[0].mxu0
        %v3940 = vpop.f32.mrb[0].mxu0
        %v3941 = vadd.f32 %v3780, %v3940
        %v3942 = vpop.f32.mrb[0].mxu0
        %3943 = vmatprep.mubr.bf16.mxu0 %v3032
        %3944 = vmatmul.mubr.bf16.gmra.mrb[0].mxu0 %v3031
        %v3945 = vpop.f32.mrb[0].mxu0
        %v3946 = vadd.f32 %v3785, %v3945
        %v3947 = vpop.f32.mrb[0].mxu0
        %v3948 = vpop.f32.mrb[0].mxu0
        %v3949 = vadd.f32 %v3788, %v3948
        %v3950 = vpop.f32.mrb[0].mxu0
        %3951 = vmatprep.mubr.bf16.mxu0 %v3041
        %3952 = vmatmul.mubr.bf16.gmra.mrb[0].mxu0 %v3040
        %v3953 = vpop.f32.mrb[0].mxu0
        %v3954 = vadd.f32 %v3793, %v3953
        %v3955 = vpop.f32.mrb[0].mxu0
        %v3956 = vpop.f32.mrb[0].mxu0
        %v3957 = vadd.f32 %v3796, %v3956
        %v3958 = vpop.f32.mrb[0].mxu0
        %3959 = vmatprep.mubr.bf16.mxu0 %v3050
        %3960 = vmatmul.mubr.bf16.gmra.mrb[0].mxu0 %v3049
        %v3961 = vpop.f32.mrb[0].mxu0
        %v3962 = vadd.f32 %v3801, %v3961
        %v3963 = vpop.f32.mrb[0].mxu0
        %v3964 = vpop.f32.mrb[0].mxu0
        %v3965 = vadd.f32 %v3804, %v3964
        %v3966 = vpop.f32.mrb[0].mxu0
        %3967 = vmatprep.mubr.bf16.mxu0 %v3059
        %3968 = vmatmul.mubr.bf16.gmra.mrb[0].mxu0 %v3058
        %v3969 = vpop.f32.mrb[0].mxu0
        %v3970 = vadd.f32 %v3809, %v3969
        %v3971 = vpop.f32.mrb[0].mxu0
        %v3972 = vpop.f32.mrb[0].mxu0
        %v3973 = vadd.f32 %v3812, %v3972
        %v3974 = vpop.f32.mrb[0].mxu0
        %3975 = vmatprep.mubr.bf16.mxu0 %v3068
        %3976 = vmatmul.mubr.bf16.gmra.mrb[0].mxu0 %v3067
        %v3977 = vpop.f32.mrb[0].mxu0
        %v3978 = vadd.f32 %v3817, %v3977
        %v3979 = vpop.f32.mrb[0].mxu0
        %v3980 = vpop.f32.mrb[0].mxu0
        %v3981 = vadd.f32 %v3820, %v3980
        %v3982 = vpop.f32.mrb[0].mxu0
        %3983 = vmatprep.mubr.bf16.mxu0 %v3077
        %3984 = vmatmul.mubr.bf16.gmra.mrb[0].mxu0 %v3076
        %v3985 = vpop.f32.mrb[0].mxu0
        %v3986 = vadd.f32 %v3825, %v3985
        %v3987 = vpop.f32.mrb[0].mxu0
        %v3988 = vpop.f32.mrb[0].mxu0
        %v3989 = vadd.f32 %v3828, %v3988
        %v3990 = vpop.f32.mrb[0].mxu0
        %3991 = vmatprep.mubr.bf16.mxu0 %v3086
        %3992 = vmatmul.mubr.bf16.gmra.mrb[0].mxu0 %v3085
        %v3993 = vpop.f32.mrb[0].mxu0
        %v3994 = vadd.f32 %v3833, %v3993
        %v3995 = vpop.f32.mrb[0].mxu0
        %v3996 = vpop.f32.mrb[0].mxu0
        %v3997 = vadd.f32 %v3836, %v3996
        %v3998 = vpop.f32.mrb[0].mxu0
        %3999 = vmatprep.mubr.bf16.mxu0 %v3095
        %4000 = vmatmul.mubr.bf16.gmra.mrb[0].mxu0 %v3094
        %v4001 = vpop.f32.mrb[0].mxu0
        %v4002 = vadd.f32 %v3841, %v4001
        %v4003 = vpop.f32.mrb[0].mxu0
        %v4004 = vpop.f32.mrb[0].mxu0
        %v4005 = vadd.f32 %v3844, %v4004
        %v4006 = vpop.f32.mrb[0].mxu0
        %4007 = vmatprep.mubr.bf16.mxu0 %v3104
        %4008 = vmatmul.mubr.bf16.gmra.mrb[0].mxu0 %v3103
        %v4009 = vpop.f32.mrb[0].mxu0
        %v4010 = vadd.f32 %v3849, %v4009
        %v4011 = vpop.f32.mrb[0].mxu0
        %v4012 = vpop.f32.mrb[0].mxu0
        %v4013 = vadd.f32 %v3852, %v4012
        %v4014 = vpop.f32.mrb[0].mxu0
        %4015 = vmatprep.mubr.bf16.mxu0 %v3113
        %4016 = vmatmul.mubr.bf16.gmra.mrb[0].mxu0 %v3112
        %v4017 = vpop.f32.mrb[0].mxu0
        %v4018 = vadd.f32 %v3857, %v4017
        %v4019 = vpop.f32.mrb[0].mxu0
        %v4020 = vpop.f32.mrb[0].mxu0
        %v4021 = vadd.f32 %v3860, %v4020
        %v4022 = vpop.f32.mrb[0].mxu0
        %4023 = vdwg.mxu0
        %4024 = vmatprep.subr.bf16.mxu0 0
        %4025 = vmatpush1.bf16.msra.mxu0 %v3590
        %4026 = vmatprep.subr.bf16.mxu0 0
        %4027 = vmatpush1.bf16.msra.mxu0 %v3591
        %4028 = vmatprep.subr.bf16.mxu0 0
        %4029 = vmatpush1.bf16.msra.mxu0 %v3592
        %4030 = vmatprep.subr.bf16.mxu0 0
        %4031 = vmatpush1.bf16.msra.mxu0 %v3593
        %4032 = vmatprep.subr.bf16.mxu0 0
        %4033 = vmatpush1.bf16.msra.mxu0 %v3594
        %4034 = vmatprep.subr.bf16.mxu0 0
        %4035 = vmatpush1.bf16.msra.mxu0 %v3595
        %4036 = vmatprep.subr.bf16.mxu0 0
        %4037 = vmatpush1.bf16.msra.mxu0 %v3596
        %4038 = vmatprep.subr.bf16.mxu0 0
        %4039 = vmatpush1.bf16.msra.mxu0 %v3597
        %4040 = vmatprep.subr.bf16.mxu0 0
        %4041 = vmatpush1.bf16.msra.mxu0 %v3598
        %4042 = vmatprep.subr.bf16.mxu0 0
        %4043 = vmatpush1.bf16.msra.mxu0 %v3599
        %4044 = vmatprep.subr.bf16.mxu0 0
        %4045 = vmatpush1.bf16.msra.mxu0 %v3600
        %4046 = vmatprep.subr.bf16.mxu0 0
        %4047 = vmatpush1.bf16.msra.mxu0 %v3601
        %4048 = vmatprep.subr.bf16.mxu0 0
        %4049 = vmatpush1.bf16.msra.mxu0 %v3602
        %4050 = vmatprep.subr.bf16.mxu0 0
        %4051 = vmatpush1.bf16.msra.mxu0 %v3603
        %4052 = vmatprep.subr.bf16.mxu0 0
        %4053 = vmatpush1.bf16.msra.mxu0 %v3604
        %4054 = vmatprep.subr.bf16.mxu0 0
        %4055 = vmatpush1.bf16.msra.mxu0 %v3605
        %4056 = vmatprep.mubr.bf16.mxu0 %v2980
        %4057 = vmatmul.mubr.bf16.gmra.mrb[0].mxu0 %v2979
        %v4058 = vpop.f32.mrb[0].mxu0
        %v4059 = vadd.f32 %v3898, %v4058
        %v4060 = vpop.f32.mrb[0].mxu0
        %v4061 = vpop.f32.mrb[0].mxu0
        %v4062 = vadd.f32 %v3901, %v4061
        %v4063 = vpop.f32.mrb[0].mxu0
        %4064 = vmatprep.mubr.bf16.mxu0 %v2989
        %4065 = vmatmul.mubr.bf16.gmra.mrb[0].mxu0 %v2988
        %v4066 = vpop.f32.mrb[0].mxu0
        %v4067 = vadd.f32 %v3906, %v4066
        %v4068 = vpop.f32.mrb[0].mxu0
        %v4069 = vpop.f32.mrb[0].mxu0
        %v4070 = vadd.f32 %v3909, %v4069
        %v4071 = vpop.f32.mrb[0].mxu0
        %4072 = vmatprep.mubr.bf16.mxu0 %v2998
        %4073 = vmatmul.mubr.bf16.gmra.mrb[0].mxu0 %v2997
        %v4074 = vpop.f32.mrb[0].mxu0
        %v4075 = vadd.f32 %v3914, %v4074
        %v4076 = vpop.f32.mrb[0].mxu0
        %v4077 = vpop.f32.mrb[0].mxu0
        %v4078 = vadd.f32 %v3917, %v4077
        %v4079 = vpop.f32.mrb[0].mxu0
        %4080 = vmatprep.mubr.bf16.mxu0 %v3007
        %4081 = vmatmul.mubr.bf16.gmra.mrb[0].mxu0 %v3006
        %v4082 = vpop.f32.mrb[0].mxu0
        %v4083 = vadd.f32 %v3922, %v4082
        %v4084 = vpop.f32.mrb[0].mxu0
        %v4085 = vpop.f32.mrb[0].mxu0
        %v4086 = vadd.f32 %v3925, %v4085
        %v4087 = vpop.f32.mrb[0].mxu0
        %4088 = vmatprep.mubr.bf16.mxu0 %v3016
        %4089 = vmatmul.mubr.bf16.gmra.mrb[0].mxu0 %v3015
        %v4090 = vpop.f32.mrb[0].mxu0
        %v4091 = vadd.f32 %v3930, %v4090
        %v4092 = vpop.f32.mrb[0].mxu0
        %v4093 = vpop.f32.mrb[0].mxu0
        %v4094 = vadd.f32 %v3933, %v4093
        %v4095 = vpop.f32.mrb[0].mxu0
        %4096 = vmatprep.mubr.bf16.mxu0 %v3025
        %4097 = vmatmul.mubr.bf16.gmra.mrb[0].mxu0 %v3024
        %v4098 = vpop.f32.mrb[0].mxu0
        %v4099 = vadd.f32 %v3938, %v4098
        %v4100 = vpop.f32.mrb[0].mxu0
        %v4101 = vpop.f32.mrb[0].mxu0
        %v4102 = vadd.f32 %v3941, %v4101
        %v4103 = vpop.f32.mrb[0].mxu0
        %4104 = vmatprep.mubr.bf16.mxu0 %v3034
        %4105 = vmatmul.mubr.bf16.gmra.mrb[0].mxu0 %v3033
        %v4106 = vpop.f32.mrb[0].mxu0
        %v4107 = vadd.f32 %v3946, %v4106
        %v4108 = vpop.f32.mrb[0].mxu0
        %v4109 = vpop.f32.mrb[0].mxu0
        %v4110 = vadd.f32 %v3949, %v4109
        %v4111 = vpop.f32.mrb[0].mxu0
        %4112 = vmatprep.mubr.bf16.mxu0 %v3043
        %4113 = vmatmul.mubr.bf16.gmra.mrb[0].mxu0 %v3042
        %v4114 = vpop.f32.mrb[0].mxu0
        %v4115 = vadd.f32 %v3954, %v4114
        %v4116 = vpop.f32.mrb[0].mxu0
        %v4117 = vpop.f32.mrb[0].mxu0
        %v4118 = vadd.f32 %v3957, %v4117
        %v4119 = vpop.f32.mrb[0].mxu0
        %4120 = vmatprep.mubr.bf16.mxu0 %v3052
        %4121 = vmatmul.mubr.bf16.gmra.mrb[0].mxu0 %v3051
        %v4122 = vpop.f32.mrb[0].mxu0
        %v4123 = vadd.f32 %v3962, %v4122
        %v4124 = vpop.f32.mrb[0].mxu0
        %v4125 = vpop.f32.mrb[0].mxu0
        %v4126 = vadd.f32 %v3965, %v4125
        %v4127 = vpop.f32.mrb[0].mxu0
        %4128 = vmatprep.mubr.bf16.mxu0 %v3061
        %4129 = vmatmul.mubr.bf16.gmra.mrb[0].mxu0 %v3060
        %v4130 = vpop.f32.mrb[0].mxu0
        %v4131 = vadd.f32 %v3970, %v4130
        %v4132 = vpop.f32.mrb[0].mxu0
        %v4133 = vpop.f32.mrb[0].mxu0
        %v4134 = vadd.f32 %v3973, %v4133
        %v4135 = vpop.f32.mrb[0].mxu0
        %4136 = vmatprep.mubr.bf16.mxu0 %v3070
        %4137 = vmatmul.mubr.bf16.gmra.mrb[0].mxu0 %v3069
        %v4138 = vpop.f32.mrb[0].mxu0
        %v4139 = vadd.f32 %v3978, %v4138
        %v4140 = vpop.f32.mrb[0].mxu0
        %v4141 = vpop.f32.mrb[0].mxu0
        %v4142 = vadd.f32 %v3981, %v4141
        %v4143 = vpop.f32.mrb[0].mxu0
        %4144 = vmatprep.mubr.bf16.mxu0 %v3079
        %4145 = vmatmul.mubr.bf16.gmra.mrb[0].mxu0 %v3078
        %v4146 = vpop.f32.mrb[0].mxu0
        %v4147 = vadd.f32 %v3986, %v4146
        %v4148 = vpop.f32.mrb[0].mxu0
        %v4149 = vpop.f32.mrb[0].mxu0
        %v4150 = vadd.f32 %v3989, %v4149
        %v4151 = vpop.f32.mrb[0].mxu0
        %4152 = vmatprep.mubr.bf16.mxu0 %v3088
        %4153 = vmatmul.mubr.bf16.gmra.mrb[0].mxu0 %v3087
        %v4154 = vpop.f32.mrb[0].mxu0
        %v4155 = vadd.f32 %v3994, %v4154
        %v4156 = vpop.f32.mrb[0].mxu0
        %v4157 = vpop.f32.mrb[0].mxu0
        %v4158 = vadd.f32 %v3997, %v4157
        %v4159 = vpop.f32.mrb[0].mxu0
        %4160 = vmatprep.mubr.bf16.mxu0 %v3097
        %4161 = vmatmul.mubr.bf16.gmra.mrb[0].mxu0 %v3096
        %v4162 = vpop.f32.mrb[0].mxu0
        %v4163 = vadd.f32 %v4002, %v4162
        %v4164 = vpop.f32.mrb[0].mxu0
        %v4165 = vpop.f32.mrb[0].mxu0
        %v4166 = vadd.f32 %v4005, %v4165
        %v4167 = vpop.f32.mrb[0].mxu0
        %4168 = vmatprep.mubr.bf16.mxu0 %v3106
        %4169 = vmatmul.mubr.bf16.gmra.mrb[0].mxu0 %v3105
        %v4170 = vpop.f32.mrb[0].mxu0
        %v4171 = vadd.f32 %v4010, %v4170
        %v4172 = vpop.f32.mrb[0].mxu0
        %v4173 = vpop.f32.mrb[0].mxu0
        %v4174 = vadd.f32 %v4013, %v4173
        %v4175 = vpop.f32.mrb[0].mxu0
        %4176 = vmatprep.mubr.bf16.mxu0 %v3115
        %4177 = vmatmul.mubr.bf16.gmra.mrb[0].mxu0 %v3114
        %v4178 = vpop.f32.mrb[0].mxu0
        %v4179 = vadd.f32 %v4018, %v4178
        %v4180 = vpop.f32.mrb[0].mxu0
        %v4181 = vpop.f32.mrb[0].mxu0
        %v4182 = vadd.f32 %v4021, %v4181
        %v4183 = vpop.f32.mrb[0].mxu0
        %4184 = vdwg.mxu0
        %4185 = vmatprep.subr.bf16.mxu0 0
        %4186 = vmatpush1.bf16.msra.mxu0 %v3606
        %4187 = vmatprep.subr.bf16.mxu0 0
        %4188 = vmatpush1.bf16.msra.mxu0 %v3607
        %4189 = vmatprep.subr.bf16.mxu0 0
        %4190 = vmatpush1.bf16.msra.mxu0 %v3608
        %4191 = vmatprep.subr.bf16.mxu0 0
        %4192 = vmatpush1.bf16.msra.mxu0 %v3609
        %4193 = vmatprep.subr.bf16.mxu0 0
        %4194 = vmatpush1.bf16.msra.mxu0 %v3610
        %4195 = vmatprep.subr.bf16.mxu0 0
        %4196 = vmatpush1.bf16.msra.mxu0 %v3611
        %4197 = vmatprep.subr.bf16.mxu0 0
        %4198 = vmatpush1.bf16.msra.mxu0 %v3612
        %4199 = vmatprep.subr.bf16.mxu0 0
        %4200 = vmatpush1.bf16.msra.mxu0 %v3613
        %4201 = vmatprep.subr.bf16.mxu0 0
        %4202 = vmatpush1.bf16.msra.mxu0 %v3614
        %4203 = vmatprep.subr.bf16.mxu0 0
        %4204 = vmatpush1.bf16.msra.mxu0 %v3615
        %4205 = vmatprep.subr.bf16.mxu0 0
        %4206 = vmatpush1.bf16.msra.mxu0 %v3616
        %4207 = vmatprep.subr.bf16.mxu0 0
        %4208 = vmatpush1.bf16.msra.mxu0 %v3617
        %4209 = vmatprep.subr.bf16.mxu0 0
        %4210 = vmatpush1.bf16.msra.mxu0 %v3618
        %4211 = vmatprep.subr.bf16.mxu0 0
        %4212 = vmatpush1.bf16.msra.mxu0 %v3619
        %4213 = vmatprep.subr.bf16.mxu0 0
        %4214 = vmatpush1.bf16.msra.mxu0 %v3620
        %4215 = vmatprep.subr.bf16.mxu0 0
        %4216 = vmatpush1.bf16.msra.mxu0 %v3621
        %4217 = vmatprep.mubr.bf16.mxu0 %v2982
        %4218 = vmatmul.mubr.bf16.gmra.mrb[0].mxu0 %v2981
        %v4219 = vpop.f32.mrb[0].mxu0
        %v4220 = vadd.f32 %v4059, %v4219
        %v4221 = vpop.f32.mrb[0].mxu0
        %v4222 = vpop.f32.mrb[0].mxu0
        %v4223 = vadd.f32 %v4062, %v4222
        %v4224 = vpop.f32.mrb[0].mxu0
        %4225 = vmatprep.mubr.bf16.mxu0 %v2991
        %4226 = vmatmul.mubr.bf16.gmra.mrb[0].mxu0 %v2990
        %v4227 = vpop.f32.mrb[0].mxu0
        %v4228 = vadd.f32 %v4067, %v4227
        %v4229 = vpop.f32.mrb[0].mxu0
        %v4230 = vpop.f32.mrb[0].mxu0
        %v4231 = vadd.f32 %v4070, %v4230
        %v4232 = vpop.f32.mrb[0].mxu0
        %4233 = vmatprep.mubr.bf16.mxu0 %v3000
        %4234 = vmatmul.mubr.bf16.gmra.mrb[0].mxu0 %v2999
        %v4235 = vpop.f32.mrb[0].mxu0
        %v4236 = vadd.f32 %v4075, %v4235
        %v4237 = vpop.f32.mrb[0].mxu0
        %v4238 = vpop.f32.mrb[0].mxu0
        %v4239 = vadd.f32 %v4078, %v4238
        %v4240 = vpop.f32.mrb[0].mxu0
        %4241 = vmatprep.mubr.bf16.mxu0 %v3009
        %4242 = vmatmul.mubr.bf16.gmra.mrb[0].mxu0 %v3008
        %v4243 = vpop.f32.mrb[0].mxu0
        %v4244 = vadd.f32 %v4083, %v4243
        %v4245 = vpop.f32.mrb[0].mxu0
        %v4246 = vpop.f32.mrb[0].mxu0
        %v4247 = vadd.f32 %v4086, %v4246
        %v4248 = vpop.f32.mrb[0].mxu0
        %4249 = vmatprep.mubr.bf16.mxu0 %v3018
        %4250 = vmatmul.mubr.bf16.gmra.mrb[0].mxu0 %v3017
        %v4251 = vpop.f32.mrb[0].mxu0
        %v4252 = vadd.f32 %v4091, %v4251
        %v4253 = vpop.f32.mrb[0].mxu0
        %v4254 = vpop.f32.mrb[0].mxu0
        %v4255 = vadd.f32 %v4094, %v4254
        %v4256 = vpop.f32.mrb[0].mxu0
        %4257 = vmatprep.mubr.bf16.mxu0 %v3027
        %4258 = vmatmul.mubr.bf16.gmra.mrb[0].mxu0 %v3026
        %v4259 = vpop.f32.mrb[0].mxu0
        %v4260 = vadd.f32 %v4099, %v4259
        %v4261 = vpop.f32.mrb[0].mxu0
        %v4262 = vpop.f32.mrb[0].mxu0
        %v4263 = vadd.f32 %v4102, %v4262
        %v4264 = vpop.f32.mrb[0].mxu0
        %4265 = vmatprep.mubr.bf16.mxu0 %v3036
        %4266 = vmatmul.mubr.bf16.gmra.mrb[0].mxu0 %v3035
        %v4267 = vpop.f32.mrb[0].mxu0
        %v4268 = vadd.f32 %v4107, %v4267
        %v4269 = vpop.f32.mrb[0].mxu0
        %v4270 = vpop.f32.mrb[0].mxu0
        %v4271 = vadd.f32 %v4110, %v4270
        %v4272 = vpop.f32.mrb[0].mxu0
        %4273 = vmatprep.mubr.bf16.mxu0 %v3045
        %4274 = vmatmul.mubr.bf16.gmra.mrb[0].mxu0 %v3044
        %v4275 = vpop.f32.mrb[0].mxu0
        %v4276 = vadd.f32 %v4115, %v4275
        %v4277 = vpop.f32.mrb[0].mxu0
        %v4278 = vpop.f32.mrb[0].mxu0
        %v4279 = vadd.f32 %v4118, %v4278
        %v4280 = vpop.f32.mrb[0].mxu0
        %4281 = vmatprep.mubr.bf16.mxu0 %v3054
        %4282 = vmatmul.mubr.bf16.gmra.mrb[0].mxu0 %v3053
        %v4283 = vpop.f32.mrb[0].mxu0
        %v4284 = vadd.f32 %v4123, %v4283
        %v4285 = vpop.f32.mrb[0].mxu0
        %v4286 = vpop.f32.mrb[0].mxu0
        %v4287 = vadd.f32 %v4126, %v4286
        %v4288 = vpop.f32.mrb[0].mxu0
        %4289 = vmatprep.mubr.bf16.mxu0 %v3063
        %4290 = vmatmul.mubr.bf16.gmra.mrb[0].mxu0 %v3062
        %v4291 = vpop.f32.mrb[0].mxu0
        %v4292 = vadd.f32 %v4131, %v4291
        %v4293 = vpop.f32.mrb[0].mxu0
        %v4294 = vpop.f32.mrb[0].mxu0
        %v4295 = vadd.f32 %v4134, %v4294
        %v4296 = vpop.f32.mrb[0].mxu0
        %4297 = vmatprep.mubr.bf16.mxu0 %v3072
        %4298 = vmatmul.mubr.bf16.gmra.mrb[0].mxu0 %v3071
        %v4299 = vpop.f32.mrb[0].mxu0
        %v4300 = vadd.f32 %v4139, %v4299
        %v4301 = vpop.f32.mrb[0].mxu0
        %v4302 = vpop.f32.mrb[0].mxu0
        %v4303 = vadd.f32 %v4142, %v4302
        %v4304 = vpop.f32.mrb[0].mxu0
        %4305 = vmatprep.mubr.bf16.mxu0 %v3081
        %4306 = vmatmul.mubr.bf16.gmra.mrb[0].mxu0 %v3080
        %v4307 = vpop.f32.mrb[0].mxu0
        %v4308 = vadd.f32 %v4147, %v4307
        %v4309 = vpop.f32.mrb[0].mxu0
        %v4310 = vpop.f32.mrb[0].mxu0
        %v4311 = vadd.f32 %v4150, %v4310
        %v4312 = vpop.f32.mrb[0].mxu0
        %4313 = vmatprep.mubr.bf16.mxu0 %v3090
        %4314 = vmatmul.mubr.bf16.gmra.mrb[0].mxu0 %v3089
        %v4315 = vpop.f32.mrb[0].mxu0
        %v4316 = vadd.f32 %v4155, %v4315
        %v4317 = vpop.f32.mrb[0].mxu0
        %v4318 = vpop.f32.mrb[0].mxu0
        %v4319 = vadd.f32 %v4158, %v4318
        %v4320 = vpop.f32.mrb[0].mxu0
        %4321 = vmatprep.mubr.bf16.mxu0 %v3099
        %4322 = vmatmul.mubr.bf16.gmra.mrb[0].mxu0 %v3098
        %v4323 = vpop.f32.mrb[0].mxu0
        %v4324 = vadd.f32 %v4163, %v4323
        %v4325 = vpop.f32.mrb[0].mxu0
        %v4326 = vpop.f32.mrb[0].mxu0
        %v4327 = vadd.f32 %v4166, %v4326
        %v4328 = vpop.f32.mrb[0].mxu0
        %4329 = vmatprep.mubr.bf16.mxu0 %v3108
        %4330 = vmatmul.mubr.bf16.gmra.mrb[0].mxu0 %v3107
        %v4331 = vpop.f32.mrb[0].mxu0
        %v4332 = vadd.f32 %v4171, %v4331
        %v4333 = vpop.f32.mrb[0].mxu0
        %v4334 = vpop.f32.mrb[0].mxu0
        %v4335 = vadd.f32 %v4174, %v4334
        %v4336 = vpop.f32.mrb[0].mxu0
        %4337 = vmatprep.mubr.bf16.mxu0 %v3117
        %4338 = vmatmul.mubr.bf16.gmra.mrb[0].mxu0 %v3116
        %v4339 = vpop.f32.mrb[0].mxu0
        %v4340 = vadd.f32 %v4179, %v4339
        %v4341 = vpop.f32.mrb[0].mxu0
        %v4342 = vpop.f32.mrb[0].mxu0
        %v4343 = vadd.f32 %v4182, %v4342
        %v4344 = vpop.f32.mrb[0].mxu0
        %4345 = vdwg.mxu0
        %4346 = vmatprep.subr.bf16.mxu0 0
        %4347 = vmatpush1.bf16.msra.mxu0 %v3622
        %4348 = vmatprep.subr.bf16.mxu0 0
        %4349 = vmatpush1.bf16.msra.mxu0 %v3623
        %4350 = vmatprep.subr.bf16.mxu0 0
        %4351 = vmatpush1.bf16.msra.mxu0 %v3624
        %4352 = vmatprep.subr.bf16.mxu0 0
        %4353 = vmatpush1.bf16.msra.mxu0 %v3625
        %4354 = vmatprep.subr.bf16.mxu0 0
        %4355 = vmatpush1.bf16.msra.mxu0 %v3626
        %4356 = vmatprep.subr.bf16.mxu0 0
        %4357 = vmatpush1.bf16.msra.mxu0 %v3627
        %4358 = vmatprep.subr.bf16.mxu0 0
        %4359 = vmatpush1.bf16.msra.mxu0 %v3628
        %4360 = vmatprep.subr.bf16.mxu0 0
        %4361 = vmatpush1.bf16.msra.mxu0 %v3629
        %4362 = vmatprep.subr.bf16.mxu0 0
        %4363 = vmatpush1.bf16.msra.mxu0 0
        %4364 = vmatprep.subr.bf16.mxu0 0
        %4365 = vmatpush1.bf16.msra.mxu0 0
        %4366 = vmatprep.subr.bf16.mxu0 0
        %4367 = vmatpush1.bf16.msra.mxu0 0
        %4368 = vmatprep.subr.bf16.mxu0 0
        %4369 = vmatpush1.bf16.msra.mxu0 0
        %4370 = vmatprep.subr.bf16.mxu0 0
        %4371 = vmatpush1.bf16.msra.mxu0 0
        %4372 = vmatprep.subr.bf16.mxu0 0
        %4373 = vmatpush1.bf16.msra.mxu0 0
        %4374 = vmatprep.subr.bf16.mxu0 0
        %4375 = vmatpush1.bf16.msra.mxu0 0
        %4376 = vmatprep.subr.bf16.mxu0 0
        %4377 = vmatpush1.bf16.msra.mxu0 0
        %4378 = vmatprep.mubr.bf16.mxu0 0
        %4379 = vmatmul.mubr.bf16.gmra.mrb[0].mxu0 %v2983
        %v4380 = vpop.f32.mrb[0].mxu0
        %v4381 = vadd.f32 %v4220, %v4380
        %v4382 = vpop.f32.mrb[0].mxu0
        %v4383 = vpop.f32.mrb[0].mxu0
        %v4384 = vadd.f32 %v4223, %v4383
        %v4385 = vpop.f32.mrb[0].mxu0
        %4386 = vmatprep.mubr.bf16.mxu0 0
        %4387 = vmatmul.mubr.bf16.gmra.mrb[0].mxu0 %v2992
        %v4388 = vpop.f32.mrb[0].mxu0
        %v4389 = vadd.f32 %v4228, %v4388
        %v4390 = vpop.f32.mrb[0].mxu0
        %v4391 = vpop.f32.mrb[0].mxu0
        %v4392 = vadd.f32 %v4231, %v4391
        %v4393 = vpop.f32.mrb[0].mxu0
        %4394 = vmatprep.mubr.bf16.mxu0 0
        %4395 = vmatmul.mubr.bf16.gmra.mrb[0].mxu0 %v3001
        %v4396 = vpop.f32.mrb[0].mxu0
        %v4397 = vadd.f32 %v4236, %v4396
        %v4398 = vpop.f32.mrb[0].mxu0
        %v4399 = vpop.f32.mrb[0].mxu0
        %v4400 = vadd.f32 %v4239, %v4399
        %v4401 = vpop.f32.mrb[0].mxu0
        %4402 = vmatprep.mubr.bf16.mxu0 0
        %4403 = vmatmul.mubr.bf16.gmra.mrb[0].mxu0 %v3010
        %v4404 = vpop.f32.mrb[0].mxu0
        %v4405 = vadd.f32 %v4244, %v4404
        %v4406 = vpop.f32.mrb[0].mxu0
        %v4407 = vpop.f32.mrb[0].mxu0
        %v4408 = vadd.f32 %v4247, %v4407
        %v4409 = vpop.f32.mrb[0].mxu0
        %4410 = vmatprep.mubr.bf16.mxu0 0
        %4411 = vmatmul.mubr.bf16.gmra.mrb[0].mxu0 %v3019
        %v4412 = vpop.f32.mrb[0].mxu0
        %v4413 = vadd.f32 %v4252, %v4412
        %v4414 = vpop.f32.mrb[0].mxu0
        %v4415 = vpop.f32.mrb[0].mxu0
        %v4416 = vadd.f32 %v4255, %v4415
        %v4417 = vpop.f32.mrb[0].mxu0
        %4418 = vmatprep.mubr.bf16.mxu0 0
        %4419 = vmatmul.mubr.bf16.gmra.mrb[0].mxu0 %v3028
        %v4420 = vpop.f32.mrb[0].mxu0
        %v4421 = vadd.f32 %v4260, %v4420
        %v4422 = vpop.f32.mrb[0].mxu0
        %v4423 = vpop.f32.mrb[0].mxu0
        %v4424 = vadd.f32 %v4263, %v4423
        %v4425 = vpop.f32.mrb[0].mxu0
        %4426 = vmatprep.mubr.bf16.mxu0 0
        %4427 = vmatmul.mubr.bf16.gmra.mrb[0].mxu0 %v3037
        %v4428 = vpop.f32.mrb[0].mxu0
        %v4429 = vadd.f32 %v4268, %v4428
        %v4430 = vpop.f32.mrb[0].mxu0
        %v4431 = vpop.f32.mrb[0].mxu0
        %v4432 = vadd.f32 %v4271, %v4431
        %v4433 = vpop.f32.mrb[0].mxu0
        %4434 = vmatprep.mubr.bf16.mxu0 0
        %4435 = vmatmul.mubr.bf16.gmra.mrb[0].mxu0 %v3046
        %v4436 = vpop.f32.mrb[0].mxu0
        %v4437 = vadd.f32 %v4276, %v4436
        %v4438 = vpop.f32.mrb[0].mxu0
        %v4439 = vpop.f32.mrb[0].mxu0
        %v4440 = vadd.f32 %v4279, %v4439
        %v4441 = vpop.f32.mrb[0].mxu0
        %4442 = vmatprep.mubr.bf16.mxu0 0
        %4443 = vmatmul.mubr.bf16.gmra.mrb[0].mxu0 %v3055
        %v4444 = vpop.f32.mrb[0].mxu0
        %v4445 = vadd.f32 %v4284, %v4444
        %v4446 = vpop.f32.mrb[0].mxu0
        %v4447 = vpop.f32.mrb[0].mxu0
        %v4448 = vadd.f32 %v4287, %v4447
        %v4449 = vpop.f32.mrb[0].mxu0
        %4450 = vmatprep.mubr.bf16.mxu0 0
        %4451 = vmatmul.mubr.bf16.gmra.mrb[0].mxu0 %v3064
        %v4452 = vpop.f32.mrb[0].mxu0
        %v4453 = vadd.f32 %v4292, %v4452
        %v4454 = vpop.f32.mrb[0].mxu0
        %v4455 = vpop.f32.mrb[0].mxu0
        %v4456 = vadd.f32 %v4295, %v4455
        %v4457 = vpop.f32.mrb[0].mxu0
        %4458 = vmatprep.mubr.bf16.mxu0 0
        %4459 = vmatmul.mubr.bf16.gmra.mrb[0].mxu0 %v3073
        %v4460 = vpop.f32.mrb[0].mxu0
        %v4461 = vadd.f32 %v4300, %v4460
        %v4462 = vpop.f32.mrb[0].mxu0
        %v4463 = vpop.f32.mrb[0].mxu0
        %v4464 = vadd.f32 %v4303, %v4463
        %v4465 = vpop.f32.mrb[0].mxu0
        %4466 = vmatprep.mubr.bf16.mxu0 0
        %4467 = vmatmul.mubr.bf16.gmra.mrb[0].mxu0 %v3082
        %v4468 = vpop.f32.mrb[0].mxu0
        %v4469 = vadd.f32 %v4308, %v4468
        %v4470 = vpop.f32.mrb[0].mxu0
        %v4471 = vpop.f32.mrb[0].mxu0
        %v4472 = vadd.f32 %v4311, %v4471
        %v4473 = vpop.f32.mrb[0].mxu0
        %4474 = vmatprep.mubr.bf16.mxu0 0
        %4475 = vmatmul.mubr.bf16.gmra.mrb[0].mxu0 %v3091
        %v4476 = vpop.f32.mrb[0].mxu0
        %v4477 = vadd.f32 %v4316, %v4476
        %v4478 = vpop.f32.mrb[0].mxu0
        %v4479 = vpop.f32.mrb[0].mxu0
        %v4480 = vadd.f32 %v4319, %v4479
        %v4481 = vpop.f32.mrb[0].mxu0
        %4482 = vmatprep.mubr.bf16.mxu0 0
        %4483 = vmatmul.mubr.bf16.gmra.mrb[0].mxu0 %v3100
        %v4484 = vpop.f32.mrb[0].mxu0
        %v4485 = vadd.f32 %v4324, %v4484
        %v4486 = vpop.f32.mrb[0].mxu0
        %v4487 = vpop.f32.mrb[0].mxu0
        %v4488 = vadd.f32 %v4327, %v4487
        %v4489 = vpop.f32.mrb[0].mxu0
        %4490 = vmatprep.mubr.bf16.mxu0 0
        %4491 = vmatmul.mubr.bf16.gmra.mrb[0].mxu0 %v3109
        %v4492 = vpop.f32.mrb[0].mxu0
        %v4493 = vadd.f32 %v4332, %v4492
        %v4494 = vpop.f32.mrb[0].mxu0
        %v4495 = vpop.f32.mrb[0].mxu0
        %v4496 = vadd.f32 %v4335, %v4495
        %v4497 = vpop.f32.mrb[0].mxu0
        %4498 = vmatprep.mubr.bf16.mxu0 0
        %4499 = vmatmul.mubr.bf16.gmra.mrb[0].mxu0 %v3118
        %v4500 = vpop.f32.mrb[0].mxu0
        %v4501 = vadd.f32 %v4340, %v4500
        %v4502 = vpop.f32.mrb[0].mxu0
        %v4503 = vpop.f32.mrb[0].mxu0
        %v4504 = vadd.f32 %v4343, %v4503
        %v4505 = vpop.f32.mrb[0].mxu0
        %4506 = vdwg.mxu0
        %v4507 = vmax.f32 %v4381, 0.0
        %v4508 = vmax.f32 %v4384, 0.0
        %v4509 = vmax.f32 %v4389, 0.0
        %v4510 = vmax.f32 %v4392, 0.0
        %v4511 = vmax.f32 %v4397, 0.0
        %v4512 = vmax.f32 %v4400, 0.0
        %v4513 = vmax.f32 %v4405, 0.0
        %v4514 = vmax.f32 %v4408, 0.0
        %v4515 = vmax.f32 %v4413, 0.0
        %v4516 = vmax.f32 %v4416, 0.0
        %v4517 = vmax.f32 %v4421, 0.0
        %v4518 = vmax.f32 %v4424, 0.0
        %v4519 = vmax.f32 %v4429, 0.0
        %v4520 = vmax.f32 %v4432, 0.0
        %v4521 = vmax.f32 %v4437, 0.0
        %v4522 = vmax.f32 %v4440, 0.0
        %v4523 = vmax.f32 %v4445, 0.0
        %v4524 = vmax.f32 %v4448, 0.0
        %v4525 = vmax.f32 %v4453, 0.0
        %v4526 = vmax.f32 %v4456, 0.0
        %v4527 = vmax.f32 %v4461, 0.0
        %v4528 = vmax.f32 %v4464, 0.0
        %v4529 = vmax.f32 %v4469, 0.0
        %v4530 = vmax.f32 %v4472, 0.0
        %v4531 = vmax.f32 %v4477, 0.0
        %v4532 = vmax.f32 %v4480, 0.0
        %v4533 = vmax.f32 %v4485, 0.0
        %v4534 = vmax.f32 %v4488, 0.0
        %v4535 = vmax.f32 %v4493, 0.0
        %v4536 = vmax.f32 %v4496, 0.0
        %v4537 = vmax.f32 %v4501, 0.0
        %v4538 = vmax.f32 %v4504, 0.0
        %4539 = vst [vmem:[#allocation3] sm:$0xff] 0
        %4540 = vst [vmem:[#allocation3 + $0x8] sm:$0xff] 0
        %4541 = vst [vmem:[#allocation3 + $0x10] sm:$0xff] 0
        %4542 = vst [vmem:[#allocation3 + $0x18] sm:$0xff] 0
        %s4543 = scalar_lea.vmem [#allocation3], 288
        %4544 = vst [vmem:[%s4543] sm:$0xff] 0
        %4545 = vst [vmem:[%s4543 + $0x8] sm:$0xff] 0
        %4546 = vst [vmem:[%s4543 + $0x10] sm:$0xff] 0
        %4547 = vst [vmem:[%s4543 + $0x18] sm:$0xff] 0
        %4548 = vst [vmem:[#allocation3] sm:$0xf] 0
        %4549 = vst [vmem:[#allocation3 + $0x10] sm:$0xf] 0
        %4550 = vst [vmem:[#allocation3 + $0x20] sm:$0xf] 0
        %4551 = vst [vmem:[#allocation3 + $0x30] sm:$0xf] 0
        %4552 = vst [vmem:[#allocation3 + $0x40] sm:$0xf] 0
        %4553 = vst [vmem:[#allocation3 + $0x50] sm:$0xf] 0
        %4554 = vst [vmem:[#allocation3 + $0x60] sm:$0xf] 0
        %4555 = vst [vmem:[#allocation3 + $0x70] sm:$0xf] 0
        %4556 = vst [vmem:[#allocation3 + $0x80] sm:$0xf] 0
        %4557 = vst [vmem:[#allocation3 + $0x90] sm:$0xf] 0
        %4558 = vst [vmem:[#allocation3 + $0xa0] sm:$0xf] 0
        %4559 = vst [vmem:[#allocation3 + $0xb0] sm:$0xf] 0
        %4560 = vst [vmem:[#allocation3 + $0xc0] sm:$0xf] 0
        %4561 = vst [vmem:[#allocation3 + $0xd0] sm:$0xf] 0
        %4562 = vst [vmem:[#allocation3 + $0xe0] sm:$0xf] 0
        %4563 = vst [vmem:[#allocation3 + $0xf0] sm:$0xf] 0
        %4564 = vst [vmem:[#allocation3 + $0x100] sm:$0xf] 0
        %4565 = vst [vmem:[#allocation3 + $0x110] sm:$0xf] 0
        %4566 = vst [vmem:[#allocation3 + $0x120] sm:$0xf] 0
        %4567 = vst [vmem:[#allocation3 + $0x130] sm:$0xf] 0
        %4568 = vst [vmem:[#allocation3 + $0x8] sm:$0xf0] 0
        %4569 = vst [vmem:[#allocation3 + $0x18] sm:$0xf0] 0
        %4570 = vst [vmem:[#allocation3 + $0x28] sm:$0xf0] 0
        %4571 = vst [vmem:[#allocation3 + $0x38] sm:$0xf0] 0
        %4572 = vst [vmem:[#allocation3 + $0x48] sm:$0xf0] 0
        %4573 = vst [vmem:[#allocation3 + $0x58] sm:$0xf0] 0
        %4574 = vst [vmem:[#allocation3 + $0x68] sm:$0xf0] 0
        %4575 = vst [vmem:[#allocation3 + $0x78] sm:$0xf0] 0
        %4576 = vst [vmem:[#allocation3 + $0x88] sm:$0xf0] 0
        %4577 = vst [vmem:[#allocation3 + $0x98] sm:$0xf0] 0
        %4578 = vst [vmem:[#allocation3 + $0xa8] sm:$0xf0] 0
        %4579 = vst [vmem:[#allocation3 + $0xb8] sm:$0xf0] 0
        %4580 = vst [vmem:[#allocation3 + $0xc8] sm:$0xf0] 0
        %4581 = vst [vmem:[#allocation3 + $0xd8] sm:$0xf0] 0
        %4582 = vst [vmem:[#allocation3 + $0xe8] sm:$0xf0] 0
        %4583 = vst [vmem:[#allocation3 + $0xf8] sm:$0xf0] 0
        %4584 = vst [vmem:[#allocation3 + $0x108] sm:$0xf0] 0
        %4585 = vst [vmem:[#allocation3 + $0x118] sm:$0xf0] 0
        %4586 = vst [vmem:[#allocation3 + $0x128] sm:$0xf0] 0
        %4587 = vst [vmem:[#allocation3 + $0x138] sm:$0xf0] 0
        %v4588 = vpack.c.bf16 %v4508, %v4507
        %v4589 = vpack.c.bf16 %v4510, %v4509
        %v4590 = vpack.c.bf16 %v4512, %v4511
        %v4591 = vpack.c.bf16 %v4514, %v4513
        %v4592 = vpack.c.bf16 %v4516, %v4515
        %v4593 = vpack.c.bf16 %v4518, %v4517
        %v4594 = vpack.c.bf16 %v4520, %v4519
        %v4595 = vpack.c.bf16 %v4522, %v4521
        %v4596 = vpack.c.bf16 %v4524, %v4523
        %v4597 = vpack.c.bf16 %v4526, %v4525
        %v4598 = vpack.c.bf16 %v4528, %v4527
        %v4599 = vpack.c.bf16 %v4530, %v4529
        %v4600 = vpack.c.bf16 %v4532, %v4531
        %v4601 = vpack.c.bf16 %v4534, %v4533
        %v4602 = vpack.c.bf16 %v4536, %v4535
        %v4603 = vpack.c.bf16 %v4538, %v4537
        %v4620 = vrot.slane %v4588, 4
        %v4621 = vrot.slane %v4589, 4
        %v4622 = vrot.slane %v4590, 4
        %v4623 = vrot.slane %v4591, 4
        %v4624 = vrot.slane %v4592, 4
        %v4625 = vrot.slane %v4593, 4
        %v4626 = vrot.slane %v4594, 4
        %v4627 = vrot.slane %v4595, 4
        %v4628 = vrot.slane %v4596, 4
        %v4629 = vrot.slane %v4597, 4
        %v4630 = vrot.slane %v4598, 4
        %v4631 = vrot.slane %v4599, 4
        %v4632 = vrot.slane %v4600, 4
        %v4633 = vrot.slane %v4601, 4
        %v4634 = vrot.slane %v4602, 4
        %v4635 = vrot.slane %v4603, 4
        %s4652 = scalar_lea.vmem [#allocation3], 32
        %4653 = vst [vmem:[%s4652] sm:$0xf0] %v4620
        %4654 = vst [vmem:[%s4652 + $0x8] sm:$0xf] %v4620
        %4655 = vst [vmem:[%s4652 + $0x10] sm:$0xf0] %v4621
        %4656 = vst [vmem:[%s4652 + $0x18] sm:$0xf] %v4621
        %4657 = vst [vmem:[%s4652 + $0x20] sm:$0xf0] %v4622
        %4658 = vst [vmem:[%s4652 + $0x28] sm:$0xf] %v4622
        %4659 = vst [vmem:[%s4652 + $0x30] sm:$0xf0] %v4623
        %4660 = vst [vmem:[%s4652 + $0x38] sm:$0xf] %v4623
        %4661 = vst [vmem:[%s4652 + $0x40] sm:$0xf0] %v4624
        %4662 = vst [vmem:[%s4652 + $0x48] sm:$0xf] %v4624
        %4663 = vst [vmem:[%s4652 + $0x50] sm:$0xf0] %v4625
        %4664 = vst [vmem:[%s4652 + $0x58] sm:$0xf] %v4625
        %4665 = vst [vmem:[%s4652 + $0x60] sm:$0xf0] %v4626
        %4666 = vst [vmem:[%s4652 + $0x68] sm:$0xf] %v4626
        %4667 = vst [vmem:[%s4652 + $0x70] sm:$0xf0] %v4627
        %4668 = vst [vmem:[%s4652 + $0x78] sm:$0xf] %v4627
        %4669 = vst [vmem:[%s4652 + $0x80] sm:$0xf0] %v4628
        %4670 = vst [vmem:[%s4652 + $0x88] sm:$0xf] %v4628
        %4671 = vst [vmem:[%s4652 + $0x90] sm:$0xf0] %v4629
        %4672 = vst [vmem:[%s4652 + $0x98] sm:$0xf] %v4629
        %4673 = vst [vmem:[%s4652 + $0xa0] sm:$0xf0] %v4630
        %4674 = vst [vmem:[%s4652 + $0xa8] sm:$0xf] %v4630
        %4675 = vst [vmem:[%s4652 + $0xb0] sm:$0xf0] %v4631
        %4676 = vst [vmem:[%s4652 + $0xb8] sm:$0xf] %v4631
        %4677 = vst [vmem:[%s4652 + $0xc0] sm:$0xf0] %v4632
        %4678 = vst [vmem:[%s4652 + $0xc8] sm:$0xf] %v4632
        %4679 = vst [vmem:[%s4652 + $0xd0] sm:$0xf0] %v4633
        %4680 = vst [vmem:[%s4652 + $0xd8] sm:$0xf] %v4633
        %4681 = vst [vmem:[%s4652 + $0xe0] sm:$0xf0] %v4634
        %4682 = vst [vmem:[%s4652 + $0xe8] sm:$0xf] %v4634
        %4683 = vst [vmem:[%s4652 + $0xf0] sm:$0xf0] %v4635
        %4684 = vst [vmem:[%s4652 + $0xf8] sm:$0xf] %v4635
        %v4685 = vld [vmem:[#allocation3] sm:$0xf8]
        %v4686 = vld [vmem:[#allocation3 + $0x8] sm:$0x7]
        %v4687 = vld [vmem:[#allocation3 + $0x10] sm:$0xf8]
        %v4688 = vld [vmem:[#allocation3 + $0x18] sm:$0x7]
        %v4689 = vld [vmem:[#allocation3 + $0x20] sm:$0xf8]
        %v4690 = vld [vmem:[#allocation3 + $0x28] sm:$0x7]
        %v4691 = vld [vmem:[#allocation3 + $0x30] sm:$0xf8]
        %v4692 = vld [vmem:[#allocation3 + $0x38] sm:$0x7]
        %v4693 = vld [vmem:[#allocation3 + $0x40] sm:$0xf8]
        %v4694 = vld [vmem:[#allocation3 + $0x48] sm:$0x7]
        %v4695 = vld [vmem:[#allocation3 + $0x50] sm:$0xf8]
        %v4696 = vld [vmem:[#allocation3 + $0x58] sm:$0x7]
        %v4697 = vld [vmem:[#allocation3 + $0x60] sm:$0xf8]
        %v4698 = vld [vmem:[#allocation3 + $0x68] sm:$0x7]
        %v4699 = vld [vmem:[#allocation3 + $0x70] sm:$0xf8]
        %v4700 = vld [vmem:[#allocation3 + $0x78] sm:$0x7]
        %v4701 = vld [vmem:[#allocation3 + $0x80] sm:$0xf8]
        %v4702 = vld [vmem:[#allocation3 + $0x88] sm:$0x7]
        %v4703 = vld [vmem:[#allocation3 + $0x90] sm:$0xf8]
        %v4704 = vld [vmem:[#allocation3 + $0x98] sm:$0x7]
        %v4705 = vld [vmem:[#allocation3 + $0xa0] sm:$0xf8]
        %v4706 = vld [vmem:[#allocation3 + $0xa8] sm:$0x7]
        %v4707 = vld [vmem:[#allocation3 + $0xb0] sm:$0xf8]
        %v4708 = vld [vmem:[#allocation3 + $0xb8] sm:$0x7]
        %v4709 = vld [vmem:[#allocation3 + $0xc0] sm:$0xf8]
        %v4710 = vld [vmem:[#allocation3 + $0xc8] sm:$0x7]
        %v4711 = vld [vmem:[#allocation3 + $0xd0] sm:$0xf8]
        %v4712 = vld [vmem:[#allocation3 + $0xd8] sm:$0x7]
        %v4713 = vld [vmem:[#allocation3 + $0xe0] sm:$0xf8]
        %v4714 = vld [vmem:[#allocation3 + $0xe8] sm:$0x7]
        %v4715 = vld [vmem:[#allocation3 + $0xf0] sm:$0xf8]
        %v4716 = vld [vmem:[#allocation3 + $0xf8] sm:$0x7]
        %vm4749 = vcmask 1044480
        %v4750 = vrot.slane %v4685, 3
        %v4751 = vrot.slane %v4686, 3
        %v4752 = vsel %vm4749, %v4750, %v4751
        %v4753 = vrot.slane %v4687, 3
        %v4754 = vrot.slane %v4688, 3
        %v4755 = vsel %vm4749, %v4753, %v4754
        %v4756 = vrot.slane %v4689, 3
        %v4757 = vrot.slane %v4690, 3
        %v4758 = vsel %vm4749, %v4756, %v4757
        %v4759 = vrot.slane %v4691, 3
        %v4760 = vrot.slane %v4692, 3
        %v4761 = vsel %vm4749, %v4759, %v4760
        %v4762 = vrot.slane %v4693, 3
        %v4763 = vrot.slane %v4694, 3
        %v4764 = vsel %vm4749, %v4762, %v4763
        %v4765 = vrot.slane %v4695, 3
        %v4766 = vrot.slane %v4696, 3
        %v4767 = vsel %vm4749, %v4765, %v4766
        %v4768 = vrot.slane %v4697, 3
        %v4769 = vrot.slane %v4698, 3
        %v4770 = vsel %vm4749, %v4768, %v4769
        %v4771 = vrot.slane %v4699, 3
        %v4772 = vrot.slane %v4700, 3
        %v4773 = vsel %vm4749, %v4771, %v4772
        %v4774 = vrot.slane %v4701, 3
        %v4775 = vrot.slane %v4702, 3
        %v4776 = vsel %vm4749, %v4774, %v4775
        %v4777 = vrot.slane %v4703, 3
        %v4778 = vrot.slane %v4704, 3
        %v4779 = vsel %vm4749, %v4777, %v4778
        %v4780 = vrot.slane %v4705, 3
        %v4781 = vrot.slane %v4706, 3
        %v4782 = vsel %vm4749, %v4780, %v4781
        %v4783 = vrot.slane %v4707, 3
        %v4784 = vrot.slane %v4708, 3
        %v4785 = vsel %vm4749, %v4783, %v4784
        %v4786 = vrot.slane %v4709, 3
        %v4787 = vrot.slane %v4710, 3
        %v4788 = vsel %vm4749, %v4786, %v4787
        %v4789 = vrot.slane %v4711, 3
        %v4790 = vrot.slane %v4712, 3
        %v4791 = vsel %vm4749, %v4789, %v4790
        %v4792 = vrot.slane %v4713, 3
        %v4793 = vrot.slane %v4714, 3
        %v4794 = vsel %vm4749, %v4792, %v4793
        %v4795 = vrot.slane %v4715, 3
        %v4796 = vrot.slane %v4716, 3
        %v4797 = vsel %vm4749, %v4795, %v4796
        %4814 = vst [vmem:[#allocation4] sm:$0xff] %v4752
        %4815 = vst [vmem:[#allocation4 + $0x48] sm:$0xff] %v4755
        %4816 = vst [vmem:[#allocation4 + $0x90] sm:$0xff] %v4758
        %4817 = vst [vmem:[#allocation4 + $0xd8] sm:$0xff] %v4761
        %4818 = vst [vmem:[#allocation4 + $0x120] sm:$0xff] %v4764
        %4819 = vst [vmem:[#allocation4 + $0x168] sm:$0xff] %v4767
        %4820 = vst [vmem:[#allocation4 + $0x1b0] sm:$0xff] %v4770
        %4821 = vst [vmem:[#allocation4 + $0x1f8] sm:$0xff] %v4773
        %4822 = vst [vmem:[#allocation4 + $0x240] sm:$0xff] %v4776
        %4823 = vst [vmem:[#allocation4 + $0x288] sm:$0xff] %v4779
        %4824 = vst [vmem:[#allocation4 + $0x2d0] sm:$0xff] %v4782
        %4825 = vst [vmem:[#allocation4 + $0x318] sm:$0xff] %v4785
        %4826 = vst [vmem:[#allocation4 + $0x360] sm:$0xff] %v4788
        %4827 = vst [vmem:[#allocation4 + $0x3a8] sm:$0xff] %v4791
        %4828 = vst [vmem:[#allocation4 + $0x3f0] sm:$0xff] %v4794
        %4829 = vst [vmem:[#allocation4 + $0x438] sm:$0xff] %v4797
        %v4830 = vld [vmem:[#allocation3] sm:$0xf0]
        %v4831 = vld [vmem:[#allocation3 + $0x8] sm:$0xf]
        %v4832 = vld [vmem:[#allocation3 + $0x10] sm:$0xf0]
        %v4833 = vld [vmem:[#allocation3 + $0x18] sm:$0xf]
        %v4834 = vld [vmem:[#allocation3 + $0x20] sm:$0xf0]
        %v4835 = vld [vmem:[#allocation3 + $0x28] sm:$0xf]
        %v4836 = vld [vmem:[#allocation3 + $0x30] sm:$0xf0]
        %v4837 = vld [vmem:[#allocation3 + $0x38] sm:$0xf]
        %v4838 = vld [vmem:[#allocation3 + $0x40] sm:$0xf0]
        %v4839 = vld [vmem:[#allocation3 + $0x48] sm:$0xf]
        %v4840 = vld [vmem:[#allocation3 + $0x50] sm:$0xf0]
        %v4841 = vld [vmem:[#allocation3 + $0x58] sm:$0xf]
        %v4842 = vld [vmem:[#allocation3 + $0x60] sm:$0xf0]
        %v4843 = vld [vmem:[#allocation3 + $0x68] sm:$0xf]
        %v4844 = vld [vmem:[#allocation3 + $0x70] sm:$0xf0]
        %v4845 = vld [vmem:[#allocation3 + $0x78] sm:$0xf]
        %v4846 = vld [vmem:[#allocation3 + $0x80] sm:$0xf0]
        %v4847 = vld [vmem:[#allocation3 + $0x88] sm:$0xf]
        %v4848 = vld [vmem:[#allocation3 + $0x90] sm:$0xf0]
        %v4849 = vld [vmem:[#allocation3 + $0x98] sm:$0xf]
        %v4850 = vld [vmem:[#allocation3 + $0xa0] sm:$0xf0]
        %v4851 = vld [vmem:[#allocation3 + $0xa8] sm:$0xf]
        %v4852 = vld [vmem:[#allocation3 + $0xb0] sm:$0xf0]
        %v4853 = vld [vmem:[#allocation3 + $0xb8] sm:$0xf]
        %v4854 = vld [vmem:[#allocation3 + $0xc0] sm:$0xf0]
        %v4855 = vld [vmem:[#allocation3 + $0xc8] sm:$0xf]
        %v4856 = vld [vmem:[#allocation3 + $0xd0] sm:$0xf0]
        %v4857 = vld [vmem:[#allocation3 + $0xd8] sm:$0xf]
        %v4858 = vld [vmem:[#allocation3 + $0xe0] sm:$0xf0]
        %v4859 = vld [vmem:[#allocation3 + $0xe8] sm:$0xf]
        %v4860 = vld [vmem:[#allocation3 + $0xf0] sm:$0xf0]
        %v4861 = vld [vmem:[#allocation3 + $0xf8] sm:$0xf]
        %v4894 = vrot.slane %v4830, 4
        %v4895 = vrot.slane %v4831, 4
        %v4896 = vsel %vm924, %v4894, %v4895
        %v4897 = vrot.slane %v4832, 4
        %v4898 = vrot.slane %v4833, 4
        %v4899 = vsel %vm924, %v4897, %v4898
        %v4900 = vrot.slane %v4834, 4
        %v4901 = vrot.slane %v4835, 4
        %v4902 = vsel %vm924, %v4900, %v4901
        %v4903 = vrot.slane %v4836, 4
        %v4904 = vrot.slane %v4837, 4
        %v4905 = vsel %vm924, %v4903, %v4904
        %v4906 = vrot.slane %v4838, 4
        %v4907 = vrot.slane %v4839, 4
        %v4908 = vsel %vm924, %v4906, %v4907
        %v4909 = vrot.slane %v4840, 4
        %v4910 = vrot.slane %v4841, 4
        %v4911 = vsel %vm924, %v4909, %v4910
        %v4912 = vrot.slane %v4842, 4
        %v4913 = vrot.slane %v4843, 4
        %v4914 = vsel %vm924, %v4912, %v4913
        %v4915 = vrot.slane %v4844, 4
        %v4916 = vrot.slane %v4845, 4
        %v4917 = vsel %vm924, %v4915, %v4916
        %v4918 = vrot.slane %v4846, 4
        %v4919 = vrot.slane %v4847, 4
        %v4920 = vsel %vm924, %v4918, %v4919
        %v4921 = vrot.slane %v4848, 4
        %v4922 = vrot.slane %v4849, 4
        %v4923 = vsel %vm924, %v4921, %v4922
        %v4924 = vrot.slane %v4850, 4
        %v4925 = vrot.slane %v4851, 4
        %v4926 = vsel %vm924, %v4924, %v4925
        %v4927 = vrot.slane %v4852, 4
        %v4928 = vrot.slane %v4853, 4
        %v4929 = vsel %vm924, %v4927, %v4928
        %v4930 = vrot.slane %v4854, 4
        %v4931 = vrot.slane %v4855, 4
        %v4932 = vsel %vm924, %v4930, %v4931
        %v4933 = vrot.slane %v4856, 4
        %v4934 = vrot.slane %v4857, 4
        %v4935 = vsel %vm924, %v4933, %v4934
        %v4936 = vrot.slane %v4858, 4
        %v4937 = vrot.slane %v4859, 4
        %v4938 = vsel %vm924, %v4936, %v4937
        %v4939 = vrot.slane %v4860, 4
        %v4940 = vrot.slane %v4861, 4
        %v4941 = vsel %vm924, %v4939, %v4940
        %4958 = vst [vmem:[#allocation4 + $0x8] sm:$0xff] %v4896
        %4959 = vst [vmem:[#allocation4 + $0x50] sm:$0xff] %v4899
        %4960 = vst [vmem:[#allocation4 + $0x98] sm:$0xff] %v4902
        %4961 = vst [vmem:[#allocation4 + $0xe0] sm:$0xff] %v4905
        %4962 = vst [vmem:[#allocation4 + $0x128] sm:$0xff] %v4908
        %4963 = vst [vmem:[#allocation4 + $0x170] sm:$0xff] %v4911
        %4964 = vst [vmem:[#allocation4 + $0x1b8] sm:$0xff] %v4914
        %4965 = vst [vmem:[#allocation4 + $0x200] sm:$0xff] %v4917
        %4966 = vst [vmem:[#allocation4 + $0x248] sm:$0xff] %v4920
        %4967 = vst [vmem:[#allocation4 + $0x290] sm:$0xff] %v4923
        %4968 = vst [vmem:[#allocation4 + $0x2d8] sm:$0xff] %v4926
        %4969 = vst [vmem:[#allocation4 + $0x320] sm:$0xff] %v4929
        %4970 = vst [vmem:[#allocation4 + $0x368] sm:$0xff] %v4932
        %4971 = vst [vmem:[#allocation4 + $0x3b0] sm:$0xff] %v4935
        %4972 = vst [vmem:[#allocation4 + $0x3f8] sm:$0xff] %v4938
        %4973 = vst [vmem:[#allocation4 + $0x440] sm:$0xff] %v4941
        %v4974 = vld [vmem:[#allocation3] sm:$0xe0]
        %v4975 = vld [vmem:[#allocation3 + $0x8] sm:$0x1f]
        %v4976 = vld [vmem:[#allocation3 + $0x10] sm:$0xe0]
        %v4977 = vld [vmem:[#allocation3 + $0x18] sm:$0x1f]
        %v4978 = vld [vmem:[#allocation3 + $0x20] sm:$0xe0]
        %v4979 = vld [vmem:[#allocation3 + $0x28] sm:$0x1f]
        %v4980 = vld [vmem:[#allocation3 + $0x30] sm:$0xe0]
        %v4981 = vld [vmem:[#allocation3 + $0x38] sm:$0x1f]
        %v4982 = vld [vmem:[#allocation3 + $0x40] sm:$0xe0]
        %v4983 = vld [vmem:[#allocation3 + $0x48] sm:$0x1f]
        %v4984 = vld [vmem:[#allocation3 + $0x50] sm:$0xe0]
        %v4985 = vld [vmem:[#allocation3 + $0x58] sm:$0x1f]
        %v4986 = vld [vmem:[#allocation3 + $0x60] sm:$0xe0]
        %v4987 = vld [vmem:[#allocation3 + $0x68] sm:$0x1f]
        %v4988 = vld [vmem:[#allocation3 + $0x70] sm:$0xe0]
        %v4989 = vld [vmem:[#allocation3 + $0x78] sm:$0x1f]
        %v4990 = vld [vmem:[#allocation3 + $0x80] sm:$0xe0]
        %v4991 = vld [vmem:[#allocation3 + $0x88] sm:$0x1f]
        %v4992 = vld [vmem:[#allocation3 + $0x90] sm:$0xe0]
        %v4993 = vld [vmem:[#allocation3 + $0x98] sm:$0x1f]
        %v4994 = vld [vmem:[#allocation3 + $0xa0] sm:$0xe0]
        %v4995 = vld [vmem:[#allocation3 + $0xa8] sm:$0x1f]
        %v4996 = vld [vmem:[#allocation3 + $0xb0] sm:$0xe0]
        %v4997 = vld [vmem:[#allocation3 + $0xb8] sm:$0x1f]
        %v4998 = vld [vmem:[#allocation3 + $0xc0] sm:$0xe0]
        %v4999 = vld [vmem:[#allocation3 + $0xc8] sm:$0x1f]
        %v5000 = vld [vmem:[#allocation3 + $0xd0] sm:$0xe0]
        %v5001 = vld [vmem:[#allocation3 + $0xd8] sm:$0x1f]
        %v5002 = vld [vmem:[#allocation3 + $0xe0] sm:$0xe0]
        %v5003 = vld [vmem:[#allocation3 + $0xe8] sm:$0x1f]
        %v5004 = vld [vmem:[#allocation3 + $0xf0] sm:$0xe0]
        %v5005 = vld [vmem:[#allocation3 + $0xf8] sm:$0x1f]
        %vm5038 = vcmask 1042432
        %v5039 = vrot.slane %v4974, 5
        %v5040 = vrot.slane %v4975, 5
        %v5041 = vsel %vm5038, %v5039, %v5040
        %v5042 = vrot.slane %v4976, 5
        %v5043 = vrot.slane %v4977, 5
        %v5044 = vsel %vm5038, %v5042, %v5043
        %v5045 = vrot.slane %v4978, 5
        %v5046 = vrot.slane %v4979, 5
        %v5047 = vsel %vm5038, %v5045, %v5046
        %v5048 = vrot.slane %v4980, 5
        %v5049 = vrot.slane %v4981, 5
        %v5050 = vsel %vm5038, %v5048, %v5049
        %v5051 = vrot.slane %v4982, 5
        %v5052 = vrot.slane %v4983, 5
        %v5053 = vsel %vm5038, %v5051, %v5052
        %v5054 = vrot.slane %v4984, 5
        %v5055 = vrot.slane %v4985, 5
        %v5056 = vsel %vm5038, %v5054, %v5055
        %v5057 = vrot.slane %v4986, 5
        %v5058 = vrot.slane %v4987, 5
        %v5059 = vsel %vm5038, %v5057, %v5058
        %v5060 = vrot.slane %v4988, 5
        %v5061 = vrot.slane %v4989, 5
        %v5062 = vsel %vm5038, %v5060, %v5061
        %v5063 = vrot.slane %v4990, 5
        %v5064 = vrot.slane %v4991, 5
        %v5065 = vsel %vm5038, %v5063, %v5064
        %v5066 = vrot.slane %v4992, 5
        %v5067 = vrot.slane %v4993, 5
        %v5068 = vsel %vm5038, %v5066, %v5067
        %v5069 = vrot.slane %v4994, 5
        %v5070 = vrot.slane %v4995, 5
        %v5071 = vsel %vm5038, %v5069, %v5070
        %v5072 = vrot.slane %v4996, 5
        %v5073 = vrot.slane %v4997, 5
        %v5074 = vsel %vm5038, %v5072, %v5073
        %v5075 = vrot.slane %v4998, 5
        %v5076 = vrot.slane %v4999, 5
        %v5077 = vsel %vm5038, %v5075, %v5076
        %v5078 = vrot.slane %v5000, 5
        %v5079 = vrot.slane %v5001, 5
        %v5080 = vsel %vm5038, %v5078, %v5079
        %v5081 = vrot.slane %v5002, 5
        %v5082 = vrot.slane %v5003, 5
        %v5083 = vsel %vm5038, %v5081, %v5082
        %v5084 = vrot.slane %v5004, 5
        %v5085 = vrot.slane %v5005, 5
        %v5086 = vsel %vm5038, %v5084, %v5085
        %5103 = vst [vmem:[#allocation4 + $0x10] sm:$0xff] %v5041
        %5104 = vst [vmem:[#allocation4 + $0x58] sm:$0xff] %v5044
        %5105 = vst [vmem:[#allocation4 + $0xa0] sm:$0xff] %v5047
        %5106 = vst [vmem:[#allocation4 + $0xe8] sm:$0xff] %v5050
        %5107 = vst [vmem:[#allocation4 + $0x130] sm:$0xff] %v5053
        %5108 = vst [vmem:[#allocation4 + $0x178] sm:$0xff] %v5056
        %5109 = vst [vmem:[#allocation4 + $0x1c0] sm:$0xff] %v5059
        %5110 = vst [vmem:[#allocation4 + $0x208] sm:$0xff] %v5062
        %5111 = vst [vmem:[#allocation4 + $0x250] sm:$0xff] %v5065
        %5112 = vst [vmem:[#allocation4 + $0x298] sm:$0xff] %v5068
        %5113 = vst [vmem:[#allocation4 + $0x2e0] sm:$0xff] %v5071
        %5114 = vst [vmem:[#allocation4 + $0x328] sm:$0xff] %v5074
        %5115 = vst [vmem:[#allocation4 + $0x370] sm:$0xff] %v5077
        %5116 = vst [vmem:[#allocation4 + $0x3b8] sm:$0xff] %v5080
        %5117 = vst [vmem:[#allocation4 + $0x400] sm:$0xff] %v5083
        %5118 = vst [vmem:[#allocation4 + $0x448] sm:$0xff] %v5086
        %v5119 = vld [vmem:[%s4652] sm:$0xf8]
        %v5120 = vld [vmem:[%s4652 + $0x8] sm:$0x7]
        %v5121 = vld [vmem:[%s4652 + $0x10] sm:$0xf8]
        %v5122 = vld [vmem:[%s4652 + $0x18] sm:$0x7]
        %v5123 = vld [vmem:[%s4652 + $0x20] sm:$0xf8]
        %v5124 = vld [vmem:[%s4652 + $0x28] sm:$0x7]
        %v5125 = vld [vmem:[%s4652 + $0x30] sm:$0xf8]
        %v5126 = vld [vmem:[%s4652 + $0x38] sm:$0x7]
        %v5127 = vld [vmem:[%s4652 + $0x40] sm:$0xf8]
        %v5128 = vld [vmem:[%s4652 + $0x48] sm:$0x7]
        %v5129 = vld [vmem:[%s4652 + $0x50] sm:$0xf8]
        %v5130 = vld [vmem:[%s4652 + $0x58] sm:$0x7]
        %v5131 = vld [vmem:[%s4652 + $0x60] sm:$0xf8]
        %v5132 = vld [vmem:[%s4652 + $0x68] sm:$0x7]
        %v5133 = vld [vmem:[%s4652 + $0x70] sm:$0xf8]
        %v5134 = vld [vmem:[%s4652 + $0x78] sm:$0x7]
        %v5135 = vld [vmem:[%s4652 + $0x80] sm:$0xf8]
        %v5136 = vld [vmem:[%s4652 + $0x88] sm:$0x7]
        %v5137 = vld [vmem:[%s4652 + $0x90] sm:$0xf8]
        %v5138 = vld [vmem:[%s4652 + $0x98] sm:$0x7]
        %v5139 = vld [vmem:[%s4652 + $0xa0] sm:$0xf8]
        %v5140 = vld [vmem:[%s4652 + $0xa8] sm:$0x7]
        %v5141 = vld [vmem:[%s4652 + $0xb0] sm:$0xf8]
        %v5142 = vld [vmem:[%s4652 + $0xb8] sm:$0x7]
        %v5143 = vld [vmem:[%s4652 + $0xc0] sm:$0xf8]
        %v5144 = vld [vmem:[%s4652 + $0xc8] sm:$0x7]
        %v5145 = vld [vmem:[%s4652 + $0xd0] sm:$0xf8]
        %v5146 = vld [vmem:[%s4652 + $0xd8] sm:$0x7]
        %v5147 = vld [vmem:[%s4652 + $0xe0] sm:$0xf8]
        %v5148 = vld [vmem:[%s4652 + $0xe8] sm:$0x7]
        %v5149 = vld [vmem:[%s4652 + $0xf0] sm:$0xf8]
        %v5150 = vld [vmem:[%s4652 + $0xf8] sm:$0x7]
        %v5183 = vrot.slane %v5119, 3
        %v5184 = vrot.slane %v5120, 3
        %v5185 = vsel %vm4749, %v5183, %v5184
        %v5186 = vrot.slane %v5121, 3
        %v5187 = vrot.slane %v5122, 3
        %v5188 = vsel %vm4749, %v5186, %v5187
        %v5189 = vrot.slane %v5123, 3
        %v5190 = vrot.slane %v5124, 3
        %v5191 = vsel %vm4749, %v5189, %v5190
        %v5192 = vrot.slane %v5125, 3
        %v5193 = vrot.slane %v5126, 3
        %v5194 = vsel %vm4749, %v5192, %v5193
        %v5195 = vrot.slane %v5127, 3
        %v5196 = vrot.slane %v5128, 3
        %v5197 = vsel %vm4749, %v5195, %v5196
        %v5198 = vrot.slane %v5129, 3
        %v5199 = vrot.slane %v5130, 3
        %v5200 = vsel %vm4749, %v5198, %v5199
        %v5201 = vrot.slane %v5131, 3
        %v5202 = vrot.slane %v5132, 3
        %v5203 = vsel %vm4749, %v5201, %v5202
        %v5204 = vrot.slane %v5133, 3
        %v5205 = vrot.slane %v5134, 3
        %v5206 = vsel %vm4749, %v5204, %v5205
        %v5207 = vrot.slane %v5135, 3
        %v5208 = vrot.slane %v5136, 3
        %v5209 = vsel %vm4749, %v5207, %v5208
        %v5210 = vrot.slane %v5137, 3
        %v5211 = vrot.slane %v5138, 3
        %v5212 = vsel %vm4749, %v5210, %v5211
        %v5213 = vrot.slane %v5139, 3
        %v5214 = vrot.slane %v5140, 3
        %v5215 = vsel %vm4749, %v5213, %v5214
        %v5216 = vrot.slane %v5141, 3
        %v5217 = vrot.slane %v5142, 3
        %v5218 = vsel %vm4749, %v5216, %v5217
        %v5219 = vrot.slane %v5143, 3
        %v5220 = vrot.slane %v5144, 3
        %v5221 = vsel %vm4749, %v5219, %v5220
        %v5222 = vrot.slane %v5145, 3
        %v5223 = vrot.slane %v5146, 3
        %v5224 = vsel %vm4749, %v5222, %v5223
        %v5225 = vrot.slane %v5147, 3
        %v5226 = vrot.slane %v5148, 3
        %v5227 = vsel %vm4749, %v5225, %v5226
        %v5228 = vrot.slane %v5149, 3
        %v5229 = vrot.slane %v5150, 3
        %v5230 = vsel %vm4749, %v5228, %v5229
        %5247 = vst [vmem:[#allocation4 + $0x18] sm:$0xff] %v5185
        %5248 = vst [vmem:[#allocation4 + $0x60] sm:$0xff] %v5188
        %5249 = vst [vmem:[#allocation4 + $0xa8] sm:$0xff] %v5191
        %5250 = vst [vmem:[#allocation4 + $0xf0] sm:$0xff] %v5194
        %5251 = vst [vmem:[#allocation4 + $0x138] sm:$0xff] %v5197
        %5252 = vst [vmem:[#allocation4 + $0x180] sm:$0xff] %v5200
        %5253 = vst [vmem:[#allocation4 + $0x1c8] sm:$0xff] %v5203
        %5254 = vst [vmem:[#allocation4 + $0x210] sm:$0xff] %v5206
        %5255 = vst [vmem:[#allocation4 + $0x258] sm:$0xff] %v5209
        %5256 = vst [vmem:[#allocation4 + $0x2a0] sm:$0xff] %v5212
        %5257 = vst [vmem:[#allocation4 + $0x2e8] sm:$0xff] %v5215
        %5258 = vst [vmem:[#allocation4 + $0x330] sm:$0xff] %v5218
        %5259 = vst [vmem:[#allocation4 + $0x378] sm:$0xff] %v5221
        %5260 = vst [vmem:[#allocation4 + $0x3c0] sm:$0xff] %v5224
        %5261 = vst [vmem:[#allocation4 + $0x408] sm:$0xff] %v5227
        %5262 = vst [vmem:[#allocation4 + $0x450] sm:$0xff] %v5230
        %v5263 = vld [vmem:[%s4652] sm:$0xf0]
        %v5264 = vld [vmem:[%s4652 + $0x8] sm:$0xf]
        %v5265 = vld [vmem:[%s4652 + $0x10] sm:$0xf0]
        %v5266 = vld [vmem:[%s4652 + $0x18] sm:$0xf]
        %v5267 = vld [vmem:[%s4652 + $0x20] sm:$0xf0]
        %v5268 = vld [vmem:[%s4652 + $0x28] sm:$0xf]
        %v5269 = vld [vmem:[%s4652 + $0x30] sm:$0xf0]
        %v5270 = vld [vmem:[%s4652 + $0x38] sm:$0xf]
        %v5271 = vld [vmem:[%s4652 + $0x40] sm:$0xf0]
        %v5272 = vld [vmem:[%s4652 + $0x48] sm:$0xf]
        %v5273 = vld [vmem:[%s4652 + $0x50] sm:$0xf0]
        %v5274 = vld [vmem:[%s4652 + $0x58] sm:$0xf]
        %v5275 = vld [vmem:[%s4652 + $0x60] sm:$0xf0]
        %v5276 = vld [vmem:[%s4652 + $0x68] sm:$0xf]
        %v5277 = vld [vmem:[%s4652 + $0x70] sm:$0xf0]
        %v5278 = vld [vmem:[%s4652 + $0x78] sm:$0xf]
        %v5279 = vld [vmem:[%s4652 + $0x80] sm:$0xf0]
        %v5280 = vld [vmem:[%s4652 + $0x88] sm:$0xf]
        %v5281 = vld [vmem:[%s4652 + $0x90] sm:$0xf0]
        %v5282 = vld [vmem:[%s4652 + $0x98] sm:$0xf]
        %v5283 = vld [vmem:[%s4652 + $0xa0] sm:$0xf0]
        %v5284 = vld [vmem:[%s4652 + $0xa8] sm:$0xf]
        %v5285 = vld [vmem:[%s4652 + $0xb0] sm:$0xf0]
        %v5286 = vld [vmem:[%s4652 + $0xb8] sm:$0xf]
        %v5287 = vld [vmem:[%s4652 + $0xc0] sm:$0xf0]
        %v5288 = vld [vmem:[%s4652 + $0xc8] sm:$0xf]
        %v5289 = vld [vmem:[%s4652 + $0xd0] sm:$0xf0]
        %v5290 = vld [vmem:[%s4652 + $0xd8] sm:$0xf]
        %v5291 = vld [vmem:[%s4652 + $0xe0] sm:$0xf0]
        %v5292 = vld [vmem:[%s4652 + $0xe8] sm:$0xf]
        %v5293 = vld [vmem:[%s4652 + $0xf0] sm:$0xf0]
        %v5294 = vld [vmem:[%s4652 + $0xf8] sm:$0xf]
        %v5327 = vrot.slane %v5263, 4
        %v5328 = vrot.slane %v5264, 4
        %v5329 = vsel %vm924, %v5327, %v5328
        %v5330 = vrot.slane %v5265, 4
        %v5331 = vrot.slane %v5266, 4
        %v5332 = vsel %vm924, %v5330, %v5331
        %v5333 = vrot.slane %v5267, 4
        %v5334 = vrot.slane %v5268, 4
        %v5335 = vsel %vm924, %v5333, %v5334
        %v5336 = vrot.slane %v5269, 4
        %v5337 = vrot.slane %v5270, 4
        %v5338 = vsel %vm924, %v5336, %v5337
        %v5339 = vrot.slane %v5271, 4
        %v5340 = vrot.slane %v5272, 4
        %v5341 = vsel %vm924, %v5339, %v5340
        %v5342 = vrot.slane %v5273, 4
        %v5343 = vrot.slane %v5274, 4
        %v5344 = vsel %vm924, %v5342, %v5343
        %v5345 = vrot.slane %v5275, 4
        %v5346 = vrot.slane %v5276, 4
        %v5347 = vsel %vm924, %v5345, %v5346
        %v5348 = vrot.slane %v5277, 4
        %v5349 = vrot.slane %v5278, 4
        %v5350 = vsel %vm924, %v5348, %v5349
        %v5351 = vrot.slane %v5279, 4
        %v5352 = vrot.slane %v5280, 4
        %v5353 = vsel %vm924, %v5351, %v5352
        %v5354 = vrot.slane %v5281, 4
        %v5355 = vrot.slane %v5282, 4
        %v5356 = vsel %vm924, %v5354, %v5355
        %v5357 = vrot.slane %v5283, 4
        %v5358 = vrot.slane %v5284, 4
        %v5359 = vsel %vm924, %v5357, %v5358
        %v5360 = vrot.slane %v5285, 4
        %v5361 = vrot.slane %v5286, 4
        %v5362 = vsel %vm924, %v5360, %v5361
        %v5363 = vrot.slane %v5287, 4
        %v5364 = vrot.slane %v5288, 4
        %v5365 = vsel %vm924, %v5363, %v5364
        %v5366 = vrot.slane %v5289, 4
        %v5367 = vrot.slane %v5290, 4
        %v5368 = vsel %vm924, %v5366, %v5367
        %v5369 = vrot.slane %v5291, 4
        %v5370 = vrot.slane %v5292, 4
        %v5371 = vsel %vm924, %v5369, %v5370
        %v5372 = vrot.slane %v5293, 4
        %v5373 = vrot.slane %v5294, 4
        %v5374 = vsel %vm924, %v5372, %v5373
        %5391 = vst [vmem:[#allocation4 + $0x20] sm:$0xff] %v5329
        %5392 = vst [vmem:[#allocation4 + $0x68] sm:$0xff] %v5332
        %5393 = vst [vmem:[#allocation4 + $0xb0] sm:$0xff] %v5335
        %5394 = vst [vmem:[#allocation4 + $0xf8] sm:$0xff] %v5338
        %5395 = vst [vmem:[#allocation4 + $0x140] sm:$0xff] %v5341
        %5396 = vst [vmem:[#allocation4 + $0x188] sm:$0xff] %v5344
        %5397 = vst [vmem:[#allocation4 + $0x1d0] sm:$0xff] %v5347
        %5398 = vst [vmem:[#allocation4 + $0x218] sm:$0xff] %v5350
        %5399 = vst [vmem:[#allocation4 + $0x260] sm:$0xff] %v5353
        %5400 = vst [vmem:[#allocation4 + $0x2a8] sm:$0xff] %v5356
        %5401 = vst [vmem:[#allocation4 + $0x2f0] sm:$0xff] %v5359
        %5402 = vst [vmem:[#allocation4 + $0x338] sm:$0xff] %v5362
        %5403 = vst [vmem:[#allocation4 + $0x380] sm:$0xff] %v5365
        %5404 = vst [vmem:[#allocation4 + $0x3c8] sm:$0xff] %v5368
        %5405 = vst [vmem:[#allocation4 + $0x410] sm:$0xff] %v5371
        %5406 = vst [vmem:[#allocation4 + $0x458] sm:$0xff] %v5374
        %v5407 = vld [vmem:[%s4652] sm:$0xe0]
        %v5408 = vld [vmem:[%s4652 + $0x8] sm:$0x1f]
        %v5409 = vld [vmem:[%s4652 + $0x10] sm:$0xe0]
        %v5410 = vld [vmem:[%s4652 + $0x18] sm:$0x1f]
        %v5411 = vld [vmem:[%s4652 + $0x20] sm:$0xe0]
        %v5412 = vld [vmem:[%s4652 + $0x28] sm:$0x1f]
        %v5413 = vld [vmem:[%s4652 + $0x30] sm:$0xe0]
        %v5414 = vld [vmem:[%s4652 + $0x38] sm:$0x1f]
        %v5415 = vld [vmem:[%s4652 + $0x40] sm:$0xe0]
        %v5416 = vld [vmem:[%s4652 + $0x48] sm:$0x1f]
        %v5417 = vld [vmem:[%s4652 + $0x50] sm:$0xe0]
        %v5418 = vld [vmem:[%s4652 + $0x58] sm:$0x1f]
        %v5419 = vld [vmem:[%s4652 + $0x60] sm:$0xe0]
        %v5420 = vld [vmem:[%s4652 + $0x68] sm:$0x1f]
        %v5421 = vld [vmem:[%s4652 + $0x70] sm:$0xe0]
        %v5422 = vld [vmem:[%s4652 + $0x78] sm:$0x1f]
        %v5423 = vld [vmem:[%s4652 + $0x80] sm:$0xe0]
        %v5424 = vld [vmem:[%s4652 + $0x88] sm:$0x1f]
        %v5425 = vld [vmem:[%s4652 + $0x90] sm:$0xe0]
        %v5426 = vld [vmem:[%s4652 + $0x98] sm:$0x1f]
        %v5427 = vld [vmem:[%s4652 + $0xa0] sm:$0xe0]
        %v5428 = vld [vmem:[%s4652 + $0xa8] sm:$0x1f]
        %v5429 = vld [vmem:[%s4652 + $0xb0] sm:$0xe0]
        %v5430 = vld [vmem:[%s4652 + $0xb8] sm:$0x1f]
        %v5431 = vld [vmem:[%s4652 + $0xc0] sm:$0xe0]
        %v5432 = vld [vmem:[%s4652 + $0xc8] sm:$0x1f]
        %v5433 = vld [vmem:[%s4652 + $0xd0] sm:$0xe0]
        %v5434 = vld [vmem:[%s4652 + $0xd8] sm:$0x1f]
        %v5435 = vld [vmem:[%s4652 + $0xe0] sm:$0xe0]
        %v5436 = vld [vmem:[%s4652 + $0xe8] sm:$0x1f]
        %v5437 = vld [vmem:[%s4652 + $0xf0] sm:$0xe0]
        %v5438 = vld [vmem:[%s4652 + $0xf8] sm:$0x1f]
        %v5471 = vrot.slane %v5407, 5
        %v5472 = vrot.slane %v5408, 5
        %v5473 = vsel %vm5038, %v5471, %v5472
        %v5474 = vrot.slane %v5409, 5
        %v5475 = vrot.slane %v5410, 5
        %v5476 = vsel %vm5038, %v5474, %v5475
        %v5477 = vrot.slane %v5411, 5
        %v5478 = vrot.slane %v5412, 5
        %v5479 = vsel %vm5038, %v5477, %v5478
        %v5480 = vrot.slane %v5413, 5
        %v5481 = vrot.slane %v5414, 5
        %v5482 = vsel %vm5038, %v5480, %v5481
        %v5483 = vrot.slane %v5415, 5
        %v5484 = vrot.slane %v5416, 5
        %v5485 = vsel %vm5038, %v5483, %v5484
        %v5486 = vrot.slane %v5417, 5
        %v5487 = vrot.slane %v5418, 5
        %v5488 = vsel %vm5038, %v5486, %v5487
        %v5489 = vrot.slane %v5419, 5
        %v5490 = vrot.slane %v5420, 5
        %v5491 = vsel %vm5038, %v5489, %v5490
        %v5492 = vrot.slane %v5421, 5
        %v5493 = vrot.slane %v5422, 5
        %v5494 = vsel %vm5038, %v5492, %v5493
        %v5495 = vrot.slane %v5423, 5
        %v5496 = vrot.slane %v5424, 5
        %v5497 = vsel %vm5038, %v5495, %v5496
        %v5498 = vrot.slane %v5425, 5
        %v5499 = vrot.slane %v5426, 5
        %v5500 = vsel %vm5038, %v5498, %v5499
        %v5501 = vrot.slane %v5427, 5
        %v5502 = vrot.slane %v5428, 5
        %v5503 = vsel %vm5038, %v5501, %v5502
        %v5504 = vrot.slane %v5429, 5
        %v5505 = vrot.slane %v5430, 5
        %v5506 = vsel %vm5038, %v5504, %v5505
        %v5507 = vrot.slane %v5431, 5
        %v5508 = vrot.slane %v5432, 5
        %v5509 = vsel %vm5038, %v5507, %v5508
        %v5510 = vrot.slane %v5433, 5
        %v5511 = vrot.slane %v5434, 5
        %v5512 = vsel %vm5038, %v5510, %v5511
        %v5513 = vrot.slane %v5435, 5
        %v5514 = vrot.slane %v5436, 5
        %v5515 = vsel %vm5038, %v5513, %v5514
        %v5516 = vrot.slane %v5437, 5
        %v5517 = vrot.slane %v5438, 5
        %v5518 = vsel %vm5038, %v5516, %v5517
        %5535 = vst [vmem:[#allocation4 + $0x28] sm:$0xff] %v5473
        %5536 = vst [vmem:[#allocation4 + $0x70] sm:$0xff] %v5476
        %5537 = vst [vmem:[#allocation4 + $0xb8] sm:$0xff] %v5479
        %5538 = vst [vmem:[#allocation4 + $0x100] sm:$0xff] %v5482
        %5539 = vst [vmem:[#allocation4 + $0x148] sm:$0xff] %v5485
        %5540 = vst [vmem:[#allocation4 + $0x190] sm:$0xff] %v5488
        %5541 = vst [vmem:[#allocation4 + $0x1d8] sm:$0xff] %v5491
        %5542 = vst [vmem:[#allocation4 + $0x220] sm:$0xff] %v5494
        %5543 = vst [vmem:[#allocation4 + $0x268] sm:$0xff] %v5497
        %5544 = vst [vmem:[#allocation4 + $0x2b0] sm:$0xff] %v5500
        %5545 = vst [vmem:[#allocation4 + $0x2f8] sm:$0xff] %v5503
        %5546 = vst [vmem:[#allocation4 + $0x340] sm:$0xff] %v5506
        %5547 = vst [vmem:[#allocation4 + $0x388] sm:$0xff] %v5509
        %5548 = vst [vmem:[#allocation4 + $0x3d0] sm:$0xff] %v5512
        %5549 = vst [vmem:[#allocation4 + $0x418] sm:$0xff] %v5515
        %5550 = vst [vmem:[#allocation4 + $0x460] sm:$0xff] %v5518
        %s5551 = scalar_lea.vmem [#allocation3], 64
        %v5552 = vld [vmem:[%s5551] sm:$0xf8]
        %v5553 = vld [vmem:[%s5551 + $0x8] sm:$0x7]
        %v5554 = vld [vmem:[%s5551 + $0x10] sm:$0xf8]
        %v5555 = vld [vmem:[%s5551 + $0x18] sm:$0x7]
        %v5556 = vld [vmem:[%s5551 + $0x20] sm:$0xf8]
        %v5557 = vld [vmem:[%s5551 + $0x28] sm:$0x7]
        %v5558 = vld [vmem:[%s5551 + $0x30] sm:$0xf8]
        %v5559 = vld [vmem:[%s5551 + $0x38] sm:$0x7]
        %v5560 = vld [vmem:[%s5551 + $0x40] sm:$0xf8]
        %v5561 = vld [vmem:[%s5551 + $0x48] sm:$0x7]
        %v5562 = vld [vmem:[%s5551 + $0x50] sm:$0xf8]
        %v5563 = vld [vmem:[%s5551 + $0x58] sm:$0x7]
        %v5564 = vld [vmem:[%s5551 + $0x60] sm:$0xf8]
        %v5565 = vld [vmem:[%s5551 + $0x68] sm:$0x7]
        %v5566 = vld [vmem:[%s5551 + $0x70] sm:$0xf8]
        %v5567 = vld [vmem:[%s5551 + $0x78] sm:$0x7]
        %v5568 = vld [vmem:[%s5551 + $0x80] sm:$0xf8]
        %v5569 = vld [vmem:[%s5551 + $0x88] sm:$0x7]
        %v5570 = vld [vmem:[%s5551 + $0x90] sm:$0xf8]
        %v5571 = vld [vmem:[%s5551 + $0x98] sm:$0x7]
        %v5572 = vld [vmem:[%s5551 + $0xa0] sm:$0xf8]
        %v5573 = vld [vmem:[%s5551 + $0xa8] sm:$0x7]
        %v5574 = vld [vmem:[%s5551 + $0xb0] sm:$0xf8]
        %v5575 = vld [vmem:[%s5551 + $0xb8] sm:$0x7]
        %v5576 = vld [vmem:[%s5551 + $0xc0] sm:$0xf8]
        %v5577 = vld [vmem:[%s5551 + $0xc8] sm:$0x7]
        %v5578 = vld [vmem:[%s5551 + $0xd0] sm:$0xf8]
        %v5579 = vld [vmem:[%s5551 + $0xd8] sm:$0x7]
        %v5580 = vld [vmem:[%s5551 + $0xe0] sm:$0xf8]
        %v5581 = vld [vmem:[%s5551 + $0xe8] sm:$0x7]
        %v5582 = vld [vmem:[%s5551 + $0xf0] sm:$0xf8]
        %v5583 = vld [vmem:[%s5551 + $0xf8] sm:$0x7]
        %v5616 = vrot.slane %v5552, 3
        %v5617 = vrot.slane %v5553, 3
        %v5618 = vsel %vm4749, %v5616, %v5617
        %v5619 = vrot.slane %v5554, 3
        %v5620 = vrot.slane %v5555, 3
        %v5621 = vsel %vm4749, %v5619, %v5620
        %v5622 = vrot.slane %v5556, 3
        %v5623 = vrot.slane %v5557, 3
        %v5624 = vsel %vm4749, %v5622, %v5623
        %v5625 = vrot.slane %v5558, 3
        %v5626 = vrot.slane %v5559, 3
        %v5627 = vsel %vm4749, %v5625, %v5626
        %v5628 = vrot.slane %v5560, 3
        %v5629 = vrot.slane %v5561, 3
        %v5630 = vsel %vm4749, %v5628, %v5629
        %v5631 = vrot.slane %v5562, 3
        %v5632 = vrot.slane %v5563, 3
        %v5633 = vsel %vm4749, %v5631, %v5632
        %v5634 = vrot.slane %v5564, 3
        %v5635 = vrot.slane %v5565, 3
        %v5636 = vsel %vm4749, %v5634, %v5635
        %v5637 = vrot.slane %v5566, 3
        %v5638 = vrot.slane %v5567, 3
        %v5639 = vsel %vm4749, %v5637, %v5638
        %v5640 = vrot.slane %v5568, 3
        %v5641 = vrot.slane %v5569, 3
        %v5642 = vsel %vm4749, %v5640, %v5641
        %v5643 = vrot.slane %v5570, 3
        %v5644 = vrot.slane %v5571, 3
        %v5645 = vsel %vm4749, %v5643, %v5644
        %v5646 = vrot.slane %v5572, 3
        %v5647 = vrot.slane %v5573, 3
        %v5648 = vsel %vm4749, %v5646, %v5647
        %v5649 = vrot.slane %v5574, 3
        %v5650 = vrot.slane %v5575, 3
        %v5651 = vsel %vm4749, %v5649, %v5650
        %v5652 = vrot.slane %v5576, 3
        %v5653 = vrot.slane %v5577, 3
        %v5654 = vsel %vm4749, %v5652, %v5653
        %v5655 = vrot.slane %v5578, 3
        %v5656 = vrot.slane %v5579, 3
        %v5657 = vsel %vm4749, %v5655, %v5656
        %v5658 = vrot.slane %v5580, 3
        %v5659 = vrot.slane %v5581, 3
        %v5660 = vsel %vm4749, %v5658, %v5659
        %v5661 = vrot.slane %v5582, 3
        %v5662 = vrot.slane %v5583, 3
        %v5663 = vsel %vm4749, %v5661, %v5662
        %5680 = vst [vmem:[#allocation4 + $0x30] sm:$0xff] %v5618
        %5681 = vst [vmem:[#allocation4 + $0x78] sm:$0xff] %v5621
        %5682 = vst [vmem:[#allocation4 + $0xc0] sm:$0xff] %v5624
        %5683 = vst [vmem:[#allocation4 + $0x108] sm:$0xff] %v5627
        %5684 = vst [vmem:[#allocation4 + $0x150] sm:$0xff] %v5630
        %5685 = vst [vmem:[#allocation4 + $0x198] sm:$0xff] %v5633
        %5686 = vst [vmem:[#allocation4 + $0x1e0] sm:$0xff] %v5636
        %5687 = vst [vmem:[#allocation4 + $0x228] sm:$0xff] %v5639
        %5688 = vst [vmem:[#allocation4 + $0x270] sm:$0xff] %v5642
        %5689 = vst [vmem:[#allocation4 + $0x2b8] sm:$0xff] %v5645
        %5690 = vst [vmem:[#allocation4 + $0x300] sm:$0xff] %v5648
        %5691 = vst [vmem:[#allocation4 + $0x348] sm:$0xff] %v5651
        %5692 = vst [vmem:[#allocation4 + $0x390] sm:$0xff] %v5654
        %5693 = vst [vmem:[#allocation4 + $0x3d8] sm:$0xff] %v5657
        %5694 = vst [vmem:[#allocation4 + $0x420] sm:$0xff] %v5660
        %5695 = vst [vmem:[#allocation4 + $0x468] sm:$0xff] %v5663
        %v5696 = vld [vmem:[%s5551] sm:$0xf0]
        %v5697 = vld [vmem:[%s5551 + $0x8] sm:$0xf]
        %v5698 = vld [vmem:[%s5551 + $0x10] sm:$0xf0]
        %v5699 = vld [vmem:[%s5551 + $0x18] sm:$0xf]
        %v5700 = vld [vmem:[%s5551 + $0x20] sm:$0xf0]
        %v5701 = vld [vmem:[%s5551 + $0x28] sm:$0xf]
        %v5702 = vld [vmem:[%s5551 + $0x30] sm:$0xf0]
        %v5703 = vld [vmem:[%s5551 + $0x38] sm:$0xf]
        %v5704 = vld [vmem:[%s5551 + $0x40] sm:$0xf0]
        %v5705 = vld [vmem:[%s5551 + $0x48] sm:$0xf]
        %v5706 = vld [vmem:[%s5551 + $0x50] sm:$0xf0]
        %v5707 = vld [vmem:[%s5551 + $0x58] sm:$0xf]
        %v5708 = vld [vmem:[%s5551 + $0x60] sm:$0xf0]
        %v5709 = vld [vmem:[%s5551 + $0x68] sm:$0xf]
        %v5710 = vld [vmem:[%s5551 + $0x70] sm:$0xf0]
        %v5711 = vld [vmem:[%s5551 + $0x78] sm:$0xf]
        %v5712 = vld [vmem:[%s5551 + $0x80] sm:$0xf0]
        %v5713 = vld [vmem:[%s5551 + $0x88] sm:$0xf]
        %v5714 = vld [vmem:[%s5551 + $0x90] sm:$0xf0]
        %v5715 = vld [vmem:[%s5551 + $0x98] sm:$0xf]
        %v5716 = vld [vmem:[%s5551 + $0xa0] sm:$0xf0]
        %v5717 = vld [vmem:[%s5551 + $0xa8] sm:$0xf]
        %v5718 = vld [vmem:[%s5551 + $0xb0] sm:$0xf0]
        %v5719 = vld [vmem:[%s5551 + $0xb8] sm:$0xf]
        %v5720 = vld [vmem:[%s5551 + $0xc0] sm:$0xf0]
        %v5721 = vld [vmem:[%s5551 + $0xc8] sm:$0xf]
        %v5722 = vld [vmem:[%s5551 + $0xd0] sm:$0xf0]
        %v5723 = vld [vmem:[%s5551 + $0xd8] sm:$0xf]
        %v5724 = vld [vmem:[%s5551 + $0xe0] sm:$0xf0]
        %v5725 = vld [vmem:[%s5551 + $0xe8] sm:$0xf]
        %v5726 = vld [vmem:[%s5551 + $0xf0] sm:$0xf0]
        %v5727 = vld [vmem:[%s5551 + $0xf8] sm:$0xf]
        %v5760 = vrot.slane %v5696, 4
        %v5761 = vrot.slane %v5697, 4
        %v5762 = vsel %vm924, %v5760, %v5761
        %v5763 = vrot.slane %v5698, 4
        %v5764 = vrot.slane %v5699, 4
        %v5765 = vsel %vm924, %v5763, %v5764
        %v5766 = vrot.slane %v5700, 4
        %v5767 = vrot.slane %v5701, 4
        %v5768 = vsel %vm924, %v5766, %v5767
        %v5769 = vrot.slane %v5702, 4
        %v5770 = vrot.slane %v5703, 4
        %v5771 = vsel %vm924, %v5769, %v5770
        %v5772 = vrot.slane %v5704, 4
        %v5773 = vrot.slane %v5705, 4
        %v5774 = vsel %vm924, %v5772, %v5773
        %v5775 = vrot.slane %v5706, 4
        %v5776 = vrot.slane %v5707, 4
        %v5777 = vsel %vm924, %v5775, %v5776
        %v5778 = vrot.slane %v5708, 4
        %v5779 = vrot.slane %v5709, 4
        %v5780 = vsel %vm924, %v5778, %v5779
        %v5781 = vrot.slane %v5710, 4
        %v5782 = vrot.slane %v5711, 4
        %v5783 = vsel %vm924, %v5781, %v5782
        %v5784 = vrot.slane %v5712, 4
        %v5785 = vrot.slane %v5713, 4
        %v5786 = vsel %vm924, %v5784, %v5785
        %v5787 = vrot.slane %v5714, 4
        %v5788 = vrot.slane %v5715, 4
        %v5789 = vsel %vm924, %v5787, %v5788
        %v5790 = vrot.slane %v5716, 4
        %v5791 = vrot.slane %v5717, 4
        %v5792 = vsel %vm924, %v5790, %v5791
        %v5793 = vrot.slane %v5718, 4
        %v5794 = vrot.slane %v5719, 4
        %v5795 = vsel %vm924, %v5793, %v5794
        %v5796 = vrot.slane %v5720, 4
        %v5797 = vrot.slane %v5721, 4
        %v5798 = vsel %vm924, %v5796, %v5797
        %v5799 = vrot.slane %v5722, 4
        %v5800 = vrot.slane %v5723, 4
        %v5801 = vsel %vm924, %v5799, %v5800
        %v5802 = vrot.slane %v5724, 4
        %v5803 = vrot.slane %v5725, 4
        %v5804 = vsel %vm924, %v5802, %v5803
        %v5805 = vrot.slane %v5726, 4
        %v5806 = vrot.slane %v5727, 4
        %v5807 = vsel %vm924, %v5805, %v5806
        %5824 = vst [vmem:[#allocation4 + $0x38] sm:$0xff] %v5762
        %5825 = vst [vmem:[#allocation4 + $0x80] sm:$0xff] %v5765
        %5826 = vst [vmem:[#allocation4 + $0xc8] sm:$0xff] %v5768
        %5827 = vst [vmem:[#allocation4 + $0x110] sm:$0xff] %v5771
        %5828 = vst [vmem:[#allocation4 + $0x158] sm:$0xff] %v5774
        %5829 = vst [vmem:[#allocation4 + $0x1a0] sm:$0xff] %v5777
        %5830 = vst [vmem:[#allocation4 + $0x1e8] sm:$0xff] %v5780
        %5831 = vst [vmem:[#allocation4 + $0x230] sm:$0xff] %v5783
        %5832 = vst [vmem:[#allocation4 + $0x278] sm:$0xff] %v5786
        %5833 = vst [vmem:[#allocation4 + $0x2c0] sm:$0xff] %v5789
        %5834 = vst [vmem:[#allocation4 + $0x308] sm:$0xff] %v5792
        %5835 = vst [vmem:[#allocation4 + $0x350] sm:$0xff] %v5795
        %5836 = vst [vmem:[#allocation4 + $0x398] sm:$0xff] %v5798
        %5837 = vst [vmem:[#allocation4 + $0x3e0] sm:$0xff] %v5801
        %5838 = vst [vmem:[#allocation4 + $0x428] sm:$0xff] %v5804
        %5839 = vst [vmem:[#allocation4 + $0x470] sm:$0xff] %v5807
        %v5840 = vld [vmem:[%s5551] sm:$0xe0]
        %v5841 = vld [vmem:[%s5551 + $0x8] sm:$0x1f]
        %v5842 = vld [vmem:[%s5551 + $0x10] sm:$0xe0]
        %v5843 = vld [vmem:[%s5551 + $0x18] sm:$0x1f]
        %v5844 = vld [vmem:[%s5551 + $0x20] sm:$0xe0]
        %v5845 = vld [vmem:[%s5551 + $0x28] sm:$0x1f]
        %v5846 = vld [vmem:[%s5551 + $0x30] sm:$0xe0]
        %v5847 = vld [vmem:[%s5551 + $0x38] sm:$0x1f]
        %v5848 = vld [vmem:[%s5551 + $0x40] sm:$0xe0]
        %v5849 = vld [vmem:[%s5551 + $0x48] sm:$0x1f]
        %v5850 = vld [vmem:[%s5551 + $0x50] sm:$0xe0]
        %v5851 = vld [vmem:[%s5551 + $0x58] sm:$0x1f]
        %v5852 = vld [vmem:[%s5551 + $0x60] sm:$0xe0]
        %v5853 = vld [vmem:[%s5551 + $0x68] sm:$0x1f]
        %v5854 = vld [vmem:[%s5551 + $0x70] sm:$0xe0]
        %v5855 = vld [vmem:[%s5551 + $0x78] sm:$0x1f]
        %v5856 = vld [vmem:[%s5551 + $0x80] sm:$0xe0]
        %v5857 = vld [vmem:[%s5551 + $0x88] sm:$0x1f]
        %v5858 = vld [vmem:[%s5551 + $0x90] sm:$0xe0]
        %v5859 = vld [vmem:[%s5551 + $0x98] sm:$0x1f]
        %v5860 = vld [vmem:[%s5551 + $0xa0] sm:$0xe0]
        %v5861 = vld [vmem:[%s5551 + $0xa8] sm:$0x1f]
        %v5862 = vld [vmem:[%s5551 + $0xb0] sm:$0xe0]
        %v5863 = vld [vmem:[%s5551 + $0xb8] sm:$0x1f]
        %v5864 = vld [vmem:[%s5551 + $0xc0] sm:$0xe0]
        %v5865 = vld [vmem:[%s5551 + $0xc8] sm:$0x1f]
        %v5866 = vld [vmem:[%s5551 + $0xd0] sm:$0xe0]
        %v5867 = vld [vmem:[%s5551 + $0xd8] sm:$0x1f]
        %v5868 = vld [vmem:[%s5551 + $0xe0] sm:$0xe0]
        %v5869 = vld [vmem:[%s5551 + $0xe8] sm:$0x1f]
        %v5870 = vld [vmem:[%s5551 + $0xf0] sm:$0xe0]
        %v5871 = vld [vmem:[%s5551 + $0xf8] sm:$0x1f]
        %v5904 = vrot.slane %v5840, 5
        %v5905 = vrot.slane %v5841, 5
        %v5906 = vsel %vm5038, %v5904, %v5905
        %v5907 = vrot.slane %v5842, 5
        %v5908 = vrot.slane %v5843, 5
        %v5909 = vsel %vm5038, %v5907, %v5908
        %v5910 = vrot.slane %v5844, 5
        %v5911 = vrot.slane %v5845, 5
        %v5912 = vsel %vm5038, %v5910, %v5911
        %v5913 = vrot.slane %v5846, 5
        %v5914 = vrot.slane %v5847, 5
        %v5915 = vsel %vm5038, %v5913, %v5914
        %v5916 = vrot.slane %v5848, 5
        %v5917 = vrot.slane %v5849, 5
        %v5918 = vsel %vm5038, %v5916, %v5917
        %v5919 = vrot.slane %v5850, 5
        %v5920 = vrot.slane %v5851, 5
        %v5921 = vsel %vm5038, %v5919, %v5920
        %v5922 = vrot.slane %v5852, 5
        %v5923 = vrot.slane %v5853, 5
        %v5924 = vsel %vm5038, %v5922, %v5923
        %v5925 = vrot.slane %v5854, 5
        %v5926 = vrot.slane %v5855, 5
        %v5927 = vsel %vm5038, %v5925, %v5926
        %v5928 = vrot.slane %v5856, 5
        %v5929 = vrot.slane %v5857, 5
        %v5930 = vsel %vm5038, %v5928, %v5929
        %v5931 = vrot.slane %v5858, 5
        %v5932 = vrot.slane %v5859, 5
        %v5933 = vsel %vm5038, %v5931, %v5932
        %v5934 = vrot.slane %v5860, 5
        %v5935 = vrot.slane %v5861, 5
        %v5936 = vsel %vm5038, %v5934, %v5935
        %v5937 = vrot.slane %v5862, 5
        %v5938 = vrot.slane %v5863, 5
        %v5939 = vsel %vm5038, %v5937, %v5938
        %v5940 = vrot.slane %v5864, 5
        %v5941 = vrot.slane %v5865, 5
        %v5942 = vsel %vm5038, %v5940, %v5941
        %v5943 = vrot.slane %v5866, 5
        %v5944 = vrot.slane %v5867, 5
        %v5945 = vsel %vm5038, %v5943, %v5944
        %v5946 = vrot.slane %v5868, 5
        %v5947 = vrot.slane %v5869, 5
        %v5948 = vsel %vm5038, %v5946, %v5947
        %v5949 = vrot.slane %v5870, 5
        %v5950 = vrot.slane %v5871, 5
        %v5951 = vsel %vm5038, %v5949, %v5950
        %5968 = vst [vmem:[#allocation4 + $0x40] sm:$0xff] %v5906
        %5969 = vst [vmem:[#allocation4 + $0x88] sm:$0xff] %v5909
        %5970 = vst [vmem:[#allocation4 + $0xd0] sm:$0xff] %v5912
        %5971 = vst [vmem:[#allocation4 + $0x118] sm:$0xff] %v5915
        %5972 = vst [vmem:[#allocation4 + $0x160] sm:$0xff] %v5918
        %5973 = vst [vmem:[#allocation4 + $0x1a8] sm:$0xff] %v5921
        %5974 = vst [vmem:[#allocation4 + $0x1f0] sm:$0xff] %v5924
        %5975 = vst [vmem:[#allocation4 + $0x238] sm:$0xff] %v5927
        %5976 = vst [vmem:[#allocation4 + $0x280] sm:$0xff] %v5930
        %5977 = vst [vmem:[#allocation4 + $0x2c8] sm:$0xff] %v5933
        %5978 = vst [vmem:[#allocation4 + $0x310] sm:$0xff] %v5936
        %5979 = vst [vmem:[#allocation4 + $0x358] sm:$0xff] %v5939
        %5980 = vst [vmem:[#allocation4 + $0x3a0] sm:$0xff] %v5942
        %5981 = vst [vmem:[#allocation4 + $0x3e8] sm:$0xff] %v5945
        %5982 = vst [vmem:[#allocation4 + $0x430] sm:$0xff] %v5948
        %5983 = vst [vmem:[#allocation4 + $0x478] sm:$0xff] %v5951
        %v5984 = vld [vmem:[#allocation4] sm:$0xff]
        %v5985 = vld [vmem:[#allocation4 + $0x8] sm:$0xff]
        %v5986 = vld [vmem:[#allocation4 + $0x10] sm:$0xff]
        %v5987 = vld [vmem:[#allocation4 + $0x18] sm:$0xff]
        %v5988 = vld [vmem:[#allocation4 + $0x20] sm:$0xff]
        %v5989 = vld [vmem:[#allocation4 + $0x28] sm:$0xff]
        %v5990 = vld [vmem:[#allocation4 + $0x30] sm:$0xff]
        %v5991 = vld [vmem:[#allocation4 + $0x38] sm:$0xff]
        %v5992 = vld [vmem:[#allocation4 + $0x40] sm:$0xff]
        %v5993 = vld [vmem:[#allocation4 + $0x48] sm:$0xff]
        %v5994 = vld [vmem:[#allocation4 + $0x50] sm:$0xff]
        %v5995 = vld [vmem:[#allocation4 + $0x58] sm:$0xff]
        %v5996 = vld [vmem:[#allocation4 + $0x60] sm:$0xff]
        %v5997 = vld [vmem:[#allocation4 + $0x68] sm:$0xff]
        %v5998 = vld [vmem:[#allocation4 + $0x70] sm:$0xff]
        %v5999 = vld [vmem:[#allocation4 + $0x78] sm:$0xff]
        %v6000 = vld [vmem:[#allocation4 + $0x80] sm:$0xff]
        %v6001 = vld [vmem:[#allocation4 + $0x88] sm:$0xff]
        %v6002 = vld [vmem:[#allocation4 + $0x90] sm:$0xff]
        %v6003 = vld [vmem:[#allocation4 + $0x98] sm:$0xff]
        %v6004 = vld [vmem:[#allocation4 + $0xa0] sm:$0xff]
        %v6005 = vld [vmem:[#allocation4 + $0xa8] sm:$0xff]
        %v6006 = vld [vmem:[#allocation4 + $0xb0] sm:$0xff]
        %v6007 = vld [vmem:[#allocation4 + $0xb8] sm:$0xff]
        %v6008 = vld [vmem:[#allocation4 + $0xc0] sm:$0xff]
        %v6009 = vld [vmem:[#allocation4 + $0xc8] sm:$0xff]
        %v6010 = vld [vmem:[#allocation4 + $0xd0] sm:$0xff]
        %v6011 = vld [vmem:[#allocation4 + $0xd8] sm:$0xff]
        %v6012 = vld [vmem:[#allocation4 + $0xe0] sm:$0xff]
        %v6013 = vld [vmem:[#allocation4 + $0xe8] sm:$0xff]
        %v6014 = vld [vmem:[#allocation4 + $0xf0] sm:$0xff]
        %v6015 = vld [vmem:[#allocation4 + $0xf8] sm:$0xff]
        %v6016 = vld [vmem:[#allocation4 + $0x100] sm:$0xff]
        %v6017 = vld [vmem:[#allocation4 + $0x108] sm:$0xff]
        %v6018 = vld [vmem:[#allocation4 + $0x110] sm:$0xff]
        %v6019 = vld [vmem:[#allocation4 + $0x118] sm:$0xff]
        %v6020 = vld [vmem:[#allocation4 + $0x120] sm:$0xff]
        %v6021 = vld [vmem:[#allocation4 + $0x128] sm:$0xff]
        %v6022 = vld [vmem:[#allocation4 + $0x130] sm:$0xff]
        %v6023 = vld [vmem:[#allocation4 + $0x138] sm:$0xff]
        %v6024 = vld [vmem:[#allocation4 + $0x140] sm:$0xff]
        %v6025 = vld [vmem:[#allocation4 + $0x148] sm:$0xff]
        %v6026 = vld [vmem:[#allocation4 + $0x150] sm:$0xff]
        %v6027 = vld [vmem:[#allocation4 + $0x158] sm:$0xff]
        %v6028 = vld [vmem:[#allocation4 + $0x160] sm:$0xff]
        %v6029 = vld [vmem:[#allocation4 + $0x168] sm:$0xff]
        %v6030 = vld [vmem:[#allocation4 + $0x170] sm:$0xff]
        %v6031 = vld [vmem:[#allocation4 + $0x178] sm:$0xff]
        %v6032 = vld [vmem:[#allocation4 + $0x180] sm:$0xff]
        %v6033 = vld [vmem:[#allocation4 + $0x188] sm:$0xff]
        %v6034 = vld [vmem:[#allocation4 + $0x190] sm:$0xff]
        %v6035 = vld [vmem:[#allocation4 + $0x198] sm:$0xff]
        %v6036 = vld [vmem:[#allocation4 + $0x1a0] sm:$0xff]
        %v6037 = vld [vmem:[#allocation4 + $0x1a8] sm:$0xff]
        %v6038 = vld [vmem:[#allocation4 + $0x1b0] sm:$0xff]
        %v6039 = vld [vmem:[#allocation4 + $0x1b8] sm:$0xff]
        %v6040 = vld [vmem:[#allocation4 + $0x1c0] sm:$0xff]
        %v6041 = vld [vmem:[#allocation4 + $0x1c8] sm:$0xff]
        %v6042 = vld [vmem:[#allocation4 + $0x1d0] sm:$0xff]
        %v6043 = vld [vmem:[#allocation4 + $0x1d8] sm:$0xff]
        %v6044 = vld [vmem:[#allocation4 + $0x1e0] sm:$0xff]
        %v6045 = vld [vmem:[#allocation4 + $0x1e8] sm:$0xff]
        %v6046 = vld [vmem:[#allocation4 + $0x1f0] sm:$0xff]
        %v6047 = vld [vmem:[#allocation4 + $0x1f8] sm:$0xff]
        %v6048 = vld [vmem:[#allocation4 + $0x200] sm:$0xff]
        %v6049 = vld [vmem:[#allocation4 + $0x208] sm:$0xff]
        %v6050 = vld [vmem:[#allocation4 + $0x210] sm:$0xff]
        %v6051 = vld [vmem:[#allocation4 + $0x218] sm:$0xff]
        %v6052 = vld [vmem:[#allocation4 + $0x220] sm:$0xff]
        %v6053 = vld [vmem:[#allocation4 + $0x228] sm:$0xff]
        %v6054 = vld [vmem:[#allocation4 + $0x230] sm:$0xff]
        %v6055 = vld [vmem:[#allocation4 + $0x238] sm:$0xff]
        %v6056 = vld [vmem:[#allocation4 + $0x240] sm:$0xff]
        %v6057 = vld [vmem:[#allocation4 + $0x248] sm:$0xff]
        %v6058 = vld [vmem:[#allocation4 + $0x250] sm:$0xff]
        %v6059 = vld [vmem:[#allocation4 + $0x258] sm:$0xff]
        %v6060 = vld [vmem:[#allocation4 + $0x260] sm:$0xff]
        %v6061 = vld [vmem:[#allocation4 + $0x268] sm:$0xff]
        %v6062 = vld [vmem:[#allocation4 + $0x270] sm:$0xff]
        %v6063 = vld [vmem:[#allocation4 + $0x278] sm:$0xff]
        %v6064 = vld [vmem:[#allocation4 + $0x280] sm:$0xff]
        %v6065 = vld [vmem:[#allocation4 + $0x288] sm:$0xff]
        %v6066 = vld [vmem:[#allocation4 + $0x290] sm:$0xff]
        %v6067 = vld [vmem:[#allocation4 + $0x298] sm:$0xff]
        %v6068 = vld [vmem:[#allocation4 + $0x2a0] sm:$0xff]
        %v6069 = vld [vmem:[#allocation4 + $0x2a8] sm:$0xff]
        %v6070 = vld [vmem:[#allocation4 + $0x2b0] sm:$0xff]
        %v6071 = vld [vmem:[#allocation4 + $0x2b8] sm:$0xff]
        %v6072 = vld [vmem:[#allocation4 + $0x2c0] sm:$0xff]
        %v6073 = vld [vmem:[#allocation4 + $0x2c8] sm:$0xff]
        %v6074 = vld [vmem:[#allocation4 + $0x2d0] sm:$0xff]
        %v6075 = vld [vmem:[#allocation4 + $0x2d8] sm:$0xff]
        %v6076 = vld [vmem:[#allocation4 + $0x2e0] sm:$0xff]
        %v6077 = vld [vmem:[#allocation4 + $0x2e8] sm:$0xff]
        %v6078 = vld [vmem:[#allocation4 + $0x2f0] sm:$0xff]
        %v6079 = vld [vmem:[#allocation4 + $0x2f8] sm:$0xff]
        %v6080 = vld [vmem:[#allocation4 + $0x300] sm:$0xff]
        %v6081 = vld [vmem:[#allocation4 + $0x308] sm:$0xff]
        %v6082 = vld [vmem:[#allocation4 + $0x310] sm:$0xff]
        %v6083 = vld [vmem:[#allocation4 + $0x318] sm:$0xff]
        %v6084 = vld [vmem:[#allocation4 + $0x320] sm:$0xff]
        %v6085 = vld [vmem:[#allocation4 + $0x328] sm:$0xff]
        %v6086 = vld [vmem:[#allocation4 + $0x330] sm:$0xff]
        %v6087 = vld [vmem:[#allocation4 + $0x338] sm:$0xff]
        %v6088 = vld [vmem:[#allocation4 + $0x340] sm:$0xff]
        %v6089 = vld [vmem:[#allocation4 + $0x348] sm:$0xff]
        %v6090 = vld [vmem:[#allocation4 + $0x350] sm:$0xff]
        %v6091 = vld [vmem:[#allocation4 + $0x358] sm:$0xff]
        %v6092 = vld [vmem:[#allocation4 + $0x360] sm:$0xff]
        %v6093 = vld [vmem:[#allocation4 + $0x368] sm:$0xff]
        %v6094 = vld [vmem:[#allocation4 + $0x370] sm:$0xff]
        %v6095 = vld [vmem:[#allocation4 + $0x378] sm:$0xff]
        %v6096 = vld [vmem:[#allocation4 + $0x380] sm:$0xff]
        %v6097 = vld [vmem:[#allocation4 + $0x388] sm:$0xff]
        %v6098 = vld [vmem:[#allocation4 + $0x390] sm:$0xff]
        %v6099 = vld [vmem:[#allocation4 + $0x398] sm:$0xff]
        %v6100 = vld [vmem:[#allocation4 + $0x3a0] sm:$0xff]
        %v6101 = vld [vmem:[#allocation4 + $0x3a8] sm:$0xff]
        %v6102 = vld [vmem:[#allocation4 + $0x3b0] sm:$0xff]
        %v6103 = vld [vmem:[#allocation4 + $0x3b8] sm:$0xff]
        %v6104 = vld [vmem:[#allocation4 + $0x3c0] sm:$0xff]
        %v6105 = vld [vmem:[#allocation4 + $0x3c8] sm:$0xff]
        %v6106 = vld [vmem:[#allocation4 + $0x3d0] sm:$0xff]
        %v6107 = vld [vmem:[#allocation4 + $0x3d8] sm:$0xff]
        %v6108 = vld [vmem:[#allocation4 + $0x3e0] sm:$0xff]
        %v6109 = vld [vmem:[#allocation4 + $0x3e8] sm:$0xff]
        %v6110 = vld [vmem:[#allocation4 + $0x3f0] sm:$0xff]
        %v6111 = vld [vmem:[#allocation4 + $0x3f8] sm:$0xff]
        %v6112 = vld [vmem:[#allocation4 + $0x400] sm:$0xff]
        %v6113 = vld [vmem:[#allocation4 + $0x408] sm:$0xff]
        %v6114 = vld [vmem:[#allocation4 + $0x410] sm:$0xff]
        %v6115 = vld [vmem:[#allocation4 + $0x418] sm:$0xff]
        %v6116 = vld [vmem:[#allocation4 + $0x420] sm:$0xff]
        %v6117 = vld [vmem:[#allocation4 + $0x428] sm:$0xff]
        %v6118 = vld [vmem:[#allocation4 + $0x430] sm:$0xff]
        %v6119 = vld [vmem:[#allocation4 + $0x438] sm:$0xff]
        %v6120 = vld [vmem:[#allocation4 + $0x440] sm:$0xff]
        %v6121 = vld [vmem:[#allocation4 + $0x448] sm:$0xff]
        %v6122 = vld [vmem:[#allocation4 + $0x450] sm:$0xff]
        %v6123 = vld [vmem:[#allocation4 + $0x458] sm:$0xff]
        %v6124 = vld [vmem:[#allocation4 + $0x460] sm:$0xff]
        %v6125 = vld [vmem:[#allocation4 + $0x468] sm:$0xff]
        %v6126 = vld [vmem:[#allocation4 + $0x470] sm:$0xff]
        %v6127 = vld [vmem:[#allocation4 + $0x478] sm:$0xff]
        %v6128 = vld [vmem:[#allocation10] sm:$0xf]
        %v6129 = vld [vmem:[#allocation10 + $0x4] sm:$0xf]
        %v6130 = vld [vmem:[#allocation10 + $0x8] sm:$0xf]
        %v6131 = vld [vmem:[#allocation10 + $0xc] sm:$0xf]
        %v6132 = vld [vmem:[#allocation10 + $0x10] sm:$0xf]
        %v6133 = vld [vmem:[#allocation10 + $0x14] sm:$0xf]
        %v6134 = vld [vmem:[#allocation10 + $0x18] sm:$0xf]
        %v6135 = vld [vmem:[#allocation10 + $0x1c] sm:$0xf]
        %v6136 = vld [vmem:[#allocation10 + $0x20] sm:$0xf]
        %v6137 = vld [vmem:[#allocation10 + $0x24] sm:$0xf]
        %v6138 = vld [vmem:[#allocation10 + $0x28] sm:$0xf]
        %v6139 = vld [vmem:[#allocation10 + $0x2c] sm:$0xf]
        %v6140 = vld [vmem:[#allocation10 + $0x30] sm:$0xf]
        %v6141 = vld [vmem:[#allocation10 + $0x34] sm:$0xf]
        %v6142 = vld [vmem:[#allocation10 + $0x38] sm:$0xf]
        %v6143 = vld [vmem:[#allocation10 + $0x3c] sm:$0xf]
        %v6144 = vld [vmem:[#allocation10 + $0x40] sm:$0xf]
        %v6145 = vld [vmem:[#allocation10 + $0x44] sm:$0xf]
        %v6146 = vld [vmem:[#allocation10 + $0x48] sm:$0xf]
        %v6147 = vld [vmem:[#allocation10 + $0x4c] sm:$0xf]
        %v6148 = vld [vmem:[#allocation10 + $0x50] sm:$0xf]
        %v6149 = vld [vmem:[#allocation10 + $0x54] sm:$0xf]
        %v6150 = vld [vmem:[#allocation10 + $0x58] sm:$0xf]
        %v6151 = vld [vmem:[#allocation10 + $0x5c] sm:$0xf]
        %v6152 = vld [vmem:[#allocation10 + $0x60] sm:$0xf]
        %v6153 = vld [vmem:[#allocation10 + $0x64] sm:$0xf]
        %v6154 = vld [vmem:[#allocation10 + $0x68] sm:$0xf]
        %v6155 = vld [vmem:[#allocation10 + $0x6c] sm:$0xf]
        %v6156 = vld [vmem:[#allocation10 + $0x70] sm:$0xf]
        %v6157 = vld [vmem:[#allocation10 + $0x74] sm:$0xf]
        %v6158 = vld [vmem:[#allocation10 + $0x78] sm:$0xf]
        %v6159 = vld [vmem:[#allocation10 + $0x7c] sm:$0xf]
        %v6160 = vld [vmem:[#allocation10 + $0x80] sm:$0xf]
        %v6161 = vld [vmem:[#allocation10 + $0x84] sm:$0xf]
        %v6162 = vld [vmem:[#allocation10 + $0x88] sm:$0xf]
        %v6163 = vld [vmem:[#allocation10 + $0x8c] sm:$0xf]
        %v6164 = vld [vmem:[#allocation10 + $0x90] sm:$0xf]
        %v6165 = vld [vmem:[#allocation10 + $0x94] sm:$0xf]
        %v6166 = vld [vmem:[#allocation10 + $0x98] sm:$0xf]
        %v6167 = vld [vmem:[#allocation10 + $0x9c] sm:$0xf]
        %v6168 = vld [vmem:[#allocation10 + $0xa0] sm:$0xf]
        %v6169 = vld [vmem:[#allocation10 + $0xa4] sm:$0xf]
        %v6170 = vld [vmem:[#allocation10 + $0xa8] sm:$0xf]
        %v6171 = vld [vmem:[#allocation10 + $0xac] sm:$0xf]
        %v6172 = vld [vmem:[#allocation10 + $0xb0] sm:$0xf]
        %v6173 = vld [vmem:[#allocation10 + $0xb4] sm:$0xf]
        %v6174 = vld [vmem:[#allocation10 + $0xb8] sm:$0xf]
        %v6175 = vld [vmem:[#allocation10 + $0xbc] sm:$0xf]
        %v6176 = vld [vmem:[#allocation10 + $0xc0] sm:$0xf]
        %v6177 = vld [vmem:[#allocation10 + $0xc4] sm:$0xf]
        %v6178 = vld [vmem:[#allocation10 + $0xc8] sm:$0xf]
        %v6179 = vld [vmem:[#allocation10 + $0xcc] sm:$0xf]
        %v6180 = vld [vmem:[#allocation10 + $0xd0] sm:$0xf]
        %v6181 = vld [vmem:[#allocation10 + $0xd4] sm:$0xf]
        %v6182 = vld [vmem:[#allocation10 + $0xd8] sm:$0xf]
        %v6183 = vld [vmem:[#allocation10 + $0xdc] sm:$0xf]
        %v6184 = vld [vmem:[#allocation10 + $0xe0] sm:$0xf]
        %v6185 = vld [vmem:[#allocation10 + $0xe4] sm:$0xf]
        %v6186 = vld [vmem:[#allocation10 + $0xe8] sm:$0xf]
        %v6187 = vld [vmem:[#allocation10 + $0xec] sm:$0xf]
        %v6188 = vld [vmem:[#allocation10 + $0xf0] sm:$0xf]
        %v6189 = vld [vmem:[#allocation10 + $0xf4] sm:$0xf]
        %v6190 = vld [vmem:[#allocation10 + $0xf8] sm:$0xf]
        %v6191 = vld [vmem:[#allocation10 + $0xfc] sm:$0xf]
        %v6192 = vld [vmem:[#allocation10 + $0x100] sm:$0xf]
        %v6193 = vld [vmem:[#allocation10 + $0x104] sm:$0xf]
        %v6194 = vld [vmem:[#allocation10 + $0x108] sm:$0xf]
        %v6195 = vld [vmem:[#allocation10 + $0x10c] sm:$0xf]
        %v6196 = vld [vmem:[#allocation10 + $0x110] sm:$0xf]
        %v6197 = vld [vmem:[#allocation10 + $0x114] sm:$0xf]
        %v6198 = vld [vmem:[#allocation10 + $0x118] sm:$0xf]
        %v6199 = vld [vmem:[#allocation10 + $0x11c] sm:$0xf]
        %v6200 = vld [vmem:[#allocation10 + $0x120] sm:$0xf]
        %v6201 = vld [vmem:[#allocation10 + $0x124] sm:$0xf]
        %v6202 = vld [vmem:[#allocation10 + $0x128] sm:$0xf]
        %v6203 = vld [vmem:[#allocation10 + $0x12c] sm:$0xf]
        %v6204 = vld [vmem:[#allocation10 + $0x130] sm:$0xf]
        %v6205 = vld [vmem:[#allocation10 + $0x134] sm:$0xf]
        %v6206 = vld [vmem:[#allocation10 + $0x138] sm:$0xf]
        %v6207 = vld [vmem:[#allocation10 + $0x13c] sm:$0xf]
        %v6208 = vld [vmem:[#allocation10 + $0x140] sm:$0xf]
        %v6209 = vld [vmem:[#allocation10 + $0x144] sm:$0xf]
        %v6210 = vld [vmem:[#allocation10 + $0x148] sm:$0xf]
        %v6211 = vld [vmem:[#allocation10 + $0x14c] sm:$0xf]
        %v6212 = vld [vmem:[#allocation10 + $0x150] sm:$0xf]
        %v6213 = vld [vmem:[#allocation10 + $0x154] sm:$0xf]
        %v6214 = vld [vmem:[#allocation10 + $0x158] sm:$0xf]
        %v6215 = vld [vmem:[#allocation10 + $0x15c] sm:$0xf]
        %v6216 = vld [vmem:[#allocation10 + $0x160] sm:$0xf]
        %v6217 = vld [vmem:[#allocation10 + $0x164] sm:$0xf]
        %v6218 = vld [vmem:[#allocation10 + $0x168] sm:$0xf]
        %v6219 = vld [vmem:[#allocation10 + $0x16c] sm:$0xf]
        %v6220 = vld [vmem:[#allocation10 + $0x170] sm:$0xf]
        %v6221 = vld [vmem:[#allocation10 + $0x174] sm:$0xf]
        %v6222 = vld [vmem:[#allocation10 + $0x178] sm:$0xf]
        %v6223 = vld [vmem:[#allocation10 + $0x17c] sm:$0xf]
        %v6224 = vld [vmem:[#allocation10 + $0x180] sm:$0xf]
        %v6225 = vld [vmem:[#allocation10 + $0x184] sm:$0xf]
        %v6226 = vld [vmem:[#allocation10 + $0x188] sm:$0xf]
        %v6227 = vld [vmem:[#allocation10 + $0x18c] sm:$0xf]
        %v6228 = vld [vmem:[#allocation10 + $0x190] sm:$0xf]
        %v6229 = vld [vmem:[#allocation10 + $0x194] sm:$0xf]
        %v6230 = vld [vmem:[#allocation10 + $0x198] sm:$0xf]
        %v6231 = vld [vmem:[#allocation10 + $0x19c] sm:$0xf]
        %v6232 = vld [vmem:[#allocation10 + $0x1a0] sm:$0xf]
        %v6233 = vld [vmem:[#allocation10 + $0x1a4] sm:$0xf]
        %v6234 = vld [vmem:[#allocation10 + $0x1a8] sm:$0xf]
        %v6235 = vld [vmem:[#allocation10 + $0x1ac] sm:$0xf]
        %v6236 = vld [vmem:[#allocation10 + $0x1b0] sm:$0xf]
        %v6237 = vld [vmem:[#allocation10 + $0x1b4] sm:$0xf]
        %v6238 = vld [vmem:[#allocation10 + $0x1b8] sm:$0xf]
        %v6239 = vld [vmem:[#allocation10 + $0x1bc] sm:$0xf]
        %v6240 = vld [vmem:[#allocation10 + $0x1c0] sm:$0xf]
        %v6241 = vld [vmem:[#allocation10 + $0x1c4] sm:$0xf]
        %v6242 = vld [vmem:[#allocation10 + $0x1c8] sm:$0xf]
        %v6243 = vld [vmem:[#allocation10 + $0x1cc] sm:$0xf]
        %v6244 = vld [vmem:[#allocation10 + $0x1d0] sm:$0xf]
        %v6245 = vld [vmem:[#allocation10 + $0x1d4] sm:$0xf]
        %v6246 = vld [vmem:[#allocation10 + $0x1d8] sm:$0xf]
        %v6247 = vld [vmem:[#allocation10 + $0x1dc] sm:$0xf]
        %v6248 = vld [vmem:[#allocation10 + $0x1e0] sm:$0xf]
        %v6249 = vld [vmem:[#allocation10 + $0x1e4] sm:$0xf]
        %v6250 = vld [vmem:[#allocation10 + $0x1e8] sm:$0xf]
        %v6251 = vld [vmem:[#allocation10 + $0x1ec] sm:$0xf]
        %v6252 = vld [vmem:[#allocation10 + $0x1f0] sm:$0xf]
        %v6253 = vld [vmem:[#allocation10 + $0x1f4] sm:$0xf]
        %v6254 = vld [vmem:[#allocation10 + $0x1f8] sm:$0xf]
        %v6255 = vld [vmem:[#allocation10 + $0x1fc] sm:$0xf]
        %v6256 = vld [vmem:[#allocation10 + $0x200] sm:$0xf]
        %v6257 = vld [vmem:[#allocation10 + $0x204] sm:$0xf]
        %v6258 = vld [vmem:[#allocation10 + $0x208] sm:$0xf]
        %v6259 = vld [vmem:[#allocation10 + $0x20c] sm:$0xf]
        %v6260 = vld [vmem:[#allocation10 + $0x210] sm:$0xf]
        %v6261 = vld [vmem:[#allocation10 + $0x214] sm:$0xf]
        %v6262 = vld [vmem:[#allocation10 + $0x218] sm:$0xf]
        %v6263 = vld [vmem:[#allocation10 + $0x21c] sm:$0xf]
        %v6264 = vld [vmem:[#allocation10 + $0x220] sm:$0xf]
        %v6265 = vld [vmem:[#allocation10 + $0x224] sm:$0xf]
        %v6266 = vld [vmem:[#allocation10 + $0x228] sm:$0xf]
        %v6267 = vld [vmem:[#allocation10 + $0x22c] sm:$0xf]
        %v6268 = vld [vmem:[#allocation10 + $0x230] sm:$0xf]
        %v6269 = vld [vmem:[#allocation10 + $0x234] sm:$0xf]
        %v6270 = vld [vmem:[#allocation10 + $0x238] sm:$0xf]
        %v6271 = vld [vmem:[#allocation10 + $0x23c] sm:$0xf]
        %v6272 = vld [vmem:[%s4] sm:$0x1]
        %v6274 = vlaneseq
        %v6275 = vshrl.u32 %v6274, 7
        %v6276 = vsub.s32 0, %v6275
        %v6277 = vrot.slane %v6272, %v6276
        %v6423 = vunpack.c.l.b16 %v6128
        %v6424 = vunpack.c.l.b16 %v6129
        %v6425 = vunpack.c.l.b16 %v6130
        %v6426 = vunpack.c.l.b16 %v6131
        %v6427 = vunpack.c.l.b16 %v6132
        %v6428 = vunpack.c.l.b16 %v6133
        %v6429 = vunpack.c.l.b16 %v6134
        %v6430 = vunpack.c.l.b16 %v6135
        %v6431 = vunpack.c.l.b16 %v6136
        %v6432 = vunpack.c.l.b16 %v6137
        %v6433 = vunpack.c.l.b16 %v6138
        %v6434 = vunpack.c.l.b16 %v6139
        %v6435 = vunpack.c.l.b16 %v6140
        %v6436 = vunpack.c.l.b16 %v6141
        %v6437 = vunpack.c.l.b16 %v6142
        %v6438 = vunpack.c.l.b16 %v6143
        %v6439 = vunpack.c.l.b16 %v6144
        %v6440 = vunpack.c.l.b16 %v6145
        %v6441 = vunpack.c.l.b16 %v6146
        %v6442 = vunpack.c.l.b16 %v6147
        %v6443 = vunpack.c.l.b16 %v6148
        %v6444 = vunpack.c.l.b16 %v6149
        %v6445 = vunpack.c.l.b16 %v6150
        %v6446 = vunpack.c.l.b16 %v6151
        %v6447 = vunpack.c.l.b16 %v6152
        %v6448 = vunpack.c.l.b16 %v6153
        %v6449 = vunpack.c.l.b16 %v6154
        %v6450 = vunpack.c.l.b16 %v6155
        %v6451 = vunpack.c.l.b16 %v6156
        %v6452 = vunpack.c.l.b16 %v6157
        %v6453 = vunpack.c.l.b16 %v6158
        %v6454 = vunpack.c.l.b16 %v6159
        %v6455 = vunpack.c.l.b16 %v6160
        %v6456 = vunpack.c.l.b16 %v6161
        %v6457 = vunpack.c.l.b16 %v6162
        %v6458 = vunpack.c.l.b16 %v6163
        %v6459 = vunpack.c.l.b16 %v6164
        %v6460 = vunpack.c.l.b16 %v6165
        %v6461 = vunpack.c.l.b16 %v6166
        %v6462 = vunpack.c.l.b16 %v6167
        %v6463 = vunpack.c.l.b16 %v6168
        %v6464 = vunpack.c.l.b16 %v6169
        %v6465 = vunpack.c.l.b16 %v6170
        %v6466 = vunpack.c.l.b16 %v6171
        %v6467 = vunpack.c.l.b16 %v6172
        %v6468 = vunpack.c.l.b16 %v6173
        %v6469 = vunpack.c.l.b16 %v6174
        %v6470 = vunpack.c.l.b16 %v6175
        %v6471 = vunpack.c.l.b16 %v6176
        %v6472 = vunpack.c.l.b16 %v6177
        %v6473 = vunpack.c.l.b16 %v6178
        %v6474 = vunpack.c.l.b16 %v6179
        %v6475 = vunpack.c.l.b16 %v6180
        %v6476 = vunpack.c.l.b16 %v6181
        %v6477 = vunpack.c.l.b16 %v6182
        %v6478 = vunpack.c.l.b16 %v6183
        %v6479 = vunpack.c.l.b16 %v6184
        %v6480 = vunpack.c.l.b16 %v6185
        %v6481 = vunpack.c.l.b16 %v6186
        %v6482 = vunpack.c.l.b16 %v6187
        %v6483 = vunpack.c.l.b16 %v6188
        %v6484 = vunpack.c.l.b16 %v6189
        %v6485 = vunpack.c.l.b16 %v6190
        %v6486 = vunpack.c.l.b16 %v6191
        %v6487 = vunpack.c.l.b16 %v6192
        %v6488 = vunpack.c.l.b16 %v6193
        %v6489 = vunpack.c.l.b16 %v6194
        %v6490 = vunpack.c.l.b16 %v6195
        %v6491 = vunpack.c.l.b16 %v6196
        %v6492 = vunpack.c.l.b16 %v6197
        %v6493 = vunpack.c.l.b16 %v6198
        %v6494 = vunpack.c.l.b16 %v6199
        %v6495 = vunpack.c.l.b16 %v6200
        %v6496 = vunpack.c.l.b16 %v6201
        %v6497 = vunpack.c.l.b16 %v6202
        %v6498 = vunpack.c.l.b16 %v6203
        %v6499 = vunpack.c.l.b16 %v6204
        %v6500 = vunpack.c.l.b16 %v6205
        %v6501 = vunpack.c.l.b16 %v6206
        %v6502 = vunpack.c.l.b16 %v6207
        %v6503 = vunpack.c.l.b16 %v6208
        %v6504 = vunpack.c.l.b16 %v6209
        %v6505 = vunpack.c.l.b16 %v6210
        %v6506 = vunpack.c.l.b16 %v6211
        %v6507 = vunpack.c.l.b16 %v6212
        %v6508 = vunpack.c.l.b16 %v6213
        %v6509 = vunpack.c.l.b16 %v6214
        %v6510 = vunpack.c.l.b16 %v6215
        %v6511 = vunpack.c.l.b16 %v6216
        %v6512 = vunpack.c.l.b16 %v6217
        %v6513 = vunpack.c.l.b16 %v6218
        %v6514 = vunpack.c.l.b16 %v6219
        %v6515 = vunpack.c.l.b16 %v6220
        %v6516 = vunpack.c.l.b16 %v6221
        %v6517 = vunpack.c.l.b16 %v6222
        %v6518 = vunpack.c.l.b16 %v6223
        %v6519 = vunpack.c.l.b16 %v6224
        %v6520 = vunpack.c.l.b16 %v6225
        %v6521 = vunpack.c.l.b16 %v6226
        %v6522 = vunpack.c.l.b16 %v6227
        %v6523 = vunpack.c.l.b16 %v6228
        %v6524 = vunpack.c.l.b16 %v6229
        %v6525 = vunpack.c.l.b16 %v6230
        %v6526 = vunpack.c.l.b16 %v6231
        %v6527 = vunpack.c.l.b16 %v6232
        %v6528 = vunpack.c.l.b16 %v6233
        %v6529 = vunpack.c.l.b16 %v6234
        %v6530 = vunpack.c.l.b16 %v6235
        %v6531 = vunpack.c.l.b16 %v6236
        %v6532 = vunpack.c.l.b16 %v6237
        %v6533 = vunpack.c.l.b16 %v6238
        %v6534 = vunpack.c.l.b16 %v6239
        %v6535 = vunpack.c.l.b16 %v6240
        %v6536 = vunpack.c.l.b16 %v6241
        %v6537 = vunpack.c.l.b16 %v6242
        %v6538 = vunpack.c.l.b16 %v6243
        %v6539 = vunpack.c.l.b16 %v6244
        %v6540 = vunpack.c.l.b16 %v6245
        %v6541 = vunpack.c.l.b16 %v6246
        %v6542 = vunpack.c.l.b16 %v6247
        %v6543 = vunpack.c.l.b16 %v6248
        %v6544 = vunpack.c.l.b16 %v6249
        %v6545 = vunpack.c.l.b16 %v6250
        %v6546 = vunpack.c.l.b16 %v6251
        %v6547 = vunpack.c.l.b16 %v6252
        %v6548 = vunpack.c.l.b16 %v6253
        %v6549 = vunpack.c.l.b16 %v6254
        %v6550 = vunpack.c.l.b16 %v6255
        %v6551 = vunpack.c.l.b16 %v6256
        %v6552 = vunpack.c.l.b16 %v6257
        %v6553 = vunpack.c.l.b16 %v6258
        %v6554 = vunpack.c.l.b16 %v6259
        %v6555 = vunpack.c.l.b16 %v6260
        %v6556 = vunpack.c.l.b16 %v6261
        %v6557 = vunpack.c.l.b16 %v6262
        %v6558 = vunpack.c.l.b16 %v6263
        %v6559 = vunpack.c.l.b16 %v6264
        %v6560 = vunpack.c.l.b16 %v6265
        %v6561 = vunpack.c.l.b16 %v6266
        %v6562 = vunpack.c.l.b16 %v6267
        %v6563 = vunpack.c.l.b16 %v6268
        %v6564 = vunpack.c.l.b16 %v6269
        %v6565 = vunpack.c.l.b16 %v6270
        %v6566 = vunpack.c.l.b16 %v6271
        %v6567 = vpack.c.b16 %v6424, %v6423
        %v6568 = vpack.c.b16 %v6426, %v6425
        %v6569 = vpack.c.b16 %v6428, %v6427
        %v6570 = vpack.c.b16 %v6430, %v6429
        %v6571 = vpack.c.b16 %v6432, %v6431
        %v6572 = vpack.c.b16 %v6434, %v6433
        %v6573 = vpack.c.b16 %v6436, %v6435
        %v6574 = vpack.c.b16 %v6438, %v6437
        %v6575 = vpack.c.b16 %v6440, %v6439
        %v6576 = vpack.c.b16 %v6442, %v6441
        %v6577 = vpack.c.b16 %v6444, %v6443
        %v6578 = vpack.c.b16 %v6446, %v6445
        %v6579 = vpack.c.b16 %v6448, %v6447
        %v6580 = vpack.c.b16 %v6450, %v6449
        %v6581 = vpack.c.b16 %v6452, %v6451
        %v6582 = vpack.c.b16 %v6454, %v6453
        %v6583 = vpack.c.b16 %v6456, %v6455
        %v6584 = vpack.c.b16 %v6458, %v6457
        %v6585 = vpack.c.b16 %v6460, %v6459
        %v6586 = vpack.c.b16 %v6462, %v6461
        %v6587 = vpack.c.b16 %v6464, %v6463
        %v6588 = vpack.c.b16 %v6466, %v6465
        %v6589 = vpack.c.b16 %v6468, %v6467
        %v6590 = vpack.c.b16 %v6470, %v6469
        %v6591 = vpack.c.b16 %v6472, %v6471
        %v6592 = vpack.c.b16 %v6474, %v6473
        %v6593 = vpack.c.b16 %v6476, %v6475
        %v6594 = vpack.c.b16 %v6478, %v6477
        %v6595 = vpack.c.b16 %v6480, %v6479
        %v6596 = vpack.c.b16 %v6482, %v6481
        %v6597 = vpack.c.b16 %v6484, %v6483
        %v6598 = vpack.c.b16 %v6486, %v6485
        %v6599 = vpack.c.b16 %v6488, %v6487
        %v6600 = vpack.c.b16 %v6490, %v6489
        %v6601 = vpack.c.b16 %v6492, %v6491
        %v6602 = vpack.c.b16 %v6494, %v6493
        %v6603 = vpack.c.b16 %v6496, %v6495
        %v6604 = vpack.c.b16 %v6498, %v6497
        %v6605 = vpack.c.b16 %v6500, %v6499
        %v6606 = vpack.c.b16 %v6502, %v6501
        %v6607 = vpack.c.b16 %v6504, %v6503
        %v6608 = vpack.c.b16 %v6506, %v6505
        %v6609 = vpack.c.b16 %v6508, %v6507
        %v6610 = vpack.c.b16 %v6510, %v6509
        %v6611 = vpack.c.b16 %v6512, %v6511
        %v6612 = vpack.c.b16 %v6514, %v6513
        %v6613 = vpack.c.b16 %v6516, %v6515
        %v6614 = vpack.c.b16 %v6518, %v6517
        %v6615 = vpack.c.b16 %v6520, %v6519
        %v6616 = vpack.c.b16 %v6522, %v6521
        %v6617 = vpack.c.b16 %v6524, %v6523
        %v6618 = vpack.c.b16 %v6526, %v6525
        %v6619 = vpack.c.b16 %v6528, %v6527
        %v6620 = vpack.c.b16 %v6530, %v6529
        %v6621 = vpack.c.b16 %v6532, %v6531
        %v6622 = vpack.c.b16 %v6534, %v6533
        %v6623 = vpack.c.b16 %v6536, %v6535
        %v6624 = vpack.c.b16 %v6538, %v6537
        %v6625 = vpack.c.b16 %v6540, %v6539
        %v6626 = vpack.c.b16 %v6542, %v6541
        %v6627 = vpack.c.b16 %v6544, %v6543
        %v6628 = vpack.c.b16 %v6546, %v6545
        %v6629 = vpack.c.b16 %v6548, %v6547
        %v6630 = vpack.c.b16 %v6550, %v6549
        %v6631 = vpack.c.b16 %v6552, %v6551
        %v6632 = vpack.c.b16 %v6554, %v6553
        %v6633 = vpack.c.b16 %v6556, %v6555
        %v6634 = vpack.c.b16 %v6558, %v6557
        %v6635 = vpack.c.b16 %v6560, %v6559
        %v6636 = vpack.c.b16 %v6562, %v6561
        %v6637 = vpack.c.b16 %v6564, %v6563
        %v6638 = vpack.c.b16 %v6566, %v6565
        %6711 = vmatprep.subr.bf16.mxu0 0
        %6712 = vmatpush1.bf16.msra.mxu0 %v6567
        %6713 = vmatprep.subr.bf16.mxu0 0
        %6714 = vmatpush1.bf16.msra.mxu0 %v6568
        %6715 = vmatprep.subr.bf16.mxu0 0
        %6716 = vmatpush1.bf16.msra.mxu0 %v6569
        %6717 = vmatprep.subr.bf16.mxu0 0
        %6718 = vmatpush1.bf16.msra.mxu0 %v6570
        %6719 = vmatprep.subr.bf16.mxu0 0
        %6720 = vmatpush1.bf16.msra.mxu0 %v6571
        %6721 = vmatprep.subr.bf16.mxu0 0
        %6722 = vmatpush1.bf16.msra.mxu0 %v6572
        %6723 = vmatprep.subr.bf16.mxu0 0
        %6724 = vmatpush1.bf16.msra.mxu0 %v6573
        %6725 = vmatprep.subr.bf16.mxu0 0
        %6726 = vmatpush1.bf16.msra.mxu0 %v6574
        %6727 = vmatprep.subr.bf16.mxu0 0
        %6728 = vmatpush1.bf16.msra.mxu0 %v6575
        %6729 = vmatprep.subr.bf16.mxu0 0
        %6730 = vmatpush1.bf16.msra.mxu0 %v6576
        %6731 = vmatprep.subr.bf16.mxu0 0
        %6732 = vmatpush1.bf16.msra.mxu0 %v6577
        %6733 = vmatprep.subr.bf16.mxu0 0
        %6734 = vmatpush1.bf16.msra.mxu0 %v6578
        %6735 = vmatprep.subr.bf16.mxu0 0
        %6736 = vmatpush1.bf16.msra.mxu0 %v6579
        %6737 = vmatprep.subr.bf16.mxu0 0
        %6738 = vmatpush1.bf16.msra.mxu0 %v6580
        %6739 = vmatprep.subr.bf16.mxu0 0
        %6740 = vmatpush1.bf16.msra.mxu0 %v6581
        %6741 = vmatprep.subr.bf16.mxu0 0
        %6742 = vmatpush1.bf16.msra.mxu0 %v6582
        %6743 = vmatprep.mubr.bf16.mxu0 %v5985
        %6744 = vmatmul.mubr.bf16.gmra.mrb[0].mxu0 %v5984
        %v6745 = vpop.f32.mrb[0].mxu0
        %v6746 = vadd.f32 %v6277, %v6745
        %v6747 = vpop.f32.mrb[0].mxu0
        %v6748 = vpop.f32.mrb[0].mxu0
        %v6749 = vadd.f32 %v6277, %v6748
        %v6750 = vpop.f32.mrb[0].mxu0
        %6751 = vmatprep.mubr.bf16.mxu0 %v5994
        %6752 = vmatmul.mubr.bf16.gmra.mrb[0].mxu0 %v5993
        %v6753 = vpop.f32.mrb[0].mxu0
        %v6754 = vadd.f32 %v6277, %v6753
        %v6755 = vpop.f32.mrb[0].mxu0
        %v6756 = vpop.f32.mrb[0].mxu0
        %v6757 = vadd.f32 %v6277, %v6756
        %v6758 = vpop.f32.mrb[0].mxu0
        %6759 = vmatprep.mubr.bf16.mxu0 %v6003
        %6760 = vmatmul.mubr.bf16.gmra.mrb[0].mxu0 %v6002
        %v6761 = vpop.f32.mrb[0].mxu0
        %v6762 = vadd.f32 %v6277, %v6761
        %v6763 = vpop.f32.mrb[0].mxu0
        %v6764 = vpop.f32.mrb[0].mxu0
        %v6765 = vadd.f32 %v6277, %v6764
        %v6766 = vpop.f32.mrb[0].mxu0
        %6767 = vmatprep.mubr.bf16.mxu0 %v6012
        %6768 = vmatmul.mubr.bf16.gmra.mrb[0].mxu0 %v6011
        %v6769 = vpop.f32.mrb[0].mxu0
        %v6770 = vadd.f32 %v6277, %v6769
        %v6771 = vpop.f32.mrb[0].mxu0
        %v6772 = vpop.f32.mrb[0].mxu0
        %v6773 = vadd.f32 %v6277, %v6772
        %v6774 = vpop.f32.mrb[0].mxu0
        %6775 = vmatprep.mubr.bf16.mxu0 %v6021
        %6776 = vmatmul.mubr.bf16.gmra.mrb[0].mxu0 %v6020
        %v6777 = vpop.f32.mrb[0].mxu0
        %v6778 = vadd.f32 %v6277, %v6777
        %v6779 = vpop.f32.mrb[0].mxu0
        %v6780 = vpop.f32.mrb[0].mxu0
        %v6781 = vadd.f32 %v6277, %v6780
        %v6782 = vpop.f32.mrb[0].mxu0
        %6783 = vmatprep.mubr.bf16.mxu0 %v6030
        %6784 = vmatmul.mubr.bf16.gmra.mrb[0].mxu0 %v6029
        %v6785 = vpop.f32.mrb[0].mxu0
        %v6786 = vadd.f32 %v6277, %v6785
        %v6787 = vpop.f32.mrb[0].mxu0
        %v6788 = vpop.f32.mrb[0].mxu0
        %v6789 = vadd.f32 %v6277, %v6788
        %v6790 = vpop.f32.mrb[0].mxu0
        %6791 = vmatprep.mubr.bf16.mxu0 %v6039
        %6792 = vmatmul.mubr.bf16.gmra.mrb[0].mxu0 %v6038
        %v6793 = vpop.f32.mrb[0].mxu0
        %v6794 = vadd.f32 %v6277, %v6793
        %v6795 = vpop.f32.mrb[0].mxu0
        %v6796 = vpop.f32.mrb[0].mxu0
        %v6797 = vadd.f32 %v6277, %v6796
        %v6798 = vpop.f32.mrb[0].mxu0
        %6799 = vmatprep.mubr.bf16.mxu0 %v6048
        %6800 = vmatmul.mubr.bf16.gmra.mrb[0].mxu0 %v6047
        %v6801 = vpop.f32.mrb[0].mxu0
        %v6802 = vadd.f32 %v6277, %v6801
        %v6803 = vpop.f32.mrb[0].mxu0
        %v6804 = vpop.f32.mrb[0].mxu0
        %v6805 = vadd.f32 %v6277, %v6804
        %v6806 = vpop.f32.mrb[0].mxu0
        %6807 = vmatprep.mubr.bf16.mxu0 %v6057
        %6808 = vmatmul.mubr.bf16.gmra.mrb[0].mxu0 %v6056
        %v6809 = vpop.f32.mrb[0].mxu0
        %v6810 = vadd.f32 %v6277, %v6809
        %v6811 = vpop.f32.mrb[0].mxu0
        %v6812 = vpop.f32.mrb[0].mxu0
        %v6813 = vadd.f32 %v6277, %v6812
        %v6814 = vpop.f32.mrb[0].mxu0
        %6815 = vmatprep.mubr.bf16.mxu0 %v6066
        %6816 = vmatmul.mubr.bf16.gmra.mrb[0].mxu0 %v6065
        %v6817 = vpop.f32.mrb[0].mxu0
        %v6818 = vadd.f32 %v6277, %v6817
        %v6819 = vpop.f32.mrb[0].mxu0
        %v6820 = vpop.f32.mrb[0].mxu0
        %v6821 = vadd.f32 %v6277, %v6820
        %v6822 = vpop.f32.mrb[0].mxu0
        %6823 = vmatprep.mubr.bf16.mxu0 %v6075
        %6824 = vmatmul.mubr.bf16.gmra.mrb[0].mxu0 %v6074
        %v6825 = vpop.f32.mrb[0].mxu0
        %v6826 = vadd.f32 %v6277, %v6825
        %v6827 = vpop.f32.mrb[0].mxu0
        %v6828 = vpop.f32.mrb[0].mxu0
        %v6829 = vadd.f32 %v6277, %v6828
        %v6830 = vpop.f32.mrb[0].mxu0
        %6831 = vmatprep.mubr.bf16.mxu0 %v6084
        %6832 = vmatmul.mubr.bf16.gmra.mrb[0].mxu0 %v6083
        %v6833 = vpop.f32.mrb[0].mxu0
        %v6834 = vadd.f32 %v6277, %v6833
        %v6835 = vpop.f32.mrb[0].mxu0
        %v6836 = vpop.f32.mrb[0].mxu0
        %v6837 = vadd.f32 %v6277, %v6836
        %v6838 = vpop.f32.mrb[0].mxu0
        %6839 = vmatprep.mubr.bf16.mxu0 %v6093
        %6840 = vmatmul.mubr.bf16.gmra.mrb[0].mxu0 %v6092
        %v6841 = vpop.f32.mrb[0].mxu0
        %v6842 = vadd.f32 %v6277, %v6841
        %v6843 = vpop.f32.mrb[0].mxu0
        %v6844 = vpop.f32.mrb[0].mxu0
        %v6845 = vadd.f32 %v6277, %v6844
        %v6846 = vpop.f32.mrb[0].mxu0
        %6847 = vmatprep.mubr.bf16.mxu0 %v6102
        %6848 = vmatmul.mubr.bf16.gmra.mrb[0].mxu0 %v6101
        %v6849 = vpop.f32.mrb[0].mxu0
        %v6850 = vadd.f32 %v6277, %v6849
        %v6851 = vpop.f32.mrb[0].mxu0
        %v6852 = vpop.f32.mrb[0].mxu0
        %v6853 = vadd.f32 %v6277, %v6852
        %v6854 = vpop.f32.mrb[0].mxu0
        %6855 = vmatprep.mubr.bf16.mxu0 %v6111
        %6856 = vmatmul.mubr.bf16.gmra.mrb[0].mxu0 %v6110
        %v6857 = vpop.f32.mrb[0].mxu0
        %v6858 = vadd.f32 %v6277, %v6857
        %v6859 = vpop.f32.mrb[0].mxu0
        %v6860 = vpop.f32.mrb[0].mxu0
        %v6861 = vadd.f32 %v6277, %v6860
        %v6862 = vpop.f32.mrb[0].mxu0
        %6863 = vmatprep.mubr.bf16.mxu0 %v6120
        %6864 = vmatmul.mubr.bf16.gmra.mrb[0].mxu0 %v6119
        %v6865 = vpop.f32.mrb[0].mxu0
        %v6866 = vadd.f32 %v6277, %v6865
        %v6867 = vpop.f32.mrb[0].mxu0
        %v6868 = vpop.f32.mrb[0].mxu0
        %v6869 = vadd.f32 %v6277, %v6868
        %v6870 = vpop.f32.mrb[0].mxu0
        %6871 = vdwg.mxu0
        %6872 = vmatprep.subr.bf16.mxu0 0
        %6873 = vmatpush1.bf16.msra.mxu0 %v6583
        %6874 = vmatprep.subr.bf16.mxu0 0
        %6875 = vmatpush1.bf16.msra.mxu0 %v6584
        %6876 = vmatprep.subr.bf16.mxu0 0
        %6877 = vmatpush1.bf16.msra.mxu0 %v6585
        %6878 = vmatprep.subr.bf16.mxu0 0
        %6879 = vmatpush1.bf16.msra.mxu0 %v6586
        %6880 = vmatprep.subr.bf16.mxu0 0
        %6881 = vmatpush1.bf16.msra.mxu0 %v6587
        %6882 = vmatprep.subr.bf16.mxu0 0
        %6883 = vmatpush1.bf16.msra.mxu0 %v6588
        %6884 = vmatprep.subr.bf16.mxu0 0
        %6885 = vmatpush1.bf16.msra.mxu0 %v6589
        %6886 = vmatprep.subr.bf16.mxu0 0
        %6887 = vmatpush1.bf16.msra.mxu0 %v6590
        %6888 = vmatprep.subr.bf16.mxu0 0
        %6889 = vmatpush1.bf16.msra.mxu0 %v6591
        %6890 = vmatprep.subr.bf16.mxu0 0
        %6891 = vmatpush1.bf16.msra.mxu0 %v6592
        %6892 = vmatprep.subr.bf16.mxu0 0
        %6893 = vmatpush1.bf16.msra.mxu0 %v6593
        %6894 = vmatprep.subr.bf16.mxu0 0
        %6895 = vmatpush1.bf16.msra.mxu0 %v6594
        %6896 = vmatprep.subr.bf16.mxu0 0
        %6897 = vmatpush1.bf16.msra.mxu0 %v6595
        %6898 = vmatprep.subr.bf16.mxu0 0
        %6899 = vmatpush1.bf16.msra.mxu0 %v6596
        %6900 = vmatprep.subr.bf16.mxu0 0
        %6901 = vmatpush1.bf16.msra.mxu0 %v6597
        %6902 = vmatprep.subr.bf16.mxu0 0
        %6903 = vmatpush1.bf16.msra.mxu0 %v6598
        %6904 = vmatprep.mubr.bf16.mxu0 %v5987
        %6905 = vmatmul.mubr.bf16.gmra.mrb[0].mxu0 %v5986
        %v6906 = vpop.f32.mrb[0].mxu0
        %v6907 = vadd.f32 %v6746, %v6906
        %v6908 = vpop.f32.mrb[0].mxu0
        %v6909 = vpop.f32.mrb[0].mxu0
        %v6910 = vadd.f32 %v6749, %v6909
        %v6911 = vpop.f32.mrb[0].mxu0
        %6912 = vmatprep.mubr.bf16.mxu0 %v5996
        %6913 = vmatmul.mubr.bf16.gmra.mrb[0].mxu0 %v5995
        %v6914 = vpop.f32.mrb[0].mxu0
        %v6915 = vadd.f32 %v6754, %v6914
        %v6916 = vpop.f32.mrb[0].mxu0
        %v6917 = vpop.f32.mrb[0].mxu0
        %v6918 = vadd.f32 %v6757, %v6917
        %v6919 = vpop.f32.mrb[0].mxu0
        %6920 = vmatprep.mubr.bf16.mxu0 %v6005
        %6921 = vmatmul.mubr.bf16.gmra.mrb[0].mxu0 %v6004
        %v6922 = vpop.f32.mrb[0].mxu0
        %v6923 = vadd.f32 %v6762, %v6922
        %v6924 = vpop.f32.mrb[0].mxu0
        %v6925 = vpop.f32.mrb[0].mxu0
        %v6926 = vadd.f32 %v6765, %v6925
        %v6927 = vpop.f32.mrb[0].mxu0
        %6928 = vmatprep.mubr.bf16.mxu0 %v6014
        %6929 = vmatmul.mubr.bf16.gmra.mrb[0].mxu0 %v6013
        %v6930 = vpop.f32.mrb[0].mxu0
        %v6931 = vadd.f32 %v6770, %v6930
        %v6932 = vpop.f32.mrb[0].mxu0
        %v6933 = vpop.f32.mrb[0].mxu0
        %v6934 = vadd.f32 %v6773, %v6933
        %v6935 = vpop.f32.mrb[0].mxu0
        %6936 = vmatprep.mubr.bf16.mxu0 %v6023
        %6937 = vmatmul.mubr.bf16.gmra.mrb[0].mxu0 %v6022
        %v6938 = vpop.f32.mrb[0].mxu0
        %v6939 = vadd.f32 %v6778, %v6938
        %v6940 = vpop.f32.mrb[0].mxu0
        %v6941 = vpop.f32.mrb[0].mxu0
        %v6942 = vadd.f32 %v6781, %v6941
        %v6943 = vpop.f32.mrb[0].mxu0
        %6944 = vmatprep.mubr.bf16.mxu0 %v6032
        %6945 = vmatmul.mubr.bf16.gmra.mrb[0].mxu0 %v6031
        %v6946 = vpop.f32.mrb[0].mxu0
        %v6947 = vadd.f32 %v6786, %v6946
        %v6948 = vpop.f32.mrb[0].mxu0
        %v6949 = vpop.f32.mrb[0].mxu0
        %v6950 = vadd.f32 %v6789, %v6949
        %v6951 = vpop.f32.mrb[0].mxu0
        %6952 = vmatprep.mubr.bf16.mxu0 %v6041
        %6953 = vmatmul.mubr.bf16.gmra.mrb[0].mxu0 %v6040
        %v6954 = vpop.f32.mrb[0].mxu0
        %v6955 = vadd.f32 %v6794, %v6954
        %v6956 = vpop.f32.mrb[0].mxu0
        %v6957 = vpop.f32.mrb[0].mxu0
        %v6958 = vadd.f32 %v6797, %v6957
        %v6959 = vpop.f32.mrb[0].mxu0
        %6960 = vmatprep.mubr.bf16.mxu0 %v6050
        %6961 = vmatmul.mubr.bf16.gmra.mrb[0].mxu0 %v6049
        %v6962 = vpop.f32.mrb[0].mxu0
        %v6963 = vadd.f32 %v6802, %v6962
        %v6964 = vpop.f32.mrb[0].mxu0
        %v6965 = vpop.f32.mrb[0].mxu0
        %v6966 = vadd.f32 %v6805, %v6965
        %v6967 = vpop.f32.mrb[0].mxu0
        %6968 = vmatprep.mubr.bf16.mxu0 %v6059
        %6969 = vmatmul.mubr.bf16.gmra.mrb[0].mxu0 %v6058
        %v6970 = vpop.f32.mrb[0].mxu0
        %v6971 = vadd.f32 %v6810, %v6970
        %v6972 = vpop.f32.mrb[0].mxu0
        %v6973 = vpop.f32.mrb[0].mxu0
        %v6974 = vadd.f32 %v6813, %v6973
        %v6975 = vpop.f32.mrb[0].mxu0
        %6976 = vmatprep.mubr.bf16.mxu0 %v6068
        %6977 = vmatmul.mubr.bf16.gmra.mrb[0].mxu0 %v6067
        %v6978 = vpop.f32.mrb[0].mxu0
        %v6979 = vadd.f32 %v6818, %v6978
        %v6980 = vpop.f32.mrb[0].mxu0
        %v6981 = vpop.f32.mrb[0].mxu0
        %v6982 = vadd.f32 %v6821, %v6981
        %v6983 = vpop.f32.mrb[0].mxu0
        %6984 = vmatprep.mubr.bf16.mxu0 %v6077
        %6985 = vmatmul.mubr.bf16.gmra.mrb[0].mxu0 %v6076
        %v6986 = vpop.f32.mrb[0].mxu0
        %v6987 = vadd.f32 %v6826, %v6986
        %v6988 = vpop.f32.mrb[0].mxu0
        %v6989 = vpop.f32.mrb[0].mxu0
        %v6990 = vadd.f32 %v6829, %v6989
        %v6991 = vpop.f32.mrb[0].mxu0
        %6992 = vmatprep.mubr.bf16.mxu0 %v6086
        %6993 = vmatmul.mubr.bf16.gmra.mrb[0].mxu0 %v6085
        %v6994 = vpop.f32.mrb[0].mxu0
        %v6995 = vadd.f32 %v6834, %v6994
        %v6996 = vpop.f32.mrb[0].mxu0
        %v6997 = vpop.f32.mrb[0].mxu0
        %v6998 = vadd.f32 %v6837, %v6997
        %v6999 = vpop.f32.mrb[0].mxu0
        %7000 = vmatprep.mubr.bf16.mxu0 %v6095
        %7001 = vmatmul.mubr.bf16.gmra.mrb[0].mxu0 %v6094
        %v7002 = vpop.f32.mrb[0].mxu0
        %v7003 = vadd.f32 %v6842, %v7002
        %v7004 = vpop.f32.mrb[0].mxu0
        %v7005 = vpop.f32.mrb[0].mxu0
        %v7006 = vadd.f32 %v6845, %v7005
        %v7007 = vpop.f32.mrb[0].mxu0
        %7008 = vmatprep.mubr.bf16.mxu0 %v6104
        %7009 = vmatmul.mubr.bf16.gmra.mrb[0].mxu0 %v6103
        %v7010 = vpop.f32.mrb[0].mxu0
        %v7011 = vadd.f32 %v6850, %v7010
        %v7012 = vpop.f32.mrb[0].mxu0
        %v7013 = vpop.f32.mrb[0].mxu0
        %v7014 = vadd.f32 %v6853, %v7013
        %v7015 = vpop.f32.mrb[0].mxu0
        %7016 = vmatprep.mubr.bf16.mxu0 %v6113
        %7017 = vmatmul.mubr.bf16.gmra.mrb[0].mxu0 %v6112
        %v7018 = vpop.f32.mrb[0].mxu0
        %v7019 = vadd.f32 %v6858, %v7018
        %v7020 = vpop.f32.mrb[0].mxu0
        %v7021 = vpop.f32.mrb[0].mxu0
        %v7022 = vadd.f32 %v6861, %v7021
        %v7023 = vpop.f32.mrb[0].mxu0
        %7024 = vmatprep.mubr.bf16.mxu0 %v6122
        %7025 = vmatmul.mubr.bf16.gmra.mrb[0].mxu0 %v6121
        %v7026 = vpop.f32.mrb[0].mxu0
        %v7027 = vadd.f32 %v6866, %v7026
        %v7028 = vpop.f32.mrb[0].mxu0
        %v7029 = vpop.f32.mrb[0].mxu0
        %v7030 = vadd.f32 %v6869, %v7029
        %v7031 = vpop.f32.mrb[0].mxu0
        %7032 = vdwg.mxu0
        %7033 = vmatprep.subr.bf16.mxu0 0
        %7034 = vmatpush1.bf16.msra.mxu0 %v6599
        %7035 = vmatprep.subr.bf16.mxu0 0
        %7036 = vmatpush1.bf16.msra.mxu0 %v6600
        %7037 = vmatprep.subr.bf16.mxu0 0
        %7038 = vmatpush1.bf16.msra.mxu0 %v6601
        %7039 = vmatprep.subr.bf16.mxu0 0
        %7040 = vmatpush1.bf16.msra.mxu0 %v6602
        %7041 = vmatprep.subr.bf16.mxu0 0
        %7042 = vmatpush1.bf16.msra.mxu0 %v6603
        %7043 = vmatprep.subr.bf16.mxu0 0
        %7044 = vmatpush1.bf16.msra.mxu0 %v6604
        %7045 = vmatprep.subr.bf16.mxu0 0
        %7046 = vmatpush1.bf16.msra.mxu0 %v6605
        %7047 = vmatprep.subr.bf16.mxu0 0
        %7048 = vmatpush1.bf16.msra.mxu0 %v6606
        %7049 = vmatprep.subr.bf16.mxu0 0
        %7050 = vmatpush1.bf16.msra.mxu0 %v6607
        %7051 = vmatprep.subr.bf16.mxu0 0
        %7052 = vmatpush1.bf16.msra.mxu0 %v6608
        %7053 = vmatprep.subr.bf16.mxu0 0
        %7054 = vmatpush1.bf16.msra.mxu0 %v6609
        %7055 = vmatprep.subr.bf16.mxu0 0
        %7056 = vmatpush1.bf16.msra.mxu0 %v6610
        %7057 = vmatprep.subr.bf16.mxu0 0
        %7058 = vmatpush1.bf16.msra.mxu0 %v6611
        %7059 = vmatprep.subr.bf16.mxu0 0
        %7060 = vmatpush1.bf16.msra.mxu0 %v6612
        %7061 = vmatprep.subr.bf16.mxu0 0
        %7062 = vmatpush1.bf16.msra.mxu0 %v6613
        %7063 = vmatprep.subr.bf16.mxu0 0
        %7064 = vmatpush1.bf16.msra.mxu0 %v6614
        %7065 = vmatprep.mubr.bf16.mxu0 %v5989
        %7066 = vmatmul.mubr.bf16.gmra.mrb[0].mxu0 %v5988
        %v7067 = vpop.f32.mrb[0].mxu0
        %v7068 = vadd.f32 %v6907, %v7067
        %v7069 = vpop.f32.mrb[0].mxu0
        %v7070 = vpop.f32.mrb[0].mxu0
        %v7071 = vadd.f32 %v6910, %v7070
        %v7072 = vpop.f32.mrb[0].mxu0
        %7073 = vmatprep.mubr.bf16.mxu0 %v5998
        %7074 = vmatmul.mubr.bf16.gmra.mrb[0].mxu0 %v5997
        %v7075 = vpop.f32.mrb[0].mxu0
        %v7076 = vadd.f32 %v6915, %v7075
        %v7077 = vpop.f32.mrb[0].mxu0
        %v7078 = vpop.f32.mrb[0].mxu0
        %v7079 = vadd.f32 %v6918, %v7078
        %v7080 = vpop.f32.mrb[0].mxu0
        %7081 = vmatprep.mubr.bf16.mxu0 %v6007
        %7082 = vmatmul.mubr.bf16.gmra.mrb[0].mxu0 %v6006
        %v7083 = vpop.f32.mrb[0].mxu0
        %v7084 = vadd.f32 %v6923, %v7083
        %v7085 = vpop.f32.mrb[0].mxu0
        %v7086 = vpop.f32.mrb[0].mxu0
        %v7087 = vadd.f32 %v6926, %v7086
        %v7088 = vpop.f32.mrb[0].mxu0
        %7089 = vmatprep.mubr.bf16.mxu0 %v6016
        %7090 = vmatmul.mubr.bf16.gmra.mrb[0].mxu0 %v6015
        %v7091 = vpop.f32.mrb[0].mxu0
        %v7092 = vadd.f32 %v6931, %v7091
        %v7093 = vpop.f32.mrb[0].mxu0
        %v7094 = vpop.f32.mrb[0].mxu0
        %v7095 = vadd.f32 %v6934, %v7094
        %v7096 = vpop.f32.mrb[0].mxu0
        %7097 = vmatprep.mubr.bf16.mxu0 %v6025
        %7098 = vmatmul.mubr.bf16.gmra.mrb[0].mxu0 %v6024
        %v7099 = vpop.f32.mrb[0].mxu0
        %v7100 = vadd.f32 %v6939, %v7099
        %v7101 = vpop.f32.mrb[0].mxu0
        %v7102 = vpop.f32.mrb[0].mxu0
        %v7103 = vadd.f32 %v6942, %v7102
        %v7104 = vpop.f32.mrb[0].mxu0
        %7105 = vmatprep.mubr.bf16.mxu0 %v6034
        %7106 = vmatmul.mubr.bf16.gmra.mrb[0].mxu0 %v6033
        %v7107 = vpop.f32.mrb[0].mxu0
        %v7108 = vadd.f32 %v6947, %v7107
        %v7109 = vpop.f32.mrb[0].mxu0
        %v7110 = vpop.f32.mrb[0].mxu0
        %v7111 = vadd.f32 %v6950, %v7110
        %v7112 = vpop.f32.mrb[0].mxu0
        %7113 = vmatprep.mubr.bf16.mxu0 %v6043
        %7114 = vmatmul.mubr.bf16.gmra.mrb[0].mxu0 %v6042
        %v7115 = vpop.f32.mrb[0].mxu0
        %v7116 = vadd.f32 %v6955, %v7115
        %v7117 = vpop.f32.mrb[0].mxu0
        %v7118 = vpop.f32.mrb[0].mxu0
        %v7119 = vadd.f32 %v6958, %v7118
        %v7120 = vpop.f32.mrb[0].mxu0
        %7121 = vmatprep.mubr.bf16.mxu0 %v6052
        %7122 = vmatmul.mubr.bf16.gmra.mrb[0].mxu0 %v6051
        %v7123 = vpop.f32.mrb[0].mxu0
        %v7124 = vadd.f32 %v6963, %v7123
        %v7125 = vpop.f32.mrb[0].mxu0
        %v7126 = vpop.f32.mrb[0].mxu0
        %v7127 = vadd.f32 %v6966, %v7126
        %v7128 = vpop.f32.mrb[0].mxu0
        %7129 = vmatprep.mubr.bf16.mxu0 %v6061
        %7130 = vmatmul.mubr.bf16.gmra.mrb[0].mxu0 %v6060
        %v7131 = vpop.f32.mrb[0].mxu0
        %v7132 = vadd.f32 %v6971, %v7131
        %v7133 = vpop.f32.mrb[0].mxu0
        %v7134 = vpop.f32.mrb[0].mxu0
        %v7135 = vadd.f32 %v6974, %v7134
        %v7136 = vpop.f32.mrb[0].mxu0
        %7137 = vmatprep.mubr.bf16.mxu0 %v6070
        %7138 = vmatmul.mubr.bf16.gmra.mrb[0].mxu0 %v6069
        %v7139 = vpop.f32.mrb[0].mxu0
        %v7140 = vadd.f32 %v6979, %v7139
        %v7141 = vpop.f32.mrb[0].mxu0
        %v7142 = vpop.f32.mrb[0].mxu0
        %v7143 = vadd.f32 %v6982, %v7142
        %v7144 = vpop.f32.mrb[0].mxu0
        %7145 = vmatprep.mubr.bf16.mxu0 %v6079
        %7146 = vmatmul.mubr.bf16.gmra.mrb[0].mxu0 %v6078
        %v7147 = vpop.f32.mrb[0].mxu0
        %v7148 = vadd.f32 %v6987, %v7147
        %v7149 = vpop.f32.mrb[0].mxu0
        %v7150 = vpop.f32.mrb[0].mxu0
        %v7151 = vadd.f32 %v6990, %v7150
        %v7152 = vpop.f32.mrb[0].mxu0
        %7153 = vmatprep.mubr.bf16.mxu0 %v6088
        %7154 = vmatmul.mubr.bf16.gmra.mrb[0].mxu0 %v6087
        %v7155 = vpop.f32.mrb[0].mxu0
        %v7156 = vadd.f32 %v6995, %v7155
        %v7157 = vpop.f32.mrb[0].mxu0
        %v7158 = vpop.f32.mrb[0].mxu0
        %v7159 = vadd.f32 %v6998, %v7158
        %v7160 = vpop.f32.mrb[0].mxu0
        %7161 = vmatprep.mubr.bf16.mxu0 %v6097
        %7162 = vmatmul.mubr.bf16.gmra.mrb[0].mxu0 %v6096
        %v7163 = vpop.f32.mrb[0].mxu0
        %v7164 = vadd.f32 %v7003, %v7163
        %v7165 = vpop.f32.mrb[0].mxu0
        %v7166 = vpop.f32.mrb[0].mxu0
        %v7167 = vadd.f32 %v7006, %v7166
        %v7168 = vpop.f32.mrb[0].mxu0
        %7169 = vmatprep.mubr.bf16.mxu0 %v6106
        %7170 = vmatmul.mubr.bf16.gmra.mrb[0].mxu0 %v6105
        %v7171 = vpop.f32.mrb[0].mxu0
        %v7172 = vadd.f32 %v7011, %v7171
        %v7173 = vpop.f32.mrb[0].mxu0
        %v7174 = vpop.f32.mrb[0].mxu0
        %v7175 = vadd.f32 %v7014, %v7174
        %v7176 = vpop.f32.mrb[0].mxu0
        %7177 = vmatprep.mubr.bf16.mxu0 %v6115
        %7178 = vmatmul.mubr.bf16.gmra.mrb[0].mxu0 %v6114
        %v7179 = vpop.f32.mrb[0].mxu0
        %v7180 = vadd.f32 %v7019, %v7179
        %v7181 = vpop.f32.mrb[0].mxu0
        %v7182 = vpop.f32.mrb[0].mxu0
        %v7183 = vadd.f32 %v7022, %v7182
        %v7184 = vpop.f32.mrb[0].mxu0
        %7185 = vmatprep.mubr.bf16.mxu0 %v6124
        %7186 = vmatmul.mubr.bf16.gmra.mrb[0].mxu0 %v6123
        %v7187 = vpop.f32.mrb[0].mxu0
        %v7188 = vadd.f32 %v7027, %v7187
        %v7189 = vpop.f32.mrb[0].mxu0
        %v7190 = vpop.f32.mrb[0].mxu0
        %v7191 = vadd.f32 %v7030, %v7190
        %v7192 = vpop.f32.mrb[0].mxu0
        %7193 = vdwg.mxu0
        %7194 = vmatprep.subr.bf16.mxu0 0
        %7195 = vmatpush1.bf16.msra.mxu0 %v6615
        %7196 = vmatprep.subr.bf16.mxu0 0
        %7197 = vmatpush1.bf16.msra.mxu0 %v6616
        %7198 = vmatprep.subr.bf16.mxu0 0
        %7199 = vmatpush1.bf16.msra.mxu0 %v6617
        %7200 = vmatprep.subr.bf16.mxu0 0
        %7201 = vmatpush1.bf16.msra.mxu0 %v6618
        %7202 = vmatprep.subr.bf16.mxu0 0
        %7203 = vmatpush1.bf16.msra.mxu0 %v6619
        %7204 = vmatprep.subr.bf16.mxu0 0
        %7205 = vmatpush1.bf16.msra.mxu0 %v6620
        %7206 = vmatprep.subr.bf16.mxu0 0
        %7207 = vmatpush1.bf16.msra.mxu0 %v6621
        %7208 = vmatprep.subr.bf16.mxu0 0
        %7209 = vmatpush1.bf16.msra.mxu0 %v6622
        %7210 = vmatprep.subr.bf16.mxu0 0
        %7211 = vmatpush1.bf16.msra.mxu0 %v6623
        %7212 = vmatprep.subr.bf16.mxu0 0
        %7213 = vmatpush1.bf16.msra.mxu0 %v6624
        %7214 = vmatprep.subr.bf16.mxu0 0
        %7215 = vmatpush1.bf16.msra.mxu0 %v6625
        %7216 = vmatprep.subr.bf16.mxu0 0
        %7217 = vmatpush1.bf16.msra.mxu0 %v6626
        %7218 = vmatprep.subr.bf16.mxu0 0
        %7219 = vmatpush1.bf16.msra.mxu0 %v6627
        %7220 = vmatprep.subr.bf16.mxu0 0
        %7221 = vmatpush1.bf16.msra.mxu0 %v6628
        %7222 = vmatprep.subr.bf16.mxu0 0
        %7223 = vmatpush1.bf16.msra.mxu0 %v6629
        %7224 = vmatprep.subr.bf16.mxu0 0
        %7225 = vmatpush1.bf16.msra.mxu0 %v6630
        %7226 = vmatprep.mubr.bf16.mxu0 %v5991
        %7227 = vmatmul.mubr.bf16.gmra.mrb[0].mxu0 %v5990
        %v7228 = vpop.f32.mrb[0].mxu0
        %v7229 = vadd.f32 %v7068, %v7228
        %v7230 = vpop.f32.mrb[0].mxu0
        %v7231 = vpop.f32.mrb[0].mxu0
        %v7232 = vadd.f32 %v7071, %v7231
        %v7233 = vpop.f32.mrb[0].mxu0
        %7234 = vmatprep.mubr.bf16.mxu0 %v6000
        %7235 = vmatmul.mubr.bf16.gmra.mrb[0].mxu0 %v5999
        %v7236 = vpop.f32.mrb[0].mxu0
        %v7237 = vadd.f32 %v7076, %v7236
        %v7238 = vpop.f32.mrb[0].mxu0
        %v7239 = vpop.f32.mrb[0].mxu0
        %v7240 = vadd.f32 %v7079, %v7239
        %v7241 = vpop.f32.mrb[0].mxu0
        %7242 = vmatprep.mubr.bf16.mxu0 %v6009
        %7243 = vmatmul.mubr.bf16.gmra.mrb[0].mxu0 %v6008
        %v7244 = vpop.f32.mrb[0].mxu0
        %v7245 = vadd.f32 %v7084, %v7244
        %v7246 = vpop.f32.mrb[0].mxu0
        %v7247 = vpop.f32.mrb[0].mxu0
        %v7248 = vadd.f32 %v7087, %v7247
        %v7249 = vpop.f32.mrb[0].mxu0
        %7250 = vmatprep.mubr.bf16.mxu0 %v6018
        %7251 = vmatmul.mubr.bf16.gmra.mrb[0].mxu0 %v6017
        %v7252 = vpop.f32.mrb[0].mxu0
        %v7253 = vadd.f32 %v7092, %v7252
        %v7254 = vpop.f32.mrb[0].mxu0
        %v7255 = vpop.f32.mrb[0].mxu0
        %v7256 = vadd.f32 %v7095, %v7255
        %v7257 = vpop.f32.mrb[0].mxu0
        %7258 = vmatprep.mubr.bf16.mxu0 %v6027
        %7259 = vmatmul.mubr.bf16.gmra.mrb[0].mxu0 %v6026
        %v7260 = vpop.f32.mrb[0].mxu0
        %v7261 = vadd.f32 %v7100, %v7260
        %v7262 = vpop.f32.mrb[0].mxu0
        %v7263 = vpop.f32.mrb[0].mxu0
        %v7264 = vadd.f32 %v7103, %v7263
        %v7265 = vpop.f32.mrb[0].mxu0
        %7266 = vmatprep.mubr.bf16.mxu0 %v6036
        %7267 = vmatmul.mubr.bf16.gmra.mrb[0].mxu0 %v6035
        %v7268 = vpop.f32.mrb[0].mxu0
        %v7269 = vadd.f32 %v7108, %v7268
        %v7270 = vpop.f32.mrb[0].mxu0
        %v7271 = vpop.f32.mrb[0].mxu0
        %v7272 = vadd.f32 %v7111, %v7271
        %v7273 = vpop.f32.mrb[0].mxu0
        %7274 = vmatprep.mubr.bf16.mxu0 %v6045
        %7275 = vmatmul.mubr.bf16.gmra.mrb[0].mxu0 %v6044
        %v7276 = vpop.f32.mrb[0].mxu0
        %v7277 = vadd.f32 %v7116, %v7276
        %v7278 = vpop.f32.mrb[0].mxu0
        %v7279 = vpop.f32.mrb[0].mxu0
        %v7280 = vadd.f32 %v7119, %v7279
        %v7281 = vpop.f32.mrb[0].mxu0
        %7282 = vmatprep.mubr.bf16.mxu0 %v6054
        %7283 = vmatmul.mubr.bf16.gmra.mrb[0].mxu0 %v6053
        %v7284 = vpop.f32.mrb[0].mxu0
        %v7285 = vadd.f32 %v7124, %v7284
        %v7286 = vpop.f32.mrb[0].mxu0
        %v7287 = vpop.f32.mrb[0].mxu0
        %v7288 = vadd.f32 %v7127, %v7287
        %v7289 = vpop.f32.mrb[0].mxu0
        %7290 = vmatprep.mubr.bf16.mxu0 %v6063
        %7291 = vmatmul.mubr.bf16.gmra.mrb[0].mxu0 %v6062
        %v7292 = vpop.f32.mrb[0].mxu0
        %v7293 = vadd.f32 %v7132, %v7292
        %v7294 = vpop.f32.mrb[0].mxu0
        %v7295 = vpop.f32.mrb[0].mxu0
        %v7296 = vadd.f32 %v7135, %v7295
        %v7297 = vpop.f32.mrb[0].mxu0
        %7298 = vmatprep.mubr.bf16.mxu0 %v6072
        %7299 = vmatmul.mubr.bf16.gmra.mrb[0].mxu0 %v6071
        %v7300 = vpop.f32.mrb[0].mxu0
        %v7301 = vadd.f32 %v7140, %v7300
        %v7302 = vpop.f32.mrb[0].mxu0
        %v7303 = vpop.f32.mrb[0].mxu0
        %v7304 = vadd.f32 %v7143, %v7303
        %v7305 = vpop.f32.mrb[0].mxu0
        %7306 = vmatprep.mubr.bf16.mxu0 %v6081
        %7307 = vmatmul.mubr.bf16.gmra.mrb[0].mxu0 %v6080
        %v7308 = vpop.f32.mrb[0].mxu0
        %v7309 = vadd.f32 %v7148, %v7308
        %v7310 = vpop.f32.mrb[0].mxu0
        %v7311 = vpop.f32.mrb[0].mxu0
        %v7312 = vadd.f32 %v7151, %v7311
        %v7313 = vpop.f32.mrb[0].mxu0
        %7314 = vmatprep.mubr.bf16.mxu0 %v6090
        %7315 = vmatmul.mubr.bf16.gmra.mrb[0].mxu0 %v6089
        %v7316 = vpop.f32.mrb[0].mxu0
        %v7317 = vadd.f32 %v7156, %v7316
        %v7318 = vpop.f32.mrb[0].mxu0
        %v7319 = vpop.f32.mrb[0].mxu0
        %v7320 = vadd.f32 %v7159, %v7319
        %v7321 = vpop.f32.mrb[0].mxu0
        %7322 = vmatprep.mubr.bf16.mxu0 %v6099
        %7323 = vmatmul.mubr.bf16.gmra.mrb[0].mxu0 %v6098
        %v7324 = vpop.f32.mrb[0].mxu0
        %v7325 = vadd.f32 %v7164, %v7324
        %v7326 = vpop.f32.mrb[0].mxu0
        %v7327 = vpop.f32.mrb[0].mxu0
        %v7328 = vadd.f32 %v7167, %v7327
        %v7329 = vpop.f32.mrb[0].mxu0
        %7330 = vmatprep.mubr.bf16.mxu0 %v6108
        %7331 = vmatmul.mubr.bf16.gmra.mrb[0].mxu0 %v6107
        %v7332 = vpop.f32.mrb[0].mxu0
        %v7333 = vadd.f32 %v7172, %v7332
        %v7334 = vpop.f32.mrb[0].mxu0
        %v7335 = vpop.f32.mrb[0].mxu0
        %v7336 = vadd.f32 %v7175, %v7335
        %v7337 = vpop.f32.mrb[0].mxu0
        %7338 = vmatprep.mubr.bf16.mxu0 %v6117
        %7339 = vmatmul.mubr.bf16.gmra.mrb[0].mxu0 %v6116
        %v7340 = vpop.f32.mrb[0].mxu0
        %v7341 = vadd.f32 %v7180, %v7340
        %v7342 = vpop.f32.mrb[0].mxu0
        %v7343 = vpop.f32.mrb[0].mxu0
        %v7344 = vadd.f32 %v7183, %v7343
        %v7345 = vpop.f32.mrb[0].mxu0
        %7346 = vmatprep.mubr.bf16.mxu0 %v6126
        %7347 = vmatmul.mubr.bf16.gmra.mrb[0].mxu0 %v6125
        %v7348 = vpop.f32.mrb[0].mxu0
        %v7349 = vadd.f32 %v7188, %v7348
        %v7350 = vpop.f32.mrb[0].mxu0
        %v7351 = vpop.f32.mrb[0].mxu0
        %v7352 = vadd.f32 %v7191, %v7351
        %v7353 = vpop.f32.mrb[0].mxu0
        %7354 = vdwg.mxu0
        %7355 = vmatprep.subr.bf16.mxu0 0
        %7356 = vmatpush1.bf16.msra.mxu0 %v6631
        %7357 = vmatprep.subr.bf16.mxu0 0
        %7358 = vmatpush1.bf16.msra.mxu0 %v6632
        %7359 = vmatprep.subr.bf16.mxu0 0
        %7360 = vmatpush1.bf16.msra.mxu0 %v6633
        %7361 = vmatprep.subr.bf16.mxu0 0
        %7362 = vmatpush1.bf16.msra.mxu0 %v6634
        %7363 = vmatprep.subr.bf16.mxu0 0
        %7364 = vmatpush1.bf16.msra.mxu0 %v6635
        %7365 = vmatprep.subr.bf16.mxu0 0
        %7366 = vmatpush1.bf16.msra.mxu0 %v6636
        %7367 = vmatprep.subr.bf16.mxu0 0
        %7368 = vmatpush1.bf16.msra.mxu0 %v6637
        %7369 = vmatprep.subr.bf16.mxu0 0
        %7370 = vmatpush1.bf16.msra.mxu0 %v6638
        %7371 = vmatprep.subr.bf16.mxu0 0
        %7372 = vmatpush1.bf16.msra.mxu0 0
        %7373 = vmatprep.subr.bf16.mxu0 0
        %7374 = vmatpush1.bf16.msra.mxu0 0
        %7375 = vmatprep.subr.bf16.mxu0 0
        %7376 = vmatpush1.bf16.msra.mxu0 0
        %7377 = vmatprep.subr.bf16.mxu0 0
        %7378 = vmatpush1.bf16.msra.mxu0 0
        %7379 = vmatprep.subr.bf16.mxu0 0
        %7380 = vmatpush1.bf16.msra.mxu0 0
        %7381 = vmatprep.subr.bf16.mxu0 0
        %7382 = vmatpush1.bf16.msra.mxu0 0
        %7383 = vmatprep.subr.bf16.mxu0 0
        %7384 = vmatpush1.bf16.msra.mxu0 0
        %7385 = vmatprep.subr.bf16.mxu0 0
        %7386 = vmatpush1.bf16.msra.mxu0 0
        %7387 = vmatprep.mubr.bf16.mxu0 0
        %7388 = vmatmul.mubr.bf16.gmra.mrb[0].mxu0 %v5992
        %v7389 = vpop.f32.mrb[0].mxu0
        %v7390 = vadd.f32 %v7229, %v7389
        %v7391 = vpop.f32.mrb[0].mxu0
        %v7392 = vpop.f32.mrb[0].mxu0
        %v7393 = vadd.f32 %v7232, %v7392
        %v7394 = vpop.f32.mrb[0].mxu0
        %7395 = vmatprep.mubr.bf16.mxu0 0
        %7396 = vmatmul.mubr.bf16.gmra.mrb[0].mxu0 %v6001
        %v7397 = vpop.f32.mrb[0].mxu0
        %v7398 = vadd.f32 %v7237, %v7397
        %v7399 = vpop.f32.mrb[0].mxu0
        %v7400 = vpop.f32.mrb[0].mxu0
        %v7401 = vadd.f32 %v7240, %v7400
        %v7402 = vpop.f32.mrb[0].mxu0
        %7403 = vmatprep.mubr.bf16.mxu0 0
        %7404 = vmatmul.mubr.bf16.gmra.mrb[0].mxu0 %v6010
        %v7405 = vpop.f32.mrb[0].mxu0
        %v7406 = vadd.f32 %v7245, %v7405
        %v7407 = vpop.f32.mrb[0].mxu0
        %v7408 = vpop.f32.mrb[0].mxu0
        %v7409 = vadd.f32 %v7248, %v7408
        %v7410 = vpop.f32.mrb[0].mxu0
        %7411 = vmatprep.mubr.bf16.mxu0 0
        %7412 = vmatmul.mubr.bf16.gmra.mrb[0].mxu0 %v6019
        %v7413 = vpop.f32.mrb[0].mxu0
        %v7414 = vadd.f32 %v7253, %v7413
        %v7415 = vpop.f32.mrb[0].mxu0
        %v7416 = vpop.f32.mrb[0].mxu0
        %v7417 = vadd.f32 %v7256, %v7416
        %v7418 = vpop.f32.mrb[0].mxu0
        %7419 = vmatprep.mubr.bf16.mxu0 0
        %7420 = vmatmul.mubr.bf16.gmra.mrb[0].mxu0 %v6028
        %v7421 = vpop.f32.mrb[0].mxu0
        %v7422 = vadd.f32 %v7261, %v7421
        %v7423 = vpop.f32.mrb[0].mxu0
        %v7424 = vpop.f32.mrb[0].mxu0
        %v7425 = vadd.f32 %v7264, %v7424
        %v7426 = vpop.f32.mrb[0].mxu0
        %7427 = vmatprep.mubr.bf16.mxu0 0
        %7428 = vmatmul.mubr.bf16.gmra.mrb[0].mxu0 %v6037
        %v7429 = vpop.f32.mrb[0].mxu0
        %v7430 = vadd.f32 %v7269, %v7429
        %v7431 = vpop.f32.mrb[0].mxu0
        %v7432 = vpop.f32.mrb[0].mxu0
        %v7433 = vadd.f32 %v7272, %v7432
        %v7434 = vpop.f32.mrb[0].mxu0
        %7435 = vmatprep.mubr.bf16.mxu0 0
        %7436 = vmatmul.mubr.bf16.gmra.mrb[0].mxu0 %v6046
        %v7437 = vpop.f32.mrb[0].mxu0
        %v7438 = vadd.f32 %v7277, %v7437
        %v7439 = vpop.f32.mrb[0].mxu0
        %v7440 = vpop.f32.mrb[0].mxu0
        %v7441 = vadd.f32 %v7280, %v7440
        %v7442 = vpop.f32.mrb[0].mxu0
        %7443 = vmatprep.mubr.bf16.mxu0 0
        %7444 = vmatmul.mubr.bf16.gmra.mrb[0].mxu0 %v6055
        %v7445 = vpop.f32.mrb[0].mxu0
        %v7446 = vadd.f32 %v7285, %v7445
        %v7447 = vpop.f32.mrb[0].mxu0
        %v7448 = vpop.f32.mrb[0].mxu0
        %v7449 = vadd.f32 %v7288, %v7448
        %v7450 = vpop.f32.mrb[0].mxu0
        %7451 = vmatprep.mubr.bf16.mxu0 0
        %7452 = vmatmul.mubr.bf16.gmra.mrb[0].mxu0 %v6064
        %v7453 = vpop.f32.mrb[0].mxu0
        %v7454 = vadd.f32 %v7293, %v7453
        %v7455 = vpop.f32.mrb[0].mxu0
        %v7456 = vpop.f32.mrb[0].mxu0
        %v7457 = vadd.f32 %v7296, %v7456
        %v7458 = vpop.f32.mrb[0].mxu0
        %7459 = vmatprep.mubr.bf16.mxu0 0
        %7460 = vmatmul.mubr.bf16.gmra.mrb[0].mxu0 %v6073
        %v7461 = vpop.f32.mrb[0].mxu0
        %v7462 = vadd.f32 %v7301, %v7461
        %v7463 = vpop.f32.mrb[0].mxu0
        %v7464 = vpop.f32.mrb[0].mxu0
        %v7465 = vadd.f32 %v7304, %v7464
        %v7466 = vpop.f32.mrb[0].mxu0
        %7467 = vmatprep.mubr.bf16.mxu0 0
        %7468 = vmatmul.mubr.bf16.gmra.mrb[0].mxu0 %v6082
        %v7469 = vpop.f32.mrb[0].mxu0
        %v7470 = vadd.f32 %v7309, %v7469
        %v7471 = vpop.f32.mrb[0].mxu0
        %v7472 = vpop.f32.mrb[0].mxu0
        %v7473 = vadd.f32 %v7312, %v7472
        %v7474 = vpop.f32.mrb[0].mxu0
        %7475 = vmatprep.mubr.bf16.mxu0 0
        %7476 = vmatmul.mubr.bf16.gmra.mrb[0].mxu0 %v6091
        %v7477 = vpop.f32.mrb[0].mxu0
        %v7478 = vadd.f32 %v7317, %v7477
        %v7479 = vpop.f32.mrb[0].mxu0
        %v7480 = vpop.f32.mrb[0].mxu0
        %v7481 = vadd.f32 %v7320, %v7480
        %v7482 = vpop.f32.mrb[0].mxu0
        %7483 = vmatprep.mubr.bf16.mxu0 0
        %7484 = vmatmul.mubr.bf16.gmra.mrb[0].mxu0 %v6100
        %v7485 = vpop.f32.mrb[0].mxu0
        %v7486 = vadd.f32 %v7325, %v7485
        %v7487 = vpop.f32.mrb[0].mxu0
        %v7488 = vpop.f32.mrb[0].mxu0
        %v7489 = vadd.f32 %v7328, %v7488
        %v7490 = vpop.f32.mrb[0].mxu0
        %7491 = vmatprep.mubr.bf16.mxu0 0
        %7492 = vmatmul.mubr.bf16.gmra.mrb[0].mxu0 %v6109
        %v7493 = vpop.f32.mrb[0].mxu0
        %v7494 = vadd.f32 %v7333, %v7493
        %v7495 = vpop.f32.mrb[0].mxu0
        %v7496 = vpop.f32.mrb[0].mxu0
        %v7497 = vadd.f32 %v7336, %v7496
        %v7498 = vpop.f32.mrb[0].mxu0
        %7499 = vmatprep.mubr.bf16.mxu0 0
        %7500 = vmatmul.mubr.bf16.gmra.mrb[0].mxu0 %v6118
        %v7501 = vpop.f32.mrb[0].mxu0
        %v7502 = vadd.f32 %v7341, %v7501
        %v7503 = vpop.f32.mrb[0].mxu0
        %v7504 = vpop.f32.mrb[0].mxu0
        %v7505 = vadd.f32 %v7344, %v7504
        %v7506 = vpop.f32.mrb[0].mxu0
        %7507 = vmatprep.mubr.bf16.mxu0 0
        %7508 = vmatmul.mubr.bf16.gmra.mrb[0].mxu0 %v6127
        %v7509 = vpop.f32.mrb[0].mxu0
        %v7510 = vadd.f32 %v7349, %v7509
        %v7511 = vpop.f32.mrb[0].mxu0
        %v7512 = vpop.f32.mrb[0].mxu0
        %v7513 = vadd.f32 %v7352, %v7512
        %v7514 = vpop.f32.mrb[0].mxu0
        %7515 = vdwg.mxu0
        %v7516 = vmax.f32 %v7390, 0.0
        %v7517 = vmax.f32 %v7393, 0.0
        %v7518 = vmax.f32 %v7398, 0.0
        %v7519 = vmax.f32 %v7401, 0.0
        %v7520 = vmax.f32 %v7406, 0.0
        %v7521 = vmax.f32 %v7409, 0.0
        %v7522 = vmax.f32 %v7414, 0.0
        %v7523 = vmax.f32 %v7417, 0.0
        %v7524 = vmax.f32 %v7422, 0.0
        %v7525 = vmax.f32 %v7425, 0.0
        %v7526 = vmax.f32 %v7430, 0.0
        %v7527 = vmax.f32 %v7433, 0.0
        %v7528 = vmax.f32 %v7438, 0.0
        %v7529 = vmax.f32 %v7441, 0.0
        %v7530 = vmax.f32 %v7446, 0.0
        %v7531 = vmax.f32 %v7449, 0.0
        %v7532 = vmax.f32 %v7454, 0.0
        %v7533 = vmax.f32 %v7457, 0.0
        %v7534 = vmax.f32 %v7462, 0.0
        %v7535 = vmax.f32 %v7465, 0.0
        %v7536 = vmax.f32 %v7470, 0.0
        %v7537 = vmax.f32 %v7473, 0.0
        %v7538 = vmax.f32 %v7478, 0.0
        %v7539 = vmax.f32 %v7481, 0.0
        %v7540 = vmax.f32 %v7486, 0.0
        %v7541 = vmax.f32 %v7489, 0.0
        %v7542 = vmax.f32 %v7494, 0.0
        %v7543 = vmax.f32 %v7497, 0.0
        %v7544 = vmax.f32 %v7502, 0.0
        %v7545 = vmax.f32 %v7505, 0.0
        %v7546 = vmax.f32 %v7510, 0.0
        %v7547 = vmax.f32 %v7513, 0.0
        %7548 = vst [vmem:[%s271] sm:$0xff] %v7516
        %7549 = vst [vmem:[%s271 + $0x8] sm:$0xff] %v7517
        %7550 = vst [vmem:[%s271 + $0x10] sm:$0xff] %v7518
        %7551 = vst [vmem:[%s271 + $0x18] sm:$0xff] %v7519
        %7552 = vst [vmem:[%s271 + $0x20] sm:$0xff] %v7520
        %7553 = vst [vmem:[%s271 + $0x28] sm:$0xff] %v7521
        %7554 = vst [vmem:[%s271 + $0x30] sm:$0xff] %v7522
        %7555 = vst [vmem:[%s271 + $0x38] sm:$0xff] %v7523
        %7556 = vst [vmem:[%s271 + $0x40] sm:$0xff] %v7524
        %7557 = vst [vmem:[%s271 + $0x48] sm:$0xff] %v7525
        %7558 = vst [vmem:[%s271 + $0x50] sm:$0xff] %v7526
        %7559 = vst [vmem:[%s271 + $0x58] sm:$0xff] %v7527
        %7560 = vst [vmem:[%s271 + $0x60] sm:$0xff] %v7528
        %7561 = vst [vmem:[%s271 + $0x68] sm:$0xff] %v7529
        %7562 = vst [vmem:[%s271 + $0x70] sm:$0xff] %v7530
        %7563 = vst [vmem:[%s271 + $0x78] sm:$0xff] %v7531
        %7564 = vst [vmem:[%s271 + $0x80] sm:$0xff] %v7532
        %7565 = vst [vmem:[%s271 + $0x88] sm:$0xff] %v7533
        %7566 = vst [vmem:[%s271 + $0x90] sm:$0xff] %v7534
        %7567 = vst [vmem:[%s271 + $0x98] sm:$0xff] %v7535
        %7568 = vst [vmem:[%s271 + $0xa0] sm:$0xff] %v7536
        %7569 = vst [vmem:[%s271 + $0xa8] sm:$0xff] %v7537
        %7570 = vst [vmem:[%s271 + $0xb0] sm:$0xff] %v7538
        %7571 = vst [vmem:[%s271 + $0xb8] sm:$0xff] %v7539
        %7572 = vst [vmem:[%s271 + $0xc0] sm:$0xff] %v7540
        %7573 = vst [vmem:[%s271 + $0xc8] sm:$0xff] %v7541
        %7574 = vst [vmem:[%s271 + $0xd0] sm:$0xff] %v7542
        %7575 = vst [vmem:[%s271 + $0xd8] sm:$0xff] %v7543
        %7576 = vst [vmem:[%s271 + $0xe0] sm:$0xff] %v7544
        %7577 = vst [vmem:[%s271 + $0xe8] sm:$0xff] %v7545
        %7578 = vst [vmem:[%s271 + $0xf0] sm:$0xff] %v7546
        %7579 = vst [vmem:[%s271 + $0xf8] sm:$0xff] %v7547
        %s7580 = sand.u32 %s141, 1
        %s7581 = scalar_lea.sflag [#allocation7], %s7580
        %s7582 = sand.u32 %s141, 1
        %s7583 = smul.addr %s7582, 256
        %s7584 = scalar_lea.vmem [#allocation11], %s7583
        // Predicated region
        $region53: #{tpu_custom_call.1} parent=39 // pred_check
          %p7585 = pneg %p151
        $region54: #{tpu_custom_call.1} parent=39 // pred_check_branch
          %7587 = sbr.rel (%p7585) target = $region56
        $region55: #{tpu_custom_call.1} parent=39 // pred_region
          %s7589 = ssub.s32 4096, 4096
          %7590 = vsyncadd %s7581, %s7589
          %s7591 = smul.addr %s23, 32
          %s7592 = smul.addr %s7591, 128
          %s7593 = scalar_lea.hbm %s5, %s7592
          %s7594 = sshll.u32 %s7584, 4
          %s7595 = int_to_ptr.vmem [resolvable:$true] %s7594
          %7600 = dma.vmem_to_hbm [thread:$0]  %s7595, 4096, %s7593, %s7581, 128, 128, 8
        $region56: #{tpu_custom_call.1} parent=39 // pred_fallthru
          _
      $region40: #{tpu_custom_call.1} parent=5 // pred_fallthru
        _
      %p7601 = scmp.le.s32.totalorder 2, %s18
      // Predicated region
      $region57: #{tpu_custom_call.1} parent=5 // pred_check
        %p7602 = pneg %p7601
      $region58: #{tpu_custom_call.1} parent=5 // pred_check_branch
        %7604 = sbr.rel (%p7602) target = $region60
      $region59: #{tpu_custom_call.1} parent=5 // pred_region
        %s7605 = ssub.s32 %s18, 2
        // Predicated region
        $region61: #{tpu_custom_call.1} parent=59 // pred_check
          %p7606 = pneg %p157
        $region62: #{tpu_custom_call.1} parent=59 // pred_check_branch
          %7608 = sbr.rel (%p7606) target = $region64
        $region63: #{tpu_custom_call.1} parent=59 // pred_region
          %s7609 = sand.u32 %s142, 1
          %s7610 = scalar_lea.sflag [#allocation7], %s7609
          %s7611 = sand.u32 %s142, 1
          %s7612 = smul.addr %s7611, 256
          %s7613 = scalar_lea.vmem [#allocation11], %s7612
          %7614 = dma.done %s7610, 4096
        $region64: #{tpu_custom_call.1} parent=59 // pred_fallthru
          _
      $region60: #{tpu_custom_call.1} parent=5 // pred_fallthru
        _
    $region6: #{tpu_custom_call.1} parent=1 // loop_footer
      %s22 = sadd.s32 1, %s18
    $region7: #{tpu_custom_call.1} parent=1 // loop_footer_branch
      %17 = sbr.rel target = $region3
    $region8: #{tpu_custom_call.1} parent=1 // loop_exit
      _
    %7615 = vsyncpa [#allocation6], 1
    %s7616 = scalar_lea.sflag [#allocation6], 1
    %7617 = vsyncpa %s7616, 1
    %7618 = vsyncpa [#allocation9], 1
    %7619 = vsyncpa [#allocation7], 1
    %s7620 = scalar_lea.sflag [#allocation7], 1
    %7621 = vsyncpa %s7620, 1

</llo_original>
